<compile_context>
chip_gen: v7x
topology: tpu7x:2x2x1
jax: 0.10.0
libtpu: 0.0.40
codegen_flags: <defaults>
</compile_context>

<pallas_src>
import math
import functools

import jax
import jax.numpy as jnp
from jax.experimental import pallas as pl
from jax.experimental.pallas import tpu as pltpu


# ----------------------------------------------------------------------- in-kernel helpers

def _channel_mask(c, k, hw):
    """(c, k) {0,1} f32 mask with m[i, j] = 1 iff j is in channel i's flattened chunk."""
    col = jax.lax.broadcasted_iota(jnp.int32, (c, k), 1)
    lo = jax.lax.broadcasted_iota(jnp.int32, (c, k), 0) * hw
    return jnp.logical_and(col >= lo, col < lo + hw).astype(jnp.float32)


# ----------------------------------------------------------------------- fused head kernel

def _head_kernel(xl_ref, xm_ref,
                 se1a_w1_ref, se1a_w2_ref, se1b_w1_ref, se1b_w2_ref,
                 se2a_w1_ref, se2a_w2_ref, se2b_w1_ref, se2b_w2_ref,
                 w1a_ref, b1a_ref, w1b_ref, b1b_ref,
                 w2a_ref, b2a_ref, w2b_ref, b2b_ref,
                 wc_ref, bc_ref,
                 p_ref, fcw_ref, fcb_ref, gam_ref, bet_ref, aw_ref, lab_ref,
                 chain_ref, logit_ref,
                 *, c1, hw1, c2, hw2, d,
                 gem_eps, bn_eps, s, cos_m, sin_m, th, mm):
    xl = xl_ref[...]                       # (B, C1*HW1)  backbone_last feature map
    xm = xm_ref[...]                       # (B, C2*HW2)  backbone feature map

    # Channel-membership masks, built once, reused by SE pool / SE expand / GeM pool.
    e1 = _channel_mask(c1, c1 * hw1, hw1)
    e2 = _channel_mask(c2, c2 * hw2, hw2)

    # Shared SE average pool per feature map (independent of SE weights -> computed once).
    pool_l = jax.lax.dot_general(xl, e1, (((1,), (1,)), ((), ())),
                                 preferred_element_type=jnp.float32) * (1.0 / hw1)   # (B, C1)
    pool_m = jax.lax.dot_general(xm, e2, (((1,), (1,)), ((), ())),
                                 preferred_element_type=jnp.float32) * (1.0 / hw2)   # (B, C2)

    def branch(x, pooled, e, w1t_ref, w2t_ref, wf_ref, bf_ref):
        """SE excitation -> per-channel rescale (stays in VMEM/vregs) -> OSME fc."""
        h = jnp.maximum(jnp.dot(pooled, w1t_ref[...],
                                preferred_element_type=jnp.float32), 0.0)
        sc = jax.nn.sigmoid(jnp.dot(h, w2t_ref[...],
                                    preferred_element_type=jnp.float32))              # (B, C)
        xs = x * jnp.dot(sc, e, preferred_element_type=jnp.float32)                   # (B, C*HW)
        return jnp.dot(xs, wf_ref[...], preferred_element_type=jnp.float32) + bf_ref[...]

    # OSME on backbone_last (x1_0, x1_1) and OSME2 on backbone (x2_0, x2_1)
    y1a = branch(xl, pool_l, e1, se1a_w1_ref, se1a_w2_ref, w1a_ref, b1a_ref)
    y1b = branch(xl, pool_l, e1, se1b_w1_ref, se1b_w2_ref, w1b_ref, b1b_ref)
    y2a = branch(xm, pool_m, e2, se2a_w1_ref, se2a_w2_ref, w2a_ref, b2a_ref)
    y2b = branch(xm, pool_m, e2, se2b_w1_ref, se2b_w2_ref, w2b_ref, b2b_ref)

    # chain_fc on the virtual concat [y1a | y1b | y2a | y2b] via 128-aligned weight slabs.
    z = (jnp.dot(y1a, wc_ref[pl.ds(0 * d, d), :], preferred_element_type=jnp.float32)
         + jnp.dot(y1b, wc_ref[pl.ds(1 * d, d), :], preferred_element_type=jnp.float32)
         + jnp.dot(y2a, wc_ref[pl.ds(2 * d, d), :], preferred_element_type=jnp.float32)
         + jnp.dot(y2b, wc_ref[pl.ds(3 * d, d), :], preferred_element_type=jnp.float32)
         + bc_ref[...])

    # chain softmax
    zm = jnp.max(z, axis=1, keepdims=True)
    ez = jnp.exp(z - zm)
    chain_ref[...] = ez / jnp.sum(ez, axis=1, keepdims=True)

    # ------------------------------------------------------------------- tail path
    p = p_ref[0]                                               # GeM p (scalar in SMEM)

    # GeM: (mean_HW clamp(x, eps)^p)^(1/p) per channel, pooled via the same e1 mask.
    xp = jnp.exp(jnp.log(jnp.maximum(xl, gem_eps)) * p)
    pooled = jax.lax.dot_general(xp, e1, (((1,), (1,)), ((), ())),
                                 preferred_element_type=jnp.float32) * (1.0 / hw1)    # (B, C1)
    g = jnp.exp(jnp.log(pooled) / p)

    # dropout(p=0.0) is identity -> fc + BatchNorm1d (training-mode batch statistics)
    feat = jnp.dot(g, fcw_ref[...], preferred_element_type=jnp.float32) + fcb_ref[...]
    mu = jnp.mean(feat, axis=0, keepdims=True)
    var = jnp.mean((feat - mu) ** 2, axis=0, keepdims=True)
    feat = gam_ref[...] * (feat - mu) * jax.lax.rsqrt(var + bn_eps) + bet_ref[...]

    # ArcMarginProduct (easy_margin=False, ls_eps=0.0)
    xn = feat / jnp.maximum(jnp.sqrt(jnp.sum(feat * feat, axis=1, keepdims=True)), 1e-12)
    w = aw_ref[...]
    wn = w / jnp.maximum(jnp.sqrt(jnp.sum(w * w, axis=1, keepdims=True)), 1e-12)
    cosine = jax.lax.dot_general(xn, wn, (((1,), (1,)), ((), ())),
                                 preferred_element_type=jnp.float32)                  # (B, n_cls)
    sine = jnp.sqrt(jnp.maximum(1.0 - cosine * cosine, 0.0))
    phi = cosine * cos_m - sine * sin_m
    phi = jnp.where(cosine > th, phi, cosine - mm)

    lab = lab_ref[...]                                                                # (B, 1) i32
    col = jax.lax.broadcasted_iota(jnp.int32, cosine.shape, 1)
    one_hot = (col == lab).astype(jnp.float32)
    logit_ref[...] = (one_hot * phi + (1.0 - one_hot) * cosine) * s


# ----------------------------------------------------------------------- wrapper

def _full_spec(shape):
    return pl.BlockSpec(shape, lambda i: (0,) * len(shape))


def head_forward(params, xl, xm, label, *, c1, hw1, c2, hw2, d, chain_out, scale, margin):
    B = xl.shape[0]
    fc_dim = params["fc_w"].shape[0]
    n_classes = params["arc_weight"].shape[0]

    inputs = [
        xl, xm,
        params["osme_se1_fc1"].T, params["osme_se1_fc2"].T,
        params["osme_se2_fc1"].T, params["osme_se2_fc2"].T,
        params["osme2_se1_fc1"].T, params["osme2_se1_fc2"].T,
        params["osme2_se2_fc1"].T, params["osme2_se2_fc2"].T,
        params["osme_fc1_w"].T, params["osme_fc1_b"].reshape(1, d),
        params["osme_fc2_w"].T, params["osme_fc2_b"].reshape(1, d),
        params["osme2_fc1_w"].T, params["osme2_fc1_b"].reshape(1, d),
        params["osme2_fc2_w"].T, params["osme2_fc2_b"].reshape(1, d),
        params["chain_fc_w"].T, params["chain_fc_b"].reshape(1, chain_out),
        params["gem_p"],
        params["fc_w"].T, params["fc_b"].reshape(1, fc_dim),
        params["bn_gamma"].reshape(1, fc_dim), params["bn_beta"].reshape(1, fc_dim),
        params["arc_weight"], label.reshape(B, 1).astype(jnp.int32),
    ]
    GEM_P_IDX = 20
    in_specs = [
        pl.BlockSpec(memory_space=pltpu.MemorySpace.SMEM) if i == GEM_P_IDX
        else _full_spec(a.shape)
        for i, a in enumerate(inputs)
    ]

    kern = functools.partial(
        _head_kernel, c1=c1, hw1=hw1, c2=c2, hw2=hw2, d=d,
        gem_eps=1e-6, bn_eps=1e-5, s=scale,
        cos_m=math.cos(margin), sin_m=math.sin(margin),
        th=math.cos(math.pi - margin), mm=math.sin(math.pi - margin) * margin)

    chain_probs, logits = pl.pallas_call(
        kern,
        out_shape=(jax.ShapeDtypeStruct((B, chain_out), jnp.float32),
                   jax.ShapeDtypeStruct((B, n_classes), jnp.float32)),
        grid=(1,),
        in_specs=in_specs,
        out_specs=(_full_spec((B, chain_out)), _full_spec((B, n_classes))),
        compiler_params=pltpu.CompilerParams(dimension_semantics=("arbitrary",)),
    )(*inputs)
    return logits, chain_probs


# ----------------------------------------------------------------------- params & forward

def init_params(key, cfg):
    C1, W1 = cfg["C1"], cfg["W1"]
    C2, W2 = cfg["C2"], cfg["W2"]
    d, r = cfg["d"], cfg["reduction"]
    fc_dim, n_classes, chain_out = cfg["fc_dim"], cfg["n_classes"], cfg["chain_out"]
    keys = iter(jax.random.split(key, 32))

    def torch_linear(out_f, in_f, bias=True):
        k1, k2 = jax.random.split(next(keys))
        bound = 1.0 / math.sqrt(in_f)
        w = jax.random.uniform(k1, (out_f, in_f), jnp.float32, -bound, bound)
        b = jax.random.uniform(k2, (out_f,), jnp.float32, -bound, bound) if bias else None
        return w, b

    p = {}
    # OSME on backbone_last feature map (C1, W1)
    p["osme_se1_fc1"], _ = torch_linear(C1 // r, C1, bias=False)
    p["osme_se1_fc2"], _ = torch_linear(C1, C1 // r, bias=False)
    p["osme_se2_fc1"], _ = torch_linear(C1 // r, C1, bias=False)
    p["osme_se2_fc2"], _ = torch_linear(C1, C1 // r, bias=False)
    p["osme_fc1_w"], p["osme_fc1_b"] = torch_linear(d, C1 * W1 * W1)
    p["osme_fc2_w"], p["osme_fc2_b"] = torch_linear(d, C1 * W1 * W1)
    # OSME2 on backbone feature map (C2, W2)
    p["osme2_se1_fc1"], _ = torch_linear(C2 // r, C2, bias=False)
    p["osme2_se1_fc2"], _ = torch_linear(C2, C2 // r, bias=False)
    p["osme2_se2_fc1"], _ = torch_linear(C2 // r, C2, bias=False)
    p["osme2_se2_fc2"], _ = torch_linear(C2, C2 // r, bias=False)
    p["osme2_fc1_w"], p["osme2_fc1_b"] = torch_linear(d, C2 * W2 * W2)
    p["osme2_fc2_w"], p["osme2_fc2_b"] = torch_linear(d, C2 * W2 * W2)
    # chain fc (4*d -> chain_out)
    p["chain_fc_w"], p["chain_fc_b"] = torch_linear(chain_out, 4 * d)
    # GeM p
    p["gem_p"] = jnp.ones((1,), jnp.float32) * 3.0
    # head fc: xavier_normal weight, zero bias
    std = math.sqrt(2.0 / (C1 + fc_dim))
    p["fc_w"] = std * jax.random.normal(next(keys), (fc_dim, C1), jnp.float32)
    p["fc_b"] = jnp.zeros((fc_dim,), jnp.float32)
    # BatchNorm1d
    p["bn_gamma"] = jnp.ones((fc_dim,), jnp.float32)
    p["bn_beta"] = jnp.zeros((fc_dim,), jnp.float32)
    # ArcMarginProduct weight: xavier_uniform
    lim = math.sqrt(6.0 / (fc_dim + n_classes))
    p["arc_weight"] = jax.random.uniform(next(keys), (n_classes, fc_dim), jnp.float32,
                                         -lim, lim)
    return p


def forward(params, x_mid, x_last, label, cfg):
    """x_mid  = backbone output      (B, C2, W2, W2)  [NCHW]
       x_last = backbone_last output (B, C1, W1, W1)  [NCHW]"""
    B = x_mid.shape[0]
    C2, H2, W2 = x_mid.shape[1:]
    C1, H1, W1 = x_last.shape[1:]
    # row-major NCHW flatten == torch.flatten(x, start_dim=1)
    xl = x_last.reshape(B, C1 * H1 * W1).astype(jnp.float32)
    xm = x_mid.reshape(B, C2 * H2 * W2).astype(jnp.float32)

    return head_forward(params, xl, xm, label, c1=C1, hw1=H1 * W1, c2=C2, hw2=H2 * W2,
                        d=cfg["d"], chain_out=cfg["chain_out"],
                        scale=cfg["scale"], margin=cfg["margin"])


# ----------------------------------------------------------------------- pure-JAX reference

def reference_forward(params, cfg, x_mid, x_last, label):
    B = x_mid.shape[0]

    def se_block(x, w1, w2):
        y = jnp.mean(x, axis=(2, 3))
        y = jnp.maximum(y @ w1.T, 0.0)
        y = jax.nn.sigmoid(y @ w2.T)
        return x * y[:, :, None, None]

    def osme(x, s1w1, s1w2, s2w1, s2w2, f1w, f1b, f2w, f2b):
        a = se_block(x, s1w1, s1w2).reshape(B, -1) @ f1w.T + f1b
        b = se_block(x, s2w1, s2w2).reshape(B, -1) @ f2w.T + f2b
        return a, b

    x1_0, x1_1 = osme(x_last, params["osme_se1_fc1"], params["osme_se1_fc2"],
                      params["osme_se2_fc1"], params["osme_se2_fc2"],
                      params["osme_fc1_w"], params["osme_fc1_b"],
                      params["osme_fc2_w"], params["osme_fc2_b"])
    x2_0, x2_1 = osme(x_mid, params["osme2_se1_fc1"], params["osme2_se1_fc2"],
                      params["osme2_se2_fc1"], params["osme2_se2_fc2"],
                      params["osme2_fc1_w"], params["osme2_fc1_b"],
                      params["osme2_fc2_w"], params["osme2_fc2_b"])
    x1 = jnp.concatenate([x1_0, x1_1, x2_0, x2_1], axis=1)
    x1 = jax.nn.softmax(x1 @ params["chain_fc_w"].T + params["chain_fc_b"], axis=1)

    p = params["gem_p"][0]
    g = jnp.mean(jnp.maximum(x_last, 1e-6) ** p, axis=(2, 3)) ** (1.0 / p)
    x = g @ params["fc_w"].T + params["fc_b"]
    mu = jnp.mean(x, axis=0)
    var = jnp.mean((x - mu) ** 2, axis=0)
    x = params["bn_gamma"] * (x - mu) / jnp.sqrt(var + 1e-5) + params["bn_beta"]

    xn = x / jnp.maximum(jnp.linalg.norm(x, axis=1, keepdims=True), 1e-12)
    w = params["arc_weight"]
    wn = w / jnp.maximum(jnp.linalg.norm(w, axis=1, keepdims=True), 1e-12)
    cosine = xn @ wn.T
    sine = jnp.sqrt(jnp.maximum(1.0 - cosine ** 2, 0.0))
    m = cfg["margin"]
    phi = cosine * math.cos(m) - sine * math.sin(m)
    phi = jnp.where(cosine > math.cos(math.pi - m), phi, cosine - math.sin(math.pi - m) * m)
    one_hot = jax.nn.one_hot(label, cfg["n_classes"], dtype=jnp.float32)
    logits = (one_hot * phi + (1.0 - one_hot) * cosine) * cfg["scale"]
    return logits, x1


# ----------------------------------------------------------------------- main

if __name__ == "__main__":
    cfg = dict(B=4, C1=64, W1=4, C2=32, W2=8, d=128, reduction=16,
               fc_dim=64, n_classes=32, chain_out=88, scale=30.0, margin=0.3)

    root = jax.random.PRNGKey(0)
    k_params, k_mid, k_last, k_lab = jax.random.split(root, 4)

    params = init_params(k_params, cfg)
    x_mid = jax.random.normal(k_mid, (cfg["B"], cfg["C2"], cfg["W2"], cfg["W2"]), jnp.float32)
    x_last = jax.random.normal(k_last, (cfg["B"], cfg["C1"], cfg["W1"], cfg["W1"]), jnp.float32)
    label = jax.random.randint(k_lab, (cfg["B"],), 0, cfg["n_classes"], jnp.int32)

    fwd = jax.jit(functools.partial(forward, cfg=cfg))
    logits, chain_probs = fwd(params, x_mid, x_last, label)
    jax.block_until_ready((logits, chain_probs))

    assert logits.shape == (cfg["B"], cfg["n_classes"])
    assert chain_probs.shape == (cfg["B"], cfg["chain_out"])

    ref_logits, ref_chain = reference_forward(params, cfg, x_mid, x_last, label)
    assert jnp.allclose(logits, ref_logits, rtol=1e-3, atol=1e-3)
    assert jnp.allclose(chain_probs, ref_chain, rtol=1e-3, atol=1e-3)

    print("KERNEL_OK")
</pallas_src>

<mosaic_0001>
module attributes {stable_mosaic.version = 11 : i64} {
  func.func @_head_kernel(%arg0: i32, %arg1: memref<4x1024xf32, #tpu.memory_space<vmem>>, %arg2: memref<4x2048xf32, #tpu.memory_space<vmem>>, %arg3: memref<64x4xf32, #tpu.memory_space<vmem>>, %arg4: memref<4x64xf32, #tpu.memory_space<vmem>>, %arg5: memref<64x4xf32, #tpu.memory_space<vmem>>, %arg6: memref<4x64xf32, #tpu.memory_space<vmem>>, %arg7: memref<32x2xf32, #tpu.memory_space<vmem>>, %arg8: memref<2x32xf32, #tpu.memory_space<vmem>>, %arg9: memref<32x2xf32, #tpu.memory_space<vmem>>, %arg10: memref<2x32xf32, #tpu.memory_space<vmem>>, %arg11: memref<1024x128xf32, #tpu.memory_space<vmem>>, %arg12: memref<1x128xf32, #tpu.memory_space<vmem>>, %arg13: memref<1024x128xf32, #tpu.memory_space<vmem>>, %arg14: memref<1x128xf32, #tpu.memory_space<vmem>>, %arg15: memref<2048x128xf32, #tpu.memory_space<vmem>>, %arg16: memref<1x128xf32, #tpu.memory_space<vmem>>, %arg17: memref<2048x128xf32, #tpu.memory_space<vmem>>, %arg18: memref<1x128xf32, #tpu.memory_space<vmem>>, %arg19: memref<512x88xf32, #tpu.memory_space<vmem>>, %arg20: memref<1x88xf32, #tpu.memory_space<vmem>>, %arg21: memref<1xf32, #tpu.memory_space<smem>>, %arg22: memref<64x64xf32, #tpu.memory_space<vmem>>, %arg23: memref<1x64xf32, #tpu.memory_space<vmem>>, %arg24: memref<1x64xf32, #tpu.memory_space<vmem>>, %arg25: memref<1x64xf32, #tpu.memory_space<vmem>>, %arg26: memref<32x64xf32, #tpu.memory_space<vmem>>, %arg27: memref<4x1xi32, #tpu.memory_space<vmem>>, %arg28: memref<4x88xf32, #tpu.memory_space<vmem>>, %arg29: memref<4x32xf32, #tpu.memory_space<vmem>>) attributes {dimension_semantics = [#tpu.dimension_semantics<arbitrary>], iteration_bounds = array<i64: 1>, scalar_prefetch = 0 : i64, scratch_operands = 0 : i64, tpu.core_type = #tpu.core_type<tc>, window_params = [{pipeline_mode = #tpu.pipeline_mode<synchronous>, transform_indices = @transform_0, window_bounds = array<i64: 4, 1024>}, {pipeline_mode = #tpu.pipeline_mode<synchronous>, transform_indices = @transform_1, window_bounds = array<i64: 4, 2048>}, {pipeline_mode = #tpu.pipeline_mode<synchronous>, transform_indices = @transform_2, window_bounds = array<i64: 64, 4>}, {pipeline_mode = #tpu.pipeline_mode<synchronous>, transform_indices = @transform_3, window_bounds = array<i64: 4, 64>}, {pipeline_mode = #tpu.pipeline_mode<synchronous>, transform_indices = @transform_4, window_bounds = array<i64: 64, 4>}, {pipeline_mode = #tpu.pipeline_mode<synchronous>, transform_indices = @transform_5, window_bounds = array<i64: 4, 64>}, {pipeline_mode = #tpu.pipeline_mode<synchronous>, transform_indices = @transform_6, window_bounds = array<i64: 32, 2>}, {pipeline_mode = #tpu.pipeline_mode<synchronous>, transform_indices = @transform_7, window_bounds = array<i64: 2, 32>}, {pipeline_mode = #tpu.pipeline_mode<synchronous>, transform_indices = @transform_8, window_bounds = array<i64: 32, 2>}, {pipeline_mode = #tpu.pipeline_mode<synchronous>, transform_indices = @transform_9, window_bounds = array<i64: 2, 32>}, {pipeline_mode = #tpu.pipeline_mode<synchronous>, transform_indices = @transform_10, window_bounds = array<i64: 1024, 128>}, {pipeline_mode = #tpu.pipeline_mode<synchronous>, transform_indices = @transform_11, window_bounds = array<i64: 1, 128>}, {pipeline_mode = #tpu.pipeline_mode<synchronous>, transform_indices = @transform_12, window_bounds = array<i64: 1024, 128>}, {pipeline_mode = #tpu.pipeline_mode<synchronous>, transform_indices = @transform_13, window_bounds = array<i64: 1, 128>}, {pipeline_mode = #tpu.pipeline_mode<synchronous>, transform_indices = @transform_14, window_bounds = array<i64: 2048, 128>}, {pipeline_mode = #tpu.pipeline_mode<synchronous>, transform_indices = @transform_15, window_bounds = array<i64: 1, 128>}, {pipeline_mode = #tpu.pipeline_mode<synchronous>, transform_indices = @transform_16, window_bounds = array<i64: 2048, 128>}, {pipeline_mode = #tpu.pipeline_mode<synchronous>, transform_indices = @transform_17, window_bounds = array<i64: 1, 128>}, {pipeline_mode = #tpu.pipeline_mode<synchronous>, transform_indices = @transform_18, window_bounds = array<i64: 512, 88>}, {pipeline_mode = #tpu.pipeline_mode<synchronous>, transform_indices = @transform_19, window_bounds = array<i64: 1, 88>}, {transform_indices = @transform_20, window_bounds = array<i64: 1>}, {pipeline_mode = #tpu.pipeline_mode<synchronous>, transform_indices = @transform_21, window_bounds = array<i64: 64, 64>}, {pipeline_mode = #tpu.pipeline_mode<synchronous>, transform_indices = @transform_22, window_bounds = array<i64: 1, 64>}, {pipeline_mode = #tpu.pipeline_mode<synchronous>, transform_indices = @transform_23, window_bounds = array<i64: 1, 64>}, {pipeline_mode = #tpu.pipeline_mode<synchronous>, transform_indices = @transform_24, window_bounds = array<i64: 1, 64>}, {pipeline_mode = #tpu.pipeline_mode<synchronous>, transform_indices = @transform_25, window_bounds = array<i64: 32, 64>}, {pipeline_mode = #tpu.pipeline_mode<synchronous>, transform_indices = @transform_26, window_bounds = array<i64: 4, 1>}, {pipeline_mode = #tpu.pipeline_mode<synchronous>, transform_indices = @transform_27, window_bounds = array<i64: 4, 88>}, {pipeline_mode = #tpu.pipeline_mode<synchronous>, transform_indices = @transform_28, window_bounds = array<i64: 4, 32>}]} {
    %c0 = arith.constant 0 : index
    %c0_0 = arith.constant 0 : index
    %0 = vector.load %arg1[%c0, %c0_0] : memref<4x1024xf32, #tpu.memory_space<vmem>>, vector<4x1024xf32>
    %c0_1 = arith.constant 0 : index
    %c0_2 = arith.constant 0 : index
    %1 = vector.load %arg2[%c0_1, %c0_2] : memref<4x2048xf32, #tpu.memory_space<vmem>>, vector<4x2048xf32>
    %2 = tpu.iota {dimensions = array<i32: 1>} : vector<64x1024xi32>
    %3 = tpu.iota {dimensions = array<i32: 0>} : vector<64x1024xi32>
    %c16_i32 = arith.constant 16 : i32
    %4 = vector.broadcast %c16_i32 : i32 to vector<64x1024xi32>
    %5 = arith.muli %3, %4 : vector<64x1024xi32>
    %6 = arith.cmpi sge, %2, %5 : vector<64x1024xi32>
    %c16_i32_3 = arith.constant 16 : i32
    %7 = vector.broadcast %c16_i32_3 : i32 to vector<64x1024xi32>
    %8 = arith.addi %5, %7 : vector<64x1024xi32>
    %9 = arith.cmpi slt, %2, %8 : vector<64x1024xi32>
    %10 = arith.andi %6, %9 : vector<64x1024xi1>
    %11 = arith.extui %10 : vector<64x1024xi1> to vector<64x1024xi32>
    %12 = arith.sitofp %11 : vector<64x1024xi32> to vector<64x1024xf32>
    %13 = tpu.iota {dimensions = array<i32: 1>} : vector<32x2048xi32>
    %14 = tpu.iota {dimensions = array<i32: 0>} : vector<32x2048xi32>
    %c64_i32 = arith.constant 64 : i32
    %15 = vector.broadcast %c64_i32 : i32 to vector<32x2048xi32>
    %16 = arith.muli %14, %15 : vector<32x2048xi32>
    %17 = arith.cmpi sge, %13, %16 : vector<32x2048xi32>
    %c64_i32_4 = arith.constant 64 : i32
    %18 = vector.broadcast %c64_i32_4 : i32 to vector<32x2048xi32>
    %19 = arith.addi %16, %18 : vector<32x2048xi32>
    %20 = arith.cmpi slt, %13, %19 : vector<32x2048xi32>
    %21 = arith.andi %17, %20 : vector<32x2048xi1>
    %22 = arith.extui %21 : vector<32x2048xi1> to vector<32x2048xi32>
    %23 = arith.sitofp %22 : vector<32x2048xi32> to vector<32x2048xf32>
    %cst = arith.constant dense<0.000000e+00> : vector<4x64xf32>
    %24 = tpu.matmul %0, %12, %cst {dimension_numbers = #tpu.dot_dimension_numbers<[1], [1], [0], [0], [0, 0, 1, 0], [], []>} : vector<4x1024xf32>, vector<64x1024xf32>, vector<4x64xf32> -> vector<4x64xf32>
    %cst_5 = arith.constant 6.250000e-02 : f32
    %25 = vector.broadcast %cst_5 : f32 to vector<4x64xf32>
    %26 = arith.mulf %24, %25 : vector<4x64xf32>
    %cst_6 = arith.constant dense<0.000000e+00> : vector<4x32xf32>
    %27 = tpu.matmul %1, %23, %cst_6 {dimension_numbers = #tpu.dot_dimension_numbers<[1], [1], [0], [0], [0, 0, 1, 0], [], []>} : vector<4x2048xf32>, vector<32x2048xf32>, vector<4x32xf32> -> vector<4x32xf32>
    %cst_7 = arith.constant 1.562500e-02 : f32
    %28 = vector.broadcast %cst_7 : f32 to vector<4x32xf32>
    %29 = arith.mulf %27, %28 : vector<4x32xf32>
    %c0_8 = arith.constant 0 : index
    %c0_9 = arith.constant 0 : index
    %30 = vector.load %arg3[%c0_8, %c0_9] : memref<64x4xf32, #tpu.memory_space<vmem>>, vector<64x4xf32>
    %cst_10 = arith.constant dense<0.000000e+00> : vector<4x4xf32>
    %31 = tpu.matmul %26, %30, %cst_10 {dimension_numbers = #tpu.dot_dimension_numbers<[1], [0], [0], [1], [0, 0, 1, 1], [], []>} : vector<4x64xf32>, vector<64x4xf32>, vector<4x4xf32> -> vector<4x4xf32>
    %cst_11 = arith.constant 0.000000e+00 : f32
    %32 = vector.broadcast %cst_11 : f32 to vector<4x4xf32>
    %33 = arith.maximumf %31, %32 : vector<4x4xf32>
    %c0_12 = arith.constant 0 : index
    %c0_13 = arith.constant 0 : index
    %34 = vector.load %arg4[%c0_12, %c0_13] : memref<4x64xf32, #tpu.memory_space<vmem>>, vector<4x64xf32>
    %cst_14 = arith.constant dense<0.000000e+00> : vector<4x64xf32>
    %35 = tpu.matmul %33, %34, %cst_14 {dimension_numbers = #tpu.dot_dimension_numbers<[1], [0], [0], [1], [0, 0, 1, 1], [], []>} : vector<4x4xf32>, vector<4x64xf32>, vector<4x64xf32> -> vector<4x64xf32>
    %36 = arith.negf %35 : vector<4x64xf32>
    %37 = math.exp %36 : vector<4x64xf32>
    %cst_15 = arith.constant 1.000000e+00 : f32
    %38 = vector.broadcast %cst_15 : f32 to vector<4x64xf32>
    %39 = arith.addf %38, %37 : vector<4x64xf32>
    %40 = arith.divf %38, %39 : vector<4x64xf32>
    %cst_16 = arith.constant dense<0.000000e+00> : vector<4x1024xf32>
    %41 = tpu.matmul %40, %12, %cst_16 {dimension_numbers = #tpu.dot_dimension_numbers<[1], [0], [0], [1], [0, 0, 1, 1], [], []>} : vector<4x64xf32>, vector<64x1024xf32>, vector<4x1024xf32> -> vector<4x1024xf32>
    %42 = arith.mulf %0, %41 : vector<4x1024xf32>
    %c0_17 = arith.constant 0 : index
    %c0_18 = arith.constant 0 : index
    %43 = vector.load %arg11[%c0_17, %c0_18] : memref<1024x128xf32, #tpu.memory_space<vmem>>, vector<1024x128xf32>
    %cst_19 = arith.constant dense<0.000000e+00> : vector<4x128xf32>
    %44 = tpu.matmul %42, %43, %cst_19 {dimension_numbers = #tpu.dot_dimension_numbers<[1], [0], [0], [1], [0, 0, 1, 1], [], []>} : vector<4x1024xf32>, vector<1024x128xf32>, vector<4x128xf32> -> vector<4x128xf32>
    %c0_20 = arith.constant 0 : index
    %c0_21 = arith.constant 0 : index
    %45 = vector.load %arg12[%c0_20, %c0_21] : memref<1x128xf32, #tpu.memory_space<vmem>>, vector<1x128xf32>
    %46 = vector.broadcast %45 : vector<1x128xf32> to vector<4x128xf32>
    %47 = arith.addf %44, %46 : vector<4x128xf32>
    %c0_22 = arith.constant 0 : index
    %c0_23 = arith.constant 0 : index
    %48 = vector.load %arg5[%c0_22, %c0_23] : memref<64x4xf32, #tpu.memory_space<vmem>>, vector<64x4xf32>
    %cst_24 = arith.constant dense<0.000000e+00> : vector<4x4xf32>
    %49 = tpu.matmul %26, %48, %cst_24 {dimension_numbers = #tpu.dot_dimension_numbers<[1], [0], [0], [1], [0, 0, 1, 1], [], []>} : vector<4x64xf32>, vector<64x4xf32>, vector<4x4xf32> -> vector<4x4xf32>
    %cst_25 = arith.constant 0.000000e+00 : f32
    %50 = vector.broadcast %cst_25 : f32 to vector<4x4xf32>
    %51 = arith.maximumf %49, %50 : vector<4x4xf32>
    %c0_26 = arith.constant 0 : index
    %c0_27 = arith.constant 0 : index
    %52 = vector.load %arg6[%c0_26, %c0_27] : memref<4x64xf32, #tpu.memory_space<vmem>>, vector<4x64xf32>
    %cst_28 = arith.constant dense<0.000000e+00> : vector<4x64xf32>
    %53 = tpu.matmul %51, %52, %cst_28 {dimension_numbers = #tpu.dot_dimension_numbers<[1], [0], [0], [1], [0, 0, 1, 1], [], []>} : vector<4x4xf32>, vector<4x64xf32>, vector<4x64xf32> -> vector<4x64xf32>
    %54 = arith.negf %53 : vector<4x64xf32>
    %55 = math.exp %54 : vector<4x64xf32>
    %cst_29 = arith.constant 1.000000e+00 : f32
    %56 = vector.broadcast %cst_29 : f32 to vector<4x64xf32>
    %57 = arith.addf %56, %55 : vector<4x64xf32>
    %58 = arith.divf %56, %57 : vector<4x64xf32>
    %cst_30 = arith.constant dense<0.000000e+00> : vector<4x1024xf32>
    %59 = tpu.matmul %58, %12, %cst_30 {dimension_numbers = #tpu.dot_dimension_numbers<[1], [0], [0], [1], [0, 0, 1, 1], [], []>} : vector<4x64xf32>, vector<64x1024xf32>, vector<4x1024xf32> -> vector<4x1024xf32>
    %60 = arith.mulf %0, %59 : vector<4x1024xf32>
    %c0_31 = arith.constant 0 : index
    %c0_32 = arith.constant 0 : index
    %61 = vector.load %arg13[%c0_31, %c0_32] : memref<1024x128xf32, #tpu.memory_space<vmem>>, vector<1024x128xf32>
    %cst_33 = arith.constant dense<0.000000e+00> : vector<4x128xf32>
    %62 = tpu.matmul %60, %61, %cst_33 {dimension_numbers = #tpu.dot_dimension_numbers<[1], [0], [0], [1], [0, 0, 1, 1], [], []>} : vector<4x1024xf32>, vector<1024x128xf32>, vector<4x128xf32> -> vector<4x128xf32>
    %c0_34 = arith.constant 0 : index
    %c0_35 = arith.constant 0 : index
    %63 = vector.load %arg14[%c0_34, %c0_35] : memref<1x128xf32, #tpu.memory_space<vmem>>, vector<1x128xf32>
    %64 = vector.broadcast %63 : vector<1x128xf32> to vector<4x128xf32>
    %65 = arith.addf %62, %64 : vector<4x128xf32>
    %c0_36 = arith.constant 0 : index
    %c0_37 = arith.constant 0 : index
    %66 = vector.load %arg7[%c0_36, %c0_37] : memref<32x2xf32, #tpu.memory_space<vmem>>, vector<32x2xf32>
    %cst_38 = arith.constant dense<0.000000e+00> : vector<4x2xf32>
    %67 = tpu.matmul %29, %66, %cst_38 {dimension_numbers = #tpu.dot_dimension_numbers<[1], [0], [0], [1], [0, 0, 1, 1], [], []>} : vector<4x32xf32>, vector<32x2xf32>, vector<4x2xf32> -> vector<4x2xf32>
    %cst_39 = arith.constant 0.000000e+00 : f32
    %68 = vector.broadcast %cst_39 : f32 to vector<4x2xf32>
    %69 = arith.maximumf %67, %68 : vector<4x2xf32>
    %c0_40 = arith.constant 0 : index
    %c0_41 = arith.constant 0 : index
    %70 = vector.load %arg8[%c0_40, %c0_41] : memref<2x32xf32, #tpu.memory_space<vmem>>, vector<2x32xf32>
    %cst_42 = arith.constant dense<0.000000e+00> : vector<4x32xf32>
    %71 = tpu.matmul %69, %70, %cst_42 {dimension_numbers = #tpu.dot_dimension_numbers<[1], [0], [0], [1], [0, 0, 1, 1], [], []>} : vector<4x2xf32>, vector<2x32xf32>, vector<4x32xf32> -> vector<4x32xf32>
    %72 = arith.negf %71 : vector<4x32xf32>
    %73 = math.exp %72 : vector<4x32xf32>
    %cst_43 = arith.constant 1.000000e+00 : f32
    %74 = vector.broadcast %cst_43 : f32 to vector<4x32xf32>
    %75 = arith.addf %74, %73 : vector<4x32xf32>
    %76 = arith.divf %74, %75 : vector<4x32xf32>
    %cst_44 = arith.constant dense<0.000000e+00> : vector<4x2048xf32>
    %77 = tpu.matmul %76, %23, %cst_44 {dimension_numbers = #tpu.dot_dimension_numbers<[1], [0], [0], [1], [0, 0, 1, 1], [], []>} : vector<4x32xf32>, vector<32x2048xf32>, vector<4x2048xf32> -> vector<4x2048xf32>
    %78 = arith.mulf %1, %77 : vector<4x2048xf32>
    %c0_45 = arith.constant 0 : index
    %c0_46 = arith.constant 0 : index
    %79 = vector.load %arg15[%c0_45, %c0_46] : memref<2048x128xf32, #tpu.memory_space<vmem>>, vector<2048x128xf32>
    %cst_47 = arith.constant dense<0.000000e+00> : vector<4x128xf32>
    %80 = tpu.matmul %78, %79, %cst_47 {dimension_numbers = #tpu.dot_dimension_numbers<[1], [0], [0], [1], [0, 0, 1, 1], [], []>} : vector<4x2048xf32>, vector<2048x128xf32>, vector<4x128xf32> -> vector<4x128xf32>
    %c0_48 = arith.constant 0 : index
    %c0_49 = arith.constant 0 : index
    %81 = vector.load %arg16[%c0_48, %c0_49] : memref<1x128xf32, #tpu.memory_space<vmem>>, vector<1x128xf32>
    %82 = vector.broadcast %81 : vector<1x128xf32> to vector<4x128xf32>
    %83 = arith.addf %80, %82 : vector<4x128xf32>
    %c0_50 = arith.constant 0 : index
    %c0_51 = arith.constant 0 : index
    %84 = vector.load %arg9[%c0_50, %c0_51] : memref<32x2xf32, #tpu.memory_space<vmem>>, vector<32x2xf32>
    %cst_52 = arith.constant dense<0.000000e+00> : vector<4x2xf32>
    %85 = tpu.matmul %29, %84, %cst_52 {dimension_numbers = #tpu.dot_dimension_numbers<[1], [0], [0], [1], [0, 0, 1, 1], [], []>} : vector<4x32xf32>, vector<32x2xf32>, vector<4x2xf32> -> vector<4x2xf32>
    %cst_53 = arith.constant 0.000000e+00 : f32
    %86 = vector.broadcast %cst_53 : f32 to vector<4x2xf32>
    %87 = arith.maximumf %85, %86 : vector<4x2xf32>
    %c0_54 = arith.constant 0 : index
    %c0_55 = arith.constant 0 : index
    %88 = vector.load %arg10[%c0_54, %c0_55] : memref<2x32xf32, #tpu.memory_space<vmem>>, vector<2x32xf32>
    %cst_56 = arith.constant dense<0.000000e+00> : vector<4x32xf32>
    %89 = tpu.matmul %87, %88, %cst_56 {dimension_numbers = #tpu.dot_dimension_numbers<[1], [0], [0], [1], [0, 0, 1, 1], [], []>} : vector<4x2xf32>, vector<2x32xf32>, vector<4x32xf32> -> vector<4x32xf32>
    %90 = arith.negf %89 : vector<4x32xf32>
    %91 = math.exp %90 : vector<4x32xf32>
    %cst_57 = arith.constant 1.000000e+00 : f32
    %92 = vector.broadcast %cst_57 : f32 to vector<4x32xf32>
    %93 = arith.addf %92, %91 : vector<4x32xf32>
    %94 = arith.divf %92, %93 : vector<4x32xf32>
    %cst_58 = arith.constant dense<0.000000e+00> : vector<4x2048xf32>
    %95 = tpu.matmul %94, %23, %cst_58 {dimension_numbers = #tpu.dot_dimension_numbers<[1], [0], [0], [1], [0, 0, 1, 1], [], []>} : vector<4x32xf32>, vector<32x2048xf32>, vector<4x2048xf32> -> vector<4x2048xf32>
    %96 = arith.mulf %1, %95 : vector<4x2048xf32>
    %c0_59 = arith.constant 0 : index
    %c0_60 = arith.constant 0 : index
    %97 = vector.load %arg17[%c0_59, %c0_60] : memref<2048x128xf32, #tpu.memory_space<vmem>>, vector<2048x128xf32>
    %cst_61 = arith.constant dense<0.000000e+00> : vector<4x128xf32>
    %98 = tpu.matmul %96, %97, %cst_61 {dimension_numbers = #tpu.dot_dimension_numbers<[1], [0], [0], [1], [0, 0, 1, 1], [], []>} : vector<4x2048xf32>, vector<2048x128xf32>, vector<4x128xf32> -> vector<4x128xf32>
    %c0_62 = arith.constant 0 : index
    %c0_63 = arith.constant 0 : index
    %99 = vector.load %arg18[%c0_62, %c0_63] : memref<1x128xf32, #tpu.memory_space<vmem>>, vector<1x128xf32>
    %100 = vector.broadcast %99 : vector<1x128xf32> to vector<4x128xf32>
    %101 = arith.addf %98, %100 : vector<4x128xf32>
    %c0_64 = arith.constant 0 : index
    %c0_65 = arith.constant 0 : index
    %102 = vector.load %arg19[%c0_64, %c0_65] : memref<512x88xf32, #tpu.memory_space<vmem>>, vector<128x88xf32>
    %cst_66 = arith.constant dense<0.000000e+00> : vector<4x88xf32>
    %103 = tpu.matmul %47, %102, %cst_66 {dimension_numbers = #tpu.dot_dimension_numbers<[1], [0], [0], [1], [0, 0, 1, 1], [], []>} : vector<4x128xf32>, vector<128x88xf32>, vector<4x88xf32> -> vector<4x88xf32>
    %c128 = arith.constant 128 : index
    %c0_67 = arith.constant 0 : index
    %104 = vector.load %arg19[%c128, %c0_67] : memref<512x88xf32, #tpu.memory_space<vmem>>, vector<128x88xf32>
    %cst_68 = arith.constant dense<0.000000e+00> : vector<4x88xf32>
    %105 = tpu.matmul %65, %104, %cst_68 {dimension_numbers = #tpu.dot_dimension_numbers<[1], [0], [0], [1], [0, 0, 1, 1], [], []>} : vector<4x128xf32>, vector<128x88xf32>, vector<4x88xf32> -> vector<4x88xf32>
    %106 = arith.addf %103, %105 : vector<4x88xf32>
    %c256 = arith.constant 256 : index
    %c0_69 = arith.constant 0 : index
    %107 = vector.load %arg19[%c256, %c0_69] : memref<512x88xf32, #tpu.memory_space<vmem>>, vector<128x88xf32>
    %cst_70 = arith.constant dense<0.000000e+00> : vector<4x88xf32>
    %108 = tpu.matmul %83, %107, %cst_70 {dimension_numbers = #tpu.dot_dimension_numbers<[1], [0], [0], [1], [0, 0, 1, 1], [], []>} : vector<4x128xf32>, vector<128x88xf32>, vector<4x88xf32> -> vector<4x88xf32>
    %109 = arith.addf %106, %108 : vector<4x88xf32>
    %c384 = arith.constant 384 : index
    %c0_71 = arith.constant 0 : index
    %110 = vector.load %arg19[%c384, %c0_71] : memref<512x88xf32, #tpu.memory_space<vmem>>, vector<128x88xf32>
    %cst_72 = arith.constant dense<0.000000e+00> : vector<4x88xf32>
    %111 = tpu.matmul %101, %110, %cst_72 {dimension_numbers = #tpu.dot_dimension_numbers<[1], [0], [0], [1], [0, 0, 1, 1], [], []>} : vector<4x128xf32>, vector<128x88xf32>, vector<4x88xf32> -> vector<4x88xf32>
    %112 = arith.addf %109, %111 : vector<4x88xf32>
    %c0_73 = arith.constant 0 : index
    %c0_74 = arith.constant 0 : index
    %113 = vector.load %arg20[%c0_73, %c0_74] : memref<1x88xf32, #tpu.memory_space<vmem>>, vector<1x88xf32>
    %114 = vector.broadcast %113 : vector<1x88xf32> to vector<4x88xf32>
    %115 = arith.addf %112, %114 : vector<4x88xf32>
    %cst_75 = arith.constant dense<0xFF800000> : vector<4xf32>
    %116 = vector.multi_reduction <maximumf>, %115, %cst_75 [1] : vector<4x88xf32> to vector<4xf32>
    %117 = vector.shape_cast %116 : vector<4xf32> to vector<4x1xf32>
    %118 = vector.broadcast %117 : vector<4x1xf32> to vector<4x88xf32>
    %119 = arith.subf %115, %118 : vector<4x88xf32>
    %120 = math.exp %119 : vector<4x88xf32>
    %cst_76 = arith.constant dense<0.000000e+00> : vector<4xf32>
    %121 = vector.multi_reduction <add>, %120, %cst_76 [1] : vector<4x88xf32> to vector<4xf32>
    %122 = vector.shape_cast %121 : vector<4xf32> to vector<4x1xf32>
    %123 = vector.broadcast %122 : vector<4x1xf32> to vector<4x88xf32>
    %124 = arith.divf %120, %123 : vector<4x88xf32>
    %c0_77 = arith.constant 0 : index
    %c0_78 = arith.constant 0 : index
    %125 = vector.load %arg28[%c0_77, %c0_78] : memref<4x88xf32, #tpu.memory_space<vmem>>, vector<4x88xf32>
    tpu.vector_store %arg28[%c0_77, %c0_78], %124 {strides = array<i32>} : memref<4x88xf32, #tpu.memory_space<vmem>>, vector<4x88xf32>,
    %c0_79 = arith.constant 0 : index
    %126 = memref.load %arg21[%c0_79] : memref<1xf32, #tpu.memory_space<smem>>
    %cst_80 = arith.constant 9.99999997E-7 : f32
    %127 = vector.broadcast %cst_80 : f32 to vector<4x1024xf32>
    %128 = arith.maximumf %0, %127 : vector<4x1024xf32>
    %129 = math.log %128 : vector<4x1024xf32>
    %130 = vector.broadcast %126 : f32 to vector<4x1024xf32>
    %131 = arith.mulf %129, %130 : vector<4x1024xf32>
    %132 = math.exp %131 : vector<4x1024xf32>
    %cst_81 = arith.constant dense<0.000000e+00> : vector<4x64xf32>
    %133 = tpu.matmul %132, %12, %cst_81 {dimension_numbers = #tpu.dot_dimension_numbers<[1], [1], [0], [0], [0, 0, 1, 0], [], []>} : vector<4x1024xf32>, vector<64x1024xf32>, vector<4x64xf32> -> vector<4x64xf32>
    %cst_82 = arith.constant 6.250000e-02 : f32
    %134 = vector.broadcast %cst_82 : f32 to vector<4x64xf32>
    %135 = arith.mulf %133, %134 : vector<4x64xf32>
    %136 = math.log %135 : vector<4x64xf32>
    %137 = vector.broadcast %126 : f32 to vector<4x64xf32>
    %138 = arith.divf %136, %137 : vector<4x64xf32>
    %139 = math.exp %138 : vector<4x64xf32>
    %c0_83 = arith.constant 0 : index
    %c0_84 = arith.constant 0 : index
    %140 = vector.load %arg22[%c0_83, %c0_84] : memref<64x64xf32, #tpu.memory_space<vmem>>, vector<64x64xf32>
    %cst_85 = arith.constant dense<0.000000e+00> : vector<4x64xf32>
    %141 = tpu.matmul %139, %140, %cst_85 {dimension_numbers = #tpu.dot_dimension_numbers<[1], [0], [0], [1], [0, 0, 1, 1], [], []>} : vector<4x64xf32>, vector<64x64xf32>, vector<4x64xf32> -> vector<4x64xf32>
    %c0_86 = arith.constant 0 : index
    %c0_87 = arith.constant 0 : index
    %142 = vector.load %arg23[%c0_86, %c0_87] : memref<1x64xf32, #tpu.memory_space<vmem>>, vector<1x64xf32>
    %143 = vector.broadcast %142 : vector<1x64xf32> to vector<4x64xf32>
    %144 = arith.addf %141, %143 : vector<4x64xf32>
    %cst_88 = arith.constant dense<0.000000e+00> : vector<64xf32>
    %145 = vector.multi_reduction <add>, %144, %cst_88 [0] : vector<4x64xf32> to vector<64xf32>
    %146 = vector.shape_cast %145 : vector<64xf32> to vector<1x64xf32>
    %cst_89 = arith.constant 4.000000e+00 : f32
    %147 = vector.broadcast %cst_89 : f32 to vector<1x64xf32>
    %148 = arith.divf %146, %147 : vector<1x64xf32>
    %149 = vector.broadcast %148 : vector<1x64xf32> to vector<4x64xf32>
    %150 = arith.subf %144, %149 : vector<4x64xf32>
    %151 = arith.mulf %150, %150 : vector<4x64xf32>
    %cst_90 = arith.constant dense<0.000000e+00> : vector<64xf32>
    %152 = vector.multi_reduction <add>, %151, %cst_90 [0] : vector<4x64xf32> to vector<64xf32>
    %153 = vector.shape_cast %152 : vector<64xf32> to vector<1x64xf32>
    %cst_91 = arith.constant 4.000000e+00 : f32
    %154 = vector.broadcast %cst_91 : f32 to vector<1x64xf32>
    %155 = arith.divf %153, %154 : vector<1x64xf32>
    %c0_92 = arith.constant 0 : index
    %c0_93 = arith.constant 0 : index
    %156 = vector.load %arg24[%c0_92, %c0_93] : memref<1x64xf32, #tpu.memory_space<vmem>>, vector<1x64xf32>
    %157 = vector.broadcast %148 : vector<1x64xf32> to vector<4x64xf32>
    %158 = arith.subf %144, %157 : vector<4x64xf32>
    %159 = vector.broadcast %156 : vector<1x64xf32> to vector<4x64xf32>
    %160 = arith.mulf %159, %158 : vector<4x64xf32>
    %cst_94 = arith.constant 9.99999974E-6 : f32
    %161 = vector.broadcast %cst_94 : f32 to vector<1x64xf32>
    %162 = arith.addf %155, %161 : vector<1x64xf32>
    %163 = math.rsqrt %162 : vector<1x64xf32>
    %164 = vector.broadcast %163 : vector<1x64xf32> to vector<4x64xf32>
    %165 = arith.mulf %160, %164 : vector<4x64xf32>
    %c0_95 = arith.constant 0 : index
    %c0_96 = arith.constant 0 : index
    %166 = vector.load %arg25[%c0_95, %c0_96] : memref<1x64xf32, #tpu.memory_space<vmem>>, vector<1x64xf32>
    %167 = vector.broadcast %166 : vector<1x64xf32> to vector<4x64xf32>
    %168 = arith.addf %165, %167 : vector<4x64xf32>
    %169 = arith.mulf %168, %168 : vector<4x64xf32>
    %cst_97 = arith.constant dense<0.000000e+00> : vector<4xf32>
    %170 = vector.multi_reduction <add>, %169, %cst_97 [1] : vector<4x64xf32> to vector<4xf32>
    %171 = vector.shape_cast %170 : vector<4xf32> to vector<4x1xf32>
    %172 = math.sqrt %171 : vector<4x1xf32>
    %cst_98 = arith.constant 9.99999996E-13 : f32
    %173 = vector.broadcast %cst_98 : f32 to vector<4x1xf32>
    %174 = arith.maximumf %172, %173 : vector<4x1xf32>
    %175 = vector.broadcast %174 : vector<4x1xf32> to vector<4x64xf32>
    %176 = arith.divf %168, %175 : vector<4x64xf32>
    %c0_99 = arith.constant 0 : index
    %c0_100 = arith.constant 0 : index
    %177 = vector.load %arg26[%c0_99, %c0_100] : memref<32x64xf32, #tpu.memory_space<vmem>>, vector<32x64xf32>
    %178 = arith.mulf %177, %177 : vector<32x64xf32>
    %cst_101 = arith.constant dense<0.000000e+00> : vector<32xf32>
    %179 = vector.multi_reduction <add>, %178, %cst_101 [1] : vector<32x64xf32> to vector<32xf32>
    %180 = vector.shape_cast %179 : vector<32xf32> to vector<32x1xf32>
    %181 = math.sqrt %180 : vector<32x1xf32>
    %cst_102 = arith.constant 9.99999996E-13 : f32
    %182 = vector.broadcast %cst_102 : f32 to vector<32x1xf32>
    %183 = arith.maximumf %181, %182 : vector<32x1xf32>
    %184 = vector.broadcast %183 : vector<32x1xf32> to vector<32x64xf32>
    %185 = arith.divf %177, %184 : vector<32x64xf32>
    %cst_103 = arith.constant dense<0.000000e+00> : vector<4x32xf32>
    %186 = tpu.matmul %176, %185, %cst_103 {dimension_numbers = #tpu.dot_dimension_numbers<[1], [1], [0], [0], [0, 0, 1, 0], [], []>} : vector<4x64xf32>, vector<32x64xf32>, vector<4x32xf32> -> vector<4x32xf32>
    %187 = arith.mulf %186, %186 : vector<4x32xf32>
    %cst_104 = arith.constant 1.000000e+00 : f32
    %188 = vector.broadcast %cst_104 : f32 to vector<4x32xf32>
    %189 = arith.subf %188, %187 : vector<4x32xf32>
    %cst_105 = arith.constant 0.000000e+00 : f32
    %190 = vector.broadcast %cst_105 : f32 to vector<4x32xf32>
    %191 = arith.maximumf %189, %190 : vector<4x32xf32>
    %192 = math.sqrt %191 : vector<4x32xf32>
    %cst_106 = arith.constant 0.955336511 : f32
    %193 = vector.broadcast %cst_106 : f32 to vector<4x32xf32>
    %194 = arith.mulf %186, %193 : vector<4x32xf32>
    %cst_107 = arith.constant 0.295520216 : f32
    %195 = vector.broadcast %cst_107 : f32 to vector<4x32xf32>
    %196 = arith.mulf %192, %195 : vector<4x32xf32>
    %197 = arith.subf %194, %196 : vector<4x32xf32>
    %cst_108 = arith.constant -0.955336511 : f32
    %198 = vector.broadcast %cst_108 : f32 to vector<4x32xf32>
    %199 = arith.cmpf ogt, %186, %198 : vector<4x32xf32>
    %cst_109 = arith.constant 0.0886560603 : f32
    %200 = vector.broadcast %cst_109 : f32 to vector<4x32xf32>
    %201 = arith.subf %186, %200 : vector<4x32xf32>
    %202 = arith.select %199, %197, %201 : vector<4x32xi1>, vector<4x32xf32>
    %c0_110 = arith.constant 0 : index
    %c0_111 = arith.constant 0 : index
    %203 = vector.load %arg27[%c0_110, %c0_111] : memref<4x1xi32, #tpu.memory_space<vmem>>, vector<4x1xi32>
    %204 = tpu.iota {dimensions = array<i32: 1>} : vector<4x32xi32>
    %205 = vector.broadcast %203 : vector<4x1xi32> to vector<4x32xi32>
    %206 = arith.cmpi eq, %204, %205 : vector<4x32xi32>
    %207 = arith.extui %206 : vector<4x32xi1> to vector<4x32xi32>
    %208 = arith.sitofp %207 : vector<4x32xi32> to vector<4x32xf32>
    %209 = arith.mulf %208, %202 : vector<4x32xf32>
    %cst_112 = arith.constant 1.000000e+00 : f32
    %210 = vector.broadcast %cst_112 : f32 to vector<4x32xf32>
    %211 = arith.subf %210, %208 : vector<4x32xf32>
    %212 = arith.mulf %211, %186 : vector<4x32xf32>
    %213 = arith.addf %209, %212 : vector<4x32xf32>
    %cst_113 = arith.constant 3.000000e+01 : f32
    %214 = vector.broadcast %cst_113 : f32 to vector<4x32xf32>
    %215 = arith.mulf %213, %214 : vector<4x32xf32>
    %c0_114 = arith.constant 0 : index
    %c0_115 = arith.constant 0 : index
    %216 = vector.load %arg29[%c0_114, %c0_115] : memref<4x32xf32, #tpu.memory_space<vmem>>, vector<4x32xf32>
    tpu.vector_store %arg29[%c0_114, %c0_115], %215 {strides = array<i32>} : memref<4x32xf32, #tpu.memory_space<vmem>>, vector<4x32xf32>,
    return
  }
  func.func @transform_0(%arg0: i32) -> (i32, i32) {
    %c0_i32 = arith.constant 0 : i32
    %c0_i32_0 = arith.constant 0 : i32
    %c0_i32_1 = arith.constant 0 : i32
    return %c0_i32, %c0_i32_0 : i32, i32
  }
  func.func @transform_1(%arg0: i32) -> (i32, i32) {
    %c0_i32 = arith.constant 0 : i32
    %c0_i32_0 = arith.constant 0 : i32
    %c0_i32_1 = arith.constant 0 : i32
    return %c0_i32, %c0_i32_0 : i32, i32
  }
  func.func @transform_2(%arg0: i32) -> (i32, i32) {
    %c0_i32 = arith.constant 0 : i32
    %c0_i32_0 = arith.constant 0 : i32
    %c0_i32_1 = arith.constant 0 : i32
    return %c0_i32, %c0_i32_0 : i32, i32
  }
  func.func @transform_3(%arg0: i32) -> (i32, i32) {
    %c0_i32 = arith.constant 0 : i32
    %c0_i32_0 = arith.constant 0 : i32
    %c0_i32_1 = arith.constant 0 : i32
    return %c0_i32, %c0_i32_0 : i32, i32
  }
  func.func @transform_4(%arg0: i32) -> (i32, i32) {
    %c0_i32 = arith.constant 0 : i32
    %c0_i32_0 = arith.constant 0 : i32
    %c0_i32_1 = arith.constant 0 : i32
    return %c0_i32, %c0_i32_0 : i32, i32
  }
  func.func @transform_5(%arg0: i32) -> (i32, i32) {
    %c0_i32 = arith.constant 0 : i32
    %c0_i32_0 = arith.constant 0 : i32
    %c0_i32_1 = arith.constant 0 : i32
    return %c0_i32, %c0_i32_0 : i32, i32
  }
  func.func @transform_6(%arg0: i32) -> (i32, i32) {
    %c0_i32 = arith.constant 0 : i32
    %c0_i32_0 = arith.constant 0 : i32
    %c0_i32_1 = arith.constant 0 : i32
    return %c0_i32, %c0_i32_0 : i32, i32
  }
  func.func @transform_7(%arg0: i32) -> (i32, i32) {
    %c0_i32 = arith.constant 0 : i32
    %c0_i32_0 = arith.constant 0 : i32
    %c0_i32_1 = arith.constant 0 : i32
    return %c0_i32, %c0_i32_0 : i32, i32
  }
  func.func @transform_8(%arg0: i32) -> (i32, i32) {
    %c0_i32 = arith.constant 0 : i32
    %c0_i32_0 = arith.constant 0 : i32
    %c0_i32_1 = arith.constant 0 : i32
    return %c0_i32, %c0_i32_0 : i32, i32
  }
  func.func @transform_9(%arg0: i32) -> (i32, i32) {
    %c0_i32 = arith.constant 0 : i32
    %c0_i32_0 = arith.constant 0 : i32
    %c0_i32_1 = arith.constant 0 : i32
    return %c0_i32, %c0_i32_0 : i32, i32
  }
  func.func @transform_10(%arg0: i32) -> (i32, i32) {
    %c0_i32 = arith.constant 0 : i32
    %c0_i32_0 = arith.constant 0 : i32
    %c0_i32_1 = arith.constant 0 : i32
    return %c0_i32, %c0_i32_0 : i32, i32
  }
  func.func @transform_11(%arg0: i32) -> (i32, i32) {
    %c0_i32 = arith.constant 0 : i32
    %c0_i32_0 = arith.constant 0 : i32
    %c0_i32_1 = arith.constant 0 : i32
    return %c0_i32, %c0_i32_0 : i32, i32
  }
  func.func @transform_12(%arg0: i32) -> (i32, i32) {
    %c0_i32 = arith.constant 0 : i32
    %c0_i32_0 = arith.constant 0 : i32
    %c0_i32_1 = arith.constant 0 : i32
    return %c0_i32, %c0_i32_0 : i32, i32
  }
  func.func @transform_13(%arg0: i32) -> (i32, i32) {
    %c0_i32 = arith.constant 0 : i32
    %c0_i32_0 = arith.constant 0 : i32
    %c0_i32_1 = arith.constant 0 : i32
    return %c0_i32, %c0_i32_0 : i32, i32
  }
  func.func @transform_14(%arg0: i32) -> (i32, i32) {
    %c0_i32 = arith.constant 0 : i32
    %c0_i32_0 = arith.constant 0 : i32
    %c0_i32_1 = arith.constant 0 : i32
    return %c0_i32, %c0_i32_0 : i32, i32
  }
  func.func @transform_15(%arg0: i32) -> (i32, i32) {
    %c0_i32 = arith.constant 0 : i32
    %c0_i32_0 = arith.constant 0 : i32
    %c0_i32_1 = arith.constant 0 : i32
    return %c0_i32, %c0_i32_0 : i32, i32
  }
  func.func @transform_16(%arg0: i32) -> (i32, i32) {
    %c0_i32 = arith.constant 0 : i32
    %c0_i32_0 = arith.constant 0 : i32
    %c0_i32_1 = arith.constant 0 : i32
    return %c0_i32, %c0_i32_0 : i32, i32
  }
  func.func @transform_17(%arg0: i32) -> (i32, i32) {
    %c0_i32 = arith.constant 0 : i32
    %c0_i32_0 = arith.constant 0 : i32
    %c0_i32_1 = arith.constant 0 : i32
    return %c0_i32, %c0_i32_0 : i32, i32
  }
  func.func @transform_18(%arg0: i32) -> (i32, i32) {
    %c0_i32 = arith.constant 0 : i32
    %c0_i32_0 = arith.constant 0 : i32
    %c0_i32_1 = arith.constant 0 : i32
    return %c0_i32, %c0_i32_0 : i32, i32
  }
  func.func @transform_19(%arg0: i32) -> (i32, i32) {
    %c0_i32 = arith.constant 0 : i32
    %c0_i32_0 = arith.constant 0 : i32
    %c0_i32_1 = arith.constant 0 : i32
    return %c0_i32, %c0_i32_0 : i32, i32
  }
  func.func @transform_20(%arg0: i32) -> i32 {
    %c0_i32 = arith.constant 0 : i32
    %c0_i32_0 = arith.constant 0 : i32
    return %c0_i32 : i32
  }
  func.func @transform_21(%arg0: i32) -> (i32, i32) {
    %c0_i32 = arith.constant 0 : i32
    %c0_i32_0 = arith.constant 0 : i32
    %c0_i32_1 = arith.constant 0 : i32
    return %c0_i32, %c0_i32_0 : i32, i32
  }
  func.func @transform_22(%arg0: i32) -> (i32, i32) {
    %c0_i32 = arith.constant 0 : i32
    %c0_i32_0 = arith.constant 0 : i32
    %c0_i32_1 = arith.constant 0 : i32
    return %c0_i32, %c0_i32_0 : i32, i32
  }
  func.func @transform_23(%arg0: i32) -> (i32, i32) {
    %c0_i32 = arith.constant 0 : i32
    %c0_i32_0 = arith.constant 0 : i32
    %c0_i32_1 = arith.constant 0 : i32
    return %c0_i32, %c0_i32_0 : i32, i32
  }
  func.func @transform_24(%arg0: i32) -> (i32, i32) {
    %c0_i32 = arith.constant 0 : i32
    %c0_i32_0 = arith.constant 0 : i32
    %c0_i32_1 = arith.constant 0 : i32
    return %c0_i32, %c0_i32_0 : i32, i32
  }
  func.func @transform_25(%arg0: i32) -> (i32, i32) {
    %c0_i32 = arith.constant 0 : i32
    %c0_i32_0 = arith.constant 0 : i32
    %c0_i32_1 = arith.constant 0 : i32
    return %c0_i32, %c0_i32_0 : i32, i32
  }
  func.func @transform_26(%arg0: i32) -> (i32, i32) {
    %c0_i32 = arith.constant 0 : i32
    %c0_i32_0 = arith.constant 0 : i32
    %c0_i32_1 = arith.constant 0 : i32
    return %c0_i32, %c0_i32_0 : i32, i32
  }
  func.func @transform_27(%arg0: i32) -> (i32, i32) {
    %c0_i32 = arith.constant 0 : i32
    %c0_i32_0 = arith.constant 0 : i32
    %c0_i32_1 = arith.constant 0 : i32
    return %c0_i32, %c0_i32_0 : i32, i32
  }
  func.func @transform_28(%arg0: i32) -> (i32, i32) {
    %c0_i32 = arith.constant 0 : i32
    %c0_i32_0 = arith.constant 0 : i32
    %c0_i32_1 = arith.constant 0 : i32
    return %c0_i32, %c0_i32_0 : i32, i32
  }
}

</mosaic_0001>

<llo_original>
// kernel: forward.1
$region0: #{forward.1}
  #allocation0 [shape = 'u32[]', space=smem, size = 0x4, offset = 0x4, fixed_abs, tag = 'smem constant byte address 0x4 - core index']
  #allocation1 [shape = 'u32[144,128]{1,0:T(1,128)}', space=vmem, size = 0x12000, scoped, tag = 'internal scratch']
  #allocation2 [shape = 'f32[1]{0:T(128)S(6)}', space=smem, size = 0x200, scoped, tag = 'scoped memory for forward.1']
  %s0 = inlined_call_operand.vmem [shape: f32[4,1024], index: 0, kind: input, shape index: {}]
  %s1 = inlined_call_operand.vmem [shape: f32[4,2048], index: 1, kind: input, shape index: {}]
  %s2 = inlined_call_operand.vmem [shape: f32[64,4], index: 2, kind: input, shape index: {}]
  %s3 = inlined_call_operand.vmem [shape: f32[4,64], index: 3, kind: input, shape index: {}]
  %s4 = inlined_call_operand.vmem [shape: f32[64,4], index: 4, kind: input, shape index: {}]
  %s5 = inlined_call_operand.vmem [shape: f32[4,64], index: 5, kind: input, shape index: {}]
  %s6 = inlined_call_operand.vmem [shape: f32[32,2], index: 6, kind: input, shape index: {}]
  %s7 = inlined_call_operand.vmem [shape: f32[2,32], index: 7, kind: input, shape index: {}]
  %s8 = inlined_call_operand.vmem [shape: f32[32,2], index: 8, kind: input, shape index: {}]
  %s9 = inlined_call_operand.vmem [shape: f32[2,32], index: 9, kind: input, shape index: {}]
  %s10 = inlined_call_operand.vmem [shape: f32[1024,128], index: 10, kind: input, shape index: {}]
  %s11 = inlined_call_operand.vmem [shape: f32[1,128], index: 11, kind: input, shape index: {}]
  %s12 = inlined_call_operand.vmem [shape: f32[1024,128], index: 12, kind: input, shape index: {}]
  %s13 = inlined_call_operand.vmem [shape: f32[1,128], index: 13, kind: input, shape index: {}]
  %s14 = inlined_call_operand.vmem [shape: f32[2048,128], index: 14, kind: input, shape index: {}]
  %s15 = inlined_call_operand.vmem [shape: f32[1,128], index: 15, kind: input, shape index: {}]
  %s16 = inlined_call_operand.vmem [shape: f32[2048,128], index: 16, kind: input, shape index: {}]
  %s17 = inlined_call_operand.vmem [shape: f32[1,128], index: 17, kind: input, shape index: {}]
  %s18 = inlined_call_operand.vmem [shape: f32[512,88], index: 18, kind: input, shape index: {}]
  %s19 = inlined_call_operand.vmem [shape: f32[1,88], index: 19, kind: input, shape index: {}]
  %s20 = inlined_call_operand.<no memory space> [shape: f32[1], index: 20, kind: input, shape index: {}]
  %s21 = inlined_call_operand.vmem [shape: f32[64,64], index: 21, kind: input, shape index: {}]
  %s22 = inlined_call_operand.vmem [shape: f32[1,64], index: 22, kind: input, shape index: {}]
  %s23 = inlined_call_operand.vmem [shape: f32[1,64], index: 23, kind: input, shape index: {}]
  %s24 = inlined_call_operand.vmem [shape: f32[1,64], index: 24, kind: input, shape index: {}]
  %s25 = inlined_call_operand.vmem [shape: f32[32,64], index: 25, kind: input, shape index: {}]
  %s26 = inlined_call_operand.vmem [shape: s32[4,1], index: 26, kind: input, shape index: {}]
  %s27 = inlined_call_operand.hbm [shape: f32[4,88], index: 27, kind: output, shape index: {0}]
  %s28 = inlined_call_operand.hbm [shape: f32[4,32], index: 28, kind: output, shape index: {1}]
  %29 = xla_tuple %s27, %s28
  %s30 = sld [smem:[#allocation0]]
  $region126: #{forward.1} parent=0
    _
  %s32 = ssub.s32 1, %s30
  %s33 = scalar_select 0, %s32, %s30
  %34 = sst [smem:[#allocation2]] %s20
  $region1: #{forward.1} parent=0
    #allocation3 [shape = 'u8[2048]{0}', space=vmem, size = 0x800, scoped, tag = 'output window, operand 0, single buffered']
    #allocation4 [shape = 's32[1]{0}', space=sflag, size = 0x4, scoped, tag = 'scoped memory for forward.1']
    #allocation5 [shape = 'u8[2048]{0}', space=vmem, size = 0x800, scoped, tag = 'output window, operand 1, single buffered']
    #allocation6 [shape = 's32[1]{0}', space=sflag, size = 0x4, scoped, tag = 'scoped memory for forward.1']
    %35 = vsyncpa [#allocation4], 0
    %36 = vsyncpa [#allocation6], 0
    // Predicated region
    $region2: #{forward.1} parent=1 // pred_check
      _
    $region3: #{forward.1} parent=1 // pred_check_branch
      %38 = sbr.rel (0) target = $region5
    $region4: #{forward.1} parent=1 // pred_region
      _
    $region5: #{forward.1} parent=1 // pred_fallthru
      _
    // Predicated region
    $region6: #{forward.1} parent=1 // pred_check
      _
    $region7: #{forward.1} parent=1 // pred_check_branch
      %40 = sbr.rel (0) target = $region9
    $region8: #{forward.1} parent=1 // pred_region
      _
    $region9: #{forward.1} parent=1 // pred_fallthru
      _
    // Predicated region
    $region10: #{forward.1} parent=1 // pred_check
      _
    $region11: #{forward.1} parent=1 // pred_check_branch
      %42 = sbr.rel (0) target = $region13
    $region12: #{forward.1} parent=1 // pred_region
      _
    $region13: #{forward.1} parent=1 // pred_fallthru
      _
    // Predicated region
    $region14: #{forward.1} parent=1 // pred_check
      _
    $region15: #{forward.1} parent=1 // pred_check_branch
      %44 = sbr.rel (0) target = $region17
    $region16: #{forward.1} parent=1 // pred_region
      _
    $region17: #{forward.1} parent=1 // pred_fallthru
      _
    // Predicated region
    $region18: #{forward.1} parent=1 // pred_check
      _
    $region19: #{forward.1} parent=1 // pred_check_branch
      %46 = sbr.rel (0) target = $region21
    $region20: #{forward.1} parent=1 // pred_region
      _
    $region21: #{forward.1} parent=1 // pred_fallthru
      _
    // Predicated region
    $region22: #{forward.1} parent=1 // pred_check
      _
    $region23: #{forward.1} parent=1 // pred_check_branch
      %48 = sbr.rel (0) target = $region25
    $region24: #{forward.1} parent=1 // pred_region
      _
    $region25: #{forward.1} parent=1 // pred_fallthru
      _
    // Predicated region
    $region26: #{forward.1} parent=1 // pred_check
      _
    $region27: #{forward.1} parent=1 // pred_check_branch
      %50 = sbr.rel (0) target = $region29
    $region28: #{forward.1} parent=1 // pred_region
      _
    $region29: #{forward.1} parent=1 // pred_fallthru
      _
    // Predicated region
    $region30: #{forward.1} parent=1 // pred_check
      _
    $region31: #{forward.1} parent=1 // pred_check_branch
      %52 = sbr.rel (0) target = $region33
    $region32: #{forward.1} parent=1 // pred_region
      _
    $region33: #{forward.1} parent=1 // pred_fallthru
      _
    // Predicated region
    $region34: #{forward.1} parent=1 // pred_check
      _
    $region35: #{forward.1} parent=1 // pred_check_branch
      %54 = sbr.rel (0) target = $region37
    $region36: #{forward.1} parent=1 // pred_region
      _
    $region37: #{forward.1} parent=1 // pred_fallthru
      _
    // Predicated region
    $region38: #{forward.1} parent=1 // pred_check
      _
    $region39: #{forward.1} parent=1 // pred_check_branch
      %56 = sbr.rel (0) target = $region41
    $region40: #{forward.1} parent=1 // pred_region
      _
    $region41: #{forward.1} parent=1 // pred_fallthru
      _
    // Predicated region
    $region42: #{forward.1} parent=1 // pred_check
      _
    $region43: #{forward.1} parent=1 // pred_check_branch
      %58 = sbr.rel (0) target = $region45
    $region44: #{forward.1} parent=1 // pred_region
      _
    $region45: #{forward.1} parent=1 // pred_fallthru
      _
    // Predicated region
    $region46: #{forward.1} parent=1 // pred_check
      _
    $region47: #{forward.1} parent=1 // pred_check_branch
      %60 = sbr.rel (0) target = $region49
    $region48: #{forward.1} parent=1 // pred_region
      _
    $region49: #{forward.1} parent=1 // pred_fallthru
      _
    // Predicated region
    $region50: #{forward.1} parent=1 // pred_check
      _
    $region51: #{forward.1} parent=1 // pred_check_branch
      %62 = sbr.rel (0) target = $region53
    $region52: #{forward.1} parent=1 // pred_region
      _
    $region53: #{forward.1} parent=1 // pred_fallthru
      _
    // Predicated region
    $region54: #{forward.1} parent=1 // pred_check
      _
    $region55: #{forward.1} parent=1 // pred_check_branch
      %64 = sbr.rel (0) target = $region57
    $region56: #{forward.1} parent=1 // pred_region
      _
    $region57: #{forward.1} parent=1 // pred_fallthru
      _
    // Predicated region
    $region58: #{forward.1} parent=1 // pred_check
      _
    $region59: #{forward.1} parent=1 // pred_check_branch
      %66 = sbr.rel (0) target = $region61
    $region60: #{forward.1} parent=1 // pred_region
      _
    $region61: #{forward.1} parent=1 // pred_fallthru
      _
    // Predicated region
    $region62: #{forward.1} parent=1 // pred_check
      _
    $region63: #{forward.1} parent=1 // pred_check_branch
      %68 = sbr.rel (0) target = $region65
    $region64: #{forward.1} parent=1 // pred_region
      _
    $region65: #{forward.1} parent=1 // pred_fallthru
      _
    // Predicated region
    $region66: #{forward.1} parent=1 // pred_check
      _
    $region67: #{forward.1} parent=1 // pred_check_branch
      %70 = sbr.rel (0) target = $region69
    $region68: #{forward.1} parent=1 // pred_region
      _
    $region69: #{forward.1} parent=1 // pred_fallthru
      _
    // Predicated region
    $region70: #{forward.1} parent=1 // pred_check
      _
    $region71: #{forward.1} parent=1 // pred_check_branch
      %72 = sbr.rel (0) target = $region73
    $region72: #{forward.1} parent=1 // pred_region
      _
    $region73: #{forward.1} parent=1 // pred_fallthru
      _
    // Predicated region
    $region74: #{forward.1} parent=1 // pred_check
      _
    $region75: #{forward.1} parent=1 // pred_check_branch
      %74 = sbr.rel (0) target = $region77
    $region76: #{forward.1} parent=1 // pred_region
      _
    $region77: #{forward.1} parent=1 // pred_fallthru
      _
    // Predicated region
    $region78: #{forward.1} parent=1 // pred_check
      _
    $region79: #{forward.1} parent=1 // pred_check_branch
      %76 = sbr.rel (0) target = $region81
    $region80: #{forward.1} parent=1 // pred_region
      _
    $region81: #{forward.1} parent=1 // pred_fallthru
      _
    // Predicated region
    $region82: #{forward.1} parent=1 // pred_check
      _
    $region83: #{forward.1} parent=1 // pred_check_branch
      %78 = sbr.rel (0) target = $region85
    $region84: #{forward.1} parent=1 // pred_region
      _
    $region85: #{forward.1} parent=1 // pred_fallthru
      _
    // Predicated region
    $region86: #{forward.1} parent=1 // pred_check
      _
    $region87: #{forward.1} parent=1 // pred_check_branch
      %80 = sbr.rel (0) target = $region89
    $region88: #{forward.1} parent=1 // pred_region
      _
    $region89: #{forward.1} parent=1 // pred_fallthru
      _
    // Predicated region
    $region90: #{forward.1} parent=1 // pred_check
      _
    $region91: #{forward.1} parent=1 // pred_check_branch
      %82 = sbr.rel (0) target = $region93
    $region92: #{forward.1} parent=1 // pred_region
      _
    $region93: #{forward.1} parent=1 // pred_fallthru
      _
    // Predicated region
    $region94: #{forward.1} parent=1 // pred_check
      _
    $region95: #{forward.1} parent=1 // pred_check_branch
      %84 = sbr.rel (0) target = $region97
    $region96: #{forward.1} parent=1 // pred_region
      _
    $region97: #{forward.1} parent=1 // pred_fallthru
      _
    // Predicated region
    $region98: #{forward.1} parent=1 // pred_check
      _
    $region99: #{forward.1} parent=1 // pred_check_branch
      %86 = sbr.rel (0) target = $region101
    $region100: #{forward.1} parent=1 // pred_region
      _
    $region101: #{forward.1} parent=1 // pred_fallthru
      _
    // Predicated region
    $region102: #{forward.1} parent=1 // pred_check
      _
    $region103: #{forward.1} parent=1 // pred_check_branch
      %88 = sbr.rel (0) target = $region105
    $region104: #{forward.1} parent=1 // pred_region
      _
    $region105: #{forward.1} parent=1 // pred_fallthru
      _
    // Predicated region
    $region106: #{forward.1} parent=1 // pred_check
      _
    $region107: #{forward.1} parent=1 // pred_check_branch
      %90 = sbr.rel (0) target = $region109
    $region108: #{forward.1} parent=1 // pred_region
      _
    $region109: #{forward.1} parent=1 // pred_fallthru
      _
    %v91 = vld [vmem:[%s0] sm:$0xff]
    %v92 = vld [vmem:[%s0 + $0x8] sm:$0xff]
    %v93 = vld [vmem:[%s0 + $0x10] sm:$0xff]
    %v94 = vld [vmem:[%s0 + $0x18] sm:$0xff]
    %v95 = vld [vmem:[%s1] sm:$0xff]
    %v96 = vld [vmem:[%s1 + $0x8] sm:$0xff]
    %v97 = vld [vmem:[%s1 + $0x10] sm:$0xff]
    %v98 = vld [vmem:[%s1 + $0x18] sm:$0xff]
    %v99 = vld [vmem:[%s1 + $0x20] sm:$0xff]
    %v100 = vld [vmem:[%s1 + $0x28] sm:$0xff]
    %v101 = vld [vmem:[%s1 + $0x30] sm:$0xff]
    %v102 = vld [vmem:[%s1 + $0x38] sm:$0xff]
    %v103 = vlaneseq
    %v104 = vand.u32 %v103, 127
    %v105 = vadd.s32 %v104, 128
    %v106 = vadd.s32 %v104, 256
    %v107 = vadd.s32 %v104, 384
    %v108 = vadd.s32 %v104, 512
    %v109 = vadd.s32 %v104, 640
    %v110 = vadd.s32 %v104, 768
    %v111 = vadd.s32 %v104, 896
    %v112 = vlaneseq
    %v113 = vshrl.u32 %v112, 7
    %v114 = vadd.s32 %v113, 8
    %v115 = vadd.s32 %v113, 16
    %v116 = vadd.s32 %v113, 24
    %v117 = vadd.s32 %v113, 32
    %v118 = vadd.s32 %v113, 40
    %v119 = vadd.s32 %v113, 48
    %v120 = vadd.s32 %v113, 56
    %v121 = vmul.u32 %v113, 16
    %v122 = vmul.u32 %v114, 16
    %v123 = vmul.u32 %v115, 16
    %v124 = vmul.u32 %v116, 16
    %v125 = vmul.u32 %v117, 16
    %v126 = vmul.u32 %v118, 16
    %v127 = vmul.u32 %v119, 16
    %v128 = vmul.u32 %v120, 16
    %vm129 = vcmp.ge.s32.totalorder %v104, %v121
    %vm130 = vcmp.ge.s32.totalorder %v105, %v121
    %vm131 = vcmp.ge.s32.totalorder %v106, %v121
    %vm132 = vcmp.ge.s32.totalorder %v107, %v121
    %vm133 = vcmp.ge.s32.totalorder %v108, %v121
    %vm134 = vcmp.ge.s32.totalorder %v109, %v121
    %vm135 = vcmp.ge.s32.totalorder %v110, %v121
    %vm136 = vcmp.ge.s32.totalorder %v111, %v121
    %vm137 = vcmp.ge.s32.totalorder %v104, %v122
    %vm138 = vcmp.ge.s32.totalorder %v105, %v122
    %vm139 = vcmp.ge.s32.totalorder %v106, %v122
    %vm140 = vcmp.ge.s32.totalorder %v107, %v122
    %vm141 = vcmp.ge.s32.totalorder %v108, %v122
    %vm142 = vcmp.ge.s32.totalorder %v109, %v122
    %vm143 = vcmp.ge.s32.totalorder %v110, %v122
    %vm144 = vcmp.ge.s32.totalorder %v111, %v122
    %vm145 = vcmp.ge.s32.totalorder %v104, %v123
    %vm146 = vcmp.ge.s32.totalorder %v105, %v123
    %vm147 = vcmp.ge.s32.totalorder %v106, %v123
    %vm148 = vcmp.ge.s32.totalorder %v107, %v123
    %vm149 = vcmp.ge.s32.totalorder %v108, %v123
    %vm150 = vcmp.ge.s32.totalorder %v109, %v123
    %vm151 = vcmp.ge.s32.totalorder %v110, %v123
    %vm152 = vcmp.ge.s32.totalorder %v111, %v123
    %vm153 = vcmp.ge.s32.totalorder %v104, %v124
    %vm154 = vcmp.ge.s32.totalorder %v105, %v124
    %vm155 = vcmp.ge.s32.totalorder %v106, %v124
    %vm156 = vcmp.ge.s32.totalorder %v107, %v124
    %vm157 = vcmp.ge.s32.totalorder %v108, %v124
    %vm158 = vcmp.ge.s32.totalorder %v109, %v124
    %vm159 = vcmp.ge.s32.totalorder %v110, %v124
    %vm160 = vcmp.ge.s32.totalorder %v111, %v124
    %vm161 = vcmp.ge.s32.totalorder %v104, %v125
    %vm162 = vcmp.ge.s32.totalorder %v105, %v125
    %vm163 = vcmp.ge.s32.totalorder %v106, %v125
    %vm164 = vcmp.ge.s32.totalorder %v107, %v125
    %vm165 = vcmp.ge.s32.totalorder %v108, %v125
    %vm166 = vcmp.ge.s32.totalorder %v109, %v125
    %vm167 = vcmp.ge.s32.totalorder %v110, %v125
    %vm168 = vcmp.ge.s32.totalorder %v111, %v125
    %vm169 = vcmp.ge.s32.totalorder %v104, %v126
    %vm170 = vcmp.ge.s32.totalorder %v105, %v126
    %vm171 = vcmp.ge.s32.totalorder %v106, %v126
    %vm172 = vcmp.ge.s32.totalorder %v107, %v126
    %vm173 = vcmp.ge.s32.totalorder %v108, %v126
    %vm174 = vcmp.ge.s32.totalorder %v109, %v126
    %vm175 = vcmp.ge.s32.totalorder %v110, %v126
    %vm176 = vcmp.ge.s32.totalorder %v111, %v126
    %vm177 = vcmp.ge.s32.totalorder %v104, %v127
    %vm178 = vcmp.ge.s32.totalorder %v105, %v127
    %vm179 = vcmp.ge.s32.totalorder %v106, %v127
    %vm180 = vcmp.ge.s32.totalorder %v107, %v127
    %vm181 = vcmp.ge.s32.totalorder %v108, %v127
    %vm182 = vcmp.ge.s32.totalorder %v109, %v127
    %vm183 = vcmp.ge.s32.totalorder %v110, %v127
    %vm184 = vcmp.ge.s32.totalorder %v111, %v127
    %vm185 = vcmp.ge.s32.totalorder %v104, %v128
    %vm186 = vcmp.ge.s32.totalorder %v105, %v128
    %vm187 = vcmp.ge.s32.totalorder %v106, %v128
    %vm188 = vcmp.ge.s32.totalorder %v107, %v128
    %vm189 = vcmp.ge.s32.totalorder %v108, %v128
    %vm190 = vcmp.ge.s32.totalorder %v109, %v128
    %vm191 = vcmp.ge.s32.totalorder %v110, %v128
    %vm192 = vcmp.ge.s32.totalorder %v111, %v128
    %v193 = vadd.s32 %v121, 16
    %v194 = vadd.s32 %v122, 16
    %v195 = vadd.s32 %v123, 16
    %v196 = vadd.s32 %v124, 16
    %v197 = vadd.s32 %v125, 16
    %v198 = vadd.s32 %v126, 16
    %v199 = vadd.s32 %v127, 16
    %v200 = vadd.s32 %v128, 16
    %vm201 = vcmp.lt.s32.totalorder %v104, %v193
    %vm202 = vcmp.lt.s32.totalorder %v105, %v193
    %vm203 = vcmp.lt.s32.totalorder %v106, %v193
    %vm204 = vcmp.lt.s32.totalorder %v107, %v193
    %vm205 = vcmp.lt.s32.totalorder %v108, %v193
    %vm206 = vcmp.lt.s32.totalorder %v109, %v193
    %vm207 = vcmp.lt.s32.totalorder %v110, %v193
    %vm208 = vcmp.lt.s32.totalorder %v111, %v193
    %vm209 = vcmp.lt.s32.totalorder %v104, %v194
    %vm210 = vcmp.lt.s32.totalorder %v105, %v194
    %vm211 = vcmp.lt.s32.totalorder %v106, %v194
    %vm212 = vcmp.lt.s32.totalorder %v107, %v194
    %vm213 = vcmp.lt.s32.totalorder %v108, %v194
    %vm214 = vcmp.lt.s32.totalorder %v109, %v194
    %vm215 = vcmp.lt.s32.totalorder %v110, %v194
    %vm216 = vcmp.lt.s32.totalorder %v111, %v194
    %vm217 = vcmp.lt.s32.totalorder %v104, %v195
    %vm218 = vcmp.lt.s32.totalorder %v105, %v195
    %vm219 = vcmp.lt.s32.totalorder %v106, %v195
    %vm220 = vcmp.lt.s32.totalorder %v107, %v195
    %vm221 = vcmp.lt.s32.totalorder %v108, %v195
    %vm222 = vcmp.lt.s32.totalorder %v109, %v195
    %vm223 = vcmp.lt.s32.totalorder %v110, %v195
    %vm224 = vcmp.lt.s32.totalorder %v111, %v195
    %vm225 = vcmp.lt.s32.totalorder %v104, %v196
    %vm226 = vcmp.lt.s32.totalorder %v105, %v196
    %vm227 = vcmp.lt.s32.totalorder %v106, %v196
    %vm228 = vcmp.lt.s32.totalorder %v107, %v196
    %vm229 = vcmp.lt.s32.totalorder %v108, %v196
    %vm230 = vcmp.lt.s32.totalorder %v109, %v196
    %vm231 = vcmp.lt.s32.totalorder %v110, %v196
    %vm232 = vcmp.lt.s32.totalorder %v111, %v196
    %vm233 = vcmp.lt.s32.totalorder %v104, %v197
    %vm234 = vcmp.lt.s32.totalorder %v105, %v197
    %vm235 = vcmp.lt.s32.totalorder %v106, %v197
    %vm236 = vcmp.lt.s32.totalorder %v107, %v197
    %vm237 = vcmp.lt.s32.totalorder %v108, %v197
    %vm238 = vcmp.lt.s32.totalorder %v109, %v197
    %vm239 = vcmp.lt.s32.totalorder %v110, %v197
    %vm240 = vcmp.lt.s32.totalorder %v111, %v197
    %vm241 = vcmp.lt.s32.totalorder %v104, %v198
    %vm242 = vcmp.lt.s32.totalorder %v105, %v198
    %vm243 = vcmp.lt.s32.totalorder %v106, %v198
    %vm244 = vcmp.lt.s32.totalorder %v107, %v198
    %vm245 = vcmp.lt.s32.totalorder %v108, %v198
    %vm246 = vcmp.lt.s32.totalorder %v109, %v198
    %vm247 = vcmp.lt.s32.totalorder %v110, %v198
    %vm248 = vcmp.lt.s32.totalorder %v111, %v198
    %vm249 = vcmp.lt.s32.totalorder %v104, %v199
    %vm250 = vcmp.lt.s32.totalorder %v105, %v199
    %vm251 = vcmp.lt.s32.totalorder %v106, %v199
    %vm252 = vcmp.lt.s32.totalorder %v107, %v199
    %vm253 = vcmp.lt.s32.totalorder %v108, %v199
    %vm254 = vcmp.lt.s32.totalorder %v109, %v199
    %vm255 = vcmp.lt.s32.totalorder %v110, %v199
    %vm256 = vcmp.lt.s32.totalorder %v111, %v199
    %vm257 = vcmp.lt.s32.totalorder %v104, %v200
    %vm258 = vcmp.lt.s32.totalorder %v105, %v200
    %vm259 = vcmp.lt.s32.totalorder %v106, %v200
    %vm260 = vcmp.lt.s32.totalorder %v107, %v200
    %vm261 = vcmp.lt.s32.totalorder %v108, %v200
    %vm262 = vcmp.lt.s32.totalorder %v109, %v200
    %vm263 = vcmp.lt.s32.totalorder %v110, %v200
    %vm264 = vcmp.lt.s32.totalorder %v111, %v200
    %vm265 = vmand %vm129, %vm201
    %vm266 = vmand %vm130, %vm202
    %vm267 = vmand %vm131, %vm203
    %vm268 = vmand %vm132, %vm204
    %vm269 = vmand %vm133, %vm205
    %vm270 = vmand %vm134, %vm206
    %vm271 = vmand %vm135, %vm207
    %vm272 = vmand %vm136, %vm208
    %vm273 = vmand %vm137, %vm209
    %vm274 = vmand %vm138, %vm210
    %vm275 = vmand %vm139, %vm211
    %vm276 = vmand %vm140, %vm212
    %vm277 = vmand %vm141, %vm213
    %vm278 = vmand %vm142, %vm214
    %vm279 = vmand %vm143, %vm215
    %vm280 = vmand %vm144, %vm216
    %vm281 = vmand %vm145, %vm217
    %vm282 = vmand %vm146, %vm218
    %vm283 = vmand %vm147, %vm219
    %vm284 = vmand %vm148, %vm220
    %vm285 = vmand %vm149, %vm221
    %vm286 = vmand %vm150, %vm222
    %vm287 = vmand %vm151, %vm223
    %vm288 = vmand %vm152, %vm224
    %vm289 = vmand %vm153, %vm225
    %vm290 = vmand %vm154, %vm226
    %vm291 = vmand %vm155, %vm227
    %vm292 = vmand %vm156, %vm228
    %vm293 = vmand %vm157, %vm229
    %vm294 = vmand %vm158, %vm230
    %vm295 = vmand %vm159, %vm231
    %vm296 = vmand %vm160, %vm232
    %vm297 = vmand %vm161, %vm233
    %vm298 = vmand %vm162, %vm234
    %vm299 = vmand %vm163, %vm235
    %vm300 = vmand %vm164, %vm236
    %vm301 = vmand %vm165, %vm237
    %vm302 = vmand %vm166, %vm238
    %vm303 = vmand %vm167, %vm239
    %vm304 = vmand %vm168, %vm240
    %vm305 = vmand %vm169, %vm241
    %vm306 = vmand %vm170, %vm242
    %vm307 = vmand %vm171, %vm243
    %vm308 = vmand %vm172, %vm244
    %vm309 = vmand %vm173, %vm245
    %vm310 = vmand %vm174, %vm246
    %vm311 = vmand %vm175, %vm247
    %vm312 = vmand %vm176, %vm248
    %vm313 = vmand %vm177, %vm249
    %vm314 = vmand %vm178, %vm250
    %vm315 = vmand %vm179, %vm251
    %vm316 = vmand %vm180, %vm252
    %vm317 = vmand %vm181, %vm253
    %vm318 = vmand %vm182, %vm254
    %vm319 = vmand %vm183, %vm255
    %vm320 = vmand %vm184, %vm256
    %vm321 = vmand %vm185, %vm257
    %vm322 = vmand %vm186, %vm258
    %vm323 = vmand %vm187, %vm259
    %vm324 = vmand %vm188, %vm260
    %vm325 = vmand %vm189, %vm261
    %vm326 = vmand %vm190, %vm262
    %vm327 = vmand %vm191, %vm263
    %vm328 = vmand %vm192, %vm264
    %v329 = vsel %vm265, 1, 0
    %v330 = vsel %vm266, 1, 0
    %v331 = vsel %vm267, 1, 0
    %v332 = vsel %vm268, 1, 0
    %v333 = vsel %vm269, 1, 0
    %v334 = vsel %vm270, 1, 0
    %v335 = vsel %vm271, 1, 0
    %v336 = vsel %vm272, 1, 0
    %v337 = vsel %vm273, 1, 0
    %v338 = vsel %vm274, 1, 0
    %v339 = vsel %vm275, 1, 0
    %v340 = vsel %vm276, 1, 0
    %v341 = vsel %vm277, 1, 0
    %v342 = vsel %vm278, 1, 0
    %v343 = vsel %vm279, 1, 0
    %v344 = vsel %vm280, 1, 0
    %v345 = vsel %vm281, 1, 0
    %v346 = vsel %vm282, 1, 0
    %v347 = vsel %vm283, 1, 0
    %v348 = vsel %vm284, 1, 0
    %v349 = vsel %vm285, 1, 0
    %v350 = vsel %vm286, 1, 0
    %v351 = vsel %vm287, 1, 0
    %v352 = vsel %vm288, 1, 0
    %v353 = vsel %vm289, 1, 0
    %v354 = vsel %vm290, 1, 0
    %v355 = vsel %vm291, 1, 0
    %v356 = vsel %vm292, 1, 0
    %v357 = vsel %vm293, 1, 0
    %v358 = vsel %vm294, 1, 0
    %v359 = vsel %vm295, 1, 0
    %v360 = vsel %vm296, 1, 0
    %v361 = vsel %vm297, 1, 0
    %v362 = vsel %vm298, 1, 0
    %v363 = vsel %vm299, 1, 0
    %v364 = vsel %vm300, 1, 0
    %v365 = vsel %vm301, 1, 0
    %v366 = vsel %vm302, 1, 0
    %v367 = vsel %vm303, 1, 0
    %v368 = vsel %vm304, 1, 0
    %v369 = vsel %vm305, 1, 0
    %v370 = vsel %vm306, 1, 0
    %v371 = vsel %vm307, 1, 0
    %v372 = vsel %vm308, 1, 0
    %v373 = vsel %vm309, 1, 0
    %v374 = vsel %vm310, 1, 0
    %v375 = vsel %vm311, 1, 0
    %v376 = vsel %vm312, 1, 0
    %v377 = vsel %vm313, 1, 0
    %v378 = vsel %vm314, 1, 0
    %v379 = vsel %vm315, 1, 0
    %v380 = vsel %vm316, 1, 0
    %v381 = vsel %vm317, 1, 0
    %v382 = vsel %vm318, 1, 0
    %v383 = vsel %vm319, 1, 0
    %v384 = vsel %vm320, 1, 0
    %v385 = vsel %vm321, 1, 0
    %v386 = vsel %vm322, 1, 0
    %v387 = vsel %vm323, 1, 0
    %v388 = vsel %vm324, 1, 0
    %v389 = vsel %vm325, 1, 0
    %v390 = vsel %vm326, 1, 0
    %v391 = vsel %vm327, 1, 0
    %v392 = vsel %vm328, 1, 0
    %v393 = vcvt.s32.f32 %v329
    %v394 = vcvt.s32.f32 %v330
    %v395 = vcvt.s32.f32 %v331
    %v396 = vcvt.s32.f32 %v332
    %v397 = vcvt.s32.f32 %v333
    %v398 = vcvt.s32.f32 %v334
    %v399 = vcvt.s32.f32 %v335
    %v400 = vcvt.s32.f32 %v336
    %v401 = vcvt.s32.f32 %v337
    %v402 = vcvt.s32.f32 %v338
    %v403 = vcvt.s32.f32 %v339
    %v404 = vcvt.s32.f32 %v340
    %v405 = vcvt.s32.f32 %v341
    %v406 = vcvt.s32.f32 %v342
    %v407 = vcvt.s32.f32 %v343
    %v408 = vcvt.s32.f32 %v344
    %v409 = vcvt.s32.f32 %v345
    %v410 = vcvt.s32.f32 %v346
    %v411 = vcvt.s32.f32 %v347
    %v412 = vcvt.s32.f32 %v348
    %v413 = vcvt.s32.f32 %v349
    %v414 = vcvt.s32.f32 %v350
    %v415 = vcvt.s32.f32 %v351
    %v416 = vcvt.s32.f32 %v352
    %v417 = vcvt.s32.f32 %v353
    %v418 = vcvt.s32.f32 %v354
    %v419 = vcvt.s32.f32 %v355
    %v420 = vcvt.s32.f32 %v356
    %v421 = vcvt.s32.f32 %v357
    %v422 = vcvt.s32.f32 %v358
    %v423 = vcvt.s32.f32 %v359
    %v424 = vcvt.s32.f32 %v360
    %v425 = vcvt.s32.f32 %v361
    %v426 = vcvt.s32.f32 %v362
    %v427 = vcvt.s32.f32 %v363
    %v428 = vcvt.s32.f32 %v364
    %v429 = vcvt.s32.f32 %v365
    %v430 = vcvt.s32.f32 %v366
    %v431 = vcvt.s32.f32 %v367
    %v432 = vcvt.s32.f32 %v368
    %v433 = vcvt.s32.f32 %v369
    %v434 = vcvt.s32.f32 %v370
    %v435 = vcvt.s32.f32 %v371
    %v436 = vcvt.s32.f32 %v372
    %v437 = vcvt.s32.f32 %v373
    %v438 = vcvt.s32.f32 %v374
    %v439 = vcvt.s32.f32 %v375
    %v440 = vcvt.s32.f32 %v376
    %v441 = vcvt.s32.f32 %v377
    %v442 = vcvt.s32.f32 %v378
    %v443 = vcvt.s32.f32 %v379
    %v444 = vcvt.s32.f32 %v380
    %v445 = vcvt.s32.f32 %v381
    %v446 = vcvt.s32.f32 %v382
    %v447 = vcvt.s32.f32 %v383
    %v448 = vcvt.s32.f32 %v384
    %v449 = vcvt.s32.f32 %v385
    %v450 = vcvt.s32.f32 %v386
    %v451 = vcvt.s32.f32 %v387
    %v452 = vcvt.s32.f32 %v388
    %v453 = vcvt.s32.f32 %v389
    %v454 = vcvt.s32.f32 %v390
    %v455 = vcvt.s32.f32 %v391
    %v456 = vcvt.s32.f32 %v392
    %v457 = vadd.s32 %v104, 1024
    %v458 = vadd.s32 %v104, 1152
    %v459 = vadd.s32 %v104, 1280
    %v460 = vadd.s32 %v104, 1408
    %v461 = vadd.s32 %v104, 1536
    %v462 = vadd.s32 %v104, 1664
    %v463 = vadd.s32 %v104, 1792
    %v464 = vadd.s32 %v104, 1920
    %v465 = vmul.u32 %v113, 64
    %v466 = vmul.u32 %v114, 64
    %v467 = vmul.u32 %v115, 64
    %v468 = vmul.u32 %v116, 64
    %vm469 = vcmp.ge.s32.totalorder %v104, %v465
    %vm470 = vcmp.ge.s32.totalorder %v105, %v465
    %vm471 = vcmp.ge.s32.totalorder %v106, %v465
    %vm472 = vcmp.ge.s32.totalorder %v107, %v465
    %vm473 = vcmp.ge.s32.totalorder %v108, %v465
    %vm474 = vcmp.ge.s32.totalorder %v109, %v465
    %vm475 = vcmp.ge.s32.totalorder %v110, %v465
    %vm476 = vcmp.ge.s32.totalorder %v111, %v465
    %vm477 = vcmp.ge.s32.totalorder %v457, %v465
    %vm478 = vcmp.ge.s32.totalorder %v458, %v465
    %vm479 = vcmp.ge.s32.totalorder %v459, %v465
    %vm480 = vcmp.ge.s32.totalorder %v460, %v465
    %vm481 = vcmp.ge.s32.totalorder %v461, %v465
    %vm482 = vcmp.ge.s32.totalorder %v462, %v465
    %vm483 = vcmp.ge.s32.totalorder %v463, %v465
    %vm484 = vcmp.ge.s32.totalorder %v464, %v465
    %vm485 = vcmp.ge.s32.totalorder %v104, %v466
    %vm486 = vcmp.ge.s32.totalorder %v105, %v466
    %vm487 = vcmp.ge.s32.totalorder %v106, %v466
    %vm488 = vcmp.ge.s32.totalorder %v107, %v466
    %vm489 = vcmp.ge.s32.totalorder %v108, %v466
    %vm490 = vcmp.ge.s32.totalorder %v109, %v466
    %vm491 = vcmp.ge.s32.totalorder %v110, %v466
    %vm492 = vcmp.ge.s32.totalorder %v111, %v466
    %vm493 = vcmp.ge.s32.totalorder %v457, %v466
    %vm494 = vcmp.ge.s32.totalorder %v458, %v466
    %vm495 = vcmp.ge.s32.totalorder %v459, %v466
    %vm496 = vcmp.ge.s32.totalorder %v460, %v466
    %vm497 = vcmp.ge.s32.totalorder %v461, %v466
    %vm498 = vcmp.ge.s32.totalorder %v462, %v466
    %vm499 = vcmp.ge.s32.totalorder %v463, %v466
    %vm500 = vcmp.ge.s32.totalorder %v464, %v466
    %vm501 = vcmp.ge.s32.totalorder %v104, %v467
    %vm502 = vcmp.ge.s32.totalorder %v105, %v467
    %vm503 = vcmp.ge.s32.totalorder %v106, %v467
    %vm504 = vcmp.ge.s32.totalorder %v107, %v467
    %vm505 = vcmp.ge.s32.totalorder %v108, %v467
    %vm506 = vcmp.ge.s32.totalorder %v109, %v467
    %vm507 = vcmp.ge.s32.totalorder %v110, %v467
    %vm508 = vcmp.ge.s32.totalorder %v111, %v467
    %vm509 = vcmp.ge.s32.totalorder %v457, %v467
    %vm510 = vcmp.ge.s32.totalorder %v458, %v467
    %vm511 = vcmp.ge.s32.totalorder %v459, %v467
    %vm512 = vcmp.ge.s32.totalorder %v460, %v467
    %vm513 = vcmp.ge.s32.totalorder %v461, %v467
    %vm514 = vcmp.ge.s32.totalorder %v462, %v467
    %vm515 = vcmp.ge.s32.totalorder %v463, %v467
    %vm516 = vcmp.ge.s32.totalorder %v464, %v467
    %vm517 = vcmp.ge.s32.totalorder %v104, %v468
    %vm518 = vcmp.ge.s32.totalorder %v105, %v468
    %vm519 = vcmp.ge.s32.totalorder %v106, %v468
    %vm520 = vcmp.ge.s32.totalorder %v107, %v468
    %vm521 = vcmp.ge.s32.totalorder %v108, %v468
    %vm522 = vcmp.ge.s32.totalorder %v109, %v468
    %vm523 = vcmp.ge.s32.totalorder %v110, %v468
    %vm524 = vcmp.ge.s32.totalorder %v111, %v468
    %vm525 = vcmp.ge.s32.totalorder %v457, %v468
    %vm526 = vcmp.ge.s32.totalorder %v458, %v468
    %vm527 = vcmp.ge.s32.totalorder %v459, %v468
    %vm528 = vcmp.ge.s32.totalorder %v460, %v468
    %vm529 = vcmp.ge.s32.totalorder %v461, %v468
    %vm530 = vcmp.ge.s32.totalorder %v462, %v468
    %vm531 = vcmp.ge.s32.totalorder %v463, %v468
    %vm532 = vcmp.ge.s32.totalorder %v464, %v468
    %v533 = vadd.s32 %v465, 64
    %v534 = vadd.s32 %v466, 64
    %v535 = vadd.s32 %v467, 64
    %v536 = vadd.s32 %v468, 64
    %vm537 = vcmp.lt.s32.totalorder %v104, %v533
    %vm538 = vcmp.lt.s32.totalorder %v105, %v533
    %vm539 = vcmp.lt.s32.totalorder %v106, %v533
    %vm540 = vcmp.lt.s32.totalorder %v107, %v533
    %vm541 = vcmp.lt.s32.totalorder %v108, %v533
    %vm542 = vcmp.lt.s32.totalorder %v109, %v533
    %vm543 = vcmp.lt.s32.totalorder %v110, %v533
    %vm544 = vcmp.lt.s32.totalorder %v111, %v533
    %vm545 = vcmp.lt.s32.totalorder %v457, %v533
    %vm546 = vcmp.lt.s32.totalorder %v458, %v533
    %vm547 = vcmp.lt.s32.totalorder %v459, %v533
    %vm548 = vcmp.lt.s32.totalorder %v460, %v533
    %vm549 = vcmp.lt.s32.totalorder %v461, %v533
    %vm550 = vcmp.lt.s32.totalorder %v462, %v533
    %vm551 = vcmp.lt.s32.totalorder %v463, %v533
    %vm552 = vcmp.lt.s32.totalorder %v464, %v533
    %vm553 = vcmp.lt.s32.totalorder %v104, %v534
    %vm554 = vcmp.lt.s32.totalorder %v105, %v534
    %vm555 = vcmp.lt.s32.totalorder %v106, %v534
    %vm556 = vcmp.lt.s32.totalorder %v107, %v534
    %vm557 = vcmp.lt.s32.totalorder %v108, %v534
    %vm558 = vcmp.lt.s32.totalorder %v109, %v534
    %vm559 = vcmp.lt.s32.totalorder %v110, %v534
    %vm560 = vcmp.lt.s32.totalorder %v111, %v534
    %vm561 = vcmp.lt.s32.totalorder %v457, %v534
    %vm562 = vcmp.lt.s32.totalorder %v458, %v534
    %vm563 = vcmp.lt.s32.totalorder %v459, %v534
    %vm564 = vcmp.lt.s32.totalorder %v460, %v534
    %vm565 = vcmp.lt.s32.totalorder %v461, %v534
    %vm566 = vcmp.lt.s32.totalorder %v462, %v534
    %vm567 = vcmp.lt.s32.totalorder %v463, %v534
    %vm568 = vcmp.lt.s32.totalorder %v464, %v534
    %vm569 = vcmp.lt.s32.totalorder %v104, %v535
    %vm570 = vcmp.lt.s32.totalorder %v105, %v535
    %vm571 = vcmp.lt.s32.totalorder %v106, %v535
    %vm572 = vcmp.lt.s32.totalorder %v107, %v535
    %vm573 = vcmp.lt.s32.totalorder %v108, %v535
    %vm574 = vcmp.lt.s32.totalorder %v109, %v535
    %vm575 = vcmp.lt.s32.totalorder %v110, %v535
    %vm576 = vcmp.lt.s32.totalorder %v111, %v535
    %vm577 = vcmp.lt.s32.totalorder %v457, %v535
    %vm578 = vcmp.lt.s32.totalorder %v458, %v535
    %vm579 = vcmp.lt.s32.totalorder %v459, %v535
    %vm580 = vcmp.lt.s32.totalorder %v460, %v535
    %vm581 = vcmp.lt.s32.totalorder %v461, %v535
    %vm582 = vcmp.lt.s32.totalorder %v462, %v535
    %vm583 = vcmp.lt.s32.totalorder %v463, %v535
    %vm584 = vcmp.lt.s32.totalorder %v464, %v535
    %vm585 = vcmp.lt.s32.totalorder %v104, %v536
    %vm586 = vcmp.lt.s32.totalorder %v105, %v536
    %vm587 = vcmp.lt.s32.totalorder %v106, %v536
    %vm588 = vcmp.lt.s32.totalorder %v107, %v536
    %vm589 = vcmp.lt.s32.totalorder %v108, %v536
    %vm590 = vcmp.lt.s32.totalorder %v109, %v536
    %vm591 = vcmp.lt.s32.totalorder %v110, %v536
    %vm592 = vcmp.lt.s32.totalorder %v111, %v536
    %vm593 = vcmp.lt.s32.totalorder %v457, %v536
    %vm594 = vcmp.lt.s32.totalorder %v458, %v536
    %vm595 = vcmp.lt.s32.totalorder %v459, %v536
    %vm596 = vcmp.lt.s32.totalorder %v460, %v536
    %vm597 = vcmp.lt.s32.totalorder %v461, %v536
    %vm598 = vcmp.lt.s32.totalorder %v462, %v536
    %vm599 = vcmp.lt.s32.totalorder %v463, %v536
    %vm600 = vcmp.lt.s32.totalorder %v464, %v536
    %vm601 = vmand %vm469, %vm537
    %vm602 = vmand %vm470, %vm538
    %vm603 = vmand %vm471, %vm539
    %vm604 = vmand %vm472, %vm540
    %vm605 = vmand %vm473, %vm541
    %vm606 = vmand %vm474, %vm542
    %vm607 = vmand %vm475, %vm543
    %vm608 = vmand %vm476, %vm544
    %vm609 = vmand %vm477, %vm545
    %vm610 = vmand %vm478, %vm546
    %vm611 = vmand %vm479, %vm547
    %vm612 = vmand %vm480, %vm548
    %vm613 = vmand %vm481, %vm549
    %vm614 = vmand %vm482, %vm550
    %vm615 = vmand %vm483, %vm551
    %vm616 = vmand %vm484, %vm552
    %vm617 = vmand %vm485, %vm553
    %vm618 = vmand %vm486, %vm554
    %vm619 = vmand %vm487, %vm555
    %vm620 = vmand %vm488, %vm556
    %vm621 = vmand %vm489, %vm557
    %vm622 = vmand %vm490, %vm558
    %vm623 = vmand %vm491, %vm559
    %vm624 = vmand %vm492, %vm560
    %vm625 = vmand %vm493, %vm561
    %vm626 = vmand %vm494, %vm562
    %vm627 = vmand %vm495, %vm563
    %vm628 = vmand %vm496, %vm564
    %vm629 = vmand %vm497, %vm565
    %vm630 = vmand %vm498, %vm566
    %vm631 = vmand %vm499, %vm567
    %vm632 = vmand %vm500, %vm568
    %vm633 = vmand %vm501, %vm569
    %vm634 = vmand %vm502, %vm570
    %vm635 = vmand %vm503, %vm571
    %vm636 = vmand %vm504, %vm572
    %vm637 = vmand %vm505, %vm573
    %vm638 = vmand %vm506, %vm574
    %vm639 = vmand %vm507, %vm575
    %vm640 = vmand %vm508, %vm576
    %vm641 = vmand %vm509, %vm577
    %vm642 = vmand %vm510, %vm578
    %vm643 = vmand %vm511, %vm579
    %vm644 = vmand %vm512, %vm580
    %vm645 = vmand %vm513, %vm581
    %vm646 = vmand %vm514, %vm582
    %vm647 = vmand %vm515, %vm583
    %vm648 = vmand %vm516, %vm584
    %vm649 = vmand %vm517, %vm585
    %vm650 = vmand %vm518, %vm586
    %vm651 = vmand %vm519, %vm587
    %vm652 = vmand %vm520, %vm588
    %vm653 = vmand %vm521, %vm589
    %vm654 = vmand %vm522, %vm590
    %vm655 = vmand %vm523, %vm591
    %vm656 = vmand %vm524, %vm592
    %vm657 = vmand %vm525, %vm593
    %vm658 = vmand %vm526, %vm594
    %vm659 = vmand %vm527, %vm595
    %vm660 = vmand %vm528, %vm596
    %vm661 = vmand %vm529, %vm597
    %vm662 = vmand %vm530, %vm598
    %vm663 = vmand %vm531, %vm599
    %vm664 = vmand %vm532, %vm600
    %v665 = vsel %vm601, 1, 0
    %v666 = vsel %vm602, 1, 0
    %v667 = vsel %vm603, 1, 0
    %v668 = vsel %vm604, 1, 0
    %v669 = vsel %vm605, 1, 0
    %v670 = vsel %vm606, 1, 0
    %v671 = vsel %vm607, 1, 0
    %v672 = vsel %vm608, 1, 0
    %v673 = vsel %vm609, 1, 0
    %v674 = vsel %vm610, 1, 0
    %v675 = vsel %vm611, 1, 0
    %v676 = vsel %vm612, 1, 0
    %v677 = vsel %vm613, 1, 0
    %v678 = vsel %vm614, 1, 0
    %v679 = vsel %vm615, 1, 0
    %v680 = vsel %vm616, 1, 0
    %v681 = vsel %vm617, 1, 0
    %v682 = vsel %vm618, 1, 0
    %v683 = vsel %vm619, 1, 0
    %v684 = vsel %vm620, 1, 0
    %v685 = vsel %vm621, 1, 0
    %v686 = vsel %vm622, 1, 0
    %v687 = vsel %vm623, 1, 0
    %v688 = vsel %vm624, 1, 0
    %v689 = vsel %vm625, 1, 0
    %v690 = vsel %vm626, 1, 0
    %v691 = vsel %vm627, 1, 0
    %v692 = vsel %vm628, 1, 0
    %v693 = vsel %vm629, 1, 0
    %v694 = vsel %vm630, 1, 0
    %v695 = vsel %vm631, 1, 0
    %v696 = vsel %vm632, 1, 0
    %v697 = vsel %vm633, 1, 0
    %v698 = vsel %vm634, 1, 0
    %v699 = vsel %vm635, 1, 0
    %v700 = vsel %vm636, 1, 0
    %v701 = vsel %vm637, 1, 0
    %v702 = vsel %vm638, 1, 0
    %v703 = vsel %vm639, 1, 0
    %v704 = vsel %vm640, 1, 0
    %v705 = vsel %vm641, 1, 0
    %v706 = vsel %vm642, 1, 0
    %v707 = vsel %vm643, 1, 0
    %v708 = vsel %vm644, 1, 0
    %v709 = vsel %vm645, 1, 0
    %v710 = vsel %vm646, 1, 0
    %v711 = vsel %vm647, 1, 0
    %v712 = vsel %vm648, 1, 0
    %v713 = vsel %vm649, 1, 0
    %v714 = vsel %vm650, 1, 0
    %v715 = vsel %vm651, 1, 0
    %v716 = vsel %vm652, 1, 0
    %v717 = vsel %vm653, 1, 0
    %v718 = vsel %vm654, 1, 0
    %v719 = vsel %vm655, 1, 0
    %v720 = vsel %vm656, 1, 0
    %v721 = vsel %vm657, 1, 0
    %v722 = vsel %vm658, 1, 0
    %v723 = vsel %vm659, 1, 0
    %v724 = vsel %vm660, 1, 0
    %v725 = vsel %vm661, 1, 0
    %v726 = vsel %vm662, 1, 0
    %v727 = vsel %vm663, 1, 0
    %v728 = vsel %vm664, 1, 0
    %v729 = vcvt.s32.f32 %v665
    %v730 = vcvt.s32.f32 %v666
    %v731 = vcvt.s32.f32 %v667
    %v732 = vcvt.s32.f32 %v668
    %v733 = vcvt.s32.f32 %v669
    %v734 = vcvt.s32.f32 %v670
    %v735 = vcvt.s32.f32 %v671
    %v736 = vcvt.s32.f32 %v672
    %v737 = vcvt.s32.f32 %v673
    %v738 = vcvt.s32.f32 %v674
    %v739 = vcvt.s32.f32 %v675
    %v740 = vcvt.s32.f32 %v676
    %v741 = vcvt.s32.f32 %v677
    %v742 = vcvt.s32.f32 %v678
    %v743 = vcvt.s32.f32 %v679
    %v744 = vcvt.s32.f32 %v680
    %v745 = vcvt.s32.f32 %v681
    %v746 = vcvt.s32.f32 %v682
    %v747 = vcvt.s32.f32 %v683
    %v748 = vcvt.s32.f32 %v684
    %v749 = vcvt.s32.f32 %v685
    %v750 = vcvt.s32.f32 %v686
    %v751 = vcvt.s32.f32 %v687
    %v752 = vcvt.s32.f32 %v688
    %v753 = vcvt.s32.f32 %v689
    %v754 = vcvt.s32.f32 %v690
    %v755 = vcvt.s32.f32 %v691
    %v756 = vcvt.s32.f32 %v692
    %v757 = vcvt.s32.f32 %v693
    %v758 = vcvt.s32.f32 %v694
    %v759 = vcvt.s32.f32 %v695
    %v760 = vcvt.s32.f32 %v696
    %v761 = vcvt.s32.f32 %v697
    %v762 = vcvt.s32.f32 %v698
    %v763 = vcvt.s32.f32 %v699
    %v764 = vcvt.s32.f32 %v700
    %v765 = vcvt.s32.f32 %v701
    %v766 = vcvt.s32.f32 %v702
    %v767 = vcvt.s32.f32 %v703
    %v768 = vcvt.s32.f32 %v704
    %v769 = vcvt.s32.f32 %v705
    %v770 = vcvt.s32.f32 %v706
    %v771 = vcvt.s32.f32 %v707
    %v772 = vcvt.s32.f32 %v708
    %v773 = vcvt.s32.f32 %v709
    %v774 = vcvt.s32.f32 %v710
    %v775 = vcvt.s32.f32 %v711
    %v776 = vcvt.s32.f32 %v712
    %v777 = vcvt.s32.f32 %v713
    %v778 = vcvt.s32.f32 %v714
    %v779 = vcvt.s32.f32 %v715
    %v780 = vcvt.s32.f32 %v716
    %v781 = vcvt.s32.f32 %v717
    %v782 = vcvt.s32.f32 %v718
    %v783 = vcvt.s32.f32 %v719
    %v784 = vcvt.s32.f32 %v720
    %v785 = vcvt.s32.f32 %v721
    %v786 = vcvt.s32.f32 %v722
    %v787 = vcvt.s32.f32 %v723
    %v788 = vcvt.s32.f32 %v724
    %v789 = vcvt.s32.f32 %v725
    %v790 = vcvt.s32.f32 %v726
    %v791 = vcvt.s32.f32 %v727
    %v792 = vcvt.s32.f32 %v728
    %v797 = vcombine.high %v91, %v91
    %v798 = vcombine.high %v92, %v92
    %v799 = vcombine.high %v93, %v93
    %v800 = vcombine.high %v94, %v94
    %805 = vmatprep.subr.mxu0 %v394
    %806 = vmatpush1.xpose.msra.mxu0 %v393
    %807 = vmatprep.subr.mxu0 %v402
    %808 = vmatpush1.xpose.msra.mxu0 %v401
    %809 = vmatprep.subr.mxu0 %v410
    %810 = vmatpush1.xpose.msra.mxu0 %v409
    %811 = vmatprep.subr.mxu0 %v418
    %812 = vmatpush1.xpose.msra.mxu0 %v417
    %813 = vmatprep.subr.mxu0 %v426
    %814 = vmatpush1.xpose.msra.mxu0 %v425
    %815 = vmatprep.subr.mxu0 %v434
    %816 = vmatpush1.xpose.msra.mxu0 %v433
    %817 = vmatprep.subr.mxu0 %v442
    %818 = vmatpush1.xpose.msra.mxu0 %v441
    %819 = vmatprep.subr.mxu0 %v450
    %820 = vmatpush1.xpose.msra.mxu0 %v449
    %821 = vmatprep.subr.mxu0 0.0
    %822 = vmatpush1.xpose.msra.mxu0 0.0
    %823 = vmatprep.subr.mxu0 0.0
    %824 = vmatpush1.xpose.msra.mxu0 0.0
    %825 = vmatprep.subr.mxu0 0.0
    %826 = vmatpush1.xpose.msra.mxu0 0.0
    %827 = vmatprep.subr.mxu0 0.0
    %828 = vmatpush1.xpose.msra.mxu0 0.0
    %829 = vmatprep.subr.mxu0 0.0
    %830 = vmatpush1.xpose.msra.mxu0 0.0
    %831 = vmatprep.subr.mxu0 0.0
    %832 = vmatpush1.xpose.msra.mxu0 0.0
    %833 = vmatprep.subr.mxu0 0.0
    %834 = vmatpush1.xpose.msra.mxu0 0.0
    %835 = vmatprep.subr.mxu0 0.0
    %836 = vmatpush1.xpose.msra.mxu0 0.0
    %837 = vmatprep.subr.mxu0 0.0
    %838 = vmatpush1.xpose.msra.mxu0 0.0
    %839 = vmatprep.subr.mxu0 0.0
    %840 = vmatpush1.xpose.msra.mxu0 0.0
    %841 = vmatprep.subr.mxu0 0.0
    %842 = vmatpush1.xpose.msra.mxu0 0.0
    %843 = vmatprep.subr.mxu0 0.0
    %844 = vmatpush1.xpose.msra.mxu0 0.0
    %845 = vmatprep.subr.mxu0 0.0
    %846 = vmatpush1.xpose.msra.mxu0 0.0
    %847 = vmatprep.subr.mxu0 0.0
    %848 = vmatpush1.xpose.msra.mxu0 0.0
    %849 = vmatprep.subr.mxu0 0.0
    %850 = vmatpush1.xpose.msra.mxu0 0.0
    %851 = vmatprep.subr.mxu0 0.0
    %852 = vmatpush1.xpose.msra.mxu0 0.0
    %853 = vmatprep.subr.mxu0 0.0
    %854 = vmatpush1.xpose.msra.mxu0 0.0
    %855 = vmatprep.subr.mxu0 0.0
    %856 = vmatpush1.xpose.msra.mxu0 0.0
    %857 = vmatprep.subr.mxu0 0.0
    %858 = vmatpush1.xpose.msra.mxu0 0.0
    %859 = vmatprep.subr.mxu0 0.0
    %860 = vmatpush1.xpose.msra.mxu0 0.0
    %861 = vmatprep.subr.mxu0 0.0
    %862 = vmatpush1.xpose.msra.mxu0 0.0
    %863 = vmatprep.subr.mxu0 0.0
    %864 = vmatpush1.xpose.msra.mxu0 0.0
    %865 = vmatprep.subr.mxu0 0.0
    %866 = vmatpush1.xpose.msra.mxu0 0.0
    %867 = vmatprep.subr.mxu0 0.0
    %868 = vmatpush1.xpose.msra.mxu0 0.0
    %869 = vmatprep.mubr.f32.mxu0 %v797
    %870 = vmatmul.mubr.f32.gmra.mrb[0].mxu0 %v91
    %v871 = vpop.f32.mrb[0].mxu0
    %v872 = vadd.f32 0.0, %v871
    %v873 = vpop.f32.mrb[0].mxu0
    %874 = vdwg.mxu0
    %875 = vmatprep.subr.mxu0 %v396
    %876 = vmatpush1.xpose.msra.mxu0 %v395
    %877 = vmatprep.subr.mxu0 %v404
    %878 = vmatpush1.xpose.msra.mxu0 %v403
    %879 = vmatprep.subr.mxu0 %v412
    %880 = vmatpush1.xpose.msra.mxu0 %v411
    %881 = vmatprep.subr.mxu0 %v420
    %882 = vmatpush1.xpose.msra.mxu0 %v419
    %883 = vmatprep.subr.mxu0 %v428
    %884 = vmatpush1.xpose.msra.mxu0 %v427
    %885 = vmatprep.subr.mxu0 %v436
    %886 = vmatpush1.xpose.msra.mxu0 %v435
    %887 = vmatprep.subr.mxu0 %v444
    %888 = vmatpush1.xpose.msra.mxu0 %v443
    %889 = vmatprep.subr.mxu0 %v452
    %890 = vmatpush1.xpose.msra.mxu0 %v451
    %891 = vmatprep.subr.mxu0 0.0
    %892 = vmatpush1.xpose.msra.mxu0 0.0
    %893 = vmatprep.subr.mxu0 0.0
    %894 = vmatpush1.xpose.msra.mxu0 0.0
    %895 = vmatprep.subr.mxu0 0.0
    %896 = vmatpush1.xpose.msra.mxu0 0.0
    %897 = vmatprep.subr.mxu0 0.0
    %898 = vmatpush1.xpose.msra.mxu0 0.0
    %899 = vmatprep.subr.mxu0 0.0
    %900 = vmatpush1.xpose.msra.mxu0 0.0
    %901 = vmatprep.subr.mxu0 0.0
    %902 = vmatpush1.xpose.msra.mxu0 0.0
    %903 = vmatprep.subr.mxu0 0.0
    %904 = vmatpush1.xpose.msra.mxu0 0.0
    %905 = vmatprep.subr.mxu0 0.0
    %906 = vmatpush1.xpose.msra.mxu0 0.0
    %907 = vmatprep.subr.mxu0 0.0
    %908 = vmatpush1.xpose.msra.mxu0 0.0
    %909 = vmatprep.subr.mxu0 0.0
    %910 = vmatpush1.xpose.msra.mxu0 0.0
    %911 = vmatprep.subr.mxu0 0.0
    %912 = vmatpush1.xpose.msra.mxu0 0.0
    %913 = vmatprep.subr.mxu0 0.0
    %914 = vmatpush1.xpose.msra.mxu0 0.0
    %915 = vmatprep.subr.mxu0 0.0
    %916 = vmatpush1.xpose.msra.mxu0 0.0
    %917 = vmatprep.subr.mxu0 0.0
    %918 = vmatpush1.xpose.msra.mxu0 0.0
    %919 = vmatprep.subr.mxu0 0.0
    %920 = vmatpush1.xpose.msra.mxu0 0.0
    %921 = vmatprep.subr.mxu0 0.0
    %922 = vmatpush1.xpose.msra.mxu0 0.0
    %923 = vmatprep.subr.mxu0 0.0
    %924 = vmatpush1.xpose.msra.mxu0 0.0
    %925 = vmatprep.subr.mxu0 0.0
    %926 = vmatpush1.xpose.msra.mxu0 0.0
    %927 = vmatprep.subr.mxu0 0.0
    %928 = vmatpush1.xpose.msra.mxu0 0.0
    %929 = vmatprep.subr.mxu0 0.0
    %930 = vmatpush1.xpose.msra.mxu0 0.0
    %931 = vmatprep.subr.mxu0 0.0
    %932 = vmatpush1.xpose.msra.mxu0 0.0
    %933 = vmatprep.subr.mxu0 0.0
    %934 = vmatpush1.xpose.msra.mxu0 0.0
    %935 = vmatprep.subr.mxu0 0.0
    %936 = vmatpush1.xpose.msra.mxu0 0.0
    %937 = vmatprep.subr.mxu0 0.0
    %938 = vmatpush1.xpose.msra.mxu0 0.0
    %939 = vmatprep.mubr.f32.mxu0 %v798
    %940 = vmatmul.mubr.f32.gmra.mrb[0].mxu0 %v92
    %v941 = vpop.f32.mrb[0].mxu0
    %v942 = vadd.f32 %v872, %v941
    %v943 = vpop.f32.mrb[0].mxu0
    %944 = vdwg.mxu0
    %945 = vmatprep.subr.mxu0 %v398
    %946 = vmatpush1.xpose.msra.mxu0 %v397
    %947 = vmatprep.subr.mxu0 %v406
    %948 = vmatpush1.xpose.msra.mxu0 %v405
    %949 = vmatprep.subr.mxu0 %v414
    %950 = vmatpush1.xpose.msra.mxu0 %v413
    %951 = vmatprep.subr.mxu0 %v422
    %952 = vmatpush1.xpose.msra.mxu0 %v421
    %953 = vmatprep.subr.mxu0 %v430
    %954 = vmatpush1.xpose.msra.mxu0 %v429
    %955 = vmatprep.subr.mxu0 %v438
    %956 = vmatpush1.xpose.msra.mxu0 %v437
    %957 = vmatprep.subr.mxu0 %v446
    %958 = vmatpush1.xpose.msra.mxu0 %v445
    %959 = vmatprep.subr.mxu0 %v454
    %960 = vmatpush1.xpose.msra.mxu0 %v453
    %961 = vmatprep.subr.mxu0 0.0
    %962 = vmatpush1.xpose.msra.mxu0 0.0
    %963 = vmatprep.subr.mxu0 0.0
    %964 = vmatpush1.xpose.msra.mxu0 0.0
    %965 = vmatprep.subr.mxu0 0.0
    %966 = vmatpush1.xpose.msra.mxu0 0.0
    %967 = vmatprep.subr.mxu0 0.0
    %968 = vmatpush1.xpose.msra.mxu0 0.0
    %969 = vmatprep.subr.mxu0 0.0
    %970 = vmatpush1.xpose.msra.mxu0 0.0
    %971 = vmatprep.subr.mxu0 0.0
    %972 = vmatpush1.xpose.msra.mxu0 0.0
    %973 = vmatprep.subr.mxu0 0.0
    %974 = vmatpush1.xpose.msra.mxu0 0.0
    %975 = vmatprep.subr.mxu0 0.0
    %976 = vmatpush1.xpose.msra.mxu0 0.0
    %977 = vmatprep.subr.mxu0 0.0
    %978 = vmatpush1.xpose.msra.mxu0 0.0
    %979 = vmatprep.subr.mxu0 0.0
    %980 = vmatpush1.xpose.msra.mxu0 0.0
    %981 = vmatprep.subr.mxu0 0.0
    %982 = vmatpush1.xpose.msra.mxu0 0.0
    %983 = vmatprep.subr.mxu0 0.0
    %984 = vmatpush1.xpose.msra.mxu0 0.0
    %985 = vmatprep.subr.mxu0 0.0
    %986 = vmatpush1.xpose.msra.mxu0 0.0
    %987 = vmatprep.subr.mxu0 0.0
    %988 = vmatpush1.xpose.msra.mxu0 0.0
    %989 = vmatprep.subr.mxu0 0.0
    %990 = vmatpush1.xpose.msra.mxu0 0.0
    %991 = vmatprep.subr.mxu0 0.0
    %992 = vmatpush1.xpose.msra.mxu0 0.0
    %993 = vmatprep.subr.mxu0 0.0
    %994 = vmatpush1.xpose.msra.mxu0 0.0
    %995 = vmatprep.subr.mxu0 0.0
    %996 = vmatpush1.xpose.msra.mxu0 0.0
    %997 = vmatprep.subr.mxu0 0.0
    %998 = vmatpush1.xpose.msra.mxu0 0.0
    %999 = vmatprep.subr.mxu0 0.0
    %1000 = vmatpush1.xpose.msra.mxu0 0.0
    %1001 = vmatprep.subr.mxu0 0.0
    %1002 = vmatpush1.xpose.msra.mxu0 0.0
    %1003 = vmatprep.subr.mxu0 0.0
    %1004 = vmatpush1.xpose.msra.mxu0 0.0
    %1005 = vmatprep.subr.mxu0 0.0
    %1006 = vmatpush1.xpose.msra.mxu0 0.0
    %1007 = vmatprep.subr.mxu0 0.0
    %1008 = vmatpush1.xpose.msra.mxu0 0.0
    %1009 = vmatprep.mubr.f32.mxu0 %v799
    %1010 = vmatmul.mubr.f32.gmra.mrb[0].mxu0 %v93
    %v1011 = vpop.f32.mrb[0].mxu0
    %v1012 = vadd.f32 %v942, %v1011
    %v1013 = vpop.f32.mrb[0].mxu0
    %1014 = vdwg.mxu0
    %1015 = vmatprep.subr.mxu0 %v400
    %1016 = vmatpush1.xpose.msra.mxu0 %v399
    %1017 = vmatprep.subr.mxu0 %v408
    %1018 = vmatpush1.xpose.msra.mxu0 %v407
    %1019 = vmatprep.subr.mxu0 %v416
    %1020 = vmatpush1.xpose.msra.mxu0 %v415
    %1021 = vmatprep.subr.mxu0 %v424
    %1022 = vmatpush1.xpose.msra.mxu0 %v423
    %1023 = vmatprep.subr.mxu0 %v432
    %1024 = vmatpush1.xpose.msra.mxu0 %v431
    %1025 = vmatprep.subr.mxu0 %v440
    %1026 = vmatpush1.xpose.msra.mxu0 %v439
    %1027 = vmatprep.subr.mxu0 %v448
    %1028 = vmatpush1.xpose.msra.mxu0 %v447
    %1029 = vmatprep.subr.mxu0 %v456
    %1030 = vmatpush1.xpose.msra.mxu0 %v455
    %1031 = vmatprep.subr.mxu0 0.0
    %1032 = vmatpush1.xpose.msra.mxu0 0.0
    %1033 = vmatprep.subr.mxu0 0.0
    %1034 = vmatpush1.xpose.msra.mxu0 0.0
    %1035 = vmatprep.subr.mxu0 0.0
    %1036 = vmatpush1.xpose.msra.mxu0 0.0
    %1037 = vmatprep.subr.mxu0 0.0
    %1038 = vmatpush1.xpose.msra.mxu0 0.0
    %1039 = vmatprep.subr.mxu0 0.0
    %1040 = vmatpush1.xpose.msra.mxu0 0.0
    %1041 = vmatprep.subr.mxu0 0.0
    %1042 = vmatpush1.xpose.msra.mxu0 0.0
    %1043 = vmatprep.subr.mxu0 0.0
    %1044 = vmatpush1.xpose.msra.mxu0 0.0
    %1045 = vmatprep.subr.mxu0 0.0
    %1046 = vmatpush1.xpose.msra.mxu0 0.0
    %1047 = vmatprep.subr.mxu0 0.0
    %1048 = vmatpush1.xpose.msra.mxu0 0.0
    %1049 = vmatprep.subr.mxu0 0.0
    %1050 = vmatpush1.xpose.msra.mxu0 0.0
    %1051 = vmatprep.subr.mxu0 0.0
    %1052 = vmatpush1.xpose.msra.mxu0 0.0
    %1053 = vmatprep.subr.mxu0 0.0
    %1054 = vmatpush1.xpose.msra.mxu0 0.0
    %1055 = vmatprep.subr.mxu0 0.0
    %1056 = vmatpush1.xpose.msra.mxu0 0.0
    %1057 = vmatprep.subr.mxu0 0.0
    %1058 = vmatpush1.xpose.msra.mxu0 0.0
    %1059 = vmatprep.subr.mxu0 0.0
    %1060 = vmatpush1.xpose.msra.mxu0 0.0
    %1061 = vmatprep.subr.mxu0 0.0
    %1062 = vmatpush1.xpose.msra.mxu0 0.0
    %1063 = vmatprep.subr.mxu0 0.0
    %1064 = vmatpush1.xpose.msra.mxu0 0.0
    %1065 = vmatprep.subr.mxu0 0.0
    %1066 = vmatpush1.xpose.msra.mxu0 0.0
    %1067 = vmatprep.subr.mxu0 0.0
    %1068 = vmatpush1.xpose.msra.mxu0 0.0
    %1069 = vmatprep.subr.mxu0 0.0
    %1070 = vmatpush1.xpose.msra.mxu0 0.0
    %1071 = vmatprep.subr.mxu0 0.0
    %1072 = vmatpush1.xpose.msra.mxu0 0.0
    %1073 = vmatprep.subr.mxu0 0.0
    %1074 = vmatpush1.xpose.msra.mxu0 0.0
    %1075 = vmatprep.subr.mxu0 0.0
    %1076 = vmatpush1.xpose.msra.mxu0 0.0
    %1077 = vmatprep.subr.mxu0 0.0
    %1078 = vmatpush1.xpose.msra.mxu0 0.0
    %1079 = vmatprep.mubr.f32.mxu0 %v800
    %1080 = vmatmul.mubr.f32.gmra.mrb[0].mxu0 %v94
    %v1081 = vpop.f32.mrb[0].mxu0
    %v1082 = vadd.f32 %v1012, %v1081
    %v1083 = vpop.f32.mrb[0].mxu0
    %1084 = vdwg.mxu0
    %v1085 = vmul.f32 %v1082, 0.0625
    %v1094 = vcombine.high %v95, %v95
    %v1095 = vcombine.high %v96, %v96
    %v1096 = vcombine.high %v97, %v97
    %v1097 = vcombine.high %v98, %v98
    %v1098 = vcombine.high %v99, %v99
    %v1099 = vcombine.high %v100, %v100
    %v1100 = vcombine.high %v101, %v101
    %v1101 = vcombine.high %v102, %v102
    %1110 = vmatprep.subr.mxu0 %v730
    %1111 = vmatpush1.xpose.msra.mxu0 %v729
    %1112 = vmatprep.subr.mxu0 %v746
    %1113 = vmatpush1.xpose.msra.mxu0 %v745
    %1114 = vmatprep.subr.mxu0 %v762
    %1115 = vmatpush1.xpose.msra.mxu0 %v761
    %1116 = vmatprep.subr.mxu0 %v778
    %1117 = vmatpush1.xpose.msra.mxu0 %v777
    %1118 = vmatprep.subr.mxu0 0.0
    %1119 = vmatpush1.xpose.msra.mxu0 0.0
    %1120 = vmatprep.subr.mxu0 0.0
    %1121 = vmatpush1.xpose.msra.mxu0 0.0
    %1122 = vmatprep.subr.mxu0 0.0
    %1123 = vmatpush1.xpose.msra.mxu0 0.0
    %1124 = vmatprep.subr.mxu0 0.0
    %1125 = vmatpush1.xpose.msra.mxu0 0.0
    %1126 = vmatprep.subr.mxu0 0.0
    %1127 = vmatpush1.xpose.msra.mxu0 0.0
    %1128 = vmatprep.subr.mxu0 0.0
    %1129 = vmatpush1.xpose.msra.mxu0 0.0
    %1130 = vmatprep.subr.mxu0 0.0
    %1131 = vmatpush1.xpose.msra.mxu0 0.0
    %1132 = vmatprep.subr.mxu0 0.0
    %1133 = vmatpush1.xpose.msra.mxu0 0.0
    %1134 = vmatprep.subr.mxu0 0.0
    %1135 = vmatpush1.xpose.msra.mxu0 0.0
    %1136 = vmatprep.subr.mxu0 0.0
    %1137 = vmatpush1.xpose.msra.mxu0 0.0
    %1138 = vmatprep.subr.mxu0 0.0
    %1139 = vmatpush1.xpose.msra.mxu0 0.0
    %1140 = vmatprep.subr.mxu0 0.0
    %1141 = vmatpush1.xpose.msra.mxu0 0.0
    %1142 = vmatprep.subr.mxu0 0.0
    %1143 = vmatpush1.xpose.msra.mxu0 0.0
    %1144 = vmatprep.subr.mxu0 0.0
    %1145 = vmatpush1.xpose.msra.mxu0 0.0
    %1146 = vmatprep.subr.mxu0 0.0
    %1147 = vmatpush1.xpose.msra.mxu0 0.0
    %1148 = vmatprep.subr.mxu0 0.0
    %1149 = vmatpush1.xpose.msra.mxu0 0.0
    %1150 = vmatprep.subr.mxu0 0.0
    %1151 = vmatpush1.xpose.msra.mxu0 0.0
    %1152 = vmatprep.subr.mxu0 0.0
    %1153 = vmatpush1.xpose.msra.mxu0 0.0
    %1154 = vmatprep.subr.mxu0 0.0
    %1155 = vmatpush1.xpose.msra.mxu0 0.0
    %1156 = vmatprep.subr.mxu0 0.0
    %1157 = vmatpush1.xpose.msra.mxu0 0.0
    %1158 = vmatprep.subr.mxu0 0.0
    %1159 = vmatpush1.xpose.msra.mxu0 0.0
    %1160 = vmatprep.subr.mxu0 0.0
    %1161 = vmatpush1.xpose.msra.mxu0 0.0
    %1162 = vmatprep.subr.mxu0 0.0
    %1163 = vmatpush1.xpose.msra.mxu0 0.0
    %1164 = vmatprep.subr.mxu0 0.0
    %1165 = vmatpush1.xpose.msra.mxu0 0.0
    %1166 = vmatprep.subr.mxu0 0.0
    %1167 = vmatpush1.xpose.msra.mxu0 0.0
    %1168 = vmatprep.subr.mxu0 0.0
    %1169 = vmatpush1.xpose.msra.mxu0 0.0
    %1170 = vmatprep.subr.mxu0 0.0
    %1171 = vmatpush1.xpose.msra.mxu0 0.0
    %1172 = vmatprep.subr.mxu0 0.0
    %1173 = vmatpush1.xpose.msra.mxu0 0.0
    %1174 = vmatprep.mubr.f32.mxu0 %v1094
    %1175 = vmatmul.mubr.f32.gmra.mrb[0].mxu0 %v95
    %v1176 = vpop.f32.mrb[0].mxu0
    %v1177 = vadd.f32 0.0, %v1176
    %v1178 = vpop.f32.mrb[0].mxu0
    %1179 = vdwg.mxu0
    %1180 = vmatprep.subr.mxu0 %v732
    %1181 = vmatpush1.xpose.msra.mxu0 %v731
    %1182 = vmatprep.subr.mxu0 %v748
    %1183 = vmatpush1.xpose.msra.mxu0 %v747
    %1184 = vmatprep.subr.mxu0 %v764
    %1185 = vmatpush1.xpose.msra.mxu0 %v763
    %1186 = vmatprep.subr.mxu0 %v780
    %1187 = vmatpush1.xpose.msra.mxu0 %v779
    %1188 = vmatprep.subr.mxu0 0.0
    %1189 = vmatpush1.xpose.msra.mxu0 0.0
    %1190 = vmatprep.subr.mxu0 0.0
    %1191 = vmatpush1.xpose.msra.mxu0 0.0
    %1192 = vmatprep.subr.mxu0 0.0
    %1193 = vmatpush1.xpose.msra.mxu0 0.0
    %1194 = vmatprep.subr.mxu0 0.0
    %1195 = vmatpush1.xpose.msra.mxu0 0.0
    %1196 = vmatprep.subr.mxu0 0.0
    %1197 = vmatpush1.xpose.msra.mxu0 0.0
    %1198 = vmatprep.subr.mxu0 0.0
    %1199 = vmatpush1.xpose.msra.mxu0 0.0
    %1200 = vmatprep.subr.mxu0 0.0
    %1201 = vmatpush1.xpose.msra.mxu0 0.0
    %1202 = vmatprep.subr.mxu0 0.0
    %1203 = vmatpush1.xpose.msra.mxu0 0.0
    %1204 = vmatprep.subr.mxu0 0.0
    %1205 = vmatpush1.xpose.msra.mxu0 0.0
    %1206 = vmatprep.subr.mxu0 0.0
    %1207 = vmatpush1.xpose.msra.mxu0 0.0
    %1208 = vmatprep.subr.mxu0 0.0
    %1209 = vmatpush1.xpose.msra.mxu0 0.0
    %1210 = vmatprep.subr.mxu0 0.0
    %1211 = vmatpush1.xpose.msra.mxu0 0.0
    %1212 = vmatprep.subr.mxu0 0.0
    %1213 = vmatpush1.xpose.msra.mxu0 0.0
    %1214 = vmatprep.subr.mxu0 0.0
    %1215 = vmatpush1.xpose.msra.mxu0 0.0
    %1216 = vmatprep.subr.mxu0 0.0
    %1217 = vmatpush1.xpose.msra.mxu0 0.0
    %1218 = vmatprep.subr.mxu0 0.0
    %1219 = vmatpush1.xpose.msra.mxu0 0.0
    %1220 = vmatprep.subr.mxu0 0.0
    %1221 = vmatpush1.xpose.msra.mxu0 0.0
    %1222 = vmatprep.subr.mxu0 0.0
    %1223 = vmatpush1.xpose.msra.mxu0 0.0
    %1224 = vmatprep.subr.mxu0 0.0
    %1225 = vmatpush1.xpose.msra.mxu0 0.0
    %1226 = vmatprep.subr.mxu0 0.0
    %1227 = vmatpush1.xpose.msra.mxu0 0.0
    %1228 = vmatprep.subr.mxu0 0.0
    %1229 = vmatpush1.xpose.msra.mxu0 0.0
    %1230 = vmatprep.subr.mxu0 0.0
    %1231 = vmatpush1.xpose.msra.mxu0 0.0
    %1232 = vmatprep.subr.mxu0 0.0
    %1233 = vmatpush1.xpose.msra.mxu0 0.0
    %1234 = vmatprep.subr.mxu0 0.0
    %1235 = vmatpush1.xpose.msra.mxu0 0.0
    %1236 = vmatprep.subr.mxu0 0.0
    %1237 = vmatpush1.xpose.msra.mxu0 0.0
    %1238 = vmatprep.subr.mxu0 0.0
    %1239 = vmatpush1.xpose.msra.mxu0 0.0
    %1240 = vmatprep.subr.mxu0 0.0
    %1241 = vmatpush1.xpose.msra.mxu0 0.0
    %1242 = vmatprep.subr.mxu0 0.0
    %1243 = vmatpush1.xpose.msra.mxu0 0.0
    %1244 = vmatprep.mubr.f32.mxu0 %v1095
    %1245 = vmatmul.mubr.f32.gmra.mrb[0].mxu0 %v96
    %v1246 = vpop.f32.mrb[0].mxu0
    %v1247 = vadd.f32 %v1177, %v1246
    %v1248 = vpop.f32.mrb[0].mxu0
    %1249 = vdwg.mxu0
    %1250 = vmatprep.subr.mxu0 %v734
    %1251 = vmatpush1.xpose.msra.mxu0 %v733
    %1252 = vmatprep.subr.mxu0 %v750
    %1253 = vmatpush1.xpose.msra.mxu0 %v749
    %1254 = vmatprep.subr.mxu0 %v766
    %1255 = vmatpush1.xpose.msra.mxu0 %v765
    %1256 = vmatprep.subr.mxu0 %v782
    %1257 = vmatpush1.xpose.msra.mxu0 %v781
    %1258 = vmatprep.subr.mxu0 0.0
    %1259 = vmatpush1.xpose.msra.mxu0 0.0
    %1260 = vmatprep.subr.mxu0 0.0
    %1261 = vmatpush1.xpose.msra.mxu0 0.0
    %1262 = vmatprep.subr.mxu0 0.0
    %1263 = vmatpush1.xpose.msra.mxu0 0.0
    %1264 = vmatprep.subr.mxu0 0.0
    %1265 = vmatpush1.xpose.msra.mxu0 0.0
    %1266 = vmatprep.subr.mxu0 0.0
    %1267 = vmatpush1.xpose.msra.mxu0 0.0
    %1268 = vmatprep.subr.mxu0 0.0
    %1269 = vmatpush1.xpose.msra.mxu0 0.0
    %1270 = vmatprep.subr.mxu0 0.0
    %1271 = vmatpush1.xpose.msra.mxu0 0.0
    %1272 = vmatprep.subr.mxu0 0.0
    %1273 = vmatpush1.xpose.msra.mxu0 0.0
    %1274 = vmatprep.subr.mxu0 0.0
    %1275 = vmatpush1.xpose.msra.mxu0 0.0
    %1276 = vmatprep.subr.mxu0 0.0
    %1277 = vmatpush1.xpose.msra.mxu0 0.0
    %1278 = vmatprep.subr.mxu0 0.0
    %1279 = vmatpush1.xpose.msra.mxu0 0.0
    %1280 = vmatprep.subr.mxu0 0.0
    %1281 = vmatpush1.xpose.msra.mxu0 0.0
    %1282 = vmatprep.subr.mxu0 0.0
    %1283 = vmatpush1.xpose.msra.mxu0 0.0
    %1284 = vmatprep.subr.mxu0 0.0
    %1285 = vmatpush1.xpose.msra.mxu0 0.0
    %1286 = vmatprep.subr.mxu0 0.0
    %1287 = vmatpush1.xpose.msra.mxu0 0.0
    %1288 = vmatprep.subr.mxu0 0.0
    %1289 = vmatpush1.xpose.msra.mxu0 0.0
    %1290 = vmatprep.subr.mxu0 0.0
    %1291 = vmatpush1.xpose.msra.mxu0 0.0
    %1292 = vmatprep.subr.mxu0 0.0
    %1293 = vmatpush1.xpose.msra.mxu0 0.0
    %1294 = vmatprep.subr.mxu0 0.0
    %1295 = vmatpush1.xpose.msra.mxu0 0.0
    %1296 = vmatprep.subr.mxu0 0.0
    %1297 = vmatpush1.xpose.msra.mxu0 0.0
    %1298 = vmatprep.subr.mxu0 0.0
    %1299 = vmatpush1.xpose.msra.mxu0 0.0
    %1300 = vmatprep.subr.mxu0 0.0
    %1301 = vmatpush1.xpose.msra.mxu0 0.0
    %1302 = vmatprep.subr.mxu0 0.0
    %1303 = vmatpush1.xpose.msra.mxu0 0.0
    %1304 = vmatprep.subr.mxu0 0.0
    %1305 = vmatpush1.xpose.msra.mxu0 0.0
    %1306 = vmatprep.subr.mxu0 0.0
    %1307 = vmatpush1.xpose.msra.mxu0 0.0
    %1308 = vmatprep.subr.mxu0 0.0
    %1309 = vmatpush1.xpose.msra.mxu0 0.0
    %1310 = vmatprep.subr.mxu0 0.0
    %1311 = vmatpush1.xpose.msra.mxu0 0.0
    %1312 = vmatprep.subr.mxu0 0.0
    %1313 = vmatpush1.xpose.msra.mxu0 0.0
    %1314 = vmatprep.mubr.f32.mxu0 %v1096
    %1315 = vmatmul.mubr.f32.gmra.mrb[0].mxu0 %v97
    %v1316 = vpop.f32.mrb[0].mxu0
    %v1317 = vadd.f32 %v1247, %v1316
    %v1318 = vpop.f32.mrb[0].mxu0
    %1319 = vdwg.mxu0
    %1320 = vmatprep.subr.mxu0 %v736
    %1321 = vmatpush1.xpose.msra.mxu0 %v735
    %1322 = vmatprep.subr.mxu0 %v752
    %1323 = vmatpush1.xpose.msra.mxu0 %v751
    %1324 = vmatprep.subr.mxu0 %v768
    %1325 = vmatpush1.xpose.msra.mxu0 %v767
    %1326 = vmatprep.subr.mxu0 %v784
    %1327 = vmatpush1.xpose.msra.mxu0 %v783
    %1328 = vmatprep.subr.mxu0 0.0
    %1329 = vmatpush1.xpose.msra.mxu0 0.0
    %1330 = vmatprep.subr.mxu0 0.0
    %1331 = vmatpush1.xpose.msra.mxu0 0.0
    %1332 = vmatprep.subr.mxu0 0.0
    %1333 = vmatpush1.xpose.msra.mxu0 0.0
    %1334 = vmatprep.subr.mxu0 0.0
    %1335 = vmatpush1.xpose.msra.mxu0 0.0
    %1336 = vmatprep.subr.mxu0 0.0
    %1337 = vmatpush1.xpose.msra.mxu0 0.0
    %1338 = vmatprep.subr.mxu0 0.0
    %1339 = vmatpush1.xpose.msra.mxu0 0.0
    %1340 = vmatprep.subr.mxu0 0.0
    %1341 = vmatpush1.xpose.msra.mxu0 0.0
    %1342 = vmatprep.subr.mxu0 0.0
    %1343 = vmatpush1.xpose.msra.mxu0 0.0
    %1344 = vmatprep.subr.mxu0 0.0
    %1345 = vmatpush1.xpose.msra.mxu0 0.0
    %1346 = vmatprep.subr.mxu0 0.0
    %1347 = vmatpush1.xpose.msra.mxu0 0.0
    %1348 = vmatprep.subr.mxu0 0.0
    %1349 = vmatpush1.xpose.msra.mxu0 0.0
    %1350 = vmatprep.subr.mxu0 0.0
    %1351 = vmatpush1.xpose.msra.mxu0 0.0
    %1352 = vmatprep.subr.mxu0 0.0
    %1353 = vmatpush1.xpose.msra.mxu0 0.0
    %1354 = vmatprep.subr.mxu0 0.0
    %1355 = vmatpush1.xpose.msra.mxu0 0.0
    %1356 = vmatprep.subr.mxu0 0.0
    %1357 = vmatpush1.xpose.msra.mxu0 0.0
    %1358 = vmatprep.subr.mxu0 0.0
    %1359 = vmatpush1.xpose.msra.mxu0 0.0
    %1360 = vmatprep.subr.mxu0 0.0
    %1361 = vmatpush1.xpose.msra.mxu0 0.0
    %1362 = vmatprep.subr.mxu0 0.0
    %1363 = vmatpush1.xpose.msra.mxu0 0.0
    %1364 = vmatprep.subr.mxu0 0.0
    %1365 = vmatpush1.xpose.msra.mxu0 0.0
    %1366 = vmatprep.subr.mxu0 0.0
    %1367 = vmatpush1.xpose.msra.mxu0 0.0
    %1368 = vmatprep.subr.mxu0 0.0
    %1369 = vmatpush1.xpose.msra.mxu0 0.0
    %1370 = vmatprep.subr.mxu0 0.0
    %1371 = vmatpush1.xpose.msra.mxu0 0.0
    %1372 = vmatprep.subr.mxu0 0.0
    %1373 = vmatpush1.xpose.msra.mxu0 0.0
    %1374 = vmatprep.subr.mxu0 0.0
    %1375 = vmatpush1.xpose.msra.mxu0 0.0
    %1376 = vmatprep.subr.mxu0 0.0
    %1377 = vmatpush1.xpose.msra.mxu0 0.0
    %1378 = vmatprep.subr.mxu0 0.0
    %1379 = vmatpush1.xpose.msra.mxu0 0.0
    %1380 = vmatprep.subr.mxu0 0.0
    %1381 = vmatpush1.xpose.msra.mxu0 0.0
    %1382 = vmatprep.subr.mxu0 0.0
    %1383 = vmatpush1.xpose.msra.mxu0 0.0
    %1384 = vmatprep.mubr.f32.mxu0 %v1097
    %1385 = vmatmul.mubr.f32.gmra.mrb[0].mxu0 %v98
    %v1386 = vpop.f32.mrb[0].mxu0
    %v1387 = vadd.f32 %v1317, %v1386
    %v1388 = vpop.f32.mrb[0].mxu0
    %1389 = vdwg.mxu0
    %1390 = vmatprep.subr.mxu0 %v738
    %1391 = vmatpush1.xpose.msra.mxu0 %v737
    %1392 = vmatprep.subr.mxu0 %v754
    %1393 = vmatpush1.xpose.msra.mxu0 %v753
    %1394 = vmatprep.subr.mxu0 %v770
    %1395 = vmatpush1.xpose.msra.mxu0 %v769
    %1396 = vmatprep.subr.mxu0 %v786
    %1397 = vmatpush1.xpose.msra.mxu0 %v785
    %1398 = vmatprep.subr.mxu0 0.0
    %1399 = vmatpush1.xpose.msra.mxu0 0.0
    %1400 = vmatprep.subr.mxu0 0.0
    %1401 = vmatpush1.xpose.msra.mxu0 0.0
    %1402 = vmatprep.subr.mxu0 0.0
    %1403 = vmatpush1.xpose.msra.mxu0 0.0
    %1404 = vmatprep.subr.mxu0 0.0
    %1405 = vmatpush1.xpose.msra.mxu0 0.0
    %1406 = vmatprep.subr.mxu0 0.0
    %1407 = vmatpush1.xpose.msra.mxu0 0.0
    %1408 = vmatprep.subr.mxu0 0.0
    %1409 = vmatpush1.xpose.msra.mxu0 0.0
    %1410 = vmatprep.subr.mxu0 0.0
    %1411 = vmatpush1.xpose.msra.mxu0 0.0
    %1412 = vmatprep.subr.mxu0 0.0
    %1413 = vmatpush1.xpose.msra.mxu0 0.0
    %1414 = vmatprep.subr.mxu0 0.0
    %1415 = vmatpush1.xpose.msra.mxu0 0.0
    %1416 = vmatprep.subr.mxu0 0.0
    %1417 = vmatpush1.xpose.msra.mxu0 0.0
    %1418 = vmatprep.subr.mxu0 0.0
    %1419 = vmatpush1.xpose.msra.mxu0 0.0
    %1420 = vmatprep.subr.mxu0 0.0
    %1421 = vmatpush1.xpose.msra.mxu0 0.0
    %1422 = vmatprep.subr.mxu0 0.0
    %1423 = vmatpush1.xpose.msra.mxu0 0.0
    %1424 = vmatprep.subr.mxu0 0.0
    %1425 = vmatpush1.xpose.msra.mxu0 0.0
    %1426 = vmatprep.subr.mxu0 0.0
    %1427 = vmatpush1.xpose.msra.mxu0 0.0
    %1428 = vmatprep.subr.mxu0 0.0
    %1429 = vmatpush1.xpose.msra.mxu0 0.0
    %1430 = vmatprep.subr.mxu0 0.0
    %1431 = vmatpush1.xpose.msra.mxu0 0.0
    %1432 = vmatprep.subr.mxu0 0.0
    %1433 = vmatpush1.xpose.msra.mxu0 0.0
    %1434 = vmatprep.subr.mxu0 0.0
    %1435 = vmatpush1.xpose.msra.mxu0 0.0
    %1436 = vmatprep.subr.mxu0 0.0
    %1437 = vmatpush1.xpose.msra.mxu0 0.0
    %1438 = vmatprep.subr.mxu0 0.0
    %1439 = vmatpush1.xpose.msra.mxu0 0.0
    %1440 = vmatprep.subr.mxu0 0.0
    %1441 = vmatpush1.xpose.msra.mxu0 0.0
    %1442 = vmatprep.subr.mxu0 0.0
    %1443 = vmatpush1.xpose.msra.mxu0 0.0
    %1444 = vmatprep.subr.mxu0 0.0
    %1445 = vmatpush1.xpose.msra.mxu0 0.0
    %1446 = vmatprep.subr.mxu0 0.0
    %1447 = vmatpush1.xpose.msra.mxu0 0.0
    %1448 = vmatprep.subr.mxu0 0.0
    %1449 = vmatpush1.xpose.msra.mxu0 0.0
    %1450 = vmatprep.subr.mxu0 0.0
    %1451 = vmatpush1.xpose.msra.mxu0 0.0
    %1452 = vmatprep.subr.mxu0 0.0
    %1453 = vmatpush1.xpose.msra.mxu0 0.0
    %1454 = vmatprep.mubr.f32.mxu0 %v1098
    %1455 = vmatmul.mubr.f32.gmra.mrb[0].mxu0 %v99
    %v1456 = vpop.f32.mrb[0].mxu0
    %v1457 = vadd.f32 %v1387, %v1456
    %v1458 = vpop.f32.mrb[0].mxu0
    %1459 = vdwg.mxu0
    %1460 = vmatprep.subr.mxu0 %v740
    %1461 = vmatpush1.xpose.msra.mxu0 %v739
    %1462 = vmatprep.subr.mxu0 %v756
    %1463 = vmatpush1.xpose.msra.mxu0 %v755
    %1464 = vmatprep.subr.mxu0 %v772
    %1465 = vmatpush1.xpose.msra.mxu0 %v771
    %1466 = vmatprep.subr.mxu0 %v788
    %1467 = vmatpush1.xpose.msra.mxu0 %v787
    %1468 = vmatprep.subr.mxu0 0.0
    %1469 = vmatpush1.xpose.msra.mxu0 0.0
    %1470 = vmatprep.subr.mxu0 0.0
    %1471 = vmatpush1.xpose.msra.mxu0 0.0
    %1472 = vmatprep.subr.mxu0 0.0
    %1473 = vmatpush1.xpose.msra.mxu0 0.0
    %1474 = vmatprep.subr.mxu0 0.0
    %1475 = vmatpush1.xpose.msra.mxu0 0.0
    %1476 = vmatprep.subr.mxu0 0.0
    %1477 = vmatpush1.xpose.msra.mxu0 0.0
    %1478 = vmatprep.subr.mxu0 0.0
    %1479 = vmatpush1.xpose.msra.mxu0 0.0
    %1480 = vmatprep.subr.mxu0 0.0
    %1481 = vmatpush1.xpose.msra.mxu0 0.0
    %1482 = vmatprep.subr.mxu0 0.0
    %1483 = vmatpush1.xpose.msra.mxu0 0.0
    %1484 = vmatprep.subr.mxu0 0.0
    %1485 = vmatpush1.xpose.msra.mxu0 0.0
    %1486 = vmatprep.subr.mxu0 0.0
    %1487 = vmatpush1.xpose.msra.mxu0 0.0
    %1488 = vmatprep.subr.mxu0 0.0
    %1489 = vmatpush1.xpose.msra.mxu0 0.0
    %1490 = vmatprep.subr.mxu0 0.0
    %1491 = vmatpush1.xpose.msra.mxu0 0.0
    %1492 = vmatprep.subr.mxu0 0.0
    %1493 = vmatpush1.xpose.msra.mxu0 0.0
    %1494 = vmatprep.subr.mxu0 0.0
    %1495 = vmatpush1.xpose.msra.mxu0 0.0
    %1496 = vmatprep.subr.mxu0 0.0
    %1497 = vmatpush1.xpose.msra.mxu0 0.0
    %1498 = vmatprep.subr.mxu0 0.0
    %1499 = vmatpush1.xpose.msra.mxu0 0.0
    %1500 = vmatprep.subr.mxu0 0.0
    %1501 = vmatpush1.xpose.msra.mxu0 0.0
    %1502 = vmatprep.subr.mxu0 0.0
    %1503 = vmatpush1.xpose.msra.mxu0 0.0
    %1504 = vmatprep.subr.mxu0 0.0
    %1505 = vmatpush1.xpose.msra.mxu0 0.0
    %1506 = vmatprep.subr.mxu0 0.0
    %1507 = vmatpush1.xpose.msra.mxu0 0.0
    %1508 = vmatprep.subr.mxu0 0.0
    %1509 = vmatpush1.xpose.msra.mxu0 0.0
    %1510 = vmatprep.subr.mxu0 0.0
    %1511 = vmatpush1.xpose.msra.mxu0 0.0
    %1512 = vmatprep.subr.mxu0 0.0
    %1513 = vmatpush1.xpose.msra.mxu0 0.0
    %1514 = vmatprep.subr.mxu0 0.0
    %1515 = vmatpush1.xpose.msra.mxu0 0.0
    %1516 = vmatprep.subr.mxu0 0.0
    %1517 = vmatpush1.xpose.msra.mxu0 0.0
    %1518 = vmatprep.subr.mxu0 0.0
    %1519 = vmatpush1.xpose.msra.mxu0 0.0
    %1520 = vmatprep.subr.mxu0 0.0
    %1521 = vmatpush1.xpose.msra.mxu0 0.0
    %1522 = vmatprep.subr.mxu0 0.0
    %1523 = vmatpush1.xpose.msra.mxu0 0.0
    %1524 = vmatprep.mubr.f32.mxu0 %v1099
    %1525 = vmatmul.mubr.f32.gmra.mrb[0].mxu0 %v100
    %v1526 = vpop.f32.mrb[0].mxu0
    %v1527 = vadd.f32 %v1457, %v1526
    %v1528 = vpop.f32.mrb[0].mxu0
    %1529 = vdwg.mxu0
    %1530 = vmatprep.subr.mxu0 %v742
    %1531 = vmatpush1.xpose.msra.mxu0 %v741
    %1532 = vmatprep.subr.mxu0 %v758
    %1533 = vmatpush1.xpose.msra.mxu0 %v757
    %1534 = vmatprep.subr.mxu0 %v774
    %1535 = vmatpush1.xpose.msra.mxu0 %v773
    %1536 = vmatprep.subr.mxu0 %v790
    %1537 = vmatpush1.xpose.msra.mxu0 %v789
    %1538 = vmatprep.subr.mxu0 0.0
    %1539 = vmatpush1.xpose.msra.mxu0 0.0
    %1540 = vmatprep.subr.mxu0 0.0
    %1541 = vmatpush1.xpose.msra.mxu0 0.0
    %1542 = vmatprep.subr.mxu0 0.0
    %1543 = vmatpush1.xpose.msra.mxu0 0.0
    %1544 = vmatprep.subr.mxu0 0.0
    %1545 = vmatpush1.xpose.msra.mxu0 0.0
    %1546 = vmatprep.subr.mxu0 0.0
    %1547 = vmatpush1.xpose.msra.mxu0 0.0
    %1548 = vmatprep.subr.mxu0 0.0
    %1549 = vmatpush1.xpose.msra.mxu0 0.0
    %1550 = vmatprep.subr.mxu0 0.0
    %1551 = vmatpush1.xpose.msra.mxu0 0.0
    %1552 = vmatprep.subr.mxu0 0.0
    %1553 = vmatpush1.xpose.msra.mxu0 0.0
    %1554 = vmatprep.subr.mxu0 0.0
    %1555 = vmatpush1.xpose.msra.mxu0 0.0
    %1556 = vmatprep.subr.mxu0 0.0
    %1557 = vmatpush1.xpose.msra.mxu0 0.0
    %1558 = vmatprep.subr.mxu0 0.0
    %1559 = vmatpush1.xpose.msra.mxu0 0.0
    %1560 = vmatprep.subr.mxu0 0.0
    %1561 = vmatpush1.xpose.msra.mxu0 0.0
    %1562 = vmatprep.subr.mxu0 0.0
    %1563 = vmatpush1.xpose.msra.mxu0 0.0
    %1564 = vmatprep.subr.mxu0 0.0
    %1565 = vmatpush1.xpose.msra.mxu0 0.0
    %1566 = vmatprep.subr.mxu0 0.0
    %1567 = vmatpush1.xpose.msra.mxu0 0.0
    %1568 = vmatprep.subr.mxu0 0.0
    %1569 = vmatpush1.xpose.msra.mxu0 0.0
    %1570 = vmatprep.subr.mxu0 0.0
    %1571 = vmatpush1.xpose.msra.mxu0 0.0
    %1572 = vmatprep.subr.mxu0 0.0
    %1573 = vmatpush1.xpose.msra.mxu0 0.0
    %1574 = vmatprep.subr.mxu0 0.0
    %1575 = vmatpush1.xpose.msra.mxu0 0.0
    %1576 = vmatprep.subr.mxu0 0.0
    %1577 = vmatpush1.xpose.msra.mxu0 0.0
    %1578 = vmatprep.subr.mxu0 0.0
    %1579 = vmatpush1.xpose.msra.mxu0 0.0
    %1580 = vmatprep.subr.mxu0 0.0
    %1581 = vmatpush1.xpose.msra.mxu0 0.0
    %1582 = vmatprep.subr.mxu0 0.0
    %1583 = vmatpush1.xpose.msra.mxu0 0.0
    %1584 = vmatprep.subr.mxu0 0.0
    %1585 = vmatpush1.xpose.msra.mxu0 0.0
    %1586 = vmatprep.subr.mxu0 0.0
    %1587 = vmatpush1.xpose.msra.mxu0 0.0
    %1588 = vmatprep.subr.mxu0 0.0
    %1589 = vmatpush1.xpose.msra.mxu0 0.0
    %1590 = vmatprep.subr.mxu0 0.0
    %1591 = vmatpush1.xpose.msra.mxu0 0.0
    %1592 = vmatprep.subr.mxu0 0.0
    %1593 = vmatpush1.xpose.msra.mxu0 0.0
    %1594 = vmatprep.mubr.f32.mxu0 %v1100
    %1595 = vmatmul.mubr.f32.gmra.mrb[0].mxu0 %v101
    %v1596 = vpop.f32.mrb[0].mxu0
    %v1597 = vadd.f32 %v1527, %v1596
    %v1598 = vpop.f32.mrb[0].mxu0
    %1599 = vdwg.mxu0
    %1600 = vmatprep.subr.mxu0 %v744
    %1601 = vmatpush1.xpose.msra.mxu0 %v743
    %1602 = vmatprep.subr.mxu0 %v760
    %1603 = vmatpush1.xpose.msra.mxu0 %v759
    %1604 = vmatprep.subr.mxu0 %v776
    %1605 = vmatpush1.xpose.msra.mxu0 %v775
    %1606 = vmatprep.subr.mxu0 %v792
    %1607 = vmatpush1.xpose.msra.mxu0 %v791
    %1608 = vmatprep.subr.mxu0 0.0
    %1609 = vmatpush1.xpose.msra.mxu0 0.0
    %1610 = vmatprep.subr.mxu0 0.0
    %1611 = vmatpush1.xpose.msra.mxu0 0.0
    %1612 = vmatprep.subr.mxu0 0.0
    %1613 = vmatpush1.xpose.msra.mxu0 0.0
    %1614 = vmatprep.subr.mxu0 0.0
    %1615 = vmatpush1.xpose.msra.mxu0 0.0
    %1616 = vmatprep.subr.mxu0 0.0
    %1617 = vmatpush1.xpose.msra.mxu0 0.0
    %1618 = vmatprep.subr.mxu0 0.0
    %1619 = vmatpush1.xpose.msra.mxu0 0.0
    %1620 = vmatprep.subr.mxu0 0.0
    %1621 = vmatpush1.xpose.msra.mxu0 0.0
    %1622 = vmatprep.subr.mxu0 0.0
    %1623 = vmatpush1.xpose.msra.mxu0 0.0
    %1624 = vmatprep.subr.mxu0 0.0
    %1625 = vmatpush1.xpose.msra.mxu0 0.0
    %1626 = vmatprep.subr.mxu0 0.0
    %1627 = vmatpush1.xpose.msra.mxu0 0.0
    %1628 = vmatprep.subr.mxu0 0.0
    %1629 = vmatpush1.xpose.msra.mxu0 0.0
    %1630 = vmatprep.subr.mxu0 0.0
    %1631 = vmatpush1.xpose.msra.mxu0 0.0
    %1632 = vmatprep.subr.mxu0 0.0
    %1633 = vmatpush1.xpose.msra.mxu0 0.0
    %1634 = vmatprep.subr.mxu0 0.0
    %1635 = vmatpush1.xpose.msra.mxu0 0.0
    %1636 = vmatprep.subr.mxu0 0.0
    %1637 = vmatpush1.xpose.msra.mxu0 0.0
    %1638 = vmatprep.subr.mxu0 0.0
    %1639 = vmatpush1.xpose.msra.mxu0 0.0
    %1640 = vmatprep.subr.mxu0 0.0
    %1641 = vmatpush1.xpose.msra.mxu0 0.0
    %1642 = vmatprep.subr.mxu0 0.0
    %1643 = vmatpush1.xpose.msra.mxu0 0.0
    %1644 = vmatprep.subr.mxu0 0.0
    %1645 = vmatpush1.xpose.msra.mxu0 0.0
    %1646 = vmatprep.subr.mxu0 0.0
    %1647 = vmatpush1.xpose.msra.mxu0 0.0
    %1648 = vmatprep.subr.mxu0 0.0
    %1649 = vmatpush1.xpose.msra.mxu0 0.0
    %1650 = vmatprep.subr.mxu0 0.0
    %1651 = vmatpush1.xpose.msra.mxu0 0.0
    %1652 = vmatprep.subr.mxu0 0.0
    %1653 = vmatpush1.xpose.msra.mxu0 0.0
    %1654 = vmatprep.subr.mxu0 0.0
    %1655 = vmatpush1.xpose.msra.mxu0 0.0
    %1656 = vmatprep.subr.mxu0 0.0
    %1657 = vmatpush1.xpose.msra.mxu0 0.0
    %1658 = vmatprep.subr.mxu0 0.0
    %1659 = vmatpush1.xpose.msra.mxu0 0.0
    %1660 = vmatprep.subr.mxu0 0.0
    %1661 = vmatpush1.xpose.msra.mxu0 0.0
    %1662 = vmatprep.subr.mxu0 0.0
    %1663 = vmatpush1.xpose.msra.mxu0 0.0
    %1664 = vmatprep.mubr.f32.mxu0 %v1101
    %1665 = vmatmul.mubr.f32.gmra.mrb[0].mxu0 %v102
    %v1666 = vpop.f32.mrb[0].mxu0
    %v1667 = vadd.f32 %v1597, %v1666
    %v1668 = vpop.f32.mrb[0].mxu0
    %1669 = vdwg.mxu0
    %v1670 = vmul.f32 %v1667, 0.015625
    %v1671 = vld [vmem:[%s2] sm:$0xff]
    %v1672 = vld [vmem:[%s2 + $0x8] sm:$0xff]
    %v1673 = vld [vmem:[%s2 + $0x10] sm:$0xff]
    %v1674 = vld [vmem:[%s2 + $0x18] sm:$0xff]
    %v1675 = vld [vmem:[%s2 + $0x20] sm:$0xff]
    %v1676 = vld [vmem:[%s2 + $0x28] sm:$0xff]
    %v1677 = vld [vmem:[%s2 + $0x30] sm:$0xff]
    %v1678 = vld [vmem:[%s2 + $0x38] sm:$0xff]
    %vm1679 = vcmask 523264
    %v1681 = vsel %vm1679, %v1085, 0
    %1683 = vmatprep.subr.mxu0 0.0
    %1684 = vmatpush1.msra.mxu0 %v1671
    %1685 = vmatprep.subr.mxu0 0.0
    %1686 = vmatpush1.msra.mxu0 %v1672
    %1687 = vmatprep.subr.mxu0 0.0
    %1688 = vmatpush1.msra.mxu0 %v1673
    %1689 = vmatprep.subr.mxu0 0.0
    %1690 = vmatpush1.msra.mxu0 %v1674
    %1691 = vmatprep.subr.mxu0 0.0
    %1692 = vmatpush1.msra.mxu0 %v1675
    %1693 = vmatprep.subr.mxu0 0.0
    %1694 = vmatpush1.msra.mxu0 %v1676
    %1695 = vmatprep.subr.mxu0 0.0
    %1696 = vmatpush1.msra.mxu0 %v1677
    %1697 = vmatprep.subr.mxu0 0.0
    %1698 = vmatpush1.msra.mxu0 %v1678
    %1699 = vmatprep.subr.mxu0 0.0
    %1700 = vmatpush1.msra.mxu0 0.0
    %1701 = vmatprep.subr.mxu0 0.0
    %1702 = vmatpush1.msra.mxu0 0.0
    %1703 = vmatprep.subr.mxu0 0.0
    %1704 = vmatpush1.msra.mxu0 0.0
    %1705 = vmatprep.subr.mxu0 0.0
    %1706 = vmatpush1.msra.mxu0 0.0
    %1707 = vmatprep.subr.mxu0 0.0
    %1708 = vmatpush1.msra.mxu0 0.0
    %1709 = vmatprep.subr.mxu0 0.0
    %1710 = vmatpush1.msra.mxu0 0.0
    %1711 = vmatprep.subr.mxu0 0.0
    %1712 = vmatpush1.msra.mxu0 0.0
    %1713 = vmatprep.subr.mxu0 0.0
    %1714 = vmatpush1.msra.mxu0 0.0
    %1715 = vmatprep.subr.mxu0 0.0
    %1716 = vmatpush1.msra.mxu0 0.0
    %1717 = vmatprep.subr.mxu0 0.0
    %1718 = vmatpush1.msra.mxu0 0.0
    %1719 = vmatprep.subr.mxu0 0.0
    %1720 = vmatpush1.msra.mxu0 0.0
    %1721 = vmatprep.subr.mxu0 0.0
    %1722 = vmatpush1.msra.mxu0 0.0
    %1723 = vmatprep.subr.mxu0 0.0
    %1724 = vmatpush1.msra.mxu0 0.0
    %1725 = vmatprep.subr.mxu0 0.0
    %1726 = vmatpush1.msra.mxu0 0.0
    %1727 = vmatprep.subr.mxu0 0.0
    %1728 = vmatpush1.msra.mxu0 0.0
    %1729 = vmatprep.subr.mxu0 0.0
    %1730 = vmatpush1.msra.mxu0 0.0
    %1731 = vmatprep.subr.mxu0 0.0
    %1732 = vmatpush1.msra.mxu0 0.0
    %1733 = vmatprep.subr.mxu0 0.0
    %1734 = vmatpush1.msra.mxu0 0.0
    %1735 = vmatprep.subr.mxu0 0.0
    %1736 = vmatpush1.msra.mxu0 0.0
    %1737 = vmatprep.subr.mxu0 0.0
    %1738 = vmatpush1.msra.mxu0 0.0
    %1739 = vmatprep.subr.mxu0 0.0
    %1740 = vmatpush1.msra.mxu0 0.0
    %1741 = vmatprep.subr.mxu0 0.0
    %1742 = vmatpush1.msra.mxu0 0.0
    %1743 = vmatprep.subr.mxu0 0.0
    %1744 = vmatpush1.msra.mxu0 0.0
    %1745 = vmatprep.subr.mxu0 0.0
    %1746 = vmatpush1.msra.mxu0 0.0
    %1747 = vmatprep.mubr.f32.mxu0 0.0
    %1748 = vmatmul.mubr.f32.gmra.mrb[0].mxu0 %v1681
    %v1749 = vpop.f32.mrb[0].mxu0
    %v1750 = vadd.f32 0.0, %v1749
    %v1751 = vpop.f32.mrb[0].mxu0
    %1752 = vdwg.mxu0
    %v1753 = vmax.f32 %v1750, 0.0
    %v1754 = vld [vmem:[%s3] sm:$0xf]
    %vm1755 = vcmask 31744
    %v1757 = vsel %vm1755, %v1753, 0
    %vm1759 = vcmask 1043456
    %v1761 = vsel %vm1759, %v1754, 0
    %1763 = vmatprep.subr.mxu0 0.0
    %1764 = vmatpush1.msra.mxu0 %v1761
    %1765 = vmatprep.subr.mxu0 0.0
    %1766 = vmatpush1.msra.mxu0 0.0
    %1767 = vmatprep.subr.mxu0 0.0
    %1768 = vmatpush1.msra.mxu0 0.0
    %1769 = vmatprep.subr.mxu0 0.0
    %1770 = vmatpush1.msra.mxu0 0.0
    %1771 = vmatprep.subr.mxu0 0.0
    %1772 = vmatpush1.msra.mxu0 0.0
    %1773 = vmatprep.subr.mxu0 0.0
    %1774 = vmatpush1.msra.mxu0 0.0
    %1775 = vmatprep.subr.mxu0 0.0
    %1776 = vmatpush1.msra.mxu0 0.0
    %1777 = vmatprep.subr.mxu0 0.0
    %1778 = vmatpush1.msra.mxu0 0.0
    %1779 = vmatprep.subr.mxu0 0.0
    %1780 = vmatpush1.msra.mxu0 0.0
    %1781 = vmatprep.subr.mxu0 0.0
    %1782 = vmatpush1.msra.mxu0 0.0
    %1783 = vmatprep.subr.mxu0 0.0
    %1784 = vmatpush1.msra.mxu0 0.0
    %1785 = vmatprep.subr.mxu0 0.0
    %1786 = vmatpush1.msra.mxu0 0.0
    %1787 = vmatprep.subr.mxu0 0.0
    %1788 = vmatpush1.msra.mxu0 0.0
    %1789 = vmatprep.subr.mxu0 0.0
    %1790 = vmatpush1.msra.mxu0 0.0
    %1791 = vmatprep.subr.mxu0 0.0
    %1792 = vmatpush1.msra.mxu0 0.0
    %1793 = vmatprep.subr.mxu0 0.0
    %1794 = vmatpush1.msra.mxu0 0.0
    %1795 = vmatprep.subr.mxu0 0.0
    %1796 = vmatpush1.msra.mxu0 0.0
    %1797 = vmatprep.subr.mxu0 0.0
    %1798 = vmatpush1.msra.mxu0 0.0
    %1799 = vmatprep.subr.mxu0 0.0
    %1800 = vmatpush1.msra.mxu0 0.0
    %1801 = vmatprep.subr.mxu0 0.0
    %1802 = vmatpush1.msra.mxu0 0.0
    %1803 = vmatprep.subr.mxu0 0.0
    %1804 = vmatpush1.msra.mxu0 0.0
    %1805 = vmatprep.subr.mxu0 0.0
    %1806 = vmatpush1.msra.mxu0 0.0
    %1807 = vmatprep.subr.mxu0 0.0
    %1808 = vmatpush1.msra.mxu0 0.0
    %1809 = vmatprep.subr.mxu0 0.0
    %1810 = vmatpush1.msra.mxu0 0.0
    %1811 = vmatprep.subr.mxu0 0.0
    %1812 = vmatpush1.msra.mxu0 0.0
    %1813 = vmatprep.subr.mxu0 0.0
    %1814 = vmatpush1.msra.mxu0 0.0
    %1815 = vmatprep.subr.mxu0 0.0
    %1816 = vmatpush1.msra.mxu0 0.0
    %1817 = vmatprep.subr.mxu0 0.0
    %1818 = vmatpush1.msra.mxu0 0.0
    %1819 = vmatprep.subr.mxu0 0.0
    %1820 = vmatpush1.msra.mxu0 0.0
    %1821 = vmatprep.subr.mxu0 0.0
    %1822 = vmatpush1.msra.mxu0 0.0
    %1823 = vmatprep.subr.mxu0 0.0
    %1824 = vmatpush1.msra.mxu0 0.0
    %1825 = vmatprep.subr.mxu0 0.0
    %1826 = vmatpush1.msra.mxu0 0.0
    %1827 = vmatprep.mubr.f32.mxu0 0.0
    %1828 = vmatmul.mubr.f32.gmra.mrb[0].mxu0 %v1757
    %v1829 = vpop.f32.mrb[0].mxu0
    %v1830 = vadd.f32 0.0, %v1829
    %v1831 = vpop.f32.mrb[0].mxu0
    %1832 = vdwg.mxu0
    %v1833 = vxor.u32 %v1830, 2147483648
    %v1834 = vmul.f32 %v1833, 1.442695
    %v1835 = vpow.pop %v1834
    %v1836 = vadd.f32 %v1835, 1.0
    %v1837 = vrcp.pop %v1836
    %v1838 = vmul.f32 1.0, %v1837
    %v1840 = vsel %vm1679, %v1838, 0
    %1842 = vmatprep.subr.mxu0 %v394
    %1843 = vmatpush1.msra.mxu0 %v393
    %1844 = vmatprep.subr.mxu0 %v402
    %1845 = vmatpush1.msra.mxu0 %v401
    %1846 = vmatprep.subr.mxu0 %v410
    %1847 = vmatpush1.msra.mxu0 %v409
    %1848 = vmatprep.subr.mxu0 %v418
    %1849 = vmatpush1.msra.mxu0 %v417
    %1850 = vmatprep.subr.mxu0 %v426
    %1851 = vmatpush1.msra.mxu0 %v425
    %1852 = vmatprep.subr.mxu0 %v434
    %1853 = vmatpush1.msra.mxu0 %v433
    %1854 = vmatprep.subr.mxu0 %v442
    %1855 = vmatpush1.msra.mxu0 %v441
    %1856 = vmatprep.subr.mxu0 %v450
    %1857 = vmatpush1.msra.mxu0 %v449
    %1858 = vmatprep.subr.mxu0 0.0
    %1859 = vmatpush1.msra.mxu0 0.0
    %1860 = vmatprep.subr.mxu0 0.0
    %1861 = vmatpush1.msra.mxu0 0.0
    %1862 = vmatprep.subr.mxu0 0.0
    %1863 = vmatpush1.msra.mxu0 0.0
    %1864 = vmatprep.subr.mxu0 0.0
    %1865 = vmatpush1.msra.mxu0 0.0
    %1866 = vmatprep.subr.mxu0 0.0
    %1867 = vmatpush1.msra.mxu0 0.0
    %1868 = vmatprep.subr.mxu0 0.0
    %1869 = vmatpush1.msra.mxu0 0.0
    %1870 = vmatprep.subr.mxu0 0.0
    %1871 = vmatpush1.msra.mxu0 0.0
    %1872 = vmatprep.subr.mxu0 0.0
    %1873 = vmatpush1.msra.mxu0 0.0
    %1874 = vmatprep.subr.mxu0 0.0
    %1875 = vmatpush1.msra.mxu0 0.0
    %1876 = vmatprep.subr.mxu0 0.0
    %1877 = vmatpush1.msra.mxu0 0.0
    %1878 = vmatprep.subr.mxu0 0.0
    %1879 = vmatpush1.msra.mxu0 0.0
    %1880 = vmatprep.subr.mxu0 0.0
    %1881 = vmatpush1.msra.mxu0 0.0
    %1882 = vmatprep.subr.mxu0 0.0
    %1883 = vmatpush1.msra.mxu0 0.0
    %1884 = vmatprep.subr.mxu0 0.0
    %1885 = vmatpush1.msra.mxu0 0.0
    %1886 = vmatprep.subr.mxu0 0.0
    %1887 = vmatpush1.msra.mxu0 0.0
    %1888 = vmatprep.subr.mxu0 0.0
    %1889 = vmatpush1.msra.mxu0 0.0
    %1890 = vmatprep.subr.mxu0 0.0
    %1891 = vmatpush1.msra.mxu0 0.0
    %1892 = vmatprep.subr.mxu0 0.0
    %1893 = vmatpush1.msra.mxu0 0.0
    %1894 = vmatprep.subr.mxu0 0.0
    %1895 = vmatpush1.msra.mxu0 0.0
    %1896 = vmatprep.subr.mxu0 0.0
    %1897 = vmatpush1.msra.mxu0 0.0
    %1898 = vmatprep.subr.mxu0 0.0
    %1899 = vmatpush1.msra.mxu0 0.0
    %1900 = vmatprep.subr.mxu0 0.0
    %1901 = vmatpush1.msra.mxu0 0.0
    %1902 = vmatprep.subr.mxu0 0.0
    %1903 = vmatpush1.msra.mxu0 0.0
    %1904 = vmatprep.subr.mxu0 0.0
    %1905 = vmatpush1.msra.mxu0 0.0
    %1906 = vmatprep.mubr.f32.mxu0 0.0
    %1907 = vmatmul.mubr.f32.gmra.mrb[0].mxu0 %v1840
    %v1908 = vpop.f32.mrb[0].mxu0
    %v1909 = vadd.f32 0.0, %v1908
    %v1910 = vpop.f32.mrb[0].mxu0
    %v1911 = vadd.f32 0.0, %v1910
    %1912 = vdwg.mxu0
    %1913 = vmatprep.subr.mxu0 %v396
    %1914 = vmatpush1.msra.mxu0 %v395
    %1915 = vmatprep.subr.mxu0 %v404
    %1916 = vmatpush1.msra.mxu0 %v403
    %1917 = vmatprep.subr.mxu0 %v412
    %1918 = vmatpush1.msra.mxu0 %v411
    %1919 = vmatprep.subr.mxu0 %v420
    %1920 = vmatpush1.msra.mxu0 %v419
    %1921 = vmatprep.subr.mxu0 %v428
    %1922 = vmatpush1.msra.mxu0 %v427
    %1923 = vmatprep.subr.mxu0 %v436
    %1924 = vmatpush1.msra.mxu0 %v435
    %1925 = vmatprep.subr.mxu0 %v444
    %1926 = vmatpush1.msra.mxu0 %v443
    %1927 = vmatprep.subr.mxu0 %v452
    %1928 = vmatpush1.msra.mxu0 %v451
    %1929 = vmatprep.subr.mxu0 0.0
    %1930 = vmatpush1.msra.mxu0 0.0
    %1931 = vmatprep.subr.mxu0 0.0
    %1932 = vmatpush1.msra.mxu0 0.0
    %1933 = vmatprep.subr.mxu0 0.0
    %1934 = vmatpush1.msra.mxu0 0.0
    %1935 = vmatprep.subr.mxu0 0.0
    %1936 = vmatpush1.msra.mxu0 0.0
    %1937 = vmatprep.subr.mxu0 0.0
    %1938 = vmatpush1.msra.mxu0 0.0
    %1939 = vmatprep.subr.mxu0 0.0
    %1940 = vmatpush1.msra.mxu0 0.0
    %1941 = vmatprep.subr.mxu0 0.0
    %1942 = vmatpush1.msra.mxu0 0.0
    %1943 = vmatprep.subr.mxu0 0.0
    %1944 = vmatpush1.msra.mxu0 0.0
    %1945 = vmatprep.subr.mxu0 0.0
    %1946 = vmatpush1.msra.mxu0 0.0
    %1947 = vmatprep.subr.mxu0 0.0
    %1948 = vmatpush1.msra.mxu0 0.0
    %1949 = vmatprep.subr.mxu0 0.0
    %1950 = vmatpush1.msra.mxu0 0.0
    %1951 = vmatprep.subr.mxu0 0.0
    %1952 = vmatpush1.msra.mxu0 0.0
    %1953 = vmatprep.subr.mxu0 0.0
    %1954 = vmatpush1.msra.mxu0 0.0
    %1955 = vmatprep.subr.mxu0 0.0
    %1956 = vmatpush1.msra.mxu0 0.0
    %1957 = vmatprep.subr.mxu0 0.0
    %1958 = vmatpush1.msra.mxu0 0.0
    %1959 = vmatprep.subr.mxu0 0.0
    %1960 = vmatpush1.msra.mxu0 0.0
    %1961 = vmatprep.subr.mxu0 0.0
    %1962 = vmatpush1.msra.mxu0 0.0
    %1963 = vmatprep.subr.mxu0 0.0
    %1964 = vmatpush1.msra.mxu0 0.0
    %1965 = vmatprep.subr.mxu0 0.0
    %1966 = vmatpush1.msra.mxu0 0.0
    %1967 = vmatprep.subr.mxu0 0.0
    %1968 = vmatpush1.msra.mxu0 0.0
    %1969 = vmatprep.subr.mxu0 0.0
    %1970 = vmatpush1.msra.mxu0 0.0
    %1971 = vmatprep.subr.mxu0 0.0
    %1972 = vmatpush1.msra.mxu0 0.0
    %1973 = vmatprep.subr.mxu0 0.0
    %1974 = vmatpush1.msra.mxu0 0.0
    %1975 = vmatprep.subr.mxu0 0.0
    %1976 = vmatpush1.msra.mxu0 0.0
    %1977 = vmatprep.mubr.f32.mxu0 0.0
    %1978 = vmatmul.mubr.f32.gmra.mrb[0].mxu0 %v1840
    %v1979 = vpop.f32.mrb[0].mxu0
    %v1980 = vadd.f32 0.0, %v1979
    %v1981 = vpop.f32.mrb[0].mxu0
    %v1982 = vadd.f32 0.0, %v1981
    %1983 = vdwg.mxu0
    %1984 = vmatprep.subr.mxu0 %v398
    %1985 = vmatpush1.msra.mxu0 %v397
    %1986 = vmatprep.subr.mxu0 %v406
    %1987 = vmatpush1.msra.mxu0 %v405
    %1988 = vmatprep.subr.mxu0 %v414
    %1989 = vmatpush1.msra.mxu0 %v413
    %1990 = vmatprep.subr.mxu0 %v422
    %1991 = vmatpush1.msra.mxu0 %v421
    %1992 = vmatprep.subr.mxu0 %v430
    %1993 = vmatpush1.msra.mxu0 %v429
    %1994 = vmatprep.subr.mxu0 %v438
    %1995 = vmatpush1.msra.mxu0 %v437
    %1996 = vmatprep.subr.mxu0 %v446
    %1997 = vmatpush1.msra.mxu0 %v445
    %1998 = vmatprep.subr.mxu0 %v454
    %1999 = vmatpush1.msra.mxu0 %v453
    %2000 = vmatprep.subr.mxu0 0.0
    %2001 = vmatpush1.msra.mxu0 0.0
    %2002 = vmatprep.subr.mxu0 0.0
    %2003 = vmatpush1.msra.mxu0 0.0
    %2004 = vmatprep.subr.mxu0 0.0
    %2005 = vmatpush1.msra.mxu0 0.0
    %2006 = vmatprep.subr.mxu0 0.0
    %2007 = vmatpush1.msra.mxu0 0.0
    %2008 = vmatprep.subr.mxu0 0.0
    %2009 = vmatpush1.msra.mxu0 0.0
    %2010 = vmatprep.subr.mxu0 0.0
    %2011 = vmatpush1.msra.mxu0 0.0
    %2012 = vmatprep.subr.mxu0 0.0
    %2013 = vmatpush1.msra.mxu0 0.0
    %2014 = vmatprep.subr.mxu0 0.0
    %2015 = vmatpush1.msra.mxu0 0.0
    %2016 = vmatprep.subr.mxu0 0.0
    %2017 = vmatpush1.msra.mxu0 0.0
    %2018 = vmatprep.subr.mxu0 0.0
    %2019 = vmatpush1.msra.mxu0 0.0
    %2020 = vmatprep.subr.mxu0 0.0
    %2021 = vmatpush1.msra.mxu0 0.0
    %2022 = vmatprep.subr.mxu0 0.0
    %2023 = vmatpush1.msra.mxu0 0.0
    %2024 = vmatprep.subr.mxu0 0.0
    %2025 = vmatpush1.msra.mxu0 0.0
    %2026 = vmatprep.subr.mxu0 0.0
    %2027 = vmatpush1.msra.mxu0 0.0
    %2028 = vmatprep.subr.mxu0 0.0
    %2029 = vmatpush1.msra.mxu0 0.0
    %2030 = vmatprep.subr.mxu0 0.0
    %2031 = vmatpush1.msra.mxu0 0.0
    %2032 = vmatprep.subr.mxu0 0.0
    %2033 = vmatpush1.msra.mxu0 0.0
    %2034 = vmatprep.subr.mxu0 0.0
    %2035 = vmatpush1.msra.mxu0 0.0
    %2036 = vmatprep.subr.mxu0 0.0
    %2037 = vmatpush1.msra.mxu0 0.0
    %2038 = vmatprep.subr.mxu0 0.0
    %2039 = vmatpush1.msra.mxu0 0.0
    %2040 = vmatprep.subr.mxu0 0.0
    %2041 = vmatpush1.msra.mxu0 0.0
    %2042 = vmatprep.subr.mxu0 0.0
    %2043 = vmatpush1.msra.mxu0 0.0
    %2044 = vmatprep.subr.mxu0 0.0
    %2045 = vmatpush1.msra.mxu0 0.0
    %2046 = vmatprep.subr.mxu0 0.0
    %2047 = vmatpush1.msra.mxu0 0.0
    %2048 = vmatprep.mubr.f32.mxu0 0.0
    %2049 = vmatmul.mubr.f32.gmra.mrb[0].mxu0 %v1840
    %v2050 = vpop.f32.mrb[0].mxu0
    %v2051 = vadd.f32 0.0, %v2050
    %v2052 = vpop.f32.mrb[0].mxu0
    %v2053 = vadd.f32 0.0, %v2052
    %2054 = vdwg.mxu0
    %2055 = vmatprep.subr.mxu0 %v400
    %2056 = vmatpush1.msra.mxu0 %v399
    %2057 = vmatprep.subr.mxu0 %v408
    %2058 = vmatpush1.msra.mxu0 %v407
    %2059 = vmatprep.subr.mxu0 %v416
    %2060 = vmatpush1.msra.mxu0 %v415
    %2061 = vmatprep.subr.mxu0 %v424
    %2062 = vmatpush1.msra.mxu0 %v423
    %2063 = vmatprep.subr.mxu0 %v432
    %2064 = vmatpush1.msra.mxu0 %v431
    %2065 = vmatprep.subr.mxu0 %v440
    %2066 = vmatpush1.msra.mxu0 %v439
    %2067 = vmatprep.subr.mxu0 %v448
    %2068 = vmatpush1.msra.mxu0 %v447
    %2069 = vmatprep.subr.mxu0 %v456
    %2070 = vmatpush1.msra.mxu0 %v455
    %2071 = vmatprep.subr.mxu0 0.0
    %2072 = vmatpush1.msra.mxu0 0.0
    %2073 = vmatprep.subr.mxu0 0.0
    %2074 = vmatpush1.msra.mxu0 0.0
    %2075 = vmatprep.subr.mxu0 0.0
    %2076 = vmatpush1.msra.mxu0 0.0
    %2077 = vmatprep.subr.mxu0 0.0
    %2078 = vmatpush1.msra.mxu0 0.0
    %2079 = vmatprep.subr.mxu0 0.0
    %2080 = vmatpush1.msra.mxu0 0.0
    %2081 = vmatprep.subr.mxu0 0.0
    %2082 = vmatpush1.msra.mxu0 0.0
    %2083 = vmatprep.subr.mxu0 0.0
    %2084 = vmatpush1.msra.mxu0 0.0
    %2085 = vmatprep.subr.mxu0 0.0
    %2086 = vmatpush1.msra.mxu0 0.0
    %2087 = vmatprep.subr.mxu0 0.0
    %2088 = vmatpush1.msra.mxu0 0.0
    %2089 = vmatprep.subr.mxu0 0.0
    %2090 = vmatpush1.msra.mxu0 0.0
    %2091 = vmatprep.subr.mxu0 0.0
    %2092 = vmatpush1.msra.mxu0 0.0
    %2093 = vmatprep.subr.mxu0 0.0
    %2094 = vmatpush1.msra.mxu0 0.0
    %2095 = vmatprep.subr.mxu0 0.0
    %2096 = vmatpush1.msra.mxu0 0.0
    %2097 = vmatprep.subr.mxu0 0.0
    %2098 = vmatpush1.msra.mxu0 0.0
    %2099 = vmatprep.subr.mxu0 0.0
    %2100 = vmatpush1.msra.mxu0 0.0
    %2101 = vmatprep.subr.mxu0 0.0
    %2102 = vmatpush1.msra.mxu0 0.0
    %2103 = vmatprep.subr.mxu0 0.0
    %2104 = vmatpush1.msra.mxu0 0.0
    %2105 = vmatprep.subr.mxu0 0.0
    %2106 = vmatpush1.msra.mxu0 0.0
    %2107 = vmatprep.subr.mxu0 0.0
    %2108 = vmatpush1.msra.mxu0 0.0
    %2109 = vmatprep.subr.mxu0 0.0
    %2110 = vmatpush1.msra.mxu0 0.0
    %2111 = vmatprep.subr.mxu0 0.0
    %2112 = vmatpush1.msra.mxu0 0.0
    %2113 = vmatprep.subr.mxu0 0.0
    %2114 = vmatpush1.msra.mxu0 0.0
    %2115 = vmatprep.subr.mxu0 0.0
    %2116 = vmatpush1.msra.mxu0 0.0
    %2117 = vmatprep.subr.mxu0 0.0
    %2118 = vmatpush1.msra.mxu0 0.0
    %2119 = vmatprep.mubr.f32.mxu0 0.0
    %2120 = vmatmul.mubr.f32.gmra.mrb[0].mxu0 %v1840
    %v2121 = vpop.f32.mrb[0].mxu0
    %v2122 = vadd.f32 0.0, %v2121
    %v2123 = vpop.f32.mrb[0].mxu0
    %v2124 = vadd.f32 0.0, %v2123
    %2125 = vdwg.mxu0
    %v2134 = vcombine.low %v1909, %v1911
    %v2135 = vcombine.low %v1980, %v1982
    %v2136 = vcombine.low %v2051, %v2053
    %v2137 = vcombine.low %v2122, %v2124
    %v2142 = vmul.f32 %v91, %v2134
    %v2143 = vmul.f32 %v92, %v2135
    %v2144 = vmul.f32 %v93, %v2136
    %v2145 = vmul.f32 %v94, %v2137
    %v2146 = vld [vmem:[%s10] sm:$0xff]
    %v2147 = vld [vmem:[%s10 + $0x8] sm:$0xff]
    %v2148 = vld [vmem:[%s10 + $0x10] sm:$0xff]
    %v2149 = vld [vmem:[%s10 + $0x18] sm:$0xff]
    %v2150 = vld [vmem:[%s10 + $0x20] sm:$0xff]
    %v2151 = vld [vmem:[%s10 + $0x28] sm:$0xff]
    %v2152 = vld [vmem:[%s10 + $0x30] sm:$0xff]
    %v2153 = vld [vmem:[%s10 + $0x38] sm:$0xff]
    %v2154 = vld [vmem:[%s10 + $0x40] sm:$0xff]
    %v2155 = vld [vmem:[%s10 + $0x48] sm:$0xff]
    %v2156 = vld [vmem:[%s10 + $0x50] sm:$0xff]
    %v2157 = vld [vmem:[%s10 + $0x58] sm:$0xff]
    %v2158 = vld [vmem:[%s10 + $0x60] sm:$0xff]
    %v2159 = vld [vmem:[%s10 + $0x68] sm:$0xff]
    %v2160 = vld [vmem:[%s10 + $0x70] sm:$0xff]
    %v2161 = vld [vmem:[%s10 + $0x78] sm:$0xff]
    %v2162 = vld [vmem:[%s10 + $0x80] sm:$0xff]
    %v2163 = vld [vmem:[%s10 + $0x88] sm:$0xff]
    %v2164 = vld [vmem:[%s10 + $0x90] sm:$0xff]
    %v2165 = vld [vmem:[%s10 + $0x98] sm:$0xff]
    %v2166 = vld [vmem:[%s10 + $0xa0] sm:$0xff]
    %v2167 = vld [vmem:[%s10 + $0xa8] sm:$0xff]
    %v2168 = vld [vmem:[%s10 + $0xb0] sm:$0xff]
    %v2169 = vld [vmem:[%s10 + $0xb8] sm:$0xff]
    %v2170 = vld [vmem:[%s10 + $0xc0] sm:$0xff]
    %v2171 = vld [vmem:[%s10 + $0xc8] sm:$0xff]
    %v2172 = vld [vmem:[%s10 + $0xd0] sm:$0xff]
    %v2173 = vld [vmem:[%s10 + $0xd8] sm:$0xff]
    %v2174 = vld [vmem:[%s10 + $0xe0] sm:$0xff]
    %v2175 = vld [vmem:[%s10 + $0xe8] sm:$0xff]
    %v2176 = vld [vmem:[%s10 + $0xf0] sm:$0xff]
    %v2177 = vld [vmem:[%s10 + $0xf8] sm:$0xff]
    %v2178 = vld [vmem:[%s10 + $0x100] sm:$0xff]
    %v2179 = vld [vmem:[%s10 + $0x108] sm:$0xff]
    %v2180 = vld [vmem:[%s10 + $0x110] sm:$0xff]
    %v2181 = vld [vmem:[%s10 + $0x118] sm:$0xff]
    %v2182 = vld [vmem:[%s10 + $0x120] sm:$0xff]
    %v2183 = vld [vmem:[%s10 + $0x128] sm:$0xff]
    %v2184 = vld [vmem:[%s10 + $0x130] sm:$0xff]
    %v2185 = vld [vmem:[%s10 + $0x138] sm:$0xff]
    %v2186 = vld [vmem:[%s10 + $0x140] sm:$0xff]
    %v2187 = vld [vmem:[%s10 + $0x148] sm:$0xff]
    %v2188 = vld [vmem:[%s10 + $0x150] sm:$0xff]
    %v2189 = vld [vmem:[%s10 + $0x158] sm:$0xff]
    %v2190 = vld [vmem:[%s10 + $0x160] sm:$0xff]
    %v2191 = vld [vmem:[%s10 + $0x168] sm:$0xff]
    %v2192 = vld [vmem:[%s10 + $0x170] sm:$0xff]
    %v2193 = vld [vmem:[%s10 + $0x178] sm:$0xff]
    %v2194 = vld [vmem:[%s10 + $0x180] sm:$0xff]
    %v2195 = vld [vmem:[%s10 + $0x188] sm:$0xff]
    %v2196 = vld [vmem:[%s10 + $0x190] sm:$0xff]
    %v2197 = vld [vmem:[%s10 + $0x198] sm:$0xff]
    %v2198 = vld [vmem:[%s10 + $0x1a0] sm:$0xff]
    %v2199 = vld [vmem:[%s10 + $0x1a8] sm:$0xff]
    %v2200 = vld [vmem:[%s10 + $0x1b0] sm:$0xff]
    %v2201 = vld [vmem:[%s10 + $0x1b8] sm:$0xff]
    %v2202 = vld [vmem:[%s10 + $0x1c0] sm:$0xff]
    %v2203 = vld [vmem:[%s10 + $0x1c8] sm:$0xff]
    %v2204 = vld [vmem:[%s10 + $0x1d0] sm:$0xff]
    %v2205 = vld [vmem:[%s10 + $0x1d8] sm:$0xff]
    %v2206 = vld [vmem:[%s10 + $0x1e0] sm:$0xff]
    %v2207 = vld [vmem:[%s10 + $0x1e8] sm:$0xff]
    %v2208 = vld [vmem:[%s10 + $0x1f0] sm:$0xff]
    %v2209 = vld [vmem:[%s10 + $0x1f8] sm:$0xff]
    %v2210 = vld [vmem:[%s10 + $0x200] sm:$0xff]
    %v2211 = vld [vmem:[%s10 + $0x208] sm:$0xff]
    %v2212 = vld [vmem:[%s10 + $0x210] sm:$0xff]
    %v2213 = vld [vmem:[%s10 + $0x218] sm:$0xff]
    %v2214 = vld [vmem:[%s10 + $0x220] sm:$0xff]
    %v2215 = vld [vmem:[%s10 + $0x228] sm:$0xff]
    %v2216 = vld [vmem:[%s10 + $0x230] sm:$0xff]
    %v2217 = vld [vmem:[%s10 + $0x238] sm:$0xff]
    %v2218 = vld [vmem:[%s10 + $0x240] sm:$0xff]
    %v2219 = vld [vmem:[%s10 + $0x248] sm:$0xff]
    %v2220 = vld [vmem:[%s10 + $0x250] sm:$0xff]
    %v2221 = vld [vmem:[%s10 + $0x258] sm:$0xff]
    %v2222 = vld [vmem:[%s10 + $0x260] sm:$0xff]
    %v2223 = vld [vmem:[%s10 + $0x268] sm:$0xff]
    %v2224 = vld [vmem:[%s10 + $0x270] sm:$0xff]
    %v2225 = vld [vmem:[%s10 + $0x278] sm:$0xff]
    %v2226 = vld [vmem:[%s10 + $0x280] sm:$0xff]
    %v2227 = vld [vmem:[%s10 + $0x288] sm:$0xff]
    %v2228 = vld [vmem:[%s10 + $0x290] sm:$0xff]
    %v2229 = vld [vmem:[%s10 + $0x298] sm:$0xff]
    %v2230 = vld [vmem:[%s10 + $0x2a0] sm:$0xff]
    %v2231 = vld [vmem:[%s10 + $0x2a8] sm:$0xff]
    %v2232 = vld [vmem:[%s10 + $0x2b0] sm:$0xff]
    %v2233 = vld [vmem:[%s10 + $0x2b8] sm:$0xff]
    %v2234 = vld [vmem:[%s10 + $0x2c0] sm:$0xff]
    %v2235 = vld [vmem:[%s10 + $0x2c8] sm:$0xff]
    %v2236 = vld [vmem:[%s10 + $0x2d0] sm:$0xff]
    %v2237 = vld [vmem:[%s10 + $0x2d8] sm:$0xff]
    %v2238 = vld [vmem:[%s10 + $0x2e0] sm:$0xff]
    %v2239 = vld [vmem:[%s10 + $0x2e8] sm:$0xff]
    %v2240 = vld [vmem:[%s10 + $0x2f0] sm:$0xff]
    %v2241 = vld [vmem:[%s10 + $0x2f8] sm:$0xff]
    %v2242 = vld [vmem:[%s10 + $0x300] sm:$0xff]
    %v2243 = vld [vmem:[%s10 + $0x308] sm:$0xff]
    %v2244 = vld [vmem:[%s10 + $0x310] sm:$0xff]
    %v2245 = vld [vmem:[%s10 + $0x318] sm:$0xff]
    %v2246 = vld [vmem:[%s10 + $0x320] sm:$0xff]
    %v2247 = vld [vmem:[%s10 + $0x328] sm:$0xff]
    %v2248 = vld [vmem:[%s10 + $0x330] sm:$0xff]
    %v2249 = vld [vmem:[%s10 + $0x338] sm:$0xff]
    %v2250 = vld [vmem:[%s10 + $0x340] sm:$0xff]
    %v2251 = vld [vmem:[%s10 + $0x348] sm:$0xff]
    %v2252 = vld [vmem:[%s10 + $0x350] sm:$0xff]
    %v2253 = vld [vmem:[%s10 + $0x358] sm:$0xff]
    %v2254 = vld [vmem:[%s10 + $0x360] sm:$0xff]
    %v2255 = vld [vmem:[%s10 + $0x368] sm:$0xff]
    %v2256 = vld [vmem:[%s10 + $0x370] sm:$0xff]
    %v2257 = vld [vmem:[%s10 + $0x378] sm:$0xff]
    %v2258 = vld [vmem:[%s10 + $0x380] sm:$0xff]
    %v2259 = vld [vmem:[%s10 + $0x388] sm:$0xff]
    %v2260 = vld [vmem:[%s10 + $0x390] sm:$0xff]
    %v2261 = vld [vmem:[%s10 + $0x398] sm:$0xff]
    %v2262 = vld [vmem:[%s10 + $0x3a0] sm:$0xff]
    %v2263 = vld [vmem:[%s10 + $0x3a8] sm:$0xff]
    %v2264 = vld [vmem:[%s10 + $0x3b0] sm:$0xff]
    %v2265 = vld [vmem:[%s10 + $0x3b8] sm:$0xff]
    %v2266 = vld [vmem:[%s10 + $0x3c0] sm:$0xff]
    %v2267 = vld [vmem:[%s10 + $0x3c8] sm:$0xff]
    %v2268 = vld [vmem:[%s10 + $0x3d0] sm:$0xff]
    %v2269 = vld [vmem:[%s10 + $0x3d8] sm:$0xff]
    %v2270 = vld [vmem:[%s10 + $0x3e0] sm:$0xff]
    %v2271 = vld [vmem:[%s10 + $0x3e8] sm:$0xff]
    %v2272 = vld [vmem:[%s10 + $0x3f0] sm:$0xff]
    %v2273 = vld [vmem:[%s10 + $0x3f8] sm:$0xff]
    %v2274 = vld [vmem:[%s11] sm:$0x1]
    %v2276 = vlaneseq
    %v2277 = vshrl.u32 %v2276, 7
    %v2278 = vsub.s32 0, %v2277
    %v2279 = vrot.slane %v2274, %v2278
    %v2285 = vcombine.high %v2142, %v2142
    %v2286 = vcombine.high %v2143, %v2143
    %v2287 = vcombine.high %v2144, %v2144
    %v2288 = vcombine.high %v2145, %v2145
    %2293 = vmatprep.subr.mxu0 0.0
    %2294 = vmatpush1.msra.mxu0 %v2146
    %2295 = vmatprep.subr.mxu0 0.0
    %2296 = vmatpush1.msra.mxu0 %v2147
    %2297 = vmatprep.subr.mxu0 0.0
    %2298 = vmatpush1.msra.mxu0 %v2148
    %2299 = vmatprep.subr.mxu0 0.0
    %2300 = vmatpush1.msra.mxu0 %v2149
    %2301 = vmatprep.subr.mxu0 0.0
    %2302 = vmatpush1.msra.mxu0 %v2150
    %2303 = vmatprep.subr.mxu0 0.0
    %2304 = vmatpush1.msra.mxu0 %v2151
    %2305 = vmatprep.subr.mxu0 0.0
    %2306 = vmatpush1.msra.mxu0 %v2152
    %2307 = vmatprep.subr.mxu0 0.0
    %2308 = vmatpush1.msra.mxu0 %v2153
    %2309 = vmatprep.subr.mxu0 0.0
    %2310 = vmatpush1.msra.mxu0 %v2154
    %2311 = vmatprep.subr.mxu0 0.0
    %2312 = vmatpush1.msra.mxu0 %v2155
    %2313 = vmatprep.subr.mxu0 0.0
    %2314 = vmatpush1.msra.mxu0 %v2156
    %2315 = vmatprep.subr.mxu0 0.0
    %2316 = vmatpush1.msra.mxu0 %v2157
    %2317 = vmatprep.subr.mxu0 0.0
    %2318 = vmatpush1.msra.mxu0 %v2158
    %2319 = vmatprep.subr.mxu0 0.0
    %2320 = vmatpush1.msra.mxu0 %v2159
    %2321 = vmatprep.subr.mxu0 0.0
    %2322 = vmatpush1.msra.mxu0 %v2160
    %2323 = vmatprep.subr.mxu0 0.0
    %2324 = vmatpush1.msra.mxu0 %v2161
    %2325 = vmatprep.subr.mxu0 0.0
    %2326 = vmatpush1.msra.mxu0 %v2162
    %2327 = vmatprep.subr.mxu0 0.0
    %2328 = vmatpush1.msra.mxu0 %v2163
    %2329 = vmatprep.subr.mxu0 0.0
    %2330 = vmatpush1.msra.mxu0 %v2164
    %2331 = vmatprep.subr.mxu0 0.0
    %2332 = vmatpush1.msra.mxu0 %v2165
    %2333 = vmatprep.subr.mxu0 0.0
    %2334 = vmatpush1.msra.mxu0 %v2166
    %2335 = vmatprep.subr.mxu0 0.0
    %2336 = vmatpush1.msra.mxu0 %v2167
    %2337 = vmatprep.subr.mxu0 0.0
    %2338 = vmatpush1.msra.mxu0 %v2168
    %2339 = vmatprep.subr.mxu0 0.0
    %2340 = vmatpush1.msra.mxu0 %v2169
    %2341 = vmatprep.subr.mxu0 0.0
    %2342 = vmatpush1.msra.mxu0 %v2170
    %2343 = vmatprep.subr.mxu0 0.0
    %2344 = vmatpush1.msra.mxu0 %v2171
    %2345 = vmatprep.subr.mxu0 0.0
    %2346 = vmatpush1.msra.mxu0 %v2172
    %2347 = vmatprep.subr.mxu0 0.0
    %2348 = vmatpush1.msra.mxu0 %v2173
    %2349 = vmatprep.subr.mxu0 0.0
    %2350 = vmatpush1.msra.mxu0 %v2174
    %2351 = vmatprep.subr.mxu0 0.0
    %2352 = vmatpush1.msra.mxu0 %v2175
    %2353 = vmatprep.subr.mxu0 0.0
    %2354 = vmatpush1.msra.mxu0 %v2176
    %2355 = vmatprep.subr.mxu0 0.0
    %2356 = vmatpush1.msra.mxu0 %v2177
    %2357 = vmatprep.mubr.f32.mxu0 %v2285
    %2358 = vmatmul.mubr.f32.gmra.mrb[0].mxu0 %v2142
    %v2359 = vpop.f32.mrb[0].mxu0
    %v2360 = vadd.f32 %v2279, %v2359
    %v2361 = vpop.f32.mrb[0].mxu0
    %2362 = vdwg.mxu0
    %2363 = vmatprep.subr.mxu0 0.0
    %2364 = vmatpush1.msra.mxu0 %v2178
    %2365 = vmatprep.subr.mxu0 0.0
    %2366 = vmatpush1.msra.mxu0 %v2179
    %2367 = vmatprep.subr.mxu0 0.0
    %2368 = vmatpush1.msra.mxu0 %v2180
    %2369 = vmatprep.subr.mxu0 0.0
    %2370 = vmatpush1.msra.mxu0 %v2181
    %2371 = vmatprep.subr.mxu0 0.0
    %2372 = vmatpush1.msra.mxu0 %v2182
    %2373 = vmatprep.subr.mxu0 0.0
    %2374 = vmatpush1.msra.mxu0 %v2183
    %2375 = vmatprep.subr.mxu0 0.0
    %2376 = vmatpush1.msra.mxu0 %v2184
    %2377 = vmatprep.subr.mxu0 0.0
    %2378 = vmatpush1.msra.mxu0 %v2185
    %2379 = vmatprep.subr.mxu0 0.0
    %2380 = vmatpush1.msra.mxu0 %v2186
    %2381 = vmatprep.subr.mxu0 0.0
    %2382 = vmatpush1.msra.mxu0 %v2187
    %2383 = vmatprep.subr.mxu0 0.0
    %2384 = vmatpush1.msra.mxu0 %v2188
    %2385 = vmatprep.subr.mxu0 0.0
    %2386 = vmatpush1.msra.mxu0 %v2189
    %2387 = vmatprep.subr.mxu0 0.0
    %2388 = vmatpush1.msra.mxu0 %v2190
    %2389 = vmatprep.subr.mxu0 0.0
    %2390 = vmatpush1.msra.mxu0 %v2191
    %2391 = vmatprep.subr.mxu0 0.0
    %2392 = vmatpush1.msra.mxu0 %v2192
    %2393 = vmatprep.subr.mxu0 0.0
    %2394 = vmatpush1.msra.mxu0 %v2193
    %2395 = vmatprep.subr.mxu0 0.0
    %2396 = vmatpush1.msra.mxu0 %v2194
    %2397 = vmatprep.subr.mxu0 0.0
    %2398 = vmatpush1.msra.mxu0 %v2195
    %2399 = vmatprep.subr.mxu0 0.0
    %2400 = vmatpush1.msra.mxu0 %v2196
    %2401 = vmatprep.subr.mxu0 0.0
    %2402 = vmatpush1.msra.mxu0 %v2197
    %2403 = vmatprep.subr.mxu0 0.0
    %2404 = vmatpush1.msra.mxu0 %v2198
    %2405 = vmatprep.subr.mxu0 0.0
    %2406 = vmatpush1.msra.mxu0 %v2199
    %2407 = vmatprep.subr.mxu0 0.0
    %2408 = vmatpush1.msra.mxu0 %v2200
    %2409 = vmatprep.subr.mxu0 0.0
    %2410 = vmatpush1.msra.mxu0 %v2201
    %2411 = vmatprep.subr.mxu0 0.0
    %2412 = vmatpush1.msra.mxu0 %v2202
    %2413 = vmatprep.subr.mxu0 0.0
    %2414 = vmatpush1.msra.mxu0 %v2203
    %2415 = vmatprep.subr.mxu0 0.0
    %2416 = vmatpush1.msra.mxu0 %v2204
    %2417 = vmatprep.subr.mxu0 0.0
    %2418 = vmatpush1.msra.mxu0 %v2205
    %2419 = vmatprep.subr.mxu0 0.0
    %2420 = vmatpush1.msra.mxu0 %v2206
    %2421 = vmatprep.subr.mxu0 0.0
    %2422 = vmatpush1.msra.mxu0 %v2207
    %2423 = vmatprep.subr.mxu0 0.0
    %2424 = vmatpush1.msra.mxu0 %v2208
    %2425 = vmatprep.subr.mxu0 0.0
    %2426 = vmatpush1.msra.mxu0 %v2209
    %2427 = vmatprep.mubr.f32.mxu0 %v2286
    %2428 = vmatmul.mubr.f32.gmra.mrb[0].mxu0 %v2143
    %v2429 = vpop.f32.mrb[0].mxu0
    %v2430 = vadd.f32 %v2360, %v2429
    %v2431 = vpop.f32.mrb[0].mxu0
    %2432 = vdwg.mxu0
    %2433 = vmatprep.subr.mxu0 0.0
    %2434 = vmatpush1.msra.mxu0 %v2210
    %2435 = vmatprep.subr.mxu0 0.0
    %2436 = vmatpush1.msra.mxu0 %v2211
    %2437 = vmatprep.subr.mxu0 0.0
    %2438 = vmatpush1.msra.mxu0 %v2212
    %2439 = vmatprep.subr.mxu0 0.0
    %2440 = vmatpush1.msra.mxu0 %v2213
    %2441 = vmatprep.subr.mxu0 0.0
    %2442 = vmatpush1.msra.mxu0 %v2214
    %2443 = vmatprep.subr.mxu0 0.0
    %2444 = vmatpush1.msra.mxu0 %v2215
    %2445 = vmatprep.subr.mxu0 0.0
    %2446 = vmatpush1.msra.mxu0 %v2216
    %2447 = vmatprep.subr.mxu0 0.0
    %2448 = vmatpush1.msra.mxu0 %v2217
    %2449 = vmatprep.subr.mxu0 0.0
    %2450 = vmatpush1.msra.mxu0 %v2218
    %2451 = vmatprep.subr.mxu0 0.0
    %2452 = vmatpush1.msra.mxu0 %v2219
    %2453 = vmatprep.subr.mxu0 0.0
    %2454 = vmatpush1.msra.mxu0 %v2220
    %2455 = vmatprep.subr.mxu0 0.0
    %2456 = vmatpush1.msra.mxu0 %v2221
    %2457 = vmatprep.subr.mxu0 0.0
    %2458 = vmatpush1.msra.mxu0 %v2222
    %2459 = vmatprep.subr.mxu0 0.0
    %2460 = vmatpush1.msra.mxu0 %v2223
    %2461 = vmatprep.subr.mxu0 0.0
    %2462 = vmatpush1.msra.mxu0 %v2224
    %2463 = vmatprep.subr.mxu0 0.0
    %2464 = vmatpush1.msra.mxu0 %v2225
    %2465 = vmatprep.subr.mxu0 0.0
    %2466 = vmatpush1.msra.mxu0 %v2226
    %2467 = vmatprep.subr.mxu0 0.0
    %2468 = vmatpush1.msra.mxu0 %v2227
    %2469 = vmatprep.subr.mxu0 0.0
    %2470 = vmatpush1.msra.mxu0 %v2228
    %2471 = vmatprep.subr.mxu0 0.0
    %2472 = vmatpush1.msra.mxu0 %v2229
    %2473 = vmatprep.subr.mxu0 0.0
    %2474 = vmatpush1.msra.mxu0 %v2230
    %2475 = vmatprep.subr.mxu0 0.0
    %2476 = vmatpush1.msra.mxu0 %v2231
    %2477 = vmatprep.subr.mxu0 0.0
    %2478 = vmatpush1.msra.mxu0 %v2232
    %2479 = vmatprep.subr.mxu0 0.0
    %2480 = vmatpush1.msra.mxu0 %v2233
    %2481 = vmatprep.subr.mxu0 0.0
    %2482 = vmatpush1.msra.mxu0 %v2234
    %2483 = vmatprep.subr.mxu0 0.0
    %2484 = vmatpush1.msra.mxu0 %v2235
    %2485 = vmatprep.subr.mxu0 0.0
    %2486 = vmatpush1.msra.mxu0 %v2236
    %2487 = vmatprep.subr.mxu0 0.0
    %2488 = vmatpush1.msra.mxu0 %v2237
    %2489 = vmatprep.subr.mxu0 0.0
    %2490 = vmatpush1.msra.mxu0 %v2238
    %2491 = vmatprep.subr.mxu0 0.0
    %2492 = vmatpush1.msra.mxu0 %v2239
    %2493 = vmatprep.subr.mxu0 0.0
    %2494 = vmatpush1.msra.mxu0 %v2240
    %2495 = vmatprep.subr.mxu0 0.0
    %2496 = vmatpush1.msra.mxu0 %v2241
    %2497 = vmatprep.mubr.f32.mxu0 %v2287
    %2498 = vmatmul.mubr.f32.gmra.mrb[0].mxu0 %v2144
    %v2499 = vpop.f32.mrb[0].mxu0
    %v2500 = vadd.f32 %v2430, %v2499
    %v2501 = vpop.f32.mrb[0].mxu0
    %2502 = vdwg.mxu0
    %2503 = vmatprep.subr.mxu0 0.0
    %2504 = vmatpush1.msra.mxu0 %v2242
    %2505 = vmatprep.subr.mxu0 0.0
    %2506 = vmatpush1.msra.mxu0 %v2243
    %2507 = vmatprep.subr.mxu0 0.0
    %2508 = vmatpush1.msra.mxu0 %v2244
    %2509 = vmatprep.subr.mxu0 0.0
    %2510 = vmatpush1.msra.mxu0 %v2245
    %2511 = vmatprep.subr.mxu0 0.0
    %2512 = vmatpush1.msra.mxu0 %v2246
    %2513 = vmatprep.subr.mxu0 0.0
    %2514 = vmatpush1.msra.mxu0 %v2247
    %2515 = vmatprep.subr.mxu0 0.0
    %2516 = vmatpush1.msra.mxu0 %v2248
    %2517 = vmatprep.subr.mxu0 0.0
    %2518 = vmatpush1.msra.mxu0 %v2249
    %2519 = vmatprep.subr.mxu0 0.0
    %2520 = vmatpush1.msra.mxu0 %v2250
    %2521 = vmatprep.subr.mxu0 0.0
    %2522 = vmatpush1.msra.mxu0 %v2251
    %2523 = vmatprep.subr.mxu0 0.0
    %2524 = vmatpush1.msra.mxu0 %v2252
    %2525 = vmatprep.subr.mxu0 0.0
    %2526 = vmatpush1.msra.mxu0 %v2253
    %2527 = vmatprep.subr.mxu0 0.0
    %2528 = vmatpush1.msra.mxu0 %v2254
    %2529 = vmatprep.subr.mxu0 0.0
    %2530 = vmatpush1.msra.mxu0 %v2255
    %2531 = vmatprep.subr.mxu0 0.0
    %2532 = vmatpush1.msra.mxu0 %v2256
    %2533 = vmatprep.subr.mxu0 0.0
    %2534 = vmatpush1.msra.mxu0 %v2257
    %2535 = vmatprep.subr.mxu0 0.0
    %2536 = vmatpush1.msra.mxu0 %v2258
    %2537 = vmatprep.subr.mxu0 0.0
    %2538 = vmatpush1.msra.mxu0 %v2259
    %2539 = vmatprep.subr.mxu0 0.0
    %2540 = vmatpush1.msra.mxu0 %v2260
    %2541 = vmatprep.subr.mxu0 0.0
    %2542 = vmatpush1.msra.mxu0 %v2261
    %2543 = vmatprep.subr.mxu0 0.0
    %2544 = vmatpush1.msra.mxu0 %v2262
    %2545 = vmatprep.subr.mxu0 0.0
    %2546 = vmatpush1.msra.mxu0 %v2263
    %2547 = vmatprep.subr.mxu0 0.0
    %2548 = vmatpush1.msra.mxu0 %v2264
    %2549 = vmatprep.subr.mxu0 0.0
    %2550 = vmatpush1.msra.mxu0 %v2265
    %2551 = vmatprep.subr.mxu0 0.0
    %2552 = vmatpush1.msra.mxu0 %v2266
    %2553 = vmatprep.subr.mxu0 0.0
    %2554 = vmatpush1.msra.mxu0 %v2267
    %2555 = vmatprep.subr.mxu0 0.0
    %2556 = vmatpush1.msra.mxu0 %v2268
    %2557 = vmatprep.subr.mxu0 0.0
    %2558 = vmatpush1.msra.mxu0 %v2269
    %2559 = vmatprep.subr.mxu0 0.0
    %2560 = vmatpush1.msra.mxu0 %v2270
    %2561 = vmatprep.subr.mxu0 0.0
    %2562 = vmatpush1.msra.mxu0 %v2271
    %2563 = vmatprep.subr.mxu0 0.0
    %2564 = vmatpush1.msra.mxu0 %v2272
    %2565 = vmatprep.subr.mxu0 0.0
    %2566 = vmatpush1.msra.mxu0 %v2273
    %2567 = vmatprep.mubr.f32.mxu0 %v2288
    %2568 = vmatmul.mubr.f32.gmra.mrb[0].mxu0 %v2145
    %v2569 = vpop.f32.mrb[0].mxu0
    %v2570 = vadd.f32 %v2500, %v2569
    %v2571 = vpop.f32.mrb[0].mxu0
    %2572 = vdwg.mxu0
    %v2573 = vld [vmem:[%s4] sm:$0xff]
    %v2574 = vld [vmem:[%s4 + $0x8] sm:$0xff]
    %v2575 = vld [vmem:[%s4 + $0x10] sm:$0xff]
    %v2576 = vld [vmem:[%s4 + $0x18] sm:$0xff]
    %v2577 = vld [vmem:[%s4 + $0x20] sm:$0xff]
    %v2578 = vld [vmem:[%s4 + $0x28] sm:$0xff]
    %v2579 = vld [vmem:[%s4 + $0x30] sm:$0xff]
    %v2580 = vld [vmem:[%s4 + $0x38] sm:$0xff]
    %2581 = vmatprep.subr.mxu0 0.0
    %2582 = vmatpush1.msra.mxu0 %v2573
    %2583 = vmatprep.subr.mxu0 0.0
    %2584 = vmatpush1.msra.mxu0 %v2574
    %2585 = vmatprep.subr.mxu0 0.0
    %2586 = vmatpush1.msra.mxu0 %v2575
    %2587 = vmatprep.subr.mxu0 0.0
    %2588 = vmatpush1.msra.mxu0 %v2576
    %2589 = vmatprep.subr.mxu0 0.0
    %2590 = vmatpush1.msra.mxu0 %v2577
    %2591 = vmatprep.subr.mxu0 0.0
    %2592 = vmatpush1.msra.mxu0 %v2578
    %2593 = vmatprep.subr.mxu0 0.0
    %2594 = vmatpush1.msra.mxu0 %v2579
    %2595 = vmatprep.subr.mxu0 0.0
    %2596 = vmatpush1.msra.mxu0 %v2580
    %2597 = vmatprep.subr.mxu0 0.0
    %2598 = vmatpush1.msra.mxu0 0.0
    %2599 = vmatprep.subr.mxu0 0.0
    %2600 = vmatpush1.msra.mxu0 0.0
    %2601 = vmatprep.subr.mxu0 0.0
    %2602 = vmatpush1.msra.mxu0 0.0
    %2603 = vmatprep.subr.mxu0 0.0
    %2604 = vmatpush1.msra.mxu0 0.0
    %2605 = vmatprep.subr.mxu0 0.0
    %2606 = vmatpush1.msra.mxu0 0.0
    %2607 = vmatprep.subr.mxu0 0.0
    %2608 = vmatpush1.msra.mxu0 0.0
    %2609 = vmatprep.subr.mxu0 0.0
    %2610 = vmatpush1.msra.mxu0 0.0
    %2611 = vmatprep.subr.mxu0 0.0
    %2612 = vmatpush1.msra.mxu0 0.0
    %2613 = vmatprep.subr.mxu0 0.0
    %2614 = vmatpush1.msra.mxu0 0.0
    %2615 = vmatprep.subr.mxu0 0.0
    %2616 = vmatpush1.msra.mxu0 0.0
    %2617 = vmatprep.subr.mxu0 0.0
    %2618 = vmatpush1.msra.mxu0 0.0
    %2619 = vmatprep.subr.mxu0 0.0
    %2620 = vmatpush1.msra.mxu0 0.0
    %2621 = vmatprep.subr.mxu0 0.0
    %2622 = vmatpush1.msra.mxu0 0.0
    %2623 = vmatprep.subr.mxu0 0.0
    %2624 = vmatpush1.msra.mxu0 0.0
    %2625 = vmatprep.subr.mxu0 0.0
    %2626 = vmatpush1.msra.mxu0 0.0
    %2627 = vmatprep.subr.mxu0 0.0
    %2628 = vmatpush1.msra.mxu0 0.0
    %2629 = vmatprep.subr.mxu0 0.0
    %2630 = vmatpush1.msra.mxu0 0.0
    %2631 = vmatprep.subr.mxu0 0.0
    %2632 = vmatpush1.msra.mxu0 0.0
    %2633 = vmatprep.subr.mxu0 0.0
    %2634 = vmatpush1.msra.mxu0 0.0
    %2635 = vmatprep.subr.mxu0 0.0
    %2636 = vmatpush1.msra.mxu0 0.0
    %2637 = vmatprep.subr.mxu0 0.0
    %2638 = vmatpush1.msra.mxu0 0.0
    %2639 = vmatprep.subr.mxu0 0.0
    %2640 = vmatpush1.msra.mxu0 0.0
    %2641 = vmatprep.subr.mxu0 0.0
    %2642 = vmatpush1.msra.mxu0 0.0
    %2643 = vmatprep.subr.mxu0 0.0
    %2644 = vmatpush1.msra.mxu0 0.0
    %2645 = vmatprep.mubr.f32.mxu0 0.0
    %2646 = vmatmul.mubr.f32.gmra.mrb[0].mxu0 %v1681
    %v2647 = vpop.f32.mrb[0].mxu0
    %v2648 = vadd.f32 0.0, %v2647
    %v2649 = vpop.f32.mrb[0].mxu0
    %2650 = vdwg.mxu0
    %v2651 = vmax.f32 %v2648, 0.0
    %v2652 = vld [vmem:[%s5] sm:$0xf]
    %v2654 = vsel %vm1755, %v2651, 0
    %v2657 = vsel %vm1759, %v2652, 0
    %2659 = vmatprep.subr.mxu0 0.0
    %2660 = vmatpush1.msra.mxu0 %v2657
    %2661 = vmatprep.subr.mxu0 0.0
    %2662 = vmatpush1.msra.mxu0 0.0
    %2663 = vmatprep.subr.mxu0 0.0
    %2664 = vmatpush1.msra.mxu0 0.0
    %2665 = vmatprep.subr.mxu0 0.0
    %2666 = vmatpush1.msra.mxu0 0.0
    %2667 = vmatprep.subr.mxu0 0.0
    %2668 = vmatpush1.msra.mxu0 0.0
    %2669 = vmatprep.subr.mxu0 0.0
    %2670 = vmatpush1.msra.mxu0 0.0
    %2671 = vmatprep.subr.mxu0 0.0
    %2672 = vmatpush1.msra.mxu0 0.0
    %2673 = vmatprep.subr.mxu0 0.0
    %2674 = vmatpush1.msra.mxu0 0.0
    %2675 = vmatprep.subr.mxu0 0.0
    %2676 = vmatpush1.msra.mxu0 0.0
    %2677 = vmatprep.subr.mxu0 0.0
    %2678 = vmatpush1.msra.mxu0 0.0
    %2679 = vmatprep.subr.mxu0 0.0
    %2680 = vmatpush1.msra.mxu0 0.0
    %2681 = vmatprep.subr.mxu0 0.0
    %2682 = vmatpush1.msra.mxu0 0.0
    %2683 = vmatprep.subr.mxu0 0.0
    %2684 = vmatpush1.msra.mxu0 0.0
    %2685 = vmatprep.subr.mxu0 0.0
    %2686 = vmatpush1.msra.mxu0 0.0
    %2687 = vmatprep.subr.mxu0 0.0
    %2688 = vmatpush1.msra.mxu0 0.0
    %2689 = vmatprep.subr.mxu0 0.0
    %2690 = vmatpush1.msra.mxu0 0.0
    %2691 = vmatprep.subr.mxu0 0.0
    %2692 = vmatpush1.msra.mxu0 0.0
    %2693 = vmatprep.subr.mxu0 0.0
    %2694 = vmatpush1.msra.mxu0 0.0
    %2695 = vmatprep.subr.mxu0 0.0
    %2696 = vmatpush1.msra.mxu0 0.0
    %2697 = vmatprep.subr.mxu0 0.0
    %2698 = vmatpush1.msra.mxu0 0.0
    %2699 = vmatprep.subr.mxu0 0.0
    %2700 = vmatpush1.msra.mxu0 0.0
    %2701 = vmatprep.subr.mxu0 0.0
    %2702 = vmatpush1.msra.mxu0 0.0
    %2703 = vmatprep.subr.mxu0 0.0
    %2704 = vmatpush1.msra.mxu0 0.0
    %2705 = vmatprep.subr.mxu0 0.0
    %2706 = vmatpush1.msra.mxu0 0.0
    %2707 = vmatprep.subr.mxu0 0.0
    %2708 = vmatpush1.msra.mxu0 0.0
    %2709 = vmatprep.subr.mxu0 0.0
    %2710 = vmatpush1.msra.mxu0 0.0
    %2711 = vmatprep.subr.mxu0 0.0
    %2712 = vmatpush1.msra.mxu0 0.0
    %2713 = vmatprep.subr.mxu0 0.0
    %2714 = vmatpush1.msra.mxu0 0.0
    %2715 = vmatprep.subr.mxu0 0.0
    %2716 = vmatpush1.msra.mxu0 0.0
    %2717 = vmatprep.subr.mxu0 0.0
    %2718 = vmatpush1.msra.mxu0 0.0
    %2719 = vmatprep.subr.mxu0 0.0
    %2720 = vmatpush1.msra.mxu0 0.0
    %2721 = vmatprep.subr.mxu0 0.0
    %2722 = vmatpush1.msra.mxu0 0.0
    %2723 = vmatprep.mubr.f32.mxu0 0.0
    %2724 = vmatmul.mubr.f32.gmra.mrb[0].mxu0 %v2654
    %v2725 = vpop.f32.mrb[0].mxu0
    %v2726 = vadd.f32 0.0, %v2725
    %v2727 = vpop.f32.mrb[0].mxu0
    %2728 = vdwg.mxu0
    %v2729 = vxor.u32 %v2726, 2147483648
    %v2730 = vmul.f32 %v2729, 1.442695
    %v2731 = vpow.pop %v2730
    %v2732 = vadd.f32 %v2731, 1.0
    %v2733 = vrcp.pop %v2732
    %v2734 = vmul.f32 1.0, %v2733
    %v2736 = vsel %vm1679, %v2734, 0
    %2738 = vmatprep.subr.mxu0 %v394
    %2739 = vmatpush1.msra.mxu0 %v393
    %2740 = vmatprep.subr.mxu0 %v402
    %2741 = vmatpush1.msra.mxu0 %v401
    %2742 = vmatprep.subr.mxu0 %v410
    %2743 = vmatpush1.msra.mxu0 %v409
    %2744 = vmatprep.subr.mxu0 %v418
    %2745 = vmatpush1.msra.mxu0 %v417
    %2746 = vmatprep.subr.mxu0 %v426
    %2747 = vmatpush1.msra.mxu0 %v425
    %2748 = vmatprep.subr.mxu0 %v434
    %2749 = vmatpush1.msra.mxu0 %v433
    %2750 = vmatprep.subr.mxu0 %v442
    %2751 = vmatpush1.msra.mxu0 %v441
    %2752 = vmatprep.subr.mxu0 %v450
    %2753 = vmatpush1.msra.mxu0 %v449
    %2754 = vmatprep.subr.mxu0 0.0
    %2755 = vmatpush1.msra.mxu0 0.0
    %2756 = vmatprep.subr.mxu0 0.0
    %2757 = vmatpush1.msra.mxu0 0.0
    %2758 = vmatprep.subr.mxu0 0.0
    %2759 = vmatpush1.msra.mxu0 0.0
    %2760 = vmatprep.subr.mxu0 0.0
    %2761 = vmatpush1.msra.mxu0 0.0
    %2762 = vmatprep.subr.mxu0 0.0
    %2763 = vmatpush1.msra.mxu0 0.0
    %2764 = vmatprep.subr.mxu0 0.0
    %2765 = vmatpush1.msra.mxu0 0.0
    %2766 = vmatprep.subr.mxu0 0.0
    %2767 = vmatpush1.msra.mxu0 0.0
    %2768 = vmatprep.subr.mxu0 0.0
    %2769 = vmatpush1.msra.mxu0 0.0
    %2770 = vmatprep.subr.mxu0 0.0
    %2771 = vmatpush1.msra.mxu0 0.0
    %2772 = vmatprep.subr.mxu0 0.0
    %2773 = vmatpush1.msra.mxu0 0.0
    %2774 = vmatprep.subr.mxu0 0.0
    %2775 = vmatpush1.msra.mxu0 0.0
    %2776 = vmatprep.subr.mxu0 0.0
    %2777 = vmatpush1.msra.mxu0 0.0
    %2778 = vmatprep.subr.mxu0 0.0
    %2779 = vmatpush1.msra.mxu0 0.0
    %2780 = vmatprep.subr.mxu0 0.0
    %2781 = vmatpush1.msra.mxu0 0.0
    %2782 = vmatprep.subr.mxu0 0.0
    %2783 = vmatpush1.msra.mxu0 0.0
    %2784 = vmatprep.subr.mxu0 0.0
    %2785 = vmatpush1.msra.mxu0 0.0
    %2786 = vmatprep.subr.mxu0 0.0
    %2787 = vmatpush1.msra.mxu0 0.0
    %2788 = vmatprep.subr.mxu0 0.0
    %2789 = vmatpush1.msra.mxu0 0.0
    %2790 = vmatprep.subr.mxu0 0.0
    %2791 = vmatpush1.msra.mxu0 0.0
    %2792 = vmatprep.subr.mxu0 0.0
    %2793 = vmatpush1.msra.mxu0 0.0
    %2794 = vmatprep.subr.mxu0 0.0
    %2795 = vmatpush1.msra.mxu0 0.0
    %2796 = vmatprep.subr.mxu0 0.0
    %2797 = vmatpush1.msra.mxu0 0.0
    %2798 = vmatprep.subr.mxu0 0.0
    %2799 = vmatpush1.msra.mxu0 0.0
    %2800 = vmatprep.subr.mxu0 0.0
    %2801 = vmatpush1.msra.mxu0 0.0
    %2802 = vmatprep.mubr.f32.mxu0 0.0
    %2803 = vmatmul.mubr.f32.gmra.mrb[0].mxu0 %v2736
    %v2804 = vpop.f32.mrb[0].mxu0
    %v2805 = vadd.f32 0.0, %v2804
    %v2806 = vpop.f32.mrb[0].mxu0
    %v2807 = vadd.f32 0.0, %v2806
    %2808 = vdwg.mxu0
    %2809 = vmatprep.subr.mxu0 %v396
    %2810 = vmatpush1.msra.mxu0 %v395
    %2811 = vmatprep.subr.mxu0 %v404
    %2812 = vmatpush1.msra.mxu0 %v403
    %2813 = vmatprep.subr.mxu0 %v412
    %2814 = vmatpush1.msra.mxu0 %v411
    %2815 = vmatprep.subr.mxu0 %v420
    %2816 = vmatpush1.msra.mxu0 %v419
    %2817 = vmatprep.subr.mxu0 %v428
    %2818 = vmatpush1.msra.mxu0 %v427
    %2819 = vmatprep.subr.mxu0 %v436
    %2820 = vmatpush1.msra.mxu0 %v435
    %2821 = vmatprep.subr.mxu0 %v444
    %2822 = vmatpush1.msra.mxu0 %v443
    %2823 = vmatprep.subr.mxu0 %v452
    %2824 = vmatpush1.msra.mxu0 %v451
    %2825 = vmatprep.subr.mxu0 0.0
    %2826 = vmatpush1.msra.mxu0 0.0
    %2827 = vmatprep.subr.mxu0 0.0
    %2828 = vmatpush1.msra.mxu0 0.0
    %2829 = vmatprep.subr.mxu0 0.0
    %2830 = vmatpush1.msra.mxu0 0.0
    %2831 = vmatprep.subr.mxu0 0.0
    %2832 = vmatpush1.msra.mxu0 0.0
    %2833 = vmatprep.subr.mxu0 0.0
    %2834 = vmatpush1.msra.mxu0 0.0
    %2835 = vmatprep.subr.mxu0 0.0
    %2836 = vmatpush1.msra.mxu0 0.0
    %2837 = vmatprep.subr.mxu0 0.0
    %2838 = vmatpush1.msra.mxu0 0.0
    %2839 = vmatprep.subr.mxu0 0.0
    %2840 = vmatpush1.msra.mxu0 0.0
    %2841 = vmatprep.subr.mxu0 0.0
    %2842 = vmatpush1.msra.mxu0 0.0
    %2843 = vmatprep.subr.mxu0 0.0
    %2844 = vmatpush1.msra.mxu0 0.0
    %2845 = vmatprep.subr.mxu0 0.0
    %2846 = vmatpush1.msra.mxu0 0.0
    %2847 = vmatprep.subr.mxu0 0.0
    %2848 = vmatpush1.msra.mxu0 0.0
    %2849 = vmatprep.subr.mxu0 0.0
    %2850 = vmatpush1.msra.mxu0 0.0
    %2851 = vmatprep.subr.mxu0 0.0
    %2852 = vmatpush1.msra.mxu0 0.0
    %2853 = vmatprep.subr.mxu0 0.0
    %2854 = vmatpush1.msra.mxu0 0.0
    %2855 = vmatprep.subr.mxu0 0.0
    %2856 = vmatpush1.msra.mxu0 0.0
    %2857 = vmatprep.subr.mxu0 0.0
    %2858 = vmatpush1.msra.mxu0 0.0
    %2859 = vmatprep.subr.mxu0 0.0
    %2860 = vmatpush1.msra.mxu0 0.0
    %2861 = vmatprep.subr.mxu0 0.0
    %2862 = vmatpush1.msra.mxu0 0.0
    %2863 = vmatprep.subr.mxu0 0.0
    %2864 = vmatpush1.msra.mxu0 0.0
    %2865 = vmatprep.subr.mxu0 0.0
    %2866 = vmatpush1.msra.mxu0 0.0
    %2867 = vmatprep.subr.mxu0 0.0
    %2868 = vmatpush1.msra.mxu0 0.0
    %2869 = vmatprep.subr.mxu0 0.0
    %2870 = vmatpush1.msra.mxu0 0.0
    %2871 = vmatprep.subr.mxu0 0.0
    %2872 = vmatpush1.msra.mxu0 0.0
    %2873 = vmatprep.mubr.f32.mxu0 0.0
    %2874 = vmatmul.mubr.f32.gmra.mrb[0].mxu0 %v2736
    %v2875 = vpop.f32.mrb[0].mxu0
    %v2876 = vadd.f32 0.0, %v2875
    %v2877 = vpop.f32.mrb[0].mxu0
    %v2878 = vadd.f32 0.0, %v2877
    %2879 = vdwg.mxu0
    %2880 = vmatprep.subr.mxu0 %v398
    %2881 = vmatpush1.msra.mxu0 %v397
    %2882 = vmatprep.subr.mxu0 %v406
    %2883 = vmatpush1.msra.mxu0 %v405
    %2884 = vmatprep.subr.mxu0 %v414
    %2885 = vmatpush1.msra.mxu0 %v413
    %2886 = vmatprep.subr.mxu0 %v422
    %2887 = vmatpush1.msra.mxu0 %v421
    %2888 = vmatprep.subr.mxu0 %v430
    %2889 = vmatpush1.msra.mxu0 %v429
    %2890 = vmatprep.subr.mxu0 %v438
    %2891 = vmatpush1.msra.mxu0 %v437
    %2892 = vmatprep.subr.mxu0 %v446
    %2893 = vmatpush1.msra.mxu0 %v445
    %2894 = vmatprep.subr.mxu0 %v454
    %2895 = vmatpush1.msra.mxu0 %v453
    %2896 = vmatprep.subr.mxu0 0.0
    %2897 = vmatpush1.msra.mxu0 0.0
    %2898 = vmatprep.subr.mxu0 0.0
    %2899 = vmatpush1.msra.mxu0 0.0
    %2900 = vmatprep.subr.mxu0 0.0
    %2901 = vmatpush1.msra.mxu0 0.0
    %2902 = vmatprep.subr.mxu0 0.0
    %2903 = vmatpush1.msra.mxu0 0.0
    %2904 = vmatprep.subr.mxu0 0.0
    %2905 = vmatpush1.msra.mxu0 0.0
    %2906 = vmatprep.subr.mxu0 0.0
    %2907 = vmatpush1.msra.mxu0 0.0
    %2908 = vmatprep.subr.mxu0 0.0
    %2909 = vmatpush1.msra.mxu0 0.0
    %2910 = vmatprep.subr.mxu0 0.0
    %2911 = vmatpush1.msra.mxu0 0.0
    %2912 = vmatprep.subr.mxu0 0.0
    %2913 = vmatpush1.msra.mxu0 0.0
    %2914 = vmatprep.subr.mxu0 0.0
    %2915 = vmatpush1.msra.mxu0 0.0
    %2916 = vmatprep.subr.mxu0 0.0
    %2917 = vmatpush1.msra.mxu0 0.0
    %2918 = vmatprep.subr.mxu0 0.0
    %2919 = vmatpush1.msra.mxu0 0.0
    %2920 = vmatprep.subr.mxu0 0.0
    %2921 = vmatpush1.msra.mxu0 0.0
    %2922 = vmatprep.subr.mxu0 0.0
    %2923 = vmatpush1.msra.mxu0 0.0
    %2924 = vmatprep.subr.mxu0 0.0
    %2925 = vmatpush1.msra.mxu0 0.0
    %2926 = vmatprep.subr.mxu0 0.0
    %2927 = vmatpush1.msra.mxu0 0.0
    %2928 = vmatprep.subr.mxu0 0.0
    %2929 = vmatpush1.msra.mxu0 0.0
    %2930 = vmatprep.subr.mxu0 0.0
    %2931 = vmatpush1.msra.mxu0 0.0
    %2932 = vmatprep.subr.mxu0 0.0
    %2933 = vmatpush1.msra.mxu0 0.0
    %2934 = vmatprep.subr.mxu0 0.0
    %2935 = vmatpush1.msra.mxu0 0.0
    %2936 = vmatprep.subr.mxu0 0.0
    %2937 = vmatpush1.msra.mxu0 0.0
    %2938 = vmatprep.subr.mxu0 0.0
    %2939 = vmatpush1.msra.mxu0 0.0
    %2940 = vmatprep.subr.mxu0 0.0
    %2941 = vmatpush1.msra.mxu0 0.0
    %2942 = vmatprep.subr.mxu0 0.0
    %2943 = vmatpush1.msra.mxu0 0.0
    %2944 = vmatprep.mubr.f32.mxu0 0.0
    %2945 = vmatmul.mubr.f32.gmra.mrb[0].mxu0 %v2736
    %v2946 = vpop.f32.mrb[0].mxu0
    %v2947 = vadd.f32 0.0, %v2946
    %v2948 = vpop.f32.mrb[0].mxu0
    %v2949 = vadd.f32 0.0, %v2948
    %2950 = vdwg.mxu0
    %2951 = vmatprep.subr.mxu0 %v400
    %2952 = vmatpush1.msra.mxu0 %v399
    %2953 = vmatprep.subr.mxu0 %v408
    %2954 = vmatpush1.msra.mxu0 %v407
    %2955 = vmatprep.subr.mxu0 %v416
    %2956 = vmatpush1.msra.mxu0 %v415
    %2957 = vmatprep.subr.mxu0 %v424
    %2958 = vmatpush1.msra.mxu0 %v423
    %2959 = vmatprep.subr.mxu0 %v432
    %2960 = vmatpush1.msra.mxu0 %v431
    %2961 = vmatprep.subr.mxu0 %v440
    %2962 = vmatpush1.msra.mxu0 %v439
    %2963 = vmatprep.subr.mxu0 %v448
    %2964 = vmatpush1.msra.mxu0 %v447
    %2965 = vmatprep.subr.mxu0 %v456
    %2966 = vmatpush1.msra.mxu0 %v455
    %2967 = vmatprep.subr.mxu0 0.0
    %2968 = vmatpush1.msra.mxu0 0.0
    %2969 = vmatprep.subr.mxu0 0.0
    %2970 = vmatpush1.msra.mxu0 0.0
    %2971 = vmatprep.subr.mxu0 0.0
    %2972 = vmatpush1.msra.mxu0 0.0
    %2973 = vmatprep.subr.mxu0 0.0
    %2974 = vmatpush1.msra.mxu0 0.0
    %2975 = vmatprep.subr.mxu0 0.0
    %2976 = vmatpush1.msra.mxu0 0.0
    %2977 = vmatprep.subr.mxu0 0.0
    %2978 = vmatpush1.msra.mxu0 0.0
    %2979 = vmatprep.subr.mxu0 0.0
    %2980 = vmatpush1.msra.mxu0 0.0
    %2981 = vmatprep.subr.mxu0 0.0
    %2982 = vmatpush1.msra.mxu0 0.0
    %2983 = vmatprep.subr.mxu0 0.0
    %2984 = vmatpush1.msra.mxu0 0.0
    %2985 = vmatprep.subr.mxu0 0.0
    %2986 = vmatpush1.msra.mxu0 0.0
    %2987 = vmatprep.subr.mxu0 0.0
    %2988 = vmatpush1.msra.mxu0 0.0
    %2989 = vmatprep.subr.mxu0 0.0
    %2990 = vmatpush1.msra.mxu0 0.0
    %2991 = vmatprep.subr.mxu0 0.0
    %2992 = vmatpush1.msra.mxu0 0.0
    %2993 = vmatprep.subr.mxu0 0.0
    %2994 = vmatpush1.msra.mxu0 0.0
    %2995 = vmatprep.subr.mxu0 0.0
    %2996 = vmatpush1.msra.mxu0 0.0
    %2997 = vmatprep.subr.mxu0 0.0
    %2998 = vmatpush1.msra.mxu0 0.0
    %2999 = vmatprep.subr.mxu0 0.0
    %3000 = vmatpush1.msra.mxu0 0.0
    %3001 = vmatprep.subr.mxu0 0.0
    %3002 = vmatpush1.msra.mxu0 0.0
    %3003 = vmatprep.subr.mxu0 0.0
    %3004 = vmatpush1.msra.mxu0 0.0
    %3005 = vmatprep.subr.mxu0 0.0
    %3006 = vmatpush1.msra.mxu0 0.0
    %3007 = vmatprep.subr.mxu0 0.0
    %3008 = vmatpush1.msra.mxu0 0.0
    %3009 = vmatprep.subr.mxu0 0.0
    %3010 = vmatpush1.msra.mxu0 0.0
    %3011 = vmatprep.subr.mxu0 0.0
    %3012 = vmatpush1.msra.mxu0 0.0
    %3013 = vmatprep.subr.mxu0 0.0
    %3014 = vmatpush1.msra.mxu0 0.0
    %3015 = vmatprep.mubr.f32.mxu0 0.0
    %3016 = vmatmul.mubr.f32.gmra.mrb[0].mxu0 %v2736
    %v3017 = vpop.f32.mrb[0].mxu0
    %v3018 = vadd.f32 0.0, %v3017
    %v3019 = vpop.f32.mrb[0].mxu0
    %v3020 = vadd.f32 0.0, %v3019
    %3021 = vdwg.mxu0
    %v3030 = vcombine.low %v2805, %v2807
    %v3031 = vcombine.low %v2876, %v2878
    %v3032 = vcombine.low %v2947, %v2949
    %v3033 = vcombine.low %v3018, %v3020
    %v3038 = vmul.f32 %v91, %v3030
    %v3039 = vmul.f32 %v92, %v3031
    %v3040 = vmul.f32 %v93, %v3032
    %v3041 = vmul.f32 %v94, %v3033
    %v3042 = vld [vmem:[%s12] sm:$0xff]
    %v3043 = vld [vmem:[%s12 + $0x8] sm:$0xff]
    %v3044 = vld [vmem:[%s12 + $0x10] sm:$0xff]
    %v3045 = vld [vmem:[%s12 + $0x18] sm:$0xff]
    %v3046 = vld [vmem:[%s12 + $0x20] sm:$0xff]
    %v3047 = vld [vmem:[%s12 + $0x28] sm:$0xff]
    %v3048 = vld [vmem:[%s12 + $0x30] sm:$0xff]
    %v3049 = vld [vmem:[%s12 + $0x38] sm:$0xff]
    %v3050 = vld [vmem:[%s12 + $0x40] sm:$0xff]
    %v3051 = vld [vmem:[%s12 + $0x48] sm:$0xff]
    %v3052 = vld [vmem:[%s12 + $0x50] sm:$0xff]
    %v3053 = vld [vmem:[%s12 + $0x58] sm:$0xff]
    %v3054 = vld [vmem:[%s12 + $0x60] sm:$0xff]
    %v3055 = vld [vmem:[%s12 + $0x68] sm:$0xff]
    %v3056 = vld [vmem:[%s12 + $0x70] sm:$0xff]
    %v3057 = vld [vmem:[%s12 + $0x78] sm:$0xff]
    %v3058 = vld [vmem:[%s12 + $0x80] sm:$0xff]
    %v3059 = vld [vmem:[%s12 + $0x88] sm:$0xff]
    %v3060 = vld [vmem:[%s12 + $0x90] sm:$0xff]
    %v3061 = vld [vmem:[%s12 + $0x98] sm:$0xff]
    %v3062 = vld [vmem:[%s12 + $0xa0] sm:$0xff]
    %v3063 = vld [vmem:[%s12 + $0xa8] sm:$0xff]
    %v3064 = vld [vmem:[%s12 + $0xb0] sm:$0xff]
    %v3065 = vld [vmem:[%s12 + $0xb8] sm:$0xff]
    %v3066 = vld [vmem:[%s12 + $0xc0] sm:$0xff]
    %v3067 = vld [vmem:[%s12 + $0xc8] sm:$0xff]
    %v3068 = vld [vmem:[%s12 + $0xd0] sm:$0xff]
    %v3069 = vld [vmem:[%s12 + $0xd8] sm:$0xff]
    %v3070 = vld [vmem:[%s12 + $0xe0] sm:$0xff]
    %v3071 = vld [vmem:[%s12 + $0xe8] sm:$0xff]
    %v3072 = vld [vmem:[%s12 + $0xf0] sm:$0xff]
    %v3073 = vld [vmem:[%s12 + $0xf8] sm:$0xff]
    %v3074 = vld [vmem:[%s12 + $0x100] sm:$0xff]
    %v3075 = vld [vmem:[%s12 + $0x108] sm:$0xff]
    %v3076 = vld [vmem:[%s12 + $0x110] sm:$0xff]
    %v3077 = vld [vmem:[%s12 + $0x118] sm:$0xff]
    %v3078 = vld [vmem:[%s12 + $0x120] sm:$0xff]
    %v3079 = vld [vmem:[%s12 + $0x128] sm:$0xff]
    %v3080 = vld [vmem:[%s12 + $0x130] sm:$0xff]
    %v3081 = vld [vmem:[%s12 + $0x138] sm:$0xff]
    %v3082 = vld [vmem:[%s12 + $0x140] sm:$0xff]
    %v3083 = vld [vmem:[%s12 + $0x148] sm:$0xff]
    %v3084 = vld [vmem:[%s12 + $0x150] sm:$0xff]
    %v3085 = vld [vmem:[%s12 + $0x158] sm:$0xff]
    %v3086 = vld [vmem:[%s12 + $0x160] sm:$0xff]
    %v3087 = vld [vmem:[%s12 + $0x168] sm:$0xff]
    %v3088 = vld [vmem:[%s12 + $0x170] sm:$0xff]
    %v3089 = vld [vmem:[%s12 + $0x178] sm:$0xff]
    %v3090 = vld [vmem:[%s12 + $0x180] sm:$0xff]
    %v3091 = vld [vmem:[%s12 + $0x188] sm:$0xff]
    %v3092 = vld [vmem:[%s12 + $0x190] sm:$0xff]
    %v3093 = vld [vmem:[%s12 + $0x198] sm:$0xff]
    %v3094 = vld [vmem:[%s12 + $0x1a0] sm:$0xff]
    %v3095 = vld [vmem:[%s12 + $0x1a8] sm:$0xff]
    %v3096 = vld [vmem:[%s12 + $0x1b0] sm:$0xff]
    %v3097 = vld [vmem:[%s12 + $0x1b8] sm:$0xff]
    %v3098 = vld [vmem:[%s12 + $0x1c0] sm:$0xff]
    %v3099 = vld [vmem:[%s12 + $0x1c8] sm:$0xff]
    %v3100 = vld [vmem:[%s12 + $0x1d0] sm:$0xff]
    %v3101 = vld [vmem:[%s12 + $0x1d8] sm:$0xff]
    %v3102 = vld [vmem:[%s12 + $0x1e0] sm:$0xff]
    %v3103 = vld [vmem:[%s12 + $0x1e8] sm:$0xff]
    %v3104 = vld [vmem:[%s12 + $0x1f0] sm:$0xff]
    %v3105 = vld [vmem:[%s12 + $0x1f8] sm:$0xff]
    %v3106 = vld [vmem:[%s12 + $0x200] sm:$0xff]
    %v3107 = vld [vmem:[%s12 + $0x208] sm:$0xff]
    %v3108 = vld [vmem:[%s12 + $0x210] sm:$0xff]
    %v3109 = vld [vmem:[%s12 + $0x218] sm:$0xff]
    %v3110 = vld [vmem:[%s12 + $0x220] sm:$0xff]
    %v3111 = vld [vmem:[%s12 + $0x228] sm:$0xff]
    %v3112 = vld [vmem:[%s12 + $0x230] sm:$0xff]
    %v3113 = vld [vmem:[%s12 + $0x238] sm:$0xff]
    %v3114 = vld [vmem:[%s12 + $0x240] sm:$0xff]
    %v3115 = vld [vmem:[%s12 + $0x248] sm:$0xff]
    %v3116 = vld [vmem:[%s12 + $0x250] sm:$0xff]
    %v3117 = vld [vmem:[%s12 + $0x258] sm:$0xff]
    %v3118 = vld [vmem:[%s12 + $0x260] sm:$0xff]
    %v3119 = vld [vmem:[%s12 + $0x268] sm:$0xff]
    %v3120 = vld [vmem:[%s12 + $0x270] sm:$0xff]
    %v3121 = vld [vmem:[%s12 + $0x278] sm:$0xff]
    %v3122 = vld [vmem:[%s12 + $0x280] sm:$0xff]
    %v3123 = vld [vmem:[%s12 + $0x288] sm:$0xff]
    %v3124 = vld [vmem:[%s12 + $0x290] sm:$0xff]
    %v3125 = vld [vmem:[%s12 + $0x298] sm:$0xff]
    %v3126 = vld [vmem:[%s12 + $0x2a0] sm:$0xff]
    %v3127 = vld [vmem:[%s12 + $0x2a8] sm:$0xff]
    %v3128 = vld [vmem:[%s12 + $0x2b0] sm:$0xff]
    %v3129 = vld [vmem:[%s12 + $0x2b8] sm:$0xff]
    %v3130 = vld [vmem:[%s12 + $0x2c0] sm:$0xff]
    %v3131 = vld [vmem:[%s12 + $0x2c8] sm:$0xff]
    %v3132 = vld [vmem:[%s12 + $0x2d0] sm:$0xff]
    %v3133 = vld [vmem:[%s12 + $0x2d8] sm:$0xff]
    %v3134 = vld [vmem:[%s12 + $0x2e0] sm:$0xff]
    %v3135 = vld [vmem:[%s12 + $0x2e8] sm:$0xff]
    %v3136 = vld [vmem:[%s12 + $0x2f0] sm:$0xff]
    %v3137 = vld [vmem:[%s12 + $0x2f8] sm:$0xff]
    %v3138 = vld [vmem:[%s12 + $0x300] sm:$0xff]
    %v3139 = vld [vmem:[%s12 + $0x308] sm:$0xff]
    %v3140 = vld [vmem:[%s12 + $0x310] sm:$0xff]
    %v3141 = vld [vmem:[%s12 + $0x318] sm:$0xff]
    %v3142 = vld [vmem:[%s12 + $0x320] sm:$0xff]
    %v3143 = vld [vmem:[%s12 + $0x328] sm:$0xff]
    %v3144 = vld [vmem:[%s12 + $0x330] sm:$0xff]
    %v3145 = vld [vmem:[%s12 + $0x338] sm:$0xff]
    %v3146 = vld [vmem:[%s12 + $0x340] sm:$0xff]
    %v3147 = vld [vmem:[%s12 + $0x348] sm:$0xff]
    %v3148 = vld [vmem:[%s12 + $0x350] sm:$0xff]
    %v3149 = vld [vmem:[%s12 + $0x358] sm:$0xff]
    %v3150 = vld [vmem:[%s12 + $0x360] sm:$0xff]
    %v3151 = vld [vmem:[%s12 + $0x368] sm:$0xff]
    %v3152 = vld [vmem:[%s12 + $0x370] sm:$0xff]
    %v3153 = vld [vmem:[%s12 + $0x378] sm:$0xff]
    %v3154 = vld [vmem:[%s12 + $0x380] sm:$0xff]
    %v3155 = vld [vmem:[%s12 + $0x388] sm:$0xff]
    %v3156 = vld [vmem:[%s12 + $0x390] sm:$0xff]
    %v3157 = vld [vmem:[%s12 + $0x398] sm:$0xff]
    %v3158 = vld [vmem:[%s12 + $0x3a0] sm:$0xff]
    %v3159 = vld [vmem:[%s12 + $0x3a8] sm:$0xff]
    %v3160 = vld [vmem:[%s12 + $0x3b0] sm:$0xff]
    %v3161 = vld [vmem:[%s12 + $0x3b8] sm:$0xff]
    %v3162 = vld [vmem:[%s12 + $0x3c0] sm:$0xff]
    %v3163 = vld [vmem:[%s12 + $0x3c8] sm:$0xff]
    %v3164 = vld [vmem:[%s12 + $0x3d0] sm:$0xff]
    %v3165 = vld [vmem:[%s12 + $0x3d8] sm:$0xff]
    %v3166 = vld [vmem:[%s12 + $0x3e0] sm:$0xff]
    %v3167 = vld [vmem:[%s12 + $0x3e8] sm:$0xff]
    %v3168 = vld [vmem:[%s12 + $0x3f0] sm:$0xff]
    %v3169 = vld [vmem:[%s12 + $0x3f8] sm:$0xff]
    %v3170 = vld [vmem:[%s13] sm:$0x1]
    %v3172 = vlaneseq
    %v3173 = vshrl.u32 %v3172, 7
    %v3174 = vsub.s32 0, %v3173
    %v3175 = vrot.slane %v3170, %v3174
    %v3181 = vcombine.high %v3038, %v3038
    %v3182 = vcombine.high %v3039, %v3039
    %v3183 = vcombine.high %v3040, %v3040
    %v3184 = vcombine.high %v3041, %v3041
    %3189 = vmatprep.subr.mxu0 0.0
    %3190 = vmatpush1.msra.mxu0 %v3042
    %3191 = vmatprep.subr.mxu0 0.0
    %3192 = vmatpush1.msra.mxu0 %v3043
    %3193 = vmatprep.subr.mxu0 0.0
    %3194 = vmatpush1.msra.mxu0 %v3044
    %3195 = vmatprep.subr.mxu0 0.0
    %3196 = vmatpush1.msra.mxu0 %v3045
    %3197 = vmatprep.subr.mxu0 0.0
    %3198 = vmatpush1.msra.mxu0 %v3046
    %3199 = vmatprep.subr.mxu0 0.0
    %3200 = vmatpush1.msra.mxu0 %v3047
    %3201 = vmatprep.subr.mxu0 0.0
    %3202 = vmatpush1.msra.mxu0 %v3048
    %3203 = vmatprep.subr.mxu0 0.0
    %3204 = vmatpush1.msra.mxu0 %v3049
    %3205 = vmatprep.subr.mxu0 0.0
    %3206 = vmatpush1.msra.mxu0 %v3050
    %3207 = vmatprep.subr.mxu0 0.0
    %3208 = vmatpush1.msra.mxu0 %v3051
    %3209 = vmatprep.subr.mxu0 0.0
    %3210 = vmatpush1.msra.mxu0 %v3052
    %3211 = vmatprep.subr.mxu0 0.0
    %3212 = vmatpush1.msra.mxu0 %v3053
    %3213 = vmatprep.subr.mxu0 0.0
    %3214 = vmatpush1.msra.mxu0 %v3054
    %3215 = vmatprep.subr.mxu0 0.0
    %3216 = vmatpush1.msra.mxu0 %v3055
    %3217 = vmatprep.subr.mxu0 0.0
    %3218 = vmatpush1.msra.mxu0 %v3056
    %3219 = vmatprep.subr.mxu0 0.0
    %3220 = vmatpush1.msra.mxu0 %v3057
    %3221 = vmatprep.subr.mxu0 0.0
    %3222 = vmatpush1.msra.mxu0 %v3058
    %3223 = vmatprep.subr.mxu0 0.0
    %3224 = vmatpush1.msra.mxu0 %v3059
    %3225 = vmatprep.subr.mxu0 0.0
    %3226 = vmatpush1.msra.mxu0 %v3060
    %3227 = vmatprep.subr.mxu0 0.0
    %3228 = vmatpush1.msra.mxu0 %v3061
    %3229 = vmatprep.subr.mxu0 0.0
    %3230 = vmatpush1.msra.mxu0 %v3062
    %3231 = vmatprep.subr.mxu0 0.0
    %3232 = vmatpush1.msra.mxu0 %v3063
    %3233 = vmatprep.subr.mxu0 0.0
    %3234 = vmatpush1.msra.mxu0 %v3064
    %3235 = vmatprep.subr.mxu0 0.0
    %3236 = vmatpush1.msra.mxu0 %v3065
    %3237 = vmatprep.subr.mxu0 0.0
    %3238 = vmatpush1.msra.mxu0 %v3066
    %3239 = vmatprep.subr.mxu0 0.0
    %3240 = vmatpush1.msra.mxu0 %v3067
    %3241 = vmatprep.subr.mxu0 0.0
    %3242 = vmatpush1.msra.mxu0 %v3068
    %3243 = vmatprep.subr.mxu0 0.0
    %3244 = vmatpush1.msra.mxu0 %v3069
    %3245 = vmatprep.subr.mxu0 0.0
    %3246 = vmatpush1.msra.mxu0 %v3070
    %3247 = vmatprep.subr.mxu0 0.0
    %3248 = vmatpush1.msra.mxu0 %v3071
    %3249 = vmatprep.subr.mxu0 0.0
    %3250 = vmatpush1.msra.mxu0 %v3072
    %3251 = vmatprep.subr.mxu0 0.0
    %3252 = vmatpush1.msra.mxu0 %v3073
    %3253 = vmatprep.mubr.f32.mxu0 %v3181
    %3254 = vmatmul.mubr.f32.gmra.mrb[0].mxu0 %v3038
    %v3255 = vpop.f32.mrb[0].mxu0
    %v3256 = vadd.f32 %v3175, %v3255
    %v3257 = vpop.f32.mrb[0].mxu0
    %3258 = vdwg.mxu0
    %3259 = vmatprep.subr.mxu0 0.0
    %3260 = vmatpush1.msra.mxu0 %v3074
    %3261 = vmatprep.subr.mxu0 0.0
    %3262 = vmatpush1.msra.mxu0 %v3075
    %3263 = vmatprep.subr.mxu0 0.0
    %3264 = vmatpush1.msra.mxu0 %v3076
    %3265 = vmatprep.subr.mxu0 0.0
    %3266 = vmatpush1.msra.mxu0 %v3077
    %3267 = vmatprep.subr.mxu0 0.0
    %3268 = vmatpush1.msra.mxu0 %v3078
    %3269 = vmatprep.subr.mxu0 0.0
    %3270 = vmatpush1.msra.mxu0 %v3079
    %3271 = vmatprep.subr.mxu0 0.0
    %3272 = vmatpush1.msra.mxu0 %v3080
    %3273 = vmatprep.subr.mxu0 0.0
    %3274 = vmatpush1.msra.mxu0 %v3081
    %3275 = vmatprep.subr.mxu0 0.0
    %3276 = vmatpush1.msra.mxu0 %v3082
    %3277 = vmatprep.subr.mxu0 0.0
    %3278 = vmatpush1.msra.mxu0 %v3083
    %3279 = vmatprep.subr.mxu0 0.0
    %3280 = vmatpush1.msra.mxu0 %v3084
    %3281 = vmatprep.subr.mxu0 0.0
    %3282 = vmatpush1.msra.mxu0 %v3085
    %3283 = vmatprep.subr.mxu0 0.0
    %3284 = vmatpush1.msra.mxu0 %v3086
    %3285 = vmatprep.subr.mxu0 0.0
    %3286 = vmatpush1.msra.mxu0 %v3087
    %3287 = vmatprep.subr.mxu0 0.0
    %3288 = vmatpush1.msra.mxu0 %v3088
    %3289 = vmatprep.subr.mxu0 0.0
    %3290 = vmatpush1.msra.mxu0 %v3089
    %3291 = vmatprep.subr.mxu0 0.0
    %3292 = vmatpush1.msra.mxu0 %v3090
    %3293 = vmatprep.subr.mxu0 0.0
    %3294 = vmatpush1.msra.mxu0 %v3091
    %3295 = vmatprep.subr.mxu0 0.0
    %3296 = vmatpush1.msra.mxu0 %v3092
    %3297 = vmatprep.subr.mxu0 0.0
    %3298 = vmatpush1.msra.mxu0 %v3093
    %3299 = vmatprep.subr.mxu0 0.0
    %3300 = vmatpush1.msra.mxu0 %v3094
    %3301 = vmatprep.subr.mxu0 0.0
    %3302 = vmatpush1.msra.mxu0 %v3095
    %3303 = vmatprep.subr.mxu0 0.0
    %3304 = vmatpush1.msra.mxu0 %v3096
    %3305 = vmatprep.subr.mxu0 0.0
    %3306 = vmatpush1.msra.mxu0 %v3097
    %3307 = vmatprep.subr.mxu0 0.0
    %3308 = vmatpush1.msra.mxu0 %v3098
    %3309 = vmatprep.subr.mxu0 0.0
    %3310 = vmatpush1.msra.mxu0 %v3099
    %3311 = vmatprep.subr.mxu0 0.0
    %3312 = vmatpush1.msra.mxu0 %v3100
    %3313 = vmatprep.subr.mxu0 0.0
    %3314 = vmatpush1.msra.mxu0 %v3101
    %3315 = vmatprep.subr.mxu0 0.0
    %3316 = vmatpush1.msra.mxu0 %v3102
    %3317 = vmatprep.subr.mxu0 0.0
    %3318 = vmatpush1.msra.mxu0 %v3103
    %3319 = vmatprep.subr.mxu0 0.0
    %3320 = vmatpush1.msra.mxu0 %v3104
    %3321 = vmatprep.subr.mxu0 0.0
    %3322 = vmatpush1.msra.mxu0 %v3105
    %3323 = vmatprep.mubr.f32.mxu0 %v3182
    %3324 = vmatmul.mubr.f32.gmra.mrb[0].mxu0 %v3039
    %v3325 = vpop.f32.mrb[0].mxu0
    %v3326 = vadd.f32 %v3256, %v3325
    %v3327 = vpop.f32.mrb[0].mxu0
    %3328 = vdwg.mxu0
    %3329 = vmatprep.subr.mxu0 0.0
    %3330 = vmatpush1.msra.mxu0 %v3106
    %3331 = vmatprep.subr.mxu0 0.0
    %3332 = vmatpush1.msra.mxu0 %v3107
    %3333 = vmatprep.subr.mxu0 0.0
    %3334 = vmatpush1.msra.mxu0 %v3108
    %3335 = vmatprep.subr.mxu0 0.0
    %3336 = vmatpush1.msra.mxu0 %v3109
    %3337 = vmatprep.subr.mxu0 0.0
    %3338 = vmatpush1.msra.mxu0 %v3110
    %3339 = vmatprep.subr.mxu0 0.0
    %3340 = vmatpush1.msra.mxu0 %v3111
    %3341 = vmatprep.subr.mxu0 0.0
    %3342 = vmatpush1.msra.mxu0 %v3112
    %3343 = vmatprep.subr.mxu0 0.0
    %3344 = vmatpush1.msra.mxu0 %v3113
    %3345 = vmatprep.subr.mxu0 0.0
    %3346 = vmatpush1.msra.mxu0 %v3114
    %3347 = vmatprep.subr.mxu0 0.0
    %3348 = vmatpush1.msra.mxu0 %v3115
    %3349 = vmatprep.subr.mxu0 0.0
    %3350 = vmatpush1.msra.mxu0 %v3116
    %3351 = vmatprep.subr.mxu0 0.0
    %3352 = vmatpush1.msra.mxu0 %v3117
    %3353 = vmatprep.subr.mxu0 0.0
    %3354 = vmatpush1.msra.mxu0 %v3118
    %3355 = vmatprep.subr.mxu0 0.0
    %3356 = vmatpush1.msra.mxu0 %v3119
    %3357 = vmatprep.subr.mxu0 0.0
    %3358 = vmatpush1.msra.mxu0 %v3120
    %3359 = vmatprep.subr.mxu0 0.0
    %3360 = vmatpush1.msra.mxu0 %v3121
    %3361 = vmatprep.subr.mxu0 0.0
    %3362 = vmatpush1.msra.mxu0 %v3122
    %3363 = vmatprep.subr.mxu0 0.0
    %3364 = vmatpush1.msra.mxu0 %v3123
    %3365 = vmatprep.subr.mxu0 0.0
    %3366 = vmatpush1.msra.mxu0 %v3124
    %3367 = vmatprep.subr.mxu0 0.0
    %3368 = vmatpush1.msra.mxu0 %v3125
    %3369 = vmatprep.subr.mxu0 0.0
    %3370 = vmatpush1.msra.mxu0 %v3126
    %3371 = vmatprep.subr.mxu0 0.0
    %3372 = vmatpush1.msra.mxu0 %v3127
    %3373 = vmatprep.subr.mxu0 0.0
    %3374 = vmatpush1.msra.mxu0 %v3128
    %3375 = vmatprep.subr.mxu0 0.0
    %3376 = vmatpush1.msra.mxu0 %v3129
    %3377 = vmatprep.subr.mxu0 0.0
    %3378 = vmatpush1.msra.mxu0 %v3130
    %3379 = vmatprep.subr.mxu0 0.0
    %3380 = vmatpush1.msra.mxu0 %v3131
    %3381 = vmatprep.subr.mxu0 0.0
    %3382 = vmatpush1.msra.mxu0 %v3132
    %3383 = vmatprep.subr.mxu0 0.0
    %3384 = vmatpush1.msra.mxu0 %v3133
    %3385 = vmatprep.subr.mxu0 0.0
    %3386 = vmatpush1.msra.mxu0 %v3134
    %3387 = vmatprep.subr.mxu0 0.0
    %3388 = vmatpush1.msra.mxu0 %v3135
    %3389 = vmatprep.subr.mxu0 0.0
    %3390 = vmatpush1.msra.mxu0 %v3136
    %3391 = vmatprep.subr.mxu0 0.0
    %3392 = vmatpush1.msra.mxu0 %v3137
    %3393 = vmatprep.mubr.f32.mxu0 %v3183
    %3394 = vmatmul.mubr.f32.gmra.mrb[0].mxu0 %v3040
    %v3395 = vpop.f32.mrb[0].mxu0
    %v3396 = vadd.f32 %v3326, %v3395
    %v3397 = vpop.f32.mrb[0].mxu0
    %3398 = vdwg.mxu0
    %3399 = vmatprep.subr.mxu0 0.0
    %3400 = vmatpush1.msra.mxu0 %v3138
    %3401 = vmatprep.subr.mxu0 0.0
    %3402 = vmatpush1.msra.mxu0 %v3139
    %3403 = vmatprep.subr.mxu0 0.0
    %3404 = vmatpush1.msra.mxu0 %v3140
    %3405 = vmatprep.subr.mxu0 0.0
    %3406 = vmatpush1.msra.mxu0 %v3141
    %3407 = vmatprep.subr.mxu0 0.0
    %3408 = vmatpush1.msra.mxu0 %v3142
    %3409 = vmatprep.subr.mxu0 0.0
    %3410 = vmatpush1.msra.mxu0 %v3143
    %3411 = vmatprep.subr.mxu0 0.0
    %3412 = vmatpush1.msra.mxu0 %v3144
    %3413 = vmatprep.subr.mxu0 0.0
    %3414 = vmatpush1.msra.mxu0 %v3145
    %3415 = vmatprep.subr.mxu0 0.0
    %3416 = vmatpush1.msra.mxu0 %v3146
    %3417 = vmatprep.subr.mxu0 0.0
    %3418 = vmatpush1.msra.mxu0 %v3147
    %3419 = vmatprep.subr.mxu0 0.0
    %3420 = vmatpush1.msra.mxu0 %v3148
    %3421 = vmatprep.subr.mxu0 0.0
    %3422 = vmatpush1.msra.mxu0 %v3149
    %3423 = vmatprep.subr.mxu0 0.0
    %3424 = vmatpush1.msra.mxu0 %v3150
    %3425 = vmatprep.subr.mxu0 0.0
    %3426 = vmatpush1.msra.mxu0 %v3151
    %3427 = vmatprep.subr.mxu0 0.0
    %3428 = vmatpush1.msra.mxu0 %v3152
    %3429 = vmatprep.subr.mxu0 0.0
    %3430 = vmatpush1.msra.mxu0 %v3153
    %3431 = vmatprep.subr.mxu0 0.0
    %3432 = vmatpush1.msra.mxu0 %v3154
    %3433 = vmatprep.subr.mxu0 0.0
    %3434 = vmatpush1.msra.mxu0 %v3155
    %3435 = vmatprep.subr.mxu0 0.0
    %3436 = vmatpush1.msra.mxu0 %v3156
    %3437 = vmatprep.subr.mxu0 0.0
    %3438 = vmatpush1.msra.mxu0 %v3157
    %3439 = vmatprep.subr.mxu0 0.0
    %3440 = vmatpush1.msra.mxu0 %v3158
    %3441 = vmatprep.subr.mxu0 0.0
    %3442 = vmatpush1.msra.mxu0 %v3159
    %3443 = vmatprep.subr.mxu0 0.0
    %3444 = vmatpush1.msra.mxu0 %v3160
    %3445 = vmatprep.subr.mxu0 0.0
    %3446 = vmatpush1.msra.mxu0 %v3161
    %3447 = vmatprep.subr.mxu0 0.0
    %3448 = vmatpush1.msra.mxu0 %v3162
    %3449 = vmatprep.subr.mxu0 0.0
    %3450 = vmatpush1.msra.mxu0 %v3163
    %3451 = vmatprep.subr.mxu0 0.0
    %3452 = vmatpush1.msra.mxu0 %v3164
    %3453 = vmatprep.subr.mxu0 0.0
    %3454 = vmatpush1.msra.mxu0 %v3165
    %3455 = vmatprep.subr.mxu0 0.0
    %3456 = vmatpush1.msra.mxu0 %v3166
    %3457 = vmatprep.subr.mxu0 0.0
    %3458 = vmatpush1.msra.mxu0 %v3167
    %3459 = vmatprep.subr.mxu0 0.0
    %3460 = vmatpush1.msra.mxu0 %v3168
    %3461 = vmatprep.subr.mxu0 0.0
    %3462 = vmatpush1.msra.mxu0 %v3169
    %3463 = vmatprep.mubr.f32.mxu0 %v3184
    %3464 = vmatmul.mubr.f32.gmra.mrb[0].mxu0 %v3041
    %v3465 = vpop.f32.mrb[0].mxu0
    %v3466 = vadd.f32 %v3396, %v3465
    %v3467 = vpop.f32.mrb[0].mxu0
    %3468 = vdwg.mxu0
    %v3469 = vld [vmem:[%s6] sm:$0xff]
    %v3470 = vld [vmem:[%s6 + $0x8] sm:$0xff]
    %v3471 = vld [vmem:[%s6 + $0x10] sm:$0xff]
    %v3472 = vld [vmem:[%s6 + $0x18] sm:$0xff]
    %vm3473 = vcmask 261120
    %v3475 = vsel %vm3473, %v1670, 0
    %3477 = vmatprep.subr.mxu0 0.0
    %3478 = vmatpush1.msra.mxu0 %v3469
    %3479 = vmatprep.subr.mxu0 0.0
    %3480 = vmatpush1.msra.mxu0 %v3470
    %3481 = vmatprep.subr.mxu0 0.0
    %3482 = vmatpush1.msra.mxu0 %v3471
    %3483 = vmatprep.subr.mxu0 0.0
    %3484 = vmatpush1.msra.mxu0 %v3472
    %3485 = vmatprep.subr.mxu0 0.0
    %3486 = vmatpush1.msra.mxu0 0.0
    %3487 = vmatprep.subr.mxu0 0.0
    %3488 = vmatpush1.msra.mxu0 0.0
    %3489 = vmatprep.subr.mxu0 0.0
    %3490 = vmatpush1.msra.mxu0 0.0
    %3491 = vmatprep.subr.mxu0 0.0
    %3492 = vmatpush1.msra.mxu0 0.0
    %3493 = vmatprep.subr.mxu0 0.0
    %3494 = vmatpush1.msra.mxu0 0.0
    %3495 = vmatprep.subr.mxu0 0.0
    %3496 = vmatpush1.msra.mxu0 0.0
    %3497 = vmatprep.subr.mxu0 0.0
    %3498 = vmatpush1.msra.mxu0 0.0
    %3499 = vmatprep.subr.mxu0 0.0
    %3500 = vmatpush1.msra.mxu0 0.0
    %3501 = vmatprep.subr.mxu0 0.0
    %3502 = vmatpush1.msra.mxu0 0.0
    %3503 = vmatprep.subr.mxu0 0.0
    %3504 = vmatpush1.msra.mxu0 0.0
    %3505 = vmatprep.subr.mxu0 0.0
    %3506 = vmatpush1.msra.mxu0 0.0
    %3507 = vmatprep.subr.mxu0 0.0
    %3508 = vmatpush1.msra.mxu0 0.0
    %3509 = vmatprep.subr.mxu0 0.0
    %3510 = vmatpush1.msra.mxu0 0.0
    %3511 = vmatprep.subr.mxu0 0.0
    %3512 = vmatpush1.msra.mxu0 0.0
    %3513 = vmatprep.subr.mxu0 0.0
    %3514 = vmatpush1.msra.mxu0 0.0
    %3515 = vmatprep.subr.mxu0 0.0
    %3516 = vmatpush1.msra.mxu0 0.0
    %3517 = vmatprep.subr.mxu0 0.0
    %3518 = vmatpush1.msra.mxu0 0.0
    %3519 = vmatprep.subr.mxu0 0.0
    %3520 = vmatpush1.msra.mxu0 0.0
    %3521 = vmatprep.subr.mxu0 0.0
    %3522 = vmatpush1.msra.mxu0 0.0
    %3523 = vmatprep.subr.mxu0 0.0
    %3524 = vmatpush1.msra.mxu0 0.0
    %3525 = vmatprep.subr.mxu0 0.0
    %3526 = vmatpush1.msra.mxu0 0.0
    %3527 = vmatprep.subr.mxu0 0.0
    %3528 = vmatpush1.msra.mxu0 0.0
    %3529 = vmatprep.subr.mxu0 0.0
    %3530 = vmatpush1.msra.mxu0 0.0
    %3531 = vmatprep.subr.mxu0 0.0
    %3532 = vmatpush1.msra.mxu0 0.0
    %3533 = vmatprep.subr.mxu0 0.0
    %3534 = vmatpush1.msra.mxu0 0.0
    %3535 = vmatprep.subr.mxu0 0.0
    %3536 = vmatpush1.msra.mxu0 0.0
    %3537 = vmatprep.subr.mxu0 0.0
    %3538 = vmatpush1.msra.mxu0 0.0
    %3539 = vmatprep.subr.mxu0 0.0
    %3540 = vmatpush1.msra.mxu0 0.0
    %3541 = vmatprep.mubr.f32.mxu0 0.0
    %3542 = vmatmul.mubr.f32.gmra.mrb[0].mxu0 %v3475
    %v3543 = vpop.f32.mrb[0].mxu0
    %v3544 = vadd.f32 0.0, %v3543
    %v3545 = vpop.f32.mrb[0].mxu0
    %3546 = vdwg.mxu0
    %v3547 = vmax.f32 %v3544, 0.0
    %v3548 = vld [vmem:[%s7] sm:$0x3]
    %vm3549 = vcmask 15360
    %v3551 = vsel %vm3549, %v3547, 0
    %vm3553 = vcmask 1041408
    %v3555 = vsel %vm3553, %v3548, 0
    %3557 = vmatprep.subr.mxu0 0.0
    %3558 = vmatpush1.msra.mxu0 %v3555
    %3559 = vmatprep.subr.mxu0 0.0
    %3560 = vmatpush1.msra.mxu0 0.0
    %3561 = vmatprep.subr.mxu0 0.0
    %3562 = vmatpush1.msra.mxu0 0.0
    %3563 = vmatprep.subr.mxu0 0.0
    %3564 = vmatpush1.msra.mxu0 0.0
    %3565 = vmatprep.subr.mxu0 0.0
    %3566 = vmatpush1.msra.mxu0 0.0
    %3567 = vmatprep.subr.mxu0 0.0
    %3568 = vmatpush1.msra.mxu0 0.0
    %3569 = vmatprep.subr.mxu0 0.0
    %3570 = vmatpush1.msra.mxu0 0.0
    %3571 = vmatprep.subr.mxu0 0.0
    %3572 = vmatpush1.msra.mxu0 0.0
    %3573 = vmatprep.subr.mxu0 0.0
    %3574 = vmatpush1.msra.mxu0 0.0
    %3575 = vmatprep.subr.mxu0 0.0
    %3576 = vmatpush1.msra.mxu0 0.0
    %3577 = vmatprep.subr.mxu0 0.0
    %3578 = vmatpush1.msra.mxu0 0.0
    %3579 = vmatprep.subr.mxu0 0.0
    %3580 = vmatpush1.msra.mxu0 0.0
    %3581 = vmatprep.subr.mxu0 0.0
    %3582 = vmatpush1.msra.mxu0 0.0
    %3583 = vmatprep.subr.mxu0 0.0
    %3584 = vmatpush1.msra.mxu0 0.0
    %3585 = vmatprep.subr.mxu0 0.0
    %3586 = vmatpush1.msra.mxu0 0.0
    %3587 = vmatprep.subr.mxu0 0.0
    %3588 = vmatpush1.msra.mxu0 0.0
    %3589 = vmatprep.subr.mxu0 0.0
    %3590 = vmatpush1.msra.mxu0 0.0
    %3591 = vmatprep.subr.mxu0 0.0
    %3592 = vmatpush1.msra.mxu0 0.0
    %3593 = vmatprep.subr.mxu0 0.0
    %3594 = vmatpush1.msra.mxu0 0.0
    %3595 = vmatprep.subr.mxu0 0.0
    %3596 = vmatpush1.msra.mxu0 0.0
    %3597 = vmatprep.subr.mxu0 0.0
    %3598 = vmatpush1.msra.mxu0 0.0
    %3599 = vmatprep.subr.mxu0 0.0
    %3600 = vmatpush1.msra.mxu0 0.0
    %3601 = vmatprep.subr.mxu0 0.0
    %3602 = vmatpush1.msra.mxu0 0.0
    %3603 = vmatprep.subr.mxu0 0.0
    %3604 = vmatpush1.msra.mxu0 0.0
    %3605 = vmatprep.subr.mxu0 0.0
    %3606 = vmatpush1.msra.mxu0 0.0
    %3607 = vmatprep.subr.mxu0 0.0
    %3608 = vmatpush1.msra.mxu0 0.0
    %3609 = vmatprep.subr.mxu0 0.0
    %3610 = vmatpush1.msra.mxu0 0.0
    %3611 = vmatprep.subr.mxu0 0.0
    %3612 = vmatpush1.msra.mxu0 0.0
    %3613 = vmatprep.subr.mxu0 0.0
    %3614 = vmatpush1.msra.mxu0 0.0
    %3615 = vmatprep.subr.mxu0 0.0
    %3616 = vmatpush1.msra.mxu0 0.0
    %3617 = vmatprep.subr.mxu0 0.0
    %3618 = vmatpush1.msra.mxu0 0.0
    %3619 = vmatprep.subr.mxu0 0.0
    %3620 = vmatpush1.msra.mxu0 0.0
    %3621 = vmatprep.mubr.f32.mxu0 0.0
    %3622 = vmatmul.mubr.f32.gmra.mrb[0].mxu0 %v3551
    %v3623 = vpop.f32.mrb[0].mxu0
    %v3624 = vadd.f32 0.0, %v3623
    %v3625 = vpop.f32.mrb[0].mxu0
    %3626 = vdwg.mxu0
    %v3627 = vxor.u32 %v3624, 2147483648
    %v3628 = vmul.f32 %v3627, 1.442695
    %v3629 = vpow.pop %v3628
    %v3630 = vadd.f32 %v3629, 1.0
    %v3631 = vrcp.pop %v3630
    %v3632 = vmul.f32 1.0, %v3631
    %v3634 = vsel %vm3473, %v3632, 0
    %3636 = vmatprep.subr.mxu0 %v730
    %3637 = vmatpush1.msra.mxu0 %v729
    %3638 = vmatprep.subr.mxu0 %v746
    %3639 = vmatpush1.msra.mxu0 %v745
    %3640 = vmatprep.subr.mxu0 %v762
    %3641 = vmatpush1.msra.mxu0 %v761
    %3642 = vmatprep.subr.mxu0 %v778
    %3643 = vmatpush1.msra.mxu0 %v777
    %3644 = vmatprep.subr.mxu0 0.0
    %3645 = vmatpush1.msra.mxu0 0.0
    %3646 = vmatprep.subr.mxu0 0.0
    %3647 = vmatpush1.msra.mxu0 0.0
    %3648 = vmatprep.subr.mxu0 0.0
    %3649 = vmatpush1.msra.mxu0 0.0
    %3650 = vmatprep.subr.mxu0 0.0
    %3651 = vmatpush1.msra.mxu0 0.0
    %3652 = vmatprep.subr.mxu0 0.0
    %3653 = vmatpush1.msra.mxu0 0.0
    %3654 = vmatprep.subr.mxu0 0.0
    %3655 = vmatpush1.msra.mxu0 0.0
    %3656 = vmatprep.subr.mxu0 0.0
    %3657 = vmatpush1.msra.mxu0 0.0
    %3658 = vmatprep.subr.mxu0 0.0
    %3659 = vmatpush1.msra.mxu0 0.0
    %3660 = vmatprep.subr.mxu0 0.0
    %3661 = vmatpush1.msra.mxu0 0.0
    %3662 = vmatprep.subr.mxu0 0.0
    %3663 = vmatpush1.msra.mxu0 0.0
    %3664 = vmatprep.subr.mxu0 0.0
    %3665 = vmatpush1.msra.mxu0 0.0
    %3666 = vmatprep.subr.mxu0 0.0
    %3667 = vmatpush1.msra.mxu0 0.0
    %3668 = vmatprep.subr.mxu0 0.0
    %3669 = vmatpush1.msra.mxu0 0.0
    %3670 = vmatprep.subr.mxu0 0.0
    %3671 = vmatpush1.msra.mxu0 0.0
    %3672 = vmatprep.subr.mxu0 0.0
    %3673 = vmatpush1.msra.mxu0 0.0
    %3674 = vmatprep.subr.mxu0 0.0
    %3675 = vmatpush1.msra.mxu0 0.0
    %3676 = vmatprep.subr.mxu0 0.0
    %3677 = vmatpush1.msra.mxu0 0.0
    %3678 = vmatprep.subr.mxu0 0.0
    %3679 = vmatpush1.msra.mxu0 0.0
    %3680 = vmatprep.subr.mxu0 0.0
    %3681 = vmatpush1.msra.mxu0 0.0
    %3682 = vmatprep.subr.mxu0 0.0
    %3683 = vmatpush1.msra.mxu0 0.0
    %3684 = vmatprep.subr.mxu0 0.0
    %3685 = vmatpush1.msra.mxu0 0.0
    %3686 = vmatprep.subr.mxu0 0.0
    %3687 = vmatpush1.msra.mxu0 0.0
    %3688 = vmatprep.subr.mxu0 0.0
    %3689 = vmatpush1.msra.mxu0 0.0
    %3690 = vmatprep.subr.mxu0 0.0
    %3691 = vmatpush1.msra.mxu0 0.0
    %3692 = vmatprep.subr.mxu0 0.0
    %3693 = vmatpush1.msra.mxu0 0.0
    %3694 = vmatprep.subr.mxu0 0.0
    %3695 = vmatpush1.msra.mxu0 0.0
    %3696 = vmatprep.subr.mxu0 0.0
    %3697 = vmatpush1.msra.mxu0 0.0
    %3698 = vmatprep.subr.mxu0 0.0
    %3699 = vmatpush1.msra.mxu0 0.0
    %3700 = vmatprep.mubr.f32.mxu0 0.0
    %3701 = vmatmul.mubr.f32.gmra.mrb[0].mxu0 %v3634
    %v3702 = vpop.f32.mrb[0].mxu0
    %v3703 = vadd.f32 0.0, %v3702
    %v3704 = vpop.f32.mrb[0].mxu0
    %v3705 = vadd.f32 0.0, %v3704
    %3706 = vdwg.mxu0
    %3707 = vmatprep.subr.mxu0 %v732
    %3708 = vmatpush1.msra.mxu0 %v731
    %3709 = vmatprep.subr.mxu0 %v748
    %3710 = vmatpush1.msra.mxu0 %v747
    %3711 = vmatprep.subr.mxu0 %v764
    %3712 = vmatpush1.msra.mxu0 %v763
    %3713 = vmatprep.subr.mxu0 %v780
    %3714 = vmatpush1.msra.mxu0 %v779
    %3715 = vmatprep.subr.mxu0 0.0
    %3716 = vmatpush1.msra.mxu0 0.0
    %3717 = vmatprep.subr.mxu0 0.0
    %3718 = vmatpush1.msra.mxu0 0.0
    %3719 = vmatprep.subr.mxu0 0.0
    %3720 = vmatpush1.msra.mxu0 0.0
    %3721 = vmatprep.subr.mxu0 0.0
    %3722 = vmatpush1.msra.mxu0 0.0
    %3723 = vmatprep.subr.mxu0 0.0
    %3724 = vmatpush1.msra.mxu0 0.0
    %3725 = vmatprep.subr.mxu0 0.0
    %3726 = vmatpush1.msra.mxu0 0.0
    %3727 = vmatprep.subr.mxu0 0.0
    %3728 = vmatpush1.msra.mxu0 0.0
    %3729 = vmatprep.subr.mxu0 0.0
    %3730 = vmatpush1.msra.mxu0 0.0
    %3731 = vmatprep.subr.mxu0 0.0
    %3732 = vmatpush1.msra.mxu0 0.0
    %3733 = vmatprep.subr.mxu0 0.0
    %3734 = vmatpush1.msra.mxu0 0.0
    %3735 = vmatprep.subr.mxu0 0.0
    %3736 = vmatpush1.msra.mxu0 0.0
    %3737 = vmatprep.subr.mxu0 0.0
    %3738 = vmatpush1.msra.mxu0 0.0
    %3739 = vmatprep.subr.mxu0 0.0
    %3740 = vmatpush1.msra.mxu0 0.0
    %3741 = vmatprep.subr.mxu0 0.0
    %3742 = vmatpush1.msra.mxu0 0.0
    %3743 = vmatprep.subr.mxu0 0.0
    %3744 = vmatpush1.msra.mxu0 0.0
    %3745 = vmatprep.subr.mxu0 0.0
    %3746 = vmatpush1.msra.mxu0 0.0
    %3747 = vmatprep.subr.mxu0 0.0
    %3748 = vmatpush1.msra.mxu0 0.0
    %3749 = vmatprep.subr.mxu0 0.0
    %3750 = vmatpush1.msra.mxu0 0.0
    %3751 = vmatprep.subr.mxu0 0.0
    %3752 = vmatpush1.msra.mxu0 0.0
    %3753 = vmatprep.subr.mxu0 0.0
    %3754 = vmatpush1.msra.mxu0 0.0
    %3755 = vmatprep.subr.mxu0 0.0
    %3756 = vmatpush1.msra.mxu0 0.0
    %3757 = vmatprep.subr.mxu0 0.0
    %3758 = vmatpush1.msra.mxu0 0.0
    %3759 = vmatprep.subr.mxu0 0.0
    %3760 = vmatpush1.msra.mxu0 0.0
    %3761 = vmatprep.subr.mxu0 0.0
    %3762 = vmatpush1.msra.mxu0 0.0
    %3763 = vmatprep.subr.mxu0 0.0
    %3764 = vmatpush1.msra.mxu0 0.0
    %3765 = vmatprep.subr.mxu0 0.0
    %3766 = vmatpush1.msra.mxu0 0.0
    %3767 = vmatprep.subr.mxu0 0.0
    %3768 = vmatpush1.msra.mxu0 0.0
    %3769 = vmatprep.subr.mxu0 0.0
    %3770 = vmatpush1.msra.mxu0 0.0
    %3771 = vmatprep.mubr.f32.mxu0 0.0
    %3772 = vmatmul.mubr.f32.gmra.mrb[0].mxu0 %v3634
    %v3773 = vpop.f32.mrb[0].mxu0
    %v3774 = vadd.f32 0.0, %v3773
    %v3775 = vpop.f32.mrb[0].mxu0
    %v3776 = vadd.f32 0.0, %v3775
    %3777 = vdwg.mxu0
    %3778 = vmatprep.subr.mxu0 %v734
    %3779 = vmatpush1.msra.mxu0 %v733
    %3780 = vmatprep.subr.mxu0 %v750
    %3781 = vmatpush1.msra.mxu0 %v749
    %3782 = vmatprep.subr.mxu0 %v766
    %3783 = vmatpush1.msra.mxu0 %v765
    %3784 = vmatprep.subr.mxu0 %v782
    %3785 = vmatpush1.msra.mxu0 %v781
    %3786 = vmatprep.subr.mxu0 0.0
    %3787 = vmatpush1.msra.mxu0 0.0
    %3788 = vmatprep.subr.mxu0 0.0
    %3789 = vmatpush1.msra.mxu0 0.0
    %3790 = vmatprep.subr.mxu0 0.0
    %3791 = vmatpush1.msra.mxu0 0.0
    %3792 = vmatprep.subr.mxu0 0.0
    %3793 = vmatpush1.msra.mxu0 0.0
    %3794 = vmatprep.subr.mxu0 0.0
    %3795 = vmatpush1.msra.mxu0 0.0
    %3796 = vmatprep.subr.mxu0 0.0
    %3797 = vmatpush1.msra.mxu0 0.0
    %3798 = vmatprep.subr.mxu0 0.0
    %3799 = vmatpush1.msra.mxu0 0.0
    %3800 = vmatprep.subr.mxu0 0.0
    %3801 = vmatpush1.msra.mxu0 0.0
    %3802 = vmatprep.subr.mxu0 0.0
    %3803 = vmatpush1.msra.mxu0 0.0
    %3804 = vmatprep.subr.mxu0 0.0
    %3805 = vmatpush1.msra.mxu0 0.0
    %3806 = vmatprep.subr.mxu0 0.0
    %3807 = vmatpush1.msra.mxu0 0.0
    %3808 = vmatprep.subr.mxu0 0.0
    %3809 = vmatpush1.msra.mxu0 0.0
    %3810 = vmatprep.subr.mxu0 0.0
    %3811 = vmatpush1.msra.mxu0 0.0
    %3812 = vmatprep.subr.mxu0 0.0
    %3813 = vmatpush1.msra.mxu0 0.0
    %3814 = vmatprep.subr.mxu0 0.0
    %3815 = vmatpush1.msra.mxu0 0.0
    %3816 = vmatprep.subr.mxu0 0.0
    %3817 = vmatpush1.msra.mxu0 0.0
    %3818 = vmatprep.subr.mxu0 0.0
    %3819 = vmatpush1.msra.mxu0 0.0
    %3820 = vmatprep.subr.mxu0 0.0
    %3821 = vmatpush1.msra.mxu0 0.0
    %3822 = vmatprep.subr.mxu0 0.0
    %3823 = vmatpush1.msra.mxu0 0.0
    %3824 = vmatprep.subr.mxu0 0.0
    %3825 = vmatpush1.msra.mxu0 0.0
    %3826 = vmatprep.subr.mxu0 0.0
    %3827 = vmatpush1.msra.mxu0 0.0
    %3828 = vmatprep.subr.mxu0 0.0
    %3829 = vmatpush1.msra.mxu0 0.0
    %3830 = vmatprep.subr.mxu0 0.0
    %3831 = vmatpush1.msra.mxu0 0.0
    %3832 = vmatprep.subr.mxu0 0.0
    %3833 = vmatpush1.msra.mxu0 0.0
    %3834 = vmatprep.subr.mxu0 0.0
    %3835 = vmatpush1.msra.mxu0 0.0
    %3836 = vmatprep.subr.mxu0 0.0
    %3837 = vmatpush1.msra.mxu0 0.0
    %3838 = vmatprep.subr.mxu0 0.0
    %3839 = vmatpush1.msra.mxu0 0.0
    %3840 = vmatprep.subr.mxu0 0.0
    %3841 = vmatpush1.msra.mxu0 0.0
    %3842 = vmatprep.mubr.f32.mxu0 0.0
    %3843 = vmatmul.mubr.f32.gmra.mrb[0].mxu0 %v3634
    %v3844 = vpop.f32.mrb[0].mxu0
    %v3845 = vadd.f32 0.0, %v3844
    %v3846 = vpop.f32.mrb[0].mxu0
    %v3847 = vadd.f32 0.0, %v3846
    %3848 = vdwg.mxu0
    %3849 = vmatprep.subr.mxu0 %v736
    %3850 = vmatpush1.msra.mxu0 %v735
    %3851 = vmatprep.subr.mxu0 %v752
    %3852 = vmatpush1.msra.mxu0 %v751
    %3853 = vmatprep.subr.mxu0 %v768
    %3854 = vmatpush1.msra.mxu0 %v767
    %3855 = vmatprep.subr.mxu0 %v784
    %3856 = vmatpush1.msra.mxu0 %v783
    %3857 = vmatprep.subr.mxu0 0.0
    %3858 = vmatpush1.msra.mxu0 0.0
    %3859 = vmatprep.subr.mxu0 0.0
    %3860 = vmatpush1.msra.mxu0 0.0
    %3861 = vmatprep.subr.mxu0 0.0
    %3862 = vmatpush1.msra.mxu0 0.0
    %3863 = vmatprep.subr.mxu0 0.0
    %3864 = vmatpush1.msra.mxu0 0.0
    %3865 = vmatprep.subr.mxu0 0.0
    %3866 = vmatpush1.msra.mxu0 0.0
    %3867 = vmatprep.subr.mxu0 0.0
    %3868 = vmatpush1.msra.mxu0 0.0
    %3869 = vmatprep.subr.mxu0 0.0
    %3870 = vmatpush1.msra.mxu0 0.0
    %3871 = vmatprep.subr.mxu0 0.0
    %3872 = vmatpush1.msra.mxu0 0.0
    %3873 = vmatprep.subr.mxu0 0.0
    %3874 = vmatpush1.msra.mxu0 0.0
    %3875 = vmatprep.subr.mxu0 0.0
    %3876 = vmatpush1.msra.mxu0 0.0
    %3877 = vmatprep.subr.mxu0 0.0
    %3878 = vmatpush1.msra.mxu0 0.0
    %3879 = vmatprep.subr.mxu0 0.0
    %3880 = vmatpush1.msra.mxu0 0.0
    %3881 = vmatprep.subr.mxu0 0.0
    %3882 = vmatpush1.msra.mxu0 0.0
    %3883 = vmatprep.subr.mxu0 0.0
    %3884 = vmatpush1.msra.mxu0 0.0
    %3885 = vmatprep.subr.mxu0 0.0
    %3886 = vmatpush1.msra.mxu0 0.0
    %3887 = vmatprep.subr.mxu0 0.0
    %3888 = vmatpush1.msra.mxu0 0.0
    %3889 = vmatprep.subr.mxu0 0.0
    %3890 = vmatpush1.msra.mxu0 0.0
    %3891 = vmatprep.subr.mxu0 0.0
    %3892 = vmatpush1.msra.mxu0 0.0
    %3893 = vmatprep.subr.mxu0 0.0
    %3894 = vmatpush1.msra.mxu0 0.0
    %3895 = vmatprep.subr.mxu0 0.0
    %3896 = vmatpush1.msra.mxu0 0.0
    %3897 = vmatprep.subr.mxu0 0.0
    %3898 = vmatpush1.msra.mxu0 0.0
    %3899 = vmatprep.subr.mxu0 0.0
    %3900 = vmatpush1.msra.mxu0 0.0
    %3901 = vmatprep.subr.mxu0 0.0
    %3902 = vmatpush1.msra.mxu0 0.0
    %3903 = vmatprep.subr.mxu0 0.0
    %3904 = vmatpush1.msra.mxu0 0.0
    %3905 = vmatprep.subr.mxu0 0.0
    %3906 = vmatpush1.msra.mxu0 0.0
    %3907 = vmatprep.subr.mxu0 0.0
    %3908 = vmatpush1.msra.mxu0 0.0
    %3909 = vmatprep.subr.mxu0 0.0
    %3910 = vmatpush1.msra.mxu0 0.0
    %3911 = vmatprep.subr.mxu0 0.0
    %3912 = vmatpush1.msra.mxu0 0.0
    %3913 = vmatprep.mubr.f32.mxu0 0.0
    %3914 = vmatmul.mubr.f32.gmra.mrb[0].mxu0 %v3634
    %v3915 = vpop.f32.mrb[0].mxu0
    %v3916 = vadd.f32 0.0, %v3915
    %v3917 = vpop.f32.mrb[0].mxu0
    %v3918 = vadd.f32 0.0, %v3917
    %3919 = vdwg.mxu0
    %3920 = vmatprep.subr.mxu0 %v738
    %3921 = vmatpush1.msra.mxu0 %v737
    %3922 = vmatprep.subr.mxu0 %v754
    %3923 = vmatpush1.msra.mxu0 %v753
    %3924 = vmatprep.subr.mxu0 %v770
    %3925 = vmatpush1.msra.mxu0 %v769
    %3926 = vmatprep.subr.mxu0 %v786
    %3927 = vmatpush1.msra.mxu0 %v785
    %3928 = vmatprep.subr.mxu0 0.0
    %3929 = vmatpush1.msra.mxu0 0.0
    %3930 = vmatprep.subr.mxu0 0.0
    %3931 = vmatpush1.msra.mxu0 0.0
    %3932 = vmatprep.subr.mxu0 0.0
    %3933 = vmatpush1.msra.mxu0 0.0
    %3934 = vmatprep.subr.mxu0 0.0
    %3935 = vmatpush1.msra.mxu0 0.0
    %3936 = vmatprep.subr.mxu0 0.0
    %3937 = vmatpush1.msra.mxu0 0.0
    %3938 = vmatprep.subr.mxu0 0.0
    %3939 = vmatpush1.msra.mxu0 0.0
    %3940 = vmatprep.subr.mxu0 0.0
    %3941 = vmatpush1.msra.mxu0 0.0
    %3942 = vmatprep.subr.mxu0 0.0
    %3943 = vmatpush1.msra.mxu0 0.0
    %3944 = vmatprep.subr.mxu0 0.0
    %3945 = vmatpush1.msra.mxu0 0.0
    %3946 = vmatprep.subr.mxu0 0.0
    %3947 = vmatpush1.msra.mxu0 0.0
    %3948 = vmatprep.subr.mxu0 0.0
    %3949 = vmatpush1.msra.mxu0 0.0
    %3950 = vmatprep.subr.mxu0 0.0
    %3951 = vmatpush1.msra.mxu0 0.0
    %3952 = vmatprep.subr.mxu0 0.0
    %3953 = vmatpush1.msra.mxu0 0.0
    %3954 = vmatprep.subr.mxu0 0.0
    %3955 = vmatpush1.msra.mxu0 0.0
    %3956 = vmatprep.subr.mxu0 0.0
    %3957 = vmatpush1.msra.mxu0 0.0
    %3958 = vmatprep.subr.mxu0 0.0
    %3959 = vmatpush1.msra.mxu0 0.0
    %3960 = vmatprep.subr.mxu0 0.0
    %3961 = vmatpush1.msra.mxu0 0.0
    %3962 = vmatprep.subr.mxu0 0.0
    %3963 = vmatpush1.msra.mxu0 0.0
    %3964 = vmatprep.subr.mxu0 0.0
    %3965 = vmatpush1.msra.mxu0 0.0
    %3966 = vmatprep.subr.mxu0 0.0
    %3967 = vmatpush1.msra.mxu0 0.0
    %3968 = vmatprep.subr.mxu0 0.0
    %3969 = vmatpush1.msra.mxu0 0.0
    %3970 = vmatprep.subr.mxu0 0.0
    %3971 = vmatpush1.msra.mxu0 0.0
    %3972 = vmatprep.subr.mxu0 0.0
    %3973 = vmatpush1.msra.mxu0 0.0
    %3974 = vmatprep.subr.mxu0 0.0
    %3975 = vmatpush1.msra.mxu0 0.0
    %3976 = vmatprep.subr.mxu0 0.0
    %3977 = vmatpush1.msra.mxu0 0.0
    %3978 = vmatprep.subr.mxu0 0.0
    %3979 = vmatpush1.msra.mxu0 0.0
    %3980 = vmatprep.subr.mxu0 0.0
    %3981 = vmatpush1.msra.mxu0 0.0
    %3982 = vmatprep.subr.mxu0 0.0
    %3983 = vmatpush1.msra.mxu0 0.0
    %3984 = vmatprep.mubr.f32.mxu0 0.0
    %3985 = vmatmul.mubr.f32.gmra.mrb[0].mxu0 %v3634
    %v3986 = vpop.f32.mrb[0].mxu0
    %v3987 = vadd.f32 0.0, %v3986
    %v3988 = vpop.f32.mrb[0].mxu0
    %v3989 = vadd.f32 0.0, %v3988
    %3990 = vdwg.mxu0
    %3991 = vmatprep.subr.mxu0 %v740
    %3992 = vmatpush1.msra.mxu0 %v739
    %3993 = vmatprep.subr.mxu0 %v756
    %3994 = vmatpush1.msra.mxu0 %v755
    %3995 = vmatprep.subr.mxu0 %v772
    %3996 = vmatpush1.msra.mxu0 %v771
    %3997 = vmatprep.subr.mxu0 %v788
    %3998 = vmatpush1.msra.mxu0 %v787
    %3999 = vmatprep.subr.mxu0 0.0
    %4000 = vmatpush1.msra.mxu0 0.0
    %4001 = vmatprep.subr.mxu0 0.0
    %4002 = vmatpush1.msra.mxu0 0.0
    %4003 = vmatprep.subr.mxu0 0.0
    %4004 = vmatpush1.msra.mxu0 0.0
    %4005 = vmatprep.subr.mxu0 0.0
    %4006 = vmatpush1.msra.mxu0 0.0
    %4007 = vmatprep.subr.mxu0 0.0
    %4008 = vmatpush1.msra.mxu0 0.0
    %4009 = vmatprep.subr.mxu0 0.0
    %4010 = vmatpush1.msra.mxu0 0.0
    %4011 = vmatprep.subr.mxu0 0.0
    %4012 = vmatpush1.msra.mxu0 0.0
    %4013 = vmatprep.subr.mxu0 0.0
    %4014 = vmatpush1.msra.mxu0 0.0
    %4015 = vmatprep.subr.mxu0 0.0
    %4016 = vmatpush1.msra.mxu0 0.0
    %4017 = vmatprep.subr.mxu0 0.0
    %4018 = vmatpush1.msra.mxu0 0.0
    %4019 = vmatprep.subr.mxu0 0.0
    %4020 = vmatpush1.msra.mxu0 0.0
    %4021 = vmatprep.subr.mxu0 0.0
    %4022 = vmatpush1.msra.mxu0 0.0
    %4023 = vmatprep.subr.mxu0 0.0
    %4024 = vmatpush1.msra.mxu0 0.0
    %4025 = vmatprep.subr.mxu0 0.0
    %4026 = vmatpush1.msra.mxu0 0.0
    %4027 = vmatprep.subr.mxu0 0.0
    %4028 = vmatpush1.msra.mxu0 0.0
    %4029 = vmatprep.subr.mxu0 0.0
    %4030 = vmatpush1.msra.mxu0 0.0
    %4031 = vmatprep.subr.mxu0 0.0
    %4032 = vmatpush1.msra.mxu0 0.0
    %4033 = vmatprep.subr.mxu0 0.0
    %4034 = vmatpush1.msra.mxu0 0.0
    %4035 = vmatprep.subr.mxu0 0.0
    %4036 = vmatpush1.msra.mxu0 0.0
    %4037 = vmatprep.subr.mxu0 0.0
    %4038 = vmatpush1.msra.mxu0 0.0
    %4039 = vmatprep.subr.mxu0 0.0
    %4040 = vmatpush1.msra.mxu0 0.0
    %4041 = vmatprep.subr.mxu0 0.0
    %4042 = vmatpush1.msra.mxu0 0.0
    %4043 = vmatprep.subr.mxu0 0.0
    %4044 = vmatpush1.msra.mxu0 0.0
    %4045 = vmatprep.subr.mxu0 0.0
    %4046 = vmatpush1.msra.mxu0 0.0
    %4047 = vmatprep.subr.mxu0 0.0
    %4048 = vmatpush1.msra.mxu0 0.0
    %4049 = vmatprep.subr.mxu0 0.0
    %4050 = vmatpush1.msra.mxu0 0.0
    %4051 = vmatprep.subr.mxu0 0.0
    %4052 = vmatpush1.msra.mxu0 0.0
    %4053 = vmatprep.subr.mxu0 0.0
    %4054 = vmatpush1.msra.mxu0 0.0
    %4055 = vmatprep.mubr.f32.mxu0 0.0
    %4056 = vmatmul.mubr.f32.gmra.mrb[0].mxu0 %v3634
    %v4057 = vpop.f32.mrb[0].mxu0
    %v4058 = vadd.f32 0.0, %v4057
    %v4059 = vpop.f32.mrb[0].mxu0
    %v4060 = vadd.f32 0.0, %v4059
    %4061 = vdwg.mxu0
    %4062 = vmatprep.subr.mxu0 %v742
    %4063 = vmatpush1.msra.mxu0 %v741
    %4064 = vmatprep.subr.mxu0 %v758
    %4065 = vmatpush1.msra.mxu0 %v757
    %4066 = vmatprep.subr.mxu0 %v774
    %4067 = vmatpush1.msra.mxu0 %v773
    %4068 = vmatprep.subr.mxu0 %v790
    %4069 = vmatpush1.msra.mxu0 %v789
    %4070 = vmatprep.subr.mxu0 0.0
    %4071 = vmatpush1.msra.mxu0 0.0
    %4072 = vmatprep.subr.mxu0 0.0
    %4073 = vmatpush1.msra.mxu0 0.0
    %4074 = vmatprep.subr.mxu0 0.0
    %4075 = vmatpush1.msra.mxu0 0.0
    %4076 = vmatprep.subr.mxu0 0.0
    %4077 = vmatpush1.msra.mxu0 0.0
    %4078 = vmatprep.subr.mxu0 0.0
    %4079 = vmatpush1.msra.mxu0 0.0
    %4080 = vmatprep.subr.mxu0 0.0
    %4081 = vmatpush1.msra.mxu0 0.0
    %4082 = vmatprep.subr.mxu0 0.0
    %4083 = vmatpush1.msra.mxu0 0.0
    %4084 = vmatprep.subr.mxu0 0.0
    %4085 = vmatpush1.msra.mxu0 0.0
    %4086 = vmatprep.subr.mxu0 0.0
    %4087 = vmatpush1.msra.mxu0 0.0
    %4088 = vmatprep.subr.mxu0 0.0
    %4089 = vmatpush1.msra.mxu0 0.0
    %4090 = vmatprep.subr.mxu0 0.0
    %4091 = vmatpush1.msra.mxu0 0.0
    %4092 = vmatprep.subr.mxu0 0.0
    %4093 = vmatpush1.msra.mxu0 0.0
    %4094 = vmatprep.subr.mxu0 0.0
    %4095 = vmatpush1.msra.mxu0 0.0
    %4096 = vmatprep.subr.mxu0 0.0
    %4097 = vmatpush1.msra.mxu0 0.0
    %4098 = vmatprep.subr.mxu0 0.0
    %4099 = vmatpush1.msra.mxu0 0.0
    %4100 = vmatprep.subr.mxu0 0.0
    %4101 = vmatpush1.msra.mxu0 0.0
    %4102 = vmatprep.subr.mxu0 0.0
    %4103 = vmatpush1.msra.mxu0 0.0
    %4104 = vmatprep.subr.mxu0 0.0
    %4105 = vmatpush1.msra.mxu0 0.0
    %4106 = vmatprep.subr.mxu0 0.0
    %4107 = vmatpush1.msra.mxu0 0.0
    %4108 = vmatprep.subr.mxu0 0.0
    %4109 = vmatpush1.msra.mxu0 0.0
    %4110 = vmatprep.subr.mxu0 0.0
    %4111 = vmatpush1.msra.mxu0 0.0
    %4112 = vmatprep.subr.mxu0 0.0
    %4113 = vmatpush1.msra.mxu0 0.0
    %4114 = vmatprep.subr.mxu0 0.0
    %4115 = vmatpush1.msra.mxu0 0.0
    %4116 = vmatprep.subr.mxu0 0.0
    %4117 = vmatpush1.msra.mxu0 0.0
    %4118 = vmatprep.subr.mxu0 0.0
    %4119 = vmatpush1.msra.mxu0 0.0
    %4120 = vmatprep.subr.mxu0 0.0
    %4121 = vmatpush1.msra.mxu0 0.0
    %4122 = vmatprep.subr.mxu0 0.0
    %4123 = vmatpush1.msra.mxu0 0.0
    %4124 = vmatprep.subr.mxu0 0.0
    %4125 = vmatpush1.msra.mxu0 0.0
    %4126 = vmatprep.mubr.f32.mxu0 0.0
    %4127 = vmatmul.mubr.f32.gmra.mrb[0].mxu0 %v3634
    %v4128 = vpop.f32.mrb[0].mxu0
    %v4129 = vadd.f32 0.0, %v4128
    %v4130 = vpop.f32.mrb[0].mxu0
    %v4131 = vadd.f32 0.0, %v4130
    %4132 = vdwg.mxu0
    %4133 = vmatprep.subr.mxu0 %v744
    %4134 = vmatpush1.msra.mxu0 %v743
    %4135 = vmatprep.subr.mxu0 %v760
    %4136 = vmatpush1.msra.mxu0 %v759
    %4137 = vmatprep.subr.mxu0 %v776
    %4138 = vmatpush1.msra.mxu0 %v775
    %4139 = vmatprep.subr.mxu0 %v792
    %4140 = vmatpush1.msra.mxu0 %v791
    %4141 = vmatprep.subr.mxu0 0.0
    %4142 = vmatpush1.msra.mxu0 0.0
    %4143 = vmatprep.subr.mxu0 0.0
    %4144 = vmatpush1.msra.mxu0 0.0
    %4145 = vmatprep.subr.mxu0 0.0
    %4146 = vmatpush1.msra.mxu0 0.0
    %4147 = vmatprep.subr.mxu0 0.0
    %4148 = vmatpush1.msra.mxu0 0.0
    %4149 = vmatprep.subr.mxu0 0.0
    %4150 = vmatpush1.msra.mxu0 0.0
    %4151 = vmatprep.subr.mxu0 0.0
    %4152 = vmatpush1.msra.mxu0 0.0
    %4153 = vmatprep.subr.mxu0 0.0
    %4154 = vmatpush1.msra.mxu0 0.0
    %4155 = vmatprep.subr.mxu0 0.0
    %4156 = vmatpush1.msra.mxu0 0.0
    %4157 = vmatprep.subr.mxu0 0.0
    %4158 = vmatpush1.msra.mxu0 0.0
    %4159 = vmatprep.subr.mxu0 0.0
    %4160 = vmatpush1.msra.mxu0 0.0
    %4161 = vmatprep.subr.mxu0 0.0
    %4162 = vmatpush1.msra.mxu0 0.0
    %4163 = vmatprep.subr.mxu0 0.0
    %4164 = vmatpush1.msra.mxu0 0.0
    %4165 = vmatprep.subr.mxu0 0.0
    %4166 = vmatpush1.msra.mxu0 0.0
    %4167 = vmatprep.subr.mxu0 0.0
    %4168 = vmatpush1.msra.mxu0 0.0
    %4169 = vmatprep.subr.mxu0 0.0
    %4170 = vmatpush1.msra.mxu0 0.0
    %4171 = vmatprep.subr.mxu0 0.0
    %4172 = vmatpush1.msra.mxu0 0.0
    %4173 = vmatprep.subr.mxu0 0.0
    %4174 = vmatpush1.msra.mxu0 0.0
    %4175 = vmatprep.subr.mxu0 0.0
    %4176 = vmatpush1.msra.mxu0 0.0
    %4177 = vmatprep.subr.mxu0 0.0
    %4178 = vmatpush1.msra.mxu0 0.0
    %4179 = vmatprep.subr.mxu0 0.0
    %4180 = vmatpush1.msra.mxu0 0.0
    %4181 = vmatprep.subr.mxu0 0.0
    %4182 = vmatpush1.msra.mxu0 0.0
    %4183 = vmatprep.subr.mxu0 0.0
    %4184 = vmatpush1.msra.mxu0 0.0
    %4185 = vmatprep.subr.mxu0 0.0
    %4186 = vmatpush1.msra.mxu0 0.0
    %4187 = vmatprep.subr.mxu0 0.0
    %4188 = vmatpush1.msra.mxu0 0.0
    %4189 = vmatprep.subr.mxu0 0.0
    %4190 = vmatpush1.msra.mxu0 0.0
    %4191 = vmatprep.subr.mxu0 0.0
    %4192 = vmatpush1.msra.mxu0 0.0
    %4193 = vmatprep.subr.mxu0 0.0
    %4194 = vmatpush1.msra.mxu0 0.0
    %4195 = vmatprep.subr.mxu0 0.0
    %4196 = vmatpush1.msra.mxu0 0.0
    %4197 = vmatprep.mubr.f32.mxu0 0.0
    %4198 = vmatmul.mubr.f32.gmra.mrb[0].mxu0 %v3634
    %v4199 = vpop.f32.mrb[0].mxu0
    %v4200 = vadd.f32 0.0, %v4199
    %v4201 = vpop.f32.mrb[0].mxu0
    %v4202 = vadd.f32 0.0, %v4201
    %4203 = vdwg.mxu0
    %v4220 = vcombine.low %v3703, %v3705
    %v4221 = vcombine.low %v3774, %v3776
    %v4222 = vcombine.low %v3845, %v3847
    %v4223 = vcombine.low %v3916, %v3918
    %v4224 = vcombine.low %v3987, %v3989
    %v4225 = vcombine.low %v4058, %v4060
    %v4226 = vcombine.low %v4129, %v4131
    %v4227 = vcombine.low %v4200, %v4202
    %v4236 = vmul.f32 %v95, %v4220
    %v4237 = vmul.f32 %v96, %v4221
    %v4238 = vmul.f32 %v97, %v4222
    %v4239 = vmul.f32 %v98, %v4223
    %v4240 = vmul.f32 %v99, %v4224
    %v4241 = vmul.f32 %v100, %v4225
    %v4242 = vmul.f32 %v101, %v4226
    %v4243 = vmul.f32 %v102, %v4227
    %v4244 = vld [vmem:[%s14] sm:$0xff]
    %v4245 = vld [vmem:[%s14 + $0x8] sm:$0xff]
    %v4246 = vld [vmem:[%s14 + $0x10] sm:$0xff]
    %v4247 = vld [vmem:[%s14 + $0x18] sm:$0xff]
    %v4248 = vld [vmem:[%s14 + $0x20] sm:$0xff]
    %v4249 = vld [vmem:[%s14 + $0x28] sm:$0xff]
    %v4250 = vld [vmem:[%s14 + $0x30] sm:$0xff]
    %v4251 = vld [vmem:[%s14 + $0x38] sm:$0xff]
    %v4252 = vld [vmem:[%s14 + $0x40] sm:$0xff]
    %v4253 = vld [vmem:[%s14 + $0x48] sm:$0xff]
    %v4254 = vld [vmem:[%s14 + $0x50] sm:$0xff]
    %v4255 = vld [vmem:[%s14 + $0x58] sm:$0xff]
    %v4256 = vld [vmem:[%s14 + $0x60] sm:$0xff]
    %v4257 = vld [vmem:[%s14 + $0x68] sm:$0xff]
    %v4258 = vld [vmem:[%s14 + $0x70] sm:$0xff]
    %v4259 = vld [vmem:[%s14 + $0x78] sm:$0xff]
    %v4260 = vld [vmem:[%s14 + $0x80] sm:$0xff]
    %v4261 = vld [vmem:[%s14 + $0x88] sm:$0xff]
    %v4262 = vld [vmem:[%s14 + $0x90] sm:$0xff]
    %v4263 = vld [vmem:[%s14 + $0x98] sm:$0xff]
    %v4264 = vld [vmem:[%s14 + $0xa0] sm:$0xff]
    %v4265 = vld [vmem:[%s14 + $0xa8] sm:$0xff]
    %v4266 = vld [vmem:[%s14 + $0xb0] sm:$0xff]
    %v4267 = vld [vmem:[%s14 + $0xb8] sm:$0xff]
    %v4268 = vld [vmem:[%s14 + $0xc0] sm:$0xff]
    %v4269 = vld [vmem:[%s14 + $0xc8] sm:$0xff]
    %v4270 = vld [vmem:[%s14 + $0xd0] sm:$0xff]
    %v4271 = vld [vmem:[%s14 + $0xd8] sm:$0xff]
    %v4272 = vld [vmem:[%s14 + $0xe0] sm:$0xff]
    %v4273 = vld [vmem:[%s14 + $0xe8] sm:$0xff]
    %v4274 = vld [vmem:[%s14 + $0xf0] sm:$0xff]
    %v4275 = vld [vmem:[%s14 + $0xf8] sm:$0xff]
    %v4276 = vld [vmem:[%s14 + $0x100] sm:$0xff]
    %v4277 = vld [vmem:[%s14 + $0x108] sm:$0xff]
    %v4278 = vld [vmem:[%s14 + $0x110] sm:$0xff]
    %v4279 = vld [vmem:[%s14 + $0x118] sm:$0xff]
    %v4280 = vld [vmem:[%s14 + $0x120] sm:$0xff]
    %v4281 = vld [vmem:[%s14 + $0x128] sm:$0xff]
    %v4282 = vld [vmem:[%s14 + $0x130] sm:$0xff]
    %v4283 = vld [vmem:[%s14 + $0x138] sm:$0xff]
    %v4284 = vld [vmem:[%s14 + $0x140] sm:$0xff]
    %v4285 = vld [vmem:[%s14 + $0x148] sm:$0xff]
    %v4286 = vld [vmem:[%s14 + $0x150] sm:$0xff]
    %v4287 = vld [vmem:[%s14 + $0x158] sm:$0xff]
    %v4288 = vld [vmem:[%s14 + $0x160] sm:$0xff]
    %v4289 = vld [vmem:[%s14 + $0x168] sm:$0xff]
    %v4290 = vld [vmem:[%s14 + $0x170] sm:$0xff]
    %v4291 = vld [vmem:[%s14 + $0x178] sm:$0xff]
    %v4292 = vld [vmem:[%s14 + $0x180] sm:$0xff]
    %v4293 = vld [vmem:[%s14 + $0x188] sm:$0xff]
    %v4294 = vld [vmem:[%s14 + $0x190] sm:$0xff]
    %v4295 = vld [vmem:[%s14 + $0x198] sm:$0xff]
    %v4296 = vld [vmem:[%s14 + $0x1a0] sm:$0xff]
    %v4297 = vld [vmem:[%s14 + $0x1a8] sm:$0xff]
    %v4298 = vld [vmem:[%s14 + $0x1b0] sm:$0xff]
    %v4299 = vld [vmem:[%s14 + $0x1b8] sm:$0xff]
    %v4300 = vld [vmem:[%s14 + $0x1c0] sm:$0xff]
    %v4301 = vld [vmem:[%s14 + $0x1c8] sm:$0xff]
    %v4302 = vld [vmem:[%s14 + $0x1d0] sm:$0xff]
    %v4303 = vld [vmem:[%s14 + $0x1d8] sm:$0xff]
    %v4304 = vld [vmem:[%s14 + $0x1e0] sm:$0xff]
    %v4305 = vld [vmem:[%s14 + $0x1e8] sm:$0xff]
    %v4306 = vld [vmem:[%s14 + $0x1f0] sm:$0xff]
    %v4307 = vld [vmem:[%s14 + $0x1f8] sm:$0xff]
    %v4308 = vld [vmem:[%s14 + $0x200] sm:$0xff]
    %v4309 = vld [vmem:[%s14 + $0x208] sm:$0xff]
    %v4310 = vld [vmem:[%s14 + $0x210] sm:$0xff]
    %v4311 = vld [vmem:[%s14 + $0x218] sm:$0xff]
    %v4312 = vld [vmem:[%s14 + $0x220] sm:$0xff]
    %v4313 = vld [vmem:[%s14 + $0x228] sm:$0xff]
    %v4314 = vld [vmem:[%s14 + $0x230] sm:$0xff]
    %v4315 = vld [vmem:[%s14 + $0x238] sm:$0xff]
    %v4316 = vld [vmem:[%s14 + $0x240] sm:$0xff]
    %v4317 = vld [vmem:[%s14 + $0x248] sm:$0xff]
    %v4318 = vld [vmem:[%s14 + $0x250] sm:$0xff]
    %v4319 = vld [vmem:[%s14 + $0x258] sm:$0xff]
    %v4320 = vld [vmem:[%s14 + $0x260] sm:$0xff]
    %v4321 = vld [vmem:[%s14 + $0x268] sm:$0xff]
    %v4322 = vld [vmem:[%s14 + $0x270] sm:$0xff]
    %v4323 = vld [vmem:[%s14 + $0x278] sm:$0xff]
    %v4324 = vld [vmem:[%s14 + $0x280] sm:$0xff]
    %v4325 = vld [vmem:[%s14 + $0x288] sm:$0xff]
    %v4326 = vld [vmem:[%s14 + $0x290] sm:$0xff]
    %v4327 = vld [vmem:[%s14 + $0x298] sm:$0xff]
    %v4328 = vld [vmem:[%s14 + $0x2a0] sm:$0xff]
    %v4329 = vld [vmem:[%s14 + $0x2a8] sm:$0xff]
    %v4330 = vld [vmem:[%s14 + $0x2b0] sm:$0xff]
    %v4331 = vld [vmem:[%s14 + $0x2b8] sm:$0xff]
    %v4332 = vld [vmem:[%s14 + $0x2c0] sm:$0xff]
    %v4333 = vld [vmem:[%s14 + $0x2c8] sm:$0xff]
    %v4334 = vld [vmem:[%s14 + $0x2d0] sm:$0xff]
    %v4335 = vld [vmem:[%s14 + $0x2d8] sm:$0xff]
    %v4336 = vld [vmem:[%s14 + $0x2e0] sm:$0xff]
    %v4337 = vld [vmem:[%s14 + $0x2e8] sm:$0xff]
    %v4338 = vld [vmem:[%s14 + $0x2f0] sm:$0xff]
    %v4339 = vld [vmem:[%s14 + $0x2f8] sm:$0xff]
    %v4340 = vld [vmem:[%s14 + $0x300] sm:$0xff]
    %v4341 = vld [vmem:[%s14 + $0x308] sm:$0xff]
    %v4342 = vld [vmem:[%s14 + $0x310] sm:$0xff]
    %v4343 = vld [vmem:[%s14 + $0x318] sm:$0xff]
    %v4344 = vld [vmem:[%s14 + $0x320] sm:$0xff]
    %v4345 = vld [vmem:[%s14 + $0x328] sm:$0xff]
    %v4346 = vld [vmem:[%s14 + $0x330] sm:$0xff]
    %v4347 = vld [vmem:[%s14 + $0x338] sm:$0xff]
    %v4348 = vld [vmem:[%s14 + $0x340] sm:$0xff]
    %v4349 = vld [vmem:[%s14 + $0x348] sm:$0xff]
    %v4350 = vld [vmem:[%s14 + $0x350] sm:$0xff]
    %v4351 = vld [vmem:[%s14 + $0x358] sm:$0xff]
    %v4352 = vld [vmem:[%s14 + $0x360] sm:$0xff]
    %v4353 = vld [vmem:[%s14 + $0x368] sm:$0xff]
    %v4354 = vld [vmem:[%s14 + $0x370] sm:$0xff]
    %v4355 = vld [vmem:[%s14 + $0x378] sm:$0xff]
    %v4356 = vld [vmem:[%s14 + $0x380] sm:$0xff]
    %v4357 = vld [vmem:[%s14 + $0x388] sm:$0xff]
    %v4358 = vld [vmem:[%s14 + $0x390] sm:$0xff]
    %v4359 = vld [vmem:[%s14 + $0x398] sm:$0xff]
    %v4360 = vld [vmem:[%s14 + $0x3a0] sm:$0xff]
    %v4361 = vld [vmem:[%s14 + $0x3a8] sm:$0xff]
    %v4362 = vld [vmem:[%s14 + $0x3b0] sm:$0xff]
    %v4363 = vld [vmem:[%s14 + $0x3b8] sm:$0xff]
    %v4364 = vld [vmem:[%s14 + $0x3c0] sm:$0xff]
    %v4365 = vld [vmem:[%s14 + $0x3c8] sm:$0xff]
    %v4366 = vld [vmem:[%s14 + $0x3d0] sm:$0xff]
    %v4367 = vld [vmem:[%s14 + $0x3d8] sm:$0xff]
    %v4368 = vld [vmem:[%s14 + $0x3e0] sm:$0xff]
    %v4369 = vld [vmem:[%s14 + $0x3e8] sm:$0xff]
    %v4370 = vld [vmem:[%s14 + $0x3f0] sm:$0xff]
    %v4371 = vld [vmem:[%s14 + $0x3f8] sm:$0xff]
    %v4372 = vld [vmem:[%s14 + $0x400] sm:$0xff]
    %v4373 = vld [vmem:[%s14 + $0x408] sm:$0xff]
    %v4374 = vld [vmem:[%s14 + $0x410] sm:$0xff]
    %v4375 = vld [vmem:[%s14 + $0x418] sm:$0xff]
    %v4376 = vld [vmem:[%s14 + $0x420] sm:$0xff]
    %v4377 = vld [vmem:[%s14 + $0x428] sm:$0xff]
    %v4378 = vld [vmem:[%s14 + $0x430] sm:$0xff]
    %v4379 = vld [vmem:[%s14 + $0x438] sm:$0xff]
    %v4380 = vld [vmem:[%s14 + $0x440] sm:$0xff]
    %v4381 = vld [vmem:[%s14 + $0x448] sm:$0xff]
    %v4382 = vld [vmem:[%s14 + $0x450] sm:$0xff]
    %v4383 = vld [vmem:[%s14 + $0x458] sm:$0xff]
    %v4384 = vld [vmem:[%s14 + $0x460] sm:$0xff]
    %v4385 = vld [vmem:[%s14 + $0x468] sm:$0xff]
    %v4386 = vld [vmem:[%s14 + $0x470] sm:$0xff]
    %v4387 = vld [vmem:[%s14 + $0x478] sm:$0xff]
    %v4388 = vld [vmem:[%s14 + $0x480] sm:$0xff]
    %v4389 = vld [vmem:[%s14 + $0x488] sm:$0xff]
    %v4390 = vld [vmem:[%s14 + $0x490] sm:$0xff]
    %v4391 = vld [vmem:[%s14 + $0x498] sm:$0xff]
    %v4392 = vld [vmem:[%s14 + $0x4a0] sm:$0xff]
    %v4393 = vld [vmem:[%s14 + $0x4a8] sm:$0xff]
    %v4394 = vld [vmem:[%s14 + $0x4b0] sm:$0xff]
    %v4395 = vld [vmem:[%s14 + $0x4b8] sm:$0xff]
    %v4396 = vld [vmem:[%s14 + $0x4c0] sm:$0xff]
    %v4397 = vld [vmem:[%s14 + $0x4c8] sm:$0xff]
    %v4398 = vld [vmem:[%s14 + $0x4d0] sm:$0xff]
    %v4399 = vld [vmem:[%s14 + $0x4d8] sm:$0xff]
    %v4400 = vld [vmem:[%s14 + $0x4e0] sm:$0xff]
    %v4401 = vld [vmem:[%s14 + $0x4e8] sm:$0xff]
    %v4402 = vld [vmem:[%s14 + $0x4f0] sm:$0xff]
    %v4403 = vld [vmem:[%s14 + $0x4f8] sm:$0xff]
    %v4404 = vld [vmem:[%s14 + $0x500] sm:$0xff]
    %v4405 = vld [vmem:[%s14 + $0x508] sm:$0xff]
    %v4406 = vld [vmem:[%s14 + $0x510] sm:$0xff]
    %v4407 = vld [vmem:[%s14 + $0x518] sm:$0xff]
    %v4408 = vld [vmem:[%s14 + $0x520] sm:$0xff]
    %v4409 = vld [vmem:[%s14 + $0x528] sm:$0xff]
    %v4410 = vld [vmem:[%s14 + $0x530] sm:$0xff]
    %v4411 = vld [vmem:[%s14 + $0x538] sm:$0xff]
    %v4412 = vld [vmem:[%s14 + $0x540] sm:$0xff]
    %v4413 = vld [vmem:[%s14 + $0x548] sm:$0xff]
    %v4414 = vld [vmem:[%s14 + $0x550] sm:$0xff]
    %v4415 = vld [vmem:[%s14 + $0x558] sm:$0xff]
    %v4416 = vld [vmem:[%s14 + $0x560] sm:$0xff]
    %v4417 = vld [vmem:[%s14 + $0x568] sm:$0xff]
    %v4418 = vld [vmem:[%s14 + $0x570] sm:$0xff]
    %v4419 = vld [vmem:[%s14 + $0x578] sm:$0xff]
    %v4420 = vld [vmem:[%s14 + $0x580] sm:$0xff]
    %v4421 = vld [vmem:[%s14 + $0x588] sm:$0xff]
    %v4422 = vld [vmem:[%s14 + $0x590] sm:$0xff]
    %v4423 = vld [vmem:[%s14 + $0x598] sm:$0xff]
    %v4424 = vld [vmem:[%s14 + $0x5a0] sm:$0xff]
    %v4425 = vld [vmem:[%s14 + $0x5a8] sm:$0xff]
    %v4426 = vld [vmem:[%s14 + $0x5b0] sm:$0xff]
    %v4427 = vld [vmem:[%s14 + $0x5b8] sm:$0xff]
    %v4428 = vld [vmem:[%s14 + $0x5c0] sm:$0xff]
    %v4429 = vld [vmem:[%s14 + $0x5c8] sm:$0xff]
    %v4430 = vld [vmem:[%s14 + $0x5d0] sm:$0xff]
    %v4431 = vld [vmem:[%s14 + $0x5d8] sm:$0xff]
    %v4432 = vld [vmem:[%s14 + $0x5e0] sm:$0xff]
    %v4433 = vld [vmem:[%s14 + $0x5e8] sm:$0xff]
    %v4434 = vld [vmem:[%s14 + $0x5f0] sm:$0xff]
    %v4435 = vld [vmem:[%s14 + $0x5f8] sm:$0xff]
    %v4436 = vld [vmem:[%s14 + $0x600] sm:$0xff]
    %v4437 = vld [vmem:[%s14 + $0x608] sm:$0xff]
    %v4438 = vld [vmem:[%s14 + $0x610] sm:$0xff]
    %v4439 = vld [vmem:[%s14 + $0x618] sm:$0xff]
    %v4440 = vld [vmem:[%s14 + $0x620] sm:$0xff]
    %v4441 = vld [vmem:[%s14 + $0x628] sm:$0xff]
    %v4442 = vld [vmem:[%s14 + $0x630] sm:$0xff]
    %v4443 = vld [vmem:[%s14 + $0x638] sm:$0xff]
    %v4444 = vld [vmem:[%s14 + $0x640] sm:$0xff]
    %v4445 = vld [vmem:[%s14 + $0x648] sm:$0xff]
    %v4446 = vld [vmem:[%s14 + $0x650] sm:$0xff]
    %v4447 = vld [vmem:[%s14 + $0x658] sm:$0xff]
    %v4448 = vld [vmem:[%s14 + $0x660] sm:$0xff]
    %v4449 = vld [vmem:[%s14 + $0x668] sm:$0xff]
    %v4450 = vld [vmem:[%s14 + $0x670] sm:$0xff]
    %v4451 = vld [vmem:[%s14 + $0x678] sm:$0xff]
    %v4452 = vld [vmem:[%s14 + $0x680] sm:$0xff]
    %v4453 = vld [vmem:[%s14 + $0x688] sm:$0xff]
    %v4454 = vld [vmem:[%s14 + $0x690] sm:$0xff]
    %v4455 = vld [vmem:[%s14 + $0x698] sm:$0xff]
    %v4456 = vld [vmem:[%s14 + $0x6a0] sm:$0xff]
    %v4457 = vld [vmem:[%s14 + $0x6a8] sm:$0xff]
    %v4458 = vld [vmem:[%s14 + $0x6b0] sm:$0xff]
    %v4459 = vld [vmem:[%s14 + $0x6b8] sm:$0xff]
    %v4460 = vld [vmem:[%s14 + $0x6c0] sm:$0xff]
    %v4461 = vld [vmem:[%s14 + $0x6c8] sm:$0xff]
    %v4462 = vld [vmem:[%s14 + $0x6d0] sm:$0xff]
    %v4463 = vld [vmem:[%s14 + $0x6d8] sm:$0xff]
    %v4464 = vld [vmem:[%s14 + $0x6e0] sm:$0xff]
    %v4465 = vld [vmem:[%s14 + $0x6e8] sm:$0xff]
    %v4466 = vld [vmem:[%s14 + $0x6f0] sm:$0xff]
    %v4467 = vld [vmem:[%s14 + $0x6f8] sm:$0xff]
    %v4468 = vld [vmem:[%s14 + $0x700] sm:$0xff]
    %v4469 = vld [vmem:[%s14 + $0x708] sm:$0xff]
    %v4470 = vld [vmem:[%s14 + $0x710] sm:$0xff]
    %v4471 = vld [vmem:[%s14 + $0x718] sm:$0xff]
    %v4472 = vld [vmem:[%s14 + $0x720] sm:$0xff]
    %v4473 = vld [vmem:[%s14 + $0x728] sm:$0xff]
    %v4474 = vld [vmem:[%s14 + $0x730] sm:$0xff]
    %v4475 = vld [vmem:[%s14 + $0x738] sm:$0xff]
    %v4476 = vld [vmem:[%s14 + $0x740] sm:$0xff]
    %v4477 = vld [vmem:[%s14 + $0x748] sm:$0xff]
    %v4478 = vld [vmem:[%s14 + $0x750] sm:$0xff]
    %v4479 = vld [vmem:[%s14 + $0x758] sm:$0xff]
    %v4480 = vld [vmem:[%s14 + $0x760] sm:$0xff]
    %v4481 = vld [vmem:[%s14 + $0x768] sm:$0xff]
    %v4482 = vld [vmem:[%s14 + $0x770] sm:$0xff]
    %v4483 = vld [vmem:[%s14 + $0x778] sm:$0xff]
    %v4484 = vld [vmem:[%s14 + $0x780] sm:$0xff]
    %v4485 = vld [vmem:[%s14 + $0x788] sm:$0xff]
    %v4486 = vld [vmem:[%s14 + $0x790] sm:$0xff]
    %v4487 = vld [vmem:[%s14 + $0x798] sm:$0xff]
    %v4488 = vld [vmem:[%s14 + $0x7a0] sm:$0xff]
    %v4489 = vld [vmem:[%s14 + $0x7a8] sm:$0xff]
    %v4490 = vld [vmem:[%s14 + $0x7b0] sm:$0xff]
    %v4491 = vld [vmem:[%s14 + $0x7b8] sm:$0xff]
    %v4492 = vld [vmem:[%s14 + $0x7c0] sm:$0xff]
    %v4493 = vld [vmem:[%s14 + $0x7c8] sm:$0xff]
    %v4494 = vld [vmem:[%s14 + $0x7d0] sm:$0xff]
    %v4495 = vld [vmem:[%s14 + $0x7d8] sm:$0xff]
    %v4496 = vld [vmem:[%s14 + $0x7e0] sm:$0xff]
    %v4497 = vld [vmem:[%s14 + $0x7e8] sm:$0xff]
    %v4498 = vld [vmem:[%s14 + $0x7f0] sm:$0xff]
    %v4499 = vld [vmem:[%s14 + $0x7f8] sm:$0xff]
    %v4500 = vld [vmem:[%s15] sm:$0x1]
    %v4502 = vlaneseq
    %v4503 = vshrl.u32 %v4502, 7
    %v4504 = vsub.s32 0, %v4503
    %v4505 = vrot.slane %v4500, %v4504
    %v4515 = vcombine.high %v4236, %v4236
    %v4516 = vcombine.high %v4237, %v4237
    %v4517 = vcombine.high %v4238, %v4238
    %v4518 = vcombine.high %v4239, %v4239
    %v4519 = vcombine.high %v4240, %v4240
    %v4520 = vcombine.high %v4241, %v4241
    %v4521 = vcombine.high %v4242, %v4242
    %v4522 = vcombine.high %v4243, %v4243
    %4531 = vmatprep.subr.mxu0 0.0
    %4532 = vmatpush1.msra.mxu0 %v4244
    %4533 = vmatprep.subr.mxu0 0.0
    %4534 = vmatpush1.msra.mxu0 %v4245
    %4535 = vmatprep.subr.mxu0 0.0
    %4536 = vmatpush1.msra.mxu0 %v4246
    %4537 = vmatprep.subr.mxu0 0.0
    %4538 = vmatpush1.msra.mxu0 %v4247
    %4539 = vmatprep.subr.mxu0 0.0
    %4540 = vmatpush1.msra.mxu0 %v4248
    %4541 = vmatprep.subr.mxu0 0.0
    %4542 = vmatpush1.msra.mxu0 %v4249
    %4543 = vmatprep.subr.mxu0 0.0
    %4544 = vmatpush1.msra.mxu0 %v4250
    %4545 = vmatprep.subr.mxu0 0.0
    %4546 = vmatpush1.msra.mxu0 %v4251
    %4547 = vmatprep.subr.mxu0 0.0
    %4548 = vmatpush1.msra.mxu0 %v4252
    %4549 = vmatprep.subr.mxu0 0.0
    %4550 = vmatpush1.msra.mxu0 %v4253
    %4551 = vmatprep.subr.mxu0 0.0
    %4552 = vmatpush1.msra.mxu0 %v4254
    %4553 = vmatprep.subr.mxu0 0.0
    %4554 = vmatpush1.msra.mxu0 %v4255
    %4555 = vmatprep.subr.mxu0 0.0
    %4556 = vmatpush1.msra.mxu0 %v4256
    %4557 = vmatprep.subr.mxu0 0.0
    %4558 = vmatpush1.msra.mxu0 %v4257
    %4559 = vmatprep.subr.mxu0 0.0
    %4560 = vmatpush1.msra.mxu0 %v4258
    %4561 = vmatprep.subr.mxu0 0.0
    %4562 = vmatpush1.msra.mxu0 %v4259
    %4563 = vmatprep.subr.mxu0 0.0
    %4564 = vmatpush1.msra.mxu0 %v4260
    %4565 = vmatprep.subr.mxu0 0.0
    %4566 = vmatpush1.msra.mxu0 %v4261
    %4567 = vmatprep.subr.mxu0 0.0
    %4568 = vmatpush1.msra.mxu0 %v4262
    %4569 = vmatprep.subr.mxu0 0.0
    %4570 = vmatpush1.msra.mxu0 %v4263
    %4571 = vmatprep.subr.mxu0 0.0
    %4572 = vmatpush1.msra.mxu0 %v4264
    %4573 = vmatprep.subr.mxu0 0.0
    %4574 = vmatpush1.msra.mxu0 %v4265
    %4575 = vmatprep.subr.mxu0 0.0
    %4576 = vmatpush1.msra.mxu0 %v4266
    %4577 = vmatprep.subr.mxu0 0.0
    %4578 = vmatpush1.msra.mxu0 %v4267
    %4579 = vmatprep.subr.mxu0 0.0
    %4580 = vmatpush1.msra.mxu0 %v4268
    %4581 = vmatprep.subr.mxu0 0.0
    %4582 = vmatpush1.msra.mxu0 %v4269
    %4583 = vmatprep.subr.mxu0 0.0
    %4584 = vmatpush1.msra.mxu0 %v4270
    %4585 = vmatprep.subr.mxu0 0.0
    %4586 = vmatpush1.msra.mxu0 %v4271
    %4587 = vmatprep.subr.mxu0 0.0
    %4588 = vmatpush1.msra.mxu0 %v4272
    %4589 = vmatprep.subr.mxu0 0.0
    %4590 = vmatpush1.msra.mxu0 %v4273
    %4591 = vmatprep.subr.mxu0 0.0
    %4592 = vmatpush1.msra.mxu0 %v4274
    %4593 = vmatprep.subr.mxu0 0.0
    %4594 = vmatpush1.msra.mxu0 %v4275
    %4595 = vmatprep.mubr.f32.mxu0 %v4515
    %4596 = vmatmul.mubr.f32.gmra.mrb[0].mxu0 %v4236
    %v4597 = vpop.f32.mrb[0].mxu0
    %v4598 = vadd.f32 %v4505, %v4597
    %v4599 = vpop.f32.mrb[0].mxu0
    %4600 = vdwg.mxu0
    %4601 = vmatprep.subr.mxu0 0.0
    %4602 = vmatpush1.msra.mxu0 %v4276
    %4603 = vmatprep.subr.mxu0 0.0
    %4604 = vmatpush1.msra.mxu0 %v4277
    %4605 = vmatprep.subr.mxu0 0.0
    %4606 = vmatpush1.msra.mxu0 %v4278
    %4607 = vmatprep.subr.mxu0 0.0
    %4608 = vmatpush1.msra.mxu0 %v4279
    %4609 = vmatprep.subr.mxu0 0.0
    %4610 = vmatpush1.msra.mxu0 %v4280
    %4611 = vmatprep.subr.mxu0 0.0
    %4612 = vmatpush1.msra.mxu0 %v4281
    %4613 = vmatprep.subr.mxu0 0.0
    %4614 = vmatpush1.msra.mxu0 %v4282
    %4615 = vmatprep.subr.mxu0 0.0
    %4616 = vmatpush1.msra.mxu0 %v4283
    %4617 = vmatprep.subr.mxu0 0.0
    %4618 = vmatpush1.msra.mxu0 %v4284
    %4619 = vmatprep.subr.mxu0 0.0
    %4620 = vmatpush1.msra.mxu0 %v4285
    %4621 = vmatprep.subr.mxu0 0.0
    %4622 = vmatpush1.msra.mxu0 %v4286
    %4623 = vmatprep.subr.mxu0 0.0
    %4624 = vmatpush1.msra.mxu0 %v4287
    %4625 = vmatprep.subr.mxu0 0.0
    %4626 = vmatpush1.msra.mxu0 %v4288
    %4627 = vmatprep.subr.mxu0 0.0
    %4628 = vmatpush1.msra.mxu0 %v4289
    %4629 = vmatprep.subr.mxu0 0.0
    %4630 = vmatpush1.msra.mxu0 %v4290
    %4631 = vmatprep.subr.mxu0 0.0
    %4632 = vmatpush1.msra.mxu0 %v4291
    %4633 = vmatprep.subr.mxu0 0.0
    %4634 = vmatpush1.msra.mxu0 %v4292
    %4635 = vmatprep.subr.mxu0 0.0
    %4636 = vmatpush1.msra.mxu0 %v4293
    %4637 = vmatprep.subr.mxu0 0.0
    %4638 = vmatpush1.msra.mxu0 %v4294
    %4639 = vmatprep.subr.mxu0 0.0
    %4640 = vmatpush1.msra.mxu0 %v4295
    %4641 = vmatprep.subr.mxu0 0.0
    %4642 = vmatpush1.msra.mxu0 %v4296
    %4643 = vmatprep.subr.mxu0 0.0
    %4644 = vmatpush1.msra.mxu0 %v4297
    %4645 = vmatprep.subr.mxu0 0.0
    %4646 = vmatpush1.msra.mxu0 %v4298
    %4647 = vmatprep.subr.mxu0 0.0
    %4648 = vmatpush1.msra.mxu0 %v4299
    %4649 = vmatprep.subr.mxu0 0.0
    %4650 = vmatpush1.msra.mxu0 %v4300
    %4651 = vmatprep.subr.mxu0 0.0
    %4652 = vmatpush1.msra.mxu0 %v4301
    %4653 = vmatprep.subr.mxu0 0.0
    %4654 = vmatpush1.msra.mxu0 %v4302
    %4655 = vmatprep.subr.mxu0 0.0
    %4656 = vmatpush1.msra.mxu0 %v4303
    %4657 = vmatprep.subr.mxu0 0.0
    %4658 = vmatpush1.msra.mxu0 %v4304
    %4659 = vmatprep.subr.mxu0 0.0
    %4660 = vmatpush1.msra.mxu0 %v4305
    %4661 = vmatprep.subr.mxu0 0.0
    %4662 = vmatpush1.msra.mxu0 %v4306
    %4663 = vmatprep.subr.mxu0 0.0
    %4664 = vmatpush1.msra.mxu0 %v4307
    %4665 = vmatprep.mubr.f32.mxu0 %v4516
    %4666 = vmatmul.mubr.f32.gmra.mrb[0].mxu0 %v4237
    %v4667 = vpop.f32.mrb[0].mxu0
    %v4668 = vadd.f32 %v4598, %v4667
    %v4669 = vpop.f32.mrb[0].mxu0
    %4670 = vdwg.mxu0
    %4671 = vmatprep.subr.mxu0 0.0
    %4672 = vmatpush1.msra.mxu0 %v4308
    %4673 = vmatprep.subr.mxu0 0.0
    %4674 = vmatpush1.msra.mxu0 %v4309
    %4675 = vmatprep.subr.mxu0 0.0
    %4676 = vmatpush1.msra.mxu0 %v4310
    %4677 = vmatprep.subr.mxu0 0.0
    %4678 = vmatpush1.msra.mxu0 %v4311
    %4679 = vmatprep.subr.mxu0 0.0
    %4680 = vmatpush1.msra.mxu0 %v4312
    %4681 = vmatprep.subr.mxu0 0.0
    %4682 = vmatpush1.msra.mxu0 %v4313
    %4683 = vmatprep.subr.mxu0 0.0
    %4684 = vmatpush1.msra.mxu0 %v4314
    %4685 = vmatprep.subr.mxu0 0.0
    %4686 = vmatpush1.msra.mxu0 %v4315
    %4687 = vmatprep.subr.mxu0 0.0
    %4688 = vmatpush1.msra.mxu0 %v4316
    %4689 = vmatprep.subr.mxu0 0.0
    %4690 = vmatpush1.msra.mxu0 %v4317
    %4691 = vmatprep.subr.mxu0 0.0
    %4692 = vmatpush1.msra.mxu0 %v4318
    %4693 = vmatprep.subr.mxu0 0.0
    %4694 = vmatpush1.msra.mxu0 %v4319
    %4695 = vmatprep.subr.mxu0 0.0
    %4696 = vmatpush1.msra.mxu0 %v4320
    %4697 = vmatprep.subr.mxu0 0.0
    %4698 = vmatpush1.msra.mxu0 %v4321
    %4699 = vmatprep.subr.mxu0 0.0
    %4700 = vmatpush1.msra.mxu0 %v4322
    %4701 = vmatprep.subr.mxu0 0.0
    %4702 = vmatpush1.msra.mxu0 %v4323
    %4703 = vmatprep.subr.mxu0 0.0
    %4704 = vmatpush1.msra.mxu0 %v4324
    %4705 = vmatprep.subr.mxu0 0.0
    %4706 = vmatpush1.msra.mxu0 %v4325
    %4707 = vmatprep.subr.mxu0 0.0
    %4708 = vmatpush1.msra.mxu0 %v4326
    %4709 = vmatprep.subr.mxu0 0.0
    %4710 = vmatpush1.msra.mxu0 %v4327
    %4711 = vmatprep.subr.mxu0 0.0
    %4712 = vmatpush1.msra.mxu0 %v4328
    %4713 = vmatprep.subr.mxu0 0.0
    %4714 = vmatpush1.msra.mxu0 %v4329
    %4715 = vmatprep.subr.mxu0 0.0
    %4716 = vmatpush1.msra.mxu0 %v4330
    %4717 = vmatprep.subr.mxu0 0.0
    %4718 = vmatpush1.msra.mxu0 %v4331
    %4719 = vmatprep.subr.mxu0 0.0
    %4720 = vmatpush1.msra.mxu0 %v4332
    %4721 = vmatprep.subr.mxu0 0.0
    %4722 = vmatpush1.msra.mxu0 %v4333
    %4723 = vmatprep.subr.mxu0 0.0
    %4724 = vmatpush1.msra.mxu0 %v4334
    %4725 = vmatprep.subr.mxu0 0.0
    %4726 = vmatpush1.msra.mxu0 %v4335
    %4727 = vmatprep.subr.mxu0 0.0
    %4728 = vmatpush1.msra.mxu0 %v4336
    %4729 = vmatprep.subr.mxu0 0.0
    %4730 = vmatpush1.msra.mxu0 %v4337
    %4731 = vmatprep.subr.mxu0 0.0
    %4732 = vmatpush1.msra.mxu0 %v4338
    %4733 = vmatprep.subr.mxu0 0.0
    %4734 = vmatpush1.msra.mxu0 %v4339
    %4735 = vmatprep.mubr.f32.mxu0 %v4517
    %4736 = vmatmul.mubr.f32.gmra.mrb[0].mxu0 %v4238
    %v4737 = vpop.f32.mrb[0].mxu0
    %v4738 = vadd.f32 %v4668, %v4737
    %v4739 = vpop.f32.mrb[0].mxu0
    %4740 = vdwg.mxu0
    %4741 = vmatprep.subr.mxu0 0.0
    %4742 = vmatpush1.msra.mxu0 %v4340
    %4743 = vmatprep.subr.mxu0 0.0
    %4744 = vmatpush1.msra.mxu0 %v4341
    %4745 = vmatprep.subr.mxu0 0.0
    %4746 = vmatpush1.msra.mxu0 %v4342
    %4747 = vmatprep.subr.mxu0 0.0
    %4748 = vmatpush1.msra.mxu0 %v4343
    %4749 = vmatprep.subr.mxu0 0.0
    %4750 = vmatpush1.msra.mxu0 %v4344
    %4751 = vmatprep.subr.mxu0 0.0
    %4752 = vmatpush1.msra.mxu0 %v4345
    %4753 = vmatprep.subr.mxu0 0.0
    %4754 = vmatpush1.msra.mxu0 %v4346
    %4755 = vmatprep.subr.mxu0 0.0
    %4756 = vmatpush1.msra.mxu0 %v4347
    %4757 = vmatprep.subr.mxu0 0.0
    %4758 = vmatpush1.msra.mxu0 %v4348
    %4759 = vmatprep.subr.mxu0 0.0
    %4760 = vmatpush1.msra.mxu0 %v4349
    %4761 = vmatprep.subr.mxu0 0.0
    %4762 = vmatpush1.msra.mxu0 %v4350
    %4763 = vmatprep.subr.mxu0 0.0
    %4764 = vmatpush1.msra.mxu0 %v4351
    %4765 = vmatprep.subr.mxu0 0.0
    %4766 = vmatpush1.msra.mxu0 %v4352
    %4767 = vmatprep.subr.mxu0 0.0
    %4768 = vmatpush1.msra.mxu0 %v4353
    %4769 = vmatprep.subr.mxu0 0.0
    %4770 = vmatpush1.msra.mxu0 %v4354
    %4771 = vmatprep.subr.mxu0 0.0
    %4772 = vmatpush1.msra.mxu0 %v4355
    %4773 = vmatprep.subr.mxu0 0.0
    %4774 = vmatpush1.msra.mxu0 %v4356
    %4775 = vmatprep.subr.mxu0 0.0
    %4776 = vmatpush1.msra.mxu0 %v4357
    %4777 = vmatprep.subr.mxu0 0.0
    %4778 = vmatpush1.msra.mxu0 %v4358
    %4779 = vmatprep.subr.mxu0 0.0
    %4780 = vmatpush1.msra.mxu0 %v4359
    %4781 = vmatprep.subr.mxu0 0.0
    %4782 = vmatpush1.msra.mxu0 %v4360
    %4783 = vmatprep.subr.mxu0 0.0
    %4784 = vmatpush1.msra.mxu0 %v4361
    %4785 = vmatprep.subr.mxu0 0.0
    %4786 = vmatpush1.msra.mxu0 %v4362
    %4787 = vmatprep.subr.mxu0 0.0
    %4788 = vmatpush1.msra.mxu0 %v4363
    %4789 = vmatprep.subr.mxu0 0.0
    %4790 = vmatpush1.msra.mxu0 %v4364
    %4791 = vmatprep.subr.mxu0 0.0
    %4792 = vmatpush1.msra.mxu0 %v4365
    %4793 = vmatprep.subr.mxu0 0.0
    %4794 = vmatpush1.msra.mxu0 %v4366
    %4795 = vmatprep.subr.mxu0 0.0
    %4796 = vmatpush1.msra.mxu0 %v4367
    %4797 = vmatprep.subr.mxu0 0.0
    %4798 = vmatpush1.msra.mxu0 %v4368
    %4799 = vmatprep.subr.mxu0 0.0
    %4800 = vmatpush1.msra.mxu0 %v4369
    %4801 = vmatprep.subr.mxu0 0.0
    %4802 = vmatpush1.msra.mxu0 %v4370
    %4803 = vmatprep.subr.mxu0 0.0
    %4804 = vmatpush1.msra.mxu0 %v4371
    %4805 = vmatprep.mubr.f32.mxu0 %v4518
    %4806 = vmatmul.mubr.f32.gmra.mrb[0].mxu0 %v4239
    %v4807 = vpop.f32.mrb[0].mxu0
    %v4808 = vadd.f32 %v4738, %v4807
    %v4809 = vpop.f32.mrb[0].mxu0
    %4810 = vdwg.mxu0
    %4811 = vmatprep.subr.mxu0 0.0
    %4812 = vmatpush1.msra.mxu0 %v4372
    %4813 = vmatprep.subr.mxu0 0.0
    %4814 = vmatpush1.msra.mxu0 %v4373
    %4815 = vmatprep.subr.mxu0 0.0
    %4816 = vmatpush1.msra.mxu0 %v4374
    %4817 = vmatprep.subr.mxu0 0.0
    %4818 = vmatpush1.msra.mxu0 %v4375
    %4819 = vmatprep.subr.mxu0 0.0
    %4820 = vmatpush1.msra.mxu0 %v4376
    %4821 = vmatprep.subr.mxu0 0.0
    %4822 = vmatpush1.msra.mxu0 %v4377
    %4823 = vmatprep.subr.mxu0 0.0
    %4824 = vmatpush1.msra.mxu0 %v4378
    %4825 = vmatprep.subr.mxu0 0.0
    %4826 = vmatpush1.msra.mxu0 %v4379
    %4827 = vmatprep.subr.mxu0 0.0
    %4828 = vmatpush1.msra.mxu0 %v4380
    %4829 = vmatprep.subr.mxu0 0.0
    %4830 = vmatpush1.msra.mxu0 %v4381
    %4831 = vmatprep.subr.mxu0 0.0
    %4832 = vmatpush1.msra.mxu0 %v4382
    %4833 = vmatprep.subr.mxu0 0.0
    %4834 = vmatpush1.msra.mxu0 %v4383
    %4835 = vmatprep.subr.mxu0 0.0
    %4836 = vmatpush1.msra.mxu0 %v4384
    %4837 = vmatprep.subr.mxu0 0.0
    %4838 = vmatpush1.msra.mxu0 %v4385
    %4839 = vmatprep.subr.mxu0 0.0
    %4840 = vmatpush1.msra.mxu0 %v4386
    %4841 = vmatprep.subr.mxu0 0.0
    %4842 = vmatpush1.msra.mxu0 %v4387
    %4843 = vmatprep.subr.mxu0 0.0
    %4844 = vmatpush1.msra.mxu0 %v4388
    %4845 = vmatprep.subr.mxu0 0.0
    %4846 = vmatpush1.msra.mxu0 %v4389
    %4847 = vmatprep.subr.mxu0 0.0
    %4848 = vmatpush1.msra.mxu0 %v4390
    %4849 = vmatprep.subr.mxu0 0.0
    %4850 = vmatpush1.msra.mxu0 %v4391
    %4851 = vmatprep.subr.mxu0 0.0
    %4852 = vmatpush1.msra.mxu0 %v4392
    %4853 = vmatprep.subr.mxu0 0.0
    %4854 = vmatpush1.msra.mxu0 %v4393
    %4855 = vmatprep.subr.mxu0 0.0
    %4856 = vmatpush1.msra.mxu0 %v4394
    %4857 = vmatprep.subr.mxu0 0.0
    %4858 = vmatpush1.msra.mxu0 %v4395
    %4859 = vmatprep.subr.mxu0 0.0
    %4860 = vmatpush1.msra.mxu0 %v4396
    %4861 = vmatprep.subr.mxu0 0.0
    %4862 = vmatpush1.msra.mxu0 %v4397
    %4863 = vmatprep.subr.mxu0 0.0
    %4864 = vmatpush1.msra.mxu0 %v4398
    %4865 = vmatprep.subr.mxu0 0.0
    %4866 = vmatpush1.msra.mxu0 %v4399
    %4867 = vmatprep.subr.mxu0 0.0
    %4868 = vmatpush1.msra.mxu0 %v4400
    %4869 = vmatprep.subr.mxu0 0.0
    %4870 = vmatpush1.msra.mxu0 %v4401
    %4871 = vmatprep.subr.mxu0 0.0
    %4872 = vmatpush1.msra.mxu0 %v4402
    %4873 = vmatprep.subr.mxu0 0.0
    %4874 = vmatpush1.msra.mxu0 %v4403
    %4875 = vmatprep.mubr.f32.mxu0 %v4519
    %4876 = vmatmul.mubr.f32.gmra.mrb[0].mxu0 %v4240
    %v4877 = vpop.f32.mrb[0].mxu0
    %v4878 = vadd.f32 %v4808, %v4877
    %v4879 = vpop.f32.mrb[0].mxu0
    %4880 = vdwg.mxu0
    %4881 = vmatprep.subr.mxu0 0.0
    %4882 = vmatpush1.msra.mxu0 %v4404
    %4883 = vmatprep.subr.mxu0 0.0
    %4884 = vmatpush1.msra.mxu0 %v4405
    %4885 = vmatprep.subr.mxu0 0.0
    %4886 = vmatpush1.msra.mxu0 %v4406
    %4887 = vmatprep.subr.mxu0 0.0
    %4888 = vmatpush1.msra.mxu0 %v4407
    %4889 = vmatprep.subr.mxu0 0.0
    %4890 = vmatpush1.msra.mxu0 %v4408
    %4891 = vmatprep.subr.mxu0 0.0
    %4892 = vmatpush1.msra.mxu0 %v4409
    %4893 = vmatprep.subr.mxu0 0.0
    %4894 = vmatpush1.msra.mxu0 %v4410
    %4895 = vmatprep.subr.mxu0 0.0
    %4896 = vmatpush1.msra.mxu0 %v4411
    %4897 = vmatprep.subr.mxu0 0.0
    %4898 = vmatpush1.msra.mxu0 %v4412
    %4899 = vmatprep.subr.mxu0 0.0
    %4900 = vmatpush1.msra.mxu0 %v4413
    %4901 = vmatprep.subr.mxu0 0.0
    %4902 = vmatpush1.msra.mxu0 %v4414
    %4903 = vmatprep.subr.mxu0 0.0
    %4904 = vmatpush1.msra.mxu0 %v4415
    %4905 = vmatprep.subr.mxu0 0.0
    %4906 = vmatpush1.msra.mxu0 %v4416
    %4907 = vmatprep.subr.mxu0 0.0
    %4908 = vmatpush1.msra.mxu0 %v4417
    %4909 = vmatprep.subr.mxu0 0.0
    %4910 = vmatpush1.msra.mxu0 %v4418
    %4911 = vmatprep.subr.mxu0 0.0
    %4912 = vmatpush1.msra.mxu0 %v4419
    %4913 = vmatprep.subr.mxu0 0.0
    %4914 = vmatpush1.msra.mxu0 %v4420
    %4915 = vmatprep.subr.mxu0 0.0
    %4916 = vmatpush1.msra.mxu0 %v4421
    %4917 = vmatprep.subr.mxu0 0.0
    %4918 = vmatpush1.msra.mxu0 %v4422
    %4919 = vmatprep.subr.mxu0 0.0
    %4920 = vmatpush1.msra.mxu0 %v4423
    %4921 = vmatprep.subr.mxu0 0.0
    %4922 = vmatpush1.msra.mxu0 %v4424
    %4923 = vmatprep.subr.mxu0 0.0
    %4924 = vmatpush1.msra.mxu0 %v4425
    %4925 = vmatprep.subr.mxu0 0.0
    %4926 = vmatpush1.msra.mxu0 %v4426
    %4927 = vmatprep.subr.mxu0 0.0
    %4928 = vmatpush1.msra.mxu0 %v4427
    %4929 = vmatprep.subr.mxu0 0.0
    %4930 = vmatpush1.msra.mxu0 %v4428
    %4931 = vmatprep.subr.mxu0 0.0
    %4932 = vmatpush1.msra.mxu0 %v4429
    %4933 = vmatprep.subr.mxu0 0.0
    %4934 = vmatpush1.msra.mxu0 %v4430
    %4935 = vmatprep.subr.mxu0 0.0
    %4936 = vmatpush1.msra.mxu0 %v4431
    %4937 = vmatprep.subr.mxu0 0.0
    %4938 = vmatpush1.msra.mxu0 %v4432
    %4939 = vmatprep.subr.mxu0 0.0
    %4940 = vmatpush1.msra.mxu0 %v4433
    %4941 = vmatprep.subr.mxu0 0.0
    %4942 = vmatpush1.msra.mxu0 %v4434
    %4943 = vmatprep.subr.mxu0 0.0
    %4944 = vmatpush1.msra.mxu0 %v4435
    %4945 = vmatprep.mubr.f32.mxu0 %v4520
    %4946 = vmatmul.mubr.f32.gmra.mrb[0].mxu0 %v4241
    %v4947 = vpop.f32.mrb[0].mxu0
    %v4948 = vadd.f32 %v4878, %v4947
    %v4949 = vpop.f32.mrb[0].mxu0
    %4950 = vdwg.mxu0
    %4951 = vmatprep.subr.mxu0 0.0
    %4952 = vmatpush1.msra.mxu0 %v4436
    %4953 = vmatprep.subr.mxu0 0.0
    %4954 = vmatpush1.msra.mxu0 %v4437
    %4955 = vmatprep.subr.mxu0 0.0
    %4956 = vmatpush1.msra.mxu0 %v4438
    %4957 = vmatprep.subr.mxu0 0.0
    %4958 = vmatpush1.msra.mxu0 %v4439
    %4959 = vmatprep.subr.mxu0 0.0
    %4960 = vmatpush1.msra.mxu0 %v4440
    %4961 = vmatprep.subr.mxu0 0.0
    %4962 = vmatpush1.msra.mxu0 %v4441
    %4963 = vmatprep.subr.mxu0 0.0
    %4964 = vmatpush1.msra.mxu0 %v4442
    %4965 = vmatprep.subr.mxu0 0.0
    %4966 = vmatpush1.msra.mxu0 %v4443
    %4967 = vmatprep.subr.mxu0 0.0
    %4968 = vmatpush1.msra.mxu0 %v4444
    %4969 = vmatprep.subr.mxu0 0.0
    %4970 = vmatpush1.msra.mxu0 %v4445
    %4971 = vmatprep.subr.mxu0 0.0
    %4972 = vmatpush1.msra.mxu0 %v4446
    %4973 = vmatprep.subr.mxu0 0.0
    %4974 = vmatpush1.msra.mxu0 %v4447
    %4975 = vmatprep.subr.mxu0 0.0
    %4976 = vmatpush1.msra.mxu0 %v4448
    %4977 = vmatprep.subr.mxu0 0.0
    %4978 = vmatpush1.msra.mxu0 %v4449
    %4979 = vmatprep.subr.mxu0 0.0
    %4980 = vmatpush1.msra.mxu0 %v4450
    %4981 = vmatprep.subr.mxu0 0.0
    %4982 = vmatpush1.msra.mxu0 %v4451
    %4983 = vmatprep.subr.mxu0 0.0
    %4984 = vmatpush1.msra.mxu0 %v4452
    %4985 = vmatprep.subr.mxu0 0.0
    %4986 = vmatpush1.msra.mxu0 %v4453
    %4987 = vmatprep.subr.mxu0 0.0
    %4988 = vmatpush1.msra.mxu0 %v4454
    %4989 = vmatprep.subr.mxu0 0.0
    %4990 = vmatpush1.msra.mxu0 %v4455
    %4991 = vmatprep.subr.mxu0 0.0
    %4992 = vmatpush1.msra.mxu0 %v4456
    %4993 = vmatprep.subr.mxu0 0.0
    %4994 = vmatpush1.msra.mxu0 %v4457
    %4995 = vmatprep.subr.mxu0 0.0
    %4996 = vmatpush1.msra.mxu0 %v4458
    %4997 = vmatprep.subr.mxu0 0.0
    %4998 = vmatpush1.msra.mxu0 %v4459
    %4999 = vmatprep.subr.mxu0 0.0
    %5000 = vmatpush1.msra.mxu0 %v4460
    %5001 = vmatprep.subr.mxu0 0.0
    %5002 = vmatpush1.msra.mxu0 %v4461
    %5003 = vmatprep.subr.mxu0 0.0
    %5004 = vmatpush1.msra.mxu0 %v4462
    %5005 = vmatprep.subr.mxu0 0.0
    %5006 = vmatpush1.msra.mxu0 %v4463
    %5007 = vmatprep.subr.mxu0 0.0
    %5008 = vmatpush1.msra.mxu0 %v4464
    %5009 = vmatprep.subr.mxu0 0.0
    %5010 = vmatpush1.msra.mxu0 %v4465
    %5011 = vmatprep.subr.mxu0 0.0
    %5012 = vmatpush1.msra.mxu0 %v4466
    %5013 = vmatprep.subr.mxu0 0.0
    %5014 = vmatpush1.msra.mxu0 %v4467
    %5015 = vmatprep.mubr.f32.mxu0 %v4521
    %5016 = vmatmul.mubr.f32.gmra.mrb[0].mxu0 %v4242
    %v5017 = vpop.f32.mrb[0].mxu0
    %v5018 = vadd.f32 %v4948, %v5017
    %v5019 = vpop.f32.mrb[0].mxu0
    %5020 = vdwg.mxu0
    %5021 = vmatprep.subr.mxu0 0.0
    %5022 = vmatpush1.msra.mxu0 %v4468
    %5023 = vmatprep.subr.mxu0 0.0
    %5024 = vmatpush1.msra.mxu0 %v4469
    %5025 = vmatprep.subr.mxu0 0.0
    %5026 = vmatpush1.msra.mxu0 %v4470
    %5027 = vmatprep.subr.mxu0 0.0
    %5028 = vmatpush1.msra.mxu0 %v4471
    %5029 = vmatprep.subr.mxu0 0.0
    %5030 = vmatpush1.msra.mxu0 %v4472
    %5031 = vmatprep.subr.mxu0 0.0
    %5032 = vmatpush1.msra.mxu0 %v4473
    %5033 = vmatprep.subr.mxu0 0.0
    %5034 = vmatpush1.msra.mxu0 %v4474
    %5035 = vmatprep.subr.mxu0 0.0
    %5036 = vmatpush1.msra.mxu0 %v4475
    %5037 = vmatprep.subr.mxu0 0.0
    %5038 = vmatpush1.msra.mxu0 %v4476
    %5039 = vmatprep.subr.mxu0 0.0
    %5040 = vmatpush1.msra.mxu0 %v4477
    %5041 = vmatprep.subr.mxu0 0.0
    %5042 = vmatpush1.msra.mxu0 %v4478
    %5043 = vmatprep.subr.mxu0 0.0
    %5044 = vmatpush1.msra.mxu0 %v4479
    %5045 = vmatprep.subr.mxu0 0.0
    %5046 = vmatpush1.msra.mxu0 %v4480
    %5047 = vmatprep.subr.mxu0 0.0
    %5048 = vmatpush1.msra.mxu0 %v4481
    %5049 = vmatprep.subr.mxu0 0.0
    %5050 = vmatpush1.msra.mxu0 %v4482
    %5051 = vmatprep.subr.mxu0 0.0
    %5052 = vmatpush1.msra.mxu0 %v4483
    %5053 = vmatprep.subr.mxu0 0.0
    %5054 = vmatpush1.msra.mxu0 %v4484
    %5055 = vmatprep.subr.mxu0 0.0
    %5056 = vmatpush1.msra.mxu0 %v4485
    %5057 = vmatprep.subr.mxu0 0.0
    %5058 = vmatpush1.msra.mxu0 %v4486
    %5059 = vmatprep.subr.mxu0 0.0
    %5060 = vmatpush1.msra.mxu0 %v4487
    %5061 = vmatprep.subr.mxu0 0.0
    %5062 = vmatpush1.msra.mxu0 %v4488
    %5063 = vmatprep.subr.mxu0 0.0
    %5064 = vmatpush1.msra.mxu0 %v4489
    %5065 = vmatprep.subr.mxu0 0.0
    %5066 = vmatpush1.msra.mxu0 %v4490
    %5067 = vmatprep.subr.mxu0 0.0
    %5068 = vmatpush1.msra.mxu0 %v4491
    %5069 = vmatprep.subr.mxu0 0.0
    %5070 = vmatpush1.msra.mxu0 %v4492
    %5071 = vmatprep.subr.mxu0 0.0
    %5072 = vmatpush1.msra.mxu0 %v4493
    %5073 = vmatprep.subr.mxu0 0.0
    %5074 = vmatpush1.msra.mxu0 %v4494
    %5075 = vmatprep.subr.mxu0 0.0
    %5076 = vmatpush1.msra.mxu0 %v4495
    %5077 = vmatprep.subr.mxu0 0.0
    %5078 = vmatpush1.msra.mxu0 %v4496
    %5079 = vmatprep.subr.mxu0 0.0
    %5080 = vmatpush1.msra.mxu0 %v4497
    %5081 = vmatprep.subr.mxu0 0.0
    %5082 = vmatpush1.msra.mxu0 %v4498
    %5083 = vmatprep.subr.mxu0 0.0
    %5084 = vmatpush1.msra.mxu0 %v4499
    %5085 = vmatprep.mubr.f32.mxu0 %v4522
    %5086 = vmatmul.mubr.f32.gmra.mrb[0].mxu0 %v4243
    %v5087 = vpop.f32.mrb[0].mxu0
    %v5088 = vadd.f32 %v5018, %v5087
    %v5089 = vpop.f32.mrb[0].mxu0
    %5090 = vdwg.mxu0
    %v5091 = vld [vmem:[%s8] sm:$0xff]
    %v5092 = vld [vmem:[%s8 + $0x8] sm:$0xff]
    %v5093 = vld [vmem:[%s8 + $0x10] sm:$0xff]
    %v5094 = vld [vmem:[%s8 + $0x18] sm:$0xff]
    %5095 = vmatprep.subr.mxu0 0.0
    %5096 = vmatpush1.msra.mxu0 %v5091
    %5097 = vmatprep.subr.mxu0 0.0
    %5098 = vmatpush1.msra.mxu0 %v5092
    %5099 = vmatprep.subr.mxu0 0.0
    %5100 = vmatpush1.msra.mxu0 %v5093
    %5101 = vmatprep.subr.mxu0 0.0
    %5102 = vmatpush1.msra.mxu0 %v5094
    %5103 = vmatprep.subr.mxu0 0.0
    %5104 = vmatpush1.msra.mxu0 0.0
    %5105 = vmatprep.subr.mxu0 0.0
    %5106 = vmatpush1.msra.mxu0 0.0
    %5107 = vmatprep.subr.mxu0 0.0
    %5108 = vmatpush1.msra.mxu0 0.0
    %5109 = vmatprep.subr.mxu0 0.0
    %5110 = vmatpush1.msra.mxu0 0.0
    %5111 = vmatprep.subr.mxu0 0.0
    %5112 = vmatpush1.msra.mxu0 0.0
    %5113 = vmatprep.subr.mxu0 0.0
    %5114 = vmatpush1.msra.mxu0 0.0
    %5115 = vmatprep.subr.mxu0 0.0
    %5116 = vmatpush1.msra.mxu0 0.0
    %5117 = vmatprep.subr.mxu0 0.0
    %5118 = vmatpush1.msra.mxu0 0.0
    %5119 = vmatprep.subr.mxu0 0.0
    %5120 = vmatpush1.msra.mxu0 0.0
    %5121 = vmatprep.subr.mxu0 0.0
    %5122 = vmatpush1.msra.mxu0 0.0
    %5123 = vmatprep.subr.mxu0 0.0
    %5124 = vmatpush1.msra.mxu0 0.0
    %5125 = vmatprep.subr.mxu0 0.0
    %5126 = vmatpush1.msra.mxu0 0.0
    %5127 = vmatprep.subr.mxu0 0.0
    %5128 = vmatpush1.msra.mxu0 0.0
    %5129 = vmatprep.subr.mxu0 0.0
    %5130 = vmatpush1.msra.mxu0 0.0
    %5131 = vmatprep.subr.mxu0 0.0
    %5132 = vmatpush1.msra.mxu0 0.0
    %5133 = vmatprep.subr.mxu0 0.0
    %5134 = vmatpush1.msra.mxu0 0.0
    %5135 = vmatprep.subr.mxu0 0.0
    %5136 = vmatpush1.msra.mxu0 0.0
    %5137 = vmatprep.subr.mxu0 0.0
    %5138 = vmatpush1.msra.mxu0 0.0
    %5139 = vmatprep.subr.mxu0 0.0
    %5140 = vmatpush1.msra.mxu0 0.0
    %5141 = vmatprep.subr.mxu0 0.0
    %5142 = vmatpush1.msra.mxu0 0.0
    %5143 = vmatprep.subr.mxu0 0.0
    %5144 = vmatpush1.msra.mxu0 0.0
    %5145 = vmatprep.subr.mxu0 0.0
    %5146 = vmatpush1.msra.mxu0 0.0
    %5147 = vmatprep.subr.mxu0 0.0
    %5148 = vmatpush1.msra.mxu0 0.0
    %5149 = vmatprep.subr.mxu0 0.0
    %5150 = vmatpush1.msra.mxu0 0.0
    %5151 = vmatprep.subr.mxu0 0.0
    %5152 = vmatpush1.msra.mxu0 0.0
    %5153 = vmatprep.subr.mxu0 0.0
    %5154 = vmatpush1.msra.mxu0 0.0
    %5155 = vmatprep.subr.mxu0 0.0
    %5156 = vmatpush1.msra.mxu0 0.0
    %5157 = vmatprep.subr.mxu0 0.0
    %5158 = vmatpush1.msra.mxu0 0.0
    %5159 = vmatprep.mubr.f32.mxu0 0.0
    %5160 = vmatmul.mubr.f32.gmra.mrb[0].mxu0 %v3475
    %v5161 = vpop.f32.mrb[0].mxu0
    %v5162 = vadd.f32 0.0, %v5161
    %v5163 = vpop.f32.mrb[0].mxu0
    %5164 = vdwg.mxu0
    %v5165 = vmax.f32 %v5162, 0.0
    %v5166 = vld [vmem:[%s9] sm:$0x3]
    %v5168 = vsel %vm3549, %v5165, 0
    %v5171 = vsel %vm3553, %v5166, 0
    %5173 = vmatprep.subr.mxu0 0.0
    %5174 = vmatpush1.msra.mxu0 %v5171
    %5175 = vmatprep.subr.mxu0 0.0
    %5176 = vmatpush1.msra.mxu0 0.0
    %5177 = vmatprep.subr.mxu0 0.0
    %5178 = vmatpush1.msra.mxu0 0.0
    %5179 = vmatprep.subr.mxu0 0.0
    %5180 = vmatpush1.msra.mxu0 0.0
    %5181 = vmatprep.subr.mxu0 0.0
    %5182 = vmatpush1.msra.mxu0 0.0
    %5183 = vmatprep.subr.mxu0 0.0
    %5184 = vmatpush1.msra.mxu0 0.0
    %5185 = vmatprep.subr.mxu0 0.0
    %5186 = vmatpush1.msra.mxu0 0.0
    %5187 = vmatprep.subr.mxu0 0.0
    %5188 = vmatpush1.msra.mxu0 0.0
    %5189 = vmatprep.subr.mxu0 0.0
    %5190 = vmatpush1.msra.mxu0 0.0
    %5191 = vmatprep.subr.mxu0 0.0
    %5192 = vmatpush1.msra.mxu0 0.0
    %5193 = vmatprep.subr.mxu0 0.0
    %5194 = vmatpush1.msra.mxu0 0.0
    %5195 = vmatprep.subr.mxu0 0.0
    %5196 = vmatpush1.msra.mxu0 0.0
    %5197 = vmatprep.subr.mxu0 0.0
    %5198 = vmatpush1.msra.mxu0 0.0
    %5199 = vmatprep.subr.mxu0 0.0
    %5200 = vmatpush1.msra.mxu0 0.0
    %5201 = vmatprep.subr.mxu0 0.0
    %5202 = vmatpush1.msra.mxu0 0.0
    %5203 = vmatprep.subr.mxu0 0.0
    %5204 = vmatpush1.msra.mxu0 0.0
    %5205 = vmatprep.subr.mxu0 0.0
    %5206 = vmatpush1.msra.mxu0 0.0
    %5207 = vmatprep.subr.mxu0 0.0
    %5208 = vmatpush1.msra.mxu0 0.0
    %5209 = vmatprep.subr.mxu0 0.0
    %5210 = vmatpush1.msra.mxu0 0.0
    %5211 = vmatprep.subr.mxu0 0.0
    %5212 = vmatpush1.msra.mxu0 0.0
    %5213 = vmatprep.subr.mxu0 0.0
    %5214 = vmatpush1.msra.mxu0 0.0
    %5215 = vmatprep.subr.mxu0 0.0
    %5216 = vmatpush1.msra.mxu0 0.0
    %5217 = vmatprep.subr.mxu0 0.0
    %5218 = vmatpush1.msra.mxu0 0.0
    %5219 = vmatprep.subr.mxu0 0.0
    %5220 = vmatpush1.msra.mxu0 0.0
    %5221 = vmatprep.subr.mxu0 0.0
    %5222 = vmatpush1.msra.mxu0 0.0
    %5223 = vmatprep.subr.mxu0 0.0
    %5224 = vmatpush1.msra.mxu0 0.0
    %5225 = vmatprep.subr.mxu0 0.0
    %5226 = vmatpush1.msra.mxu0 0.0
    %5227 = vmatprep.subr.mxu0 0.0
    %5228 = vmatpush1.msra.mxu0 0.0
    %5229 = vmatprep.subr.mxu0 0.0
    %5230 = vmatpush1.msra.mxu0 0.0
    %5231 = vmatprep.subr.mxu0 0.0
    %5232 = vmatpush1.msra.mxu0 0.0
    %5233 = vmatprep.subr.mxu0 0.0
    %5234 = vmatpush1.msra.mxu0 0.0
    %5235 = vmatprep.subr.mxu0 0.0
    %5236 = vmatpush1.msra.mxu0 0.0
    %5237 = vmatprep.mubr.f32.mxu0 0.0
    %5238 = vmatmul.mubr.f32.gmra.mrb[0].mxu0 %v5168
    %v5239 = vpop.f32.mrb[0].mxu0
    %v5240 = vadd.f32 0.0, %v5239
    %v5241 = vpop.f32.mrb[0].mxu0
    %5242 = vdwg.mxu0
    %v5243 = vxor.u32 %v5240, 2147483648
    %v5244 = vmul.f32 %v5243, 1.442695
    %v5245 = vpow.pop %v5244
    %v5246 = vadd.f32 %v5245, 1.0
    %v5247 = vrcp.pop %v5246
    %v5248 = vmul.f32 1.0, %v5247
    %v5250 = vsel %vm3473, %v5248, 0
    %5252 = vmatprep.subr.mxu0 %v730
    %5253 = vmatpush1.msra.mxu0 %v729
    %5254 = vmatprep.subr.mxu0 %v746
    %5255 = vmatpush1.msra.mxu0 %v745
    %5256 = vmatprep.subr.mxu0 %v762
    %5257 = vmatpush1.msra.mxu0 %v761
    %5258 = vmatprep.subr.mxu0 %v778
    %5259 = vmatpush1.msra.mxu0 %v777
    %5260 = vmatprep.subr.mxu0 0.0
    %5261 = vmatpush1.msra.mxu0 0.0
    %5262 = vmatprep.subr.mxu0 0.0
    %5263 = vmatpush1.msra.mxu0 0.0
    %5264 = vmatprep.subr.mxu0 0.0
    %5265 = vmatpush1.msra.mxu0 0.0
    %5266 = vmatprep.subr.mxu0 0.0
    %5267 = vmatpush1.msra.mxu0 0.0
    %5268 = vmatprep.subr.mxu0 0.0
    %5269 = vmatpush1.msra.mxu0 0.0
    %5270 = vmatprep.subr.mxu0 0.0
    %5271 = vmatpush1.msra.mxu0 0.0
    %5272 = vmatprep.subr.mxu0 0.0
    %5273 = vmatpush1.msra.mxu0 0.0
    %5274 = vmatprep.subr.mxu0 0.0
    %5275 = vmatpush1.msra.mxu0 0.0
    %5276 = vmatprep.subr.mxu0 0.0
    %5277 = vmatpush1.msra.mxu0 0.0
    %5278 = vmatprep.subr.mxu0 0.0
    %5279 = vmatpush1.msra.mxu0 0.0
    %5280 = vmatprep.subr.mxu0 0.0
    %5281 = vmatpush1.msra.mxu0 0.0
    %5282 = vmatprep.subr.mxu0 0.0
    %5283 = vmatpush1.msra.mxu0 0.0
    %5284 = vmatprep.subr.mxu0 0.0
    %5285 = vmatpush1.msra.mxu0 0.0
    %5286 = vmatprep.subr.mxu0 0.0
    %5287 = vmatpush1.msra.mxu0 0.0
    %5288 = vmatprep.subr.mxu0 0.0
    %5289 = vmatpush1.msra.mxu0 0.0
    %5290 = vmatprep.subr.mxu0 0.0
    %5291 = vmatpush1.msra.mxu0 0.0
    %5292 = vmatprep.subr.mxu0 0.0
    %5293 = vmatpush1.msra.mxu0 0.0
    %5294 = vmatprep.subr.mxu0 0.0
    %5295 = vmatpush1.msra.mxu0 0.0
    %5296 = vmatprep.subr.mxu0 0.0
    %5297 = vmatpush1.msra.mxu0 0.0
    %5298 = vmatprep.subr.mxu0 0.0
    %5299 = vmatpush1.msra.mxu0 0.0
    %5300 = vmatprep.subr.mxu0 0.0
    %5301 = vmatpush1.msra.mxu0 0.0
    %5302 = vmatprep.subr.mxu0 0.0
    %5303 = vmatpush1.msra.mxu0 0.0
    %5304 = vmatprep.subr.mxu0 0.0
    %5305 = vmatpush1.msra.mxu0 0.0
    %5306 = vmatprep.subr.mxu0 0.0
    %5307 = vmatpush1.msra.mxu0 0.0
    %5308 = vmatprep.subr.mxu0 0.0
    %5309 = vmatpush1.msra.mxu0 0.0
    %5310 = vmatprep.subr.mxu0 0.0
    %5311 = vmatpush1.msra.mxu0 0.0
    %5312 = vmatprep.subr.mxu0 0.0
    %5313 = vmatpush1.msra.mxu0 0.0
    %5314 = vmatprep.subr.mxu0 0.0
    %5315 = vmatpush1.msra.mxu0 0.0
    %5316 = vmatprep.mubr.f32.mxu0 0.0
    %5317 = vmatmul.mubr.f32.gmra.mrb[0].mxu0 %v5250
    %v5318 = vpop.f32.mrb[0].mxu0
    %v5319 = vadd.f32 0.0, %v5318
    %v5320 = vpop.f32.mrb[0].mxu0
    %v5321 = vadd.f32 0.0, %v5320
    %5322 = vdwg.mxu0
    %5323 = vmatprep.subr.mxu0 %v732
    %5324 = vmatpush1.msra.mxu0 %v731
    %5325 = vmatprep.subr.mxu0 %v748
    %5326 = vmatpush1.msra.mxu0 %v747
    %5327 = vmatprep.subr.mxu0 %v764
    %5328 = vmatpush1.msra.mxu0 %v763
    %5329 = vmatprep.subr.mxu0 %v780
    %5330 = vmatpush1.msra.mxu0 %v779
    %5331 = vmatprep.subr.mxu0 0.0
    %5332 = vmatpush1.msra.mxu0 0.0
    %5333 = vmatprep.subr.mxu0 0.0
    %5334 = vmatpush1.msra.mxu0 0.0
    %5335 = vmatprep.subr.mxu0 0.0
    %5336 = vmatpush1.msra.mxu0 0.0
    %5337 = vmatprep.subr.mxu0 0.0
    %5338 = vmatpush1.msra.mxu0 0.0
    %5339 = vmatprep.subr.mxu0 0.0
    %5340 = vmatpush1.msra.mxu0 0.0
    %5341 = vmatprep.subr.mxu0 0.0
    %5342 = vmatpush1.msra.mxu0 0.0
    %5343 = vmatprep.subr.mxu0 0.0
    %5344 = vmatpush1.msra.mxu0 0.0
    %5345 = vmatprep.subr.mxu0 0.0
    %5346 = vmatpush1.msra.mxu0 0.0
    %5347 = vmatprep.subr.mxu0 0.0
    %5348 = vmatpush1.msra.mxu0 0.0
    %5349 = vmatprep.subr.mxu0 0.0
    %5350 = vmatpush1.msra.mxu0 0.0
    %5351 = vmatprep.subr.mxu0 0.0
    %5352 = vmatpush1.msra.mxu0 0.0
    %5353 = vmatprep.subr.mxu0 0.0
    %5354 = vmatpush1.msra.mxu0 0.0
    %5355 = vmatprep.subr.mxu0 0.0
    %5356 = vmatpush1.msra.mxu0 0.0
    %5357 = vmatprep.subr.mxu0 0.0
    %5358 = vmatpush1.msra.mxu0 0.0
    %5359 = vmatprep.subr.mxu0 0.0
    %5360 = vmatpush1.msra.mxu0 0.0
    %5361 = vmatprep.subr.mxu0 0.0
    %5362 = vmatpush1.msra.mxu0 0.0
    %5363 = vmatprep.subr.mxu0 0.0
    %5364 = vmatpush1.msra.mxu0 0.0
    %5365 = vmatprep.subr.mxu0 0.0
    %5366 = vmatpush1.msra.mxu0 0.0
    %5367 = vmatprep.subr.mxu0 0.0
    %5368 = vmatpush1.msra.mxu0 0.0
    %5369 = vmatprep.subr.mxu0 0.0
    %5370 = vmatpush1.msra.mxu0 0.0
    %5371 = vmatprep.subr.mxu0 0.0
    %5372 = vmatpush1.msra.mxu0 0.0
    %5373 = vmatprep.subr.mxu0 0.0
    %5374 = vmatpush1.msra.mxu0 0.0
    %5375 = vmatprep.subr.mxu0 0.0
    %5376 = vmatpush1.msra.mxu0 0.0
    %5377 = vmatprep.subr.mxu0 0.0
    %5378 = vmatpush1.msra.mxu0 0.0
    %5379 = vmatprep.subr.mxu0 0.0
    %5380 = vmatpush1.msra.mxu0 0.0
    %5381 = vmatprep.subr.mxu0 0.0
    %5382 = vmatpush1.msra.mxu0 0.0
    %5383 = vmatprep.subr.mxu0 0.0
    %5384 = vmatpush1.msra.mxu0 0.0
    %5385 = vmatprep.subr.mxu0 0.0
    %5386 = vmatpush1.msra.mxu0 0.0
    %5387 = vmatprep.mubr.f32.mxu0 0.0
    %5388 = vmatmul.mubr.f32.gmra.mrb[0].mxu0 %v5250
    %v5389 = vpop.f32.mrb[0].mxu0
    %v5390 = vadd.f32 0.0, %v5389
    %v5391 = vpop.f32.mrb[0].mxu0
    %v5392 = vadd.f32 0.0, %v5391
    %5393 = vdwg.mxu0
    %5394 = vmatprep.subr.mxu0 %v734
    %5395 = vmatpush1.msra.mxu0 %v733
    %5396 = vmatprep.subr.mxu0 %v750
    %5397 = vmatpush1.msra.mxu0 %v749
    %5398 = vmatprep.subr.mxu0 %v766
    %5399 = vmatpush1.msra.mxu0 %v765
    %5400 = vmatprep.subr.mxu0 %v782
    %5401 = vmatpush1.msra.mxu0 %v781
    %5402 = vmatprep.subr.mxu0 0.0
    %5403 = vmatpush1.msra.mxu0 0.0
    %5404 = vmatprep.subr.mxu0 0.0
    %5405 = vmatpush1.msra.mxu0 0.0
    %5406 = vmatprep.subr.mxu0 0.0
    %5407 = vmatpush1.msra.mxu0 0.0
    %5408 = vmatprep.subr.mxu0 0.0
    %5409 = vmatpush1.msra.mxu0 0.0
    %5410 = vmatprep.subr.mxu0 0.0
    %5411 = vmatpush1.msra.mxu0 0.0
    %5412 = vmatprep.subr.mxu0 0.0
    %5413 = vmatpush1.msra.mxu0 0.0
    %5414 = vmatprep.subr.mxu0 0.0
    %5415 = vmatpush1.msra.mxu0 0.0
    %5416 = vmatprep.subr.mxu0 0.0
    %5417 = vmatpush1.msra.mxu0 0.0
    %5418 = vmatprep.subr.mxu0 0.0
    %5419 = vmatpush1.msra.mxu0 0.0
    %5420 = vmatprep.subr.mxu0 0.0
    %5421 = vmatpush1.msra.mxu0 0.0
    %5422 = vmatprep.subr.mxu0 0.0
    %5423 = vmatpush1.msra.mxu0 0.0
    %5424 = vmatprep.subr.mxu0 0.0
    %5425 = vmatpush1.msra.mxu0 0.0
    %5426 = vmatprep.subr.mxu0 0.0
    %5427 = vmatpush1.msra.mxu0 0.0
    %5428 = vmatprep.subr.mxu0 0.0
    %5429 = vmatpush1.msra.mxu0 0.0
    %5430 = vmatprep.subr.mxu0 0.0
    %5431 = vmatpush1.msra.mxu0 0.0
    %5432 = vmatprep.subr.mxu0 0.0
    %5433 = vmatpush1.msra.mxu0 0.0
    %5434 = vmatprep.subr.mxu0 0.0
    %5435 = vmatpush1.msra.mxu0 0.0
    %5436 = vmatprep.subr.mxu0 0.0
    %5437 = vmatpush1.msra.mxu0 0.0
    %5438 = vmatprep.subr.mxu0 0.0
    %5439 = vmatpush1.msra.mxu0 0.0
    %5440 = vmatprep.subr.mxu0 0.0
    %5441 = vmatpush1.msra.mxu0 0.0
    %5442 = vmatprep.subr.mxu0 0.0
    %5443 = vmatpush1.msra.mxu0 0.0
    %5444 = vmatprep.subr.mxu0 0.0
    %5445 = vmatpush1.msra.mxu0 0.0
    %5446 = vmatprep.subr.mxu0 0.0
    %5447 = vmatpush1.msra.mxu0 0.0
    %5448 = vmatprep.subr.mxu0 0.0
    %5449 = vmatpush1.msra.mxu0 0.0
    %5450 = vmatprep.subr.mxu0 0.0
    %5451 = vmatpush1.msra.mxu0 0.0
    %5452 = vmatprep.subr.mxu0 0.0
    %5453 = vmatpush1.msra.mxu0 0.0
    %5454 = vmatprep.subr.mxu0 0.0
    %5455 = vmatpush1.msra.mxu0 0.0
    %5456 = vmatprep.subr.mxu0 0.0
    %5457 = vmatpush1.msra.mxu0 0.0
    %5458 = vmatprep.mubr.f32.mxu0 0.0
    %5459 = vmatmul.mubr.f32.gmra.mrb[0].mxu0 %v5250
    %v5460 = vpop.f32.mrb[0].mxu0
    %v5461 = vadd.f32 0.0, %v5460
    %v5462 = vpop.f32.mrb[0].mxu0
    %v5463 = vadd.f32 0.0, %v5462
    %5464 = vdwg.mxu0
    %5465 = vmatprep.subr.mxu0 %v736
    %5466 = vmatpush1.msra.mxu0 %v735
    %5467 = vmatprep.subr.mxu0 %v752
    %5468 = vmatpush1.msra.mxu0 %v751
    %5469 = vmatprep.subr.mxu0 %v768
    %5470 = vmatpush1.msra.mxu0 %v767
    %5471 = vmatprep.subr.mxu0 %v784
    %5472 = vmatpush1.msra.mxu0 %v783
    %5473 = vmatprep.subr.mxu0 0.0
    %5474 = vmatpush1.msra.mxu0 0.0
    %5475 = vmatprep.subr.mxu0 0.0
    %5476 = vmatpush1.msra.mxu0 0.0
    %5477 = vmatprep.subr.mxu0 0.0
    %5478 = vmatpush1.msra.mxu0 0.0
    %5479 = vmatprep.subr.mxu0 0.0
    %5480 = vmatpush1.msra.mxu0 0.0
    %5481 = vmatprep.subr.mxu0 0.0
    %5482 = vmatpush1.msra.mxu0 0.0
    %5483 = vmatprep.subr.mxu0 0.0
    %5484 = vmatpush1.msra.mxu0 0.0
    %5485 = vmatprep.subr.mxu0 0.0
    %5486 = vmatpush1.msra.mxu0 0.0
    %5487 = vmatprep.subr.mxu0 0.0
    %5488 = vmatpush1.msra.mxu0 0.0
    %5489 = vmatprep.subr.mxu0 0.0
    %5490 = vmatpush1.msra.mxu0 0.0
    %5491 = vmatprep.subr.mxu0 0.0
    %5492 = vmatpush1.msra.mxu0 0.0
    %5493 = vmatprep.subr.mxu0 0.0
    %5494 = vmatpush1.msra.mxu0 0.0
    %5495 = vmatprep.subr.mxu0 0.0
    %5496 = vmatpush1.msra.mxu0 0.0
    %5497 = vmatprep.subr.mxu0 0.0
    %5498 = vmatpush1.msra.mxu0 0.0
    %5499 = vmatprep.subr.mxu0 0.0
    %5500 = vmatpush1.msra.mxu0 0.0
    %5501 = vmatprep.subr.mxu0 0.0
    %5502 = vmatpush1.msra.mxu0 0.0
    %5503 = vmatprep.subr.mxu0 0.0
    %5504 = vmatpush1.msra.mxu0 0.0
    %5505 = vmatprep.subr.mxu0 0.0
    %5506 = vmatpush1.msra.mxu0 0.0
    %5507 = vmatprep.subr.mxu0 0.0
    %5508 = vmatpush1.msra.mxu0 0.0
    %5509 = vmatprep.subr.mxu0 0.0
    %5510 = vmatpush1.msra.mxu0 0.0
    %5511 = vmatprep.subr.mxu0 0.0
    %5512 = vmatpush1.msra.mxu0 0.0
    %5513 = vmatprep.subr.mxu0 0.0
    %5514 = vmatpush1.msra.mxu0 0.0
    %5515 = vmatprep.subr.mxu0 0.0
    %5516 = vmatpush1.msra.mxu0 0.0
    %5517 = vmatprep.subr.mxu0 0.0
    %5518 = vmatpush1.msra.mxu0 0.0
    %5519 = vmatprep.subr.mxu0 0.0
    %5520 = vmatpush1.msra.mxu0 0.0
    %5521 = vmatprep.subr.mxu0 0.0
    %5522 = vmatpush1.msra.mxu0 0.0
    %5523 = vmatprep.subr.mxu0 0.0
    %5524 = vmatpush1.msra.mxu0 0.0
    %5525 = vmatprep.subr.mxu0 0.0
    %5526 = vmatpush1.msra.mxu0 0.0
    %5527 = vmatprep.subr.mxu0 0.0
    %5528 = vmatpush1.msra.mxu0 0.0
    %5529 = vmatprep.mubr.f32.mxu0 0.0
    %5530 = vmatmul.mubr.f32.gmra.mrb[0].mxu0 %v5250
    %v5531 = vpop.f32.mrb[0].mxu0
    %v5532 = vadd.f32 0.0, %v5531
    %v5533 = vpop.f32.mrb[0].mxu0
    %v5534 = vadd.f32 0.0, %v5533
    %5535 = vdwg.mxu0
    %5536 = vmatprep.subr.mxu0 %v738
    %5537 = vmatpush1.msra.mxu0 %v737
    %5538 = vmatprep.subr.mxu0 %v754
    %5539 = vmatpush1.msra.mxu0 %v753
    %5540 = vmatprep.subr.mxu0 %v770
    %5541 = vmatpush1.msra.mxu0 %v769
    %5542 = vmatprep.subr.mxu0 %v786
    %5543 = vmatpush1.msra.mxu0 %v785
    %5544 = vmatprep.subr.mxu0 0.0
    %5545 = vmatpush1.msra.mxu0 0.0
    %5546 = vmatprep.subr.mxu0 0.0
    %5547 = vmatpush1.msra.mxu0 0.0
    %5548 = vmatprep.subr.mxu0 0.0
    %5549 = vmatpush1.msra.mxu0 0.0
    %5550 = vmatprep.subr.mxu0 0.0
    %5551 = vmatpush1.msra.mxu0 0.0
    %5552 = vmatprep.subr.mxu0 0.0
    %5553 = vmatpush1.msra.mxu0 0.0
    %5554 = vmatprep.subr.mxu0 0.0
    %5555 = vmatpush1.msra.mxu0 0.0
    %5556 = vmatprep.subr.mxu0 0.0
    %5557 = vmatpush1.msra.mxu0 0.0
    %5558 = vmatprep.subr.mxu0 0.0
    %5559 = vmatpush1.msra.mxu0 0.0
    %5560 = vmatprep.subr.mxu0 0.0
    %5561 = vmatpush1.msra.mxu0 0.0
    %5562 = vmatprep.subr.mxu0 0.0
    %5563 = vmatpush1.msra.mxu0 0.0
    %5564 = vmatprep.subr.mxu0 0.0
    %5565 = vmatpush1.msra.mxu0 0.0
    %5566 = vmatprep.subr.mxu0 0.0
    %5567 = vmatpush1.msra.mxu0 0.0
    %5568 = vmatprep.subr.mxu0 0.0
    %5569 = vmatpush1.msra.mxu0 0.0
    %5570 = vmatprep.subr.mxu0 0.0
    %5571 = vmatpush1.msra.mxu0 0.0
    %5572 = vmatprep.subr.mxu0 0.0
    %5573 = vmatpush1.msra.mxu0 0.0
    %5574 = vmatprep.subr.mxu0 0.0
    %5575 = vmatpush1.msra.mxu0 0.0
    %5576 = vmatprep.subr.mxu0 0.0
    %5577 = vmatpush1.msra.mxu0 0.0
    %5578 = vmatprep.subr.mxu0 0.0
    %5579 = vmatpush1.msra.mxu0 0.0
    %5580 = vmatprep.subr.mxu0 0.0
    %5581 = vmatpush1.msra.mxu0 0.0
    %5582 = vmatprep.subr.mxu0 0.0
    %5583 = vmatpush1.msra.mxu0 0.0
    %5584 = vmatprep.subr.mxu0 0.0
    %5585 = vmatpush1.msra.mxu0 0.0
    %5586 = vmatprep.subr.mxu0 0.0
    %5587 = vmatpush1.msra.mxu0 0.0
    %5588 = vmatprep.subr.mxu0 0.0
    %5589 = vmatpush1.msra.mxu0 0.0
    %5590 = vmatprep.subr.mxu0 0.0
    %5591 = vmatpush1.msra.mxu0 0.0
    %5592 = vmatprep.subr.mxu0 0.0
    %5593 = vmatpush1.msra.mxu0 0.0
    %5594 = vmatprep.subr.mxu0 0.0
    %5595 = vmatpush1.msra.mxu0 0.0
    %5596 = vmatprep.subr.mxu0 0.0
    %5597 = vmatpush1.msra.mxu0 0.0
    %5598 = vmatprep.subr.mxu0 0.0
    %5599 = vmatpush1.msra.mxu0 0.0
    %5600 = vmatprep.mubr.f32.mxu0 0.0
    %5601 = vmatmul.mubr.f32.gmra.mrb[0].mxu0 %v5250
    %v5602 = vpop.f32.mrb[0].mxu0
    %v5603 = vadd.f32 0.0, %v5602
    %v5604 = vpop.f32.mrb[0].mxu0
    %v5605 = vadd.f32 0.0, %v5604
    %5606 = vdwg.mxu0
    %5607 = vmatprep.subr.mxu0 %v740
    %5608 = vmatpush1.msra.mxu0 %v739
    %5609 = vmatprep.subr.mxu0 %v756
    %5610 = vmatpush1.msra.mxu0 %v755
    %5611 = vmatprep.subr.mxu0 %v772
    %5612 = vmatpush1.msra.mxu0 %v771
    %5613 = vmatprep.subr.mxu0 %v788
    %5614 = vmatpush1.msra.mxu0 %v787
    %5615 = vmatprep.subr.mxu0 0.0
    %5616 = vmatpush1.msra.mxu0 0.0
    %5617 = vmatprep.subr.mxu0 0.0
    %5618 = vmatpush1.msra.mxu0 0.0
    %5619 = vmatprep.subr.mxu0 0.0
    %5620 = vmatpush1.msra.mxu0 0.0
    %5621 = vmatprep.subr.mxu0 0.0
    %5622 = vmatpush1.msra.mxu0 0.0
    %5623 = vmatprep.subr.mxu0 0.0
    %5624 = vmatpush1.msra.mxu0 0.0
    %5625 = vmatprep.subr.mxu0 0.0
    %5626 = vmatpush1.msra.mxu0 0.0
    %5627 = vmatprep.subr.mxu0 0.0
    %5628 = vmatpush1.msra.mxu0 0.0
    %5629 = vmatprep.subr.mxu0 0.0
    %5630 = vmatpush1.msra.mxu0 0.0
    %5631 = vmatprep.subr.mxu0 0.0
    %5632 = vmatpush1.msra.mxu0 0.0
    %5633 = vmatprep.subr.mxu0 0.0
    %5634 = vmatpush1.msra.mxu0 0.0
    %5635 = vmatprep.subr.mxu0 0.0
    %5636 = vmatpush1.msra.mxu0 0.0
    %5637 = vmatprep.subr.mxu0 0.0
    %5638 = vmatpush1.msra.mxu0 0.0
    %5639 = vmatprep.subr.mxu0 0.0
    %5640 = vmatpush1.msra.mxu0 0.0
    %5641 = vmatprep.subr.mxu0 0.0
    %5642 = vmatpush1.msra.mxu0 0.0
    %5643 = vmatprep.subr.mxu0 0.0
    %5644 = vmatpush1.msra.mxu0 0.0
    %5645 = vmatprep.subr.mxu0 0.0
    %5646 = vmatpush1.msra.mxu0 0.0
    %5647 = vmatprep.subr.mxu0 0.0
    %5648 = vmatpush1.msra.mxu0 0.0
    %5649 = vmatprep.subr.mxu0 0.0
    %5650 = vmatpush1.msra.mxu0 0.0
    %5651 = vmatprep.subr.mxu0 0.0
    %5652 = vmatpush1.msra.mxu0 0.0
    %5653 = vmatprep.subr.mxu0 0.0
    %5654 = vmatpush1.msra.mxu0 0.0
    %5655 = vmatprep.subr.mxu0 0.0
    %5656 = vmatpush1.msra.mxu0 0.0
    %5657 = vmatprep.subr.mxu0 0.0
    %5658 = vmatpush1.msra.mxu0 0.0
    %5659 = vmatprep.subr.mxu0 0.0
    %5660 = vmatpush1.msra.mxu0 0.0
    %5661 = vmatprep.subr.mxu0 0.0
    %5662 = vmatpush1.msra.mxu0 0.0
    %5663 = vmatprep.subr.mxu0 0.0
    %5664 = vmatpush1.msra.mxu0 0.0
    %5665 = vmatprep.subr.mxu0 0.0
    %5666 = vmatpush1.msra.mxu0 0.0
    %5667 = vmatprep.subr.mxu0 0.0
    %5668 = vmatpush1.msra.mxu0 0.0
    %5669 = vmatprep.subr.mxu0 0.0
    %5670 = vmatpush1.msra.mxu0 0.0
    %5671 = vmatprep.mubr.f32.mxu0 0.0
    %5672 = vmatmul.mubr.f32.gmra.mrb[0].mxu0 %v5250
    %v5673 = vpop.f32.mrb[0].mxu0
    %v5674 = vadd.f32 0.0, %v5673
    %v5675 = vpop.f32.mrb[0].mxu0
    %v5676 = vadd.f32 0.0, %v5675
    %5677 = vdwg.mxu0
    %5678 = vmatprep.subr.mxu0 %v742
    %5679 = vmatpush1.msra.mxu0 %v741
    %5680 = vmatprep.subr.mxu0 %v758
    %5681 = vmatpush1.msra.mxu0 %v757
    %5682 = vmatprep.subr.mxu0 %v774
    %5683 = vmatpush1.msra.mxu0 %v773
    %5684 = vmatprep.subr.mxu0 %v790
    %5685 = vmatpush1.msra.mxu0 %v789
    %5686 = vmatprep.subr.mxu0 0.0
    %5687 = vmatpush1.msra.mxu0 0.0
    %5688 = vmatprep.subr.mxu0 0.0
    %5689 = vmatpush1.msra.mxu0 0.0
    %5690 = vmatprep.subr.mxu0 0.0
    %5691 = vmatpush1.msra.mxu0 0.0
    %5692 = vmatprep.subr.mxu0 0.0
    %5693 = vmatpush1.msra.mxu0 0.0
    %5694 = vmatprep.subr.mxu0 0.0
    %5695 = vmatpush1.msra.mxu0 0.0
    %5696 = vmatprep.subr.mxu0 0.0
    %5697 = vmatpush1.msra.mxu0 0.0
    %5698 = vmatprep.subr.mxu0 0.0
    %5699 = vmatpush1.msra.mxu0 0.0
    %5700 = vmatprep.subr.mxu0 0.0
    %5701 = vmatpush1.msra.mxu0 0.0
    %5702 = vmatprep.subr.mxu0 0.0
    %5703 = vmatpush1.msra.mxu0 0.0
    %5704 = vmatprep.subr.mxu0 0.0
    %5705 = vmatpush1.msra.mxu0 0.0
    %5706 = vmatprep.subr.mxu0 0.0
    %5707 = vmatpush1.msra.mxu0 0.0
    %5708 = vmatprep.subr.mxu0 0.0
    %5709 = vmatpush1.msra.mxu0 0.0
    %5710 = vmatprep.subr.mxu0 0.0
    %5711 = vmatpush1.msra.mxu0 0.0
    %5712 = vmatprep.subr.mxu0 0.0
    %5713 = vmatpush1.msra.mxu0 0.0
    %5714 = vmatprep.subr.mxu0 0.0
    %5715 = vmatpush1.msra.mxu0 0.0
    %5716 = vmatprep.subr.mxu0 0.0
    %5717 = vmatpush1.msra.mxu0 0.0
    %5718 = vmatprep.subr.mxu0 0.0
    %5719 = vmatpush1.msra.mxu0 0.0
    %5720 = vmatprep.subr.mxu0 0.0
    %5721 = vmatpush1.msra.mxu0 0.0
    %5722 = vmatprep.subr.mxu0 0.0
    %5723 = vmatpush1.msra.mxu0 0.0
    %5724 = vmatprep.subr.mxu0 0.0
    %5725 = vmatpush1.msra.mxu0 0.0
    %5726 = vmatprep.subr.mxu0 0.0
    %5727 = vmatpush1.msra.mxu0 0.0
    %5728 = vmatprep.subr.mxu0 0.0
    %5729 = vmatpush1.msra.mxu0 0.0
    %5730 = vmatprep.subr.mxu0 0.0
    %5731 = vmatpush1.msra.mxu0 0.0
    %5732 = vmatprep.subr.mxu0 0.0
    %5733 = vmatpush1.msra.mxu0 0.0
    %5734 = vmatprep.subr.mxu0 0.0
    %5735 = vmatpush1.msra.mxu0 0.0
    %5736 = vmatprep.subr.mxu0 0.0
    %5737 = vmatpush1.msra.mxu0 0.0
    %5738 = vmatprep.subr.mxu0 0.0
    %5739 = vmatpush1.msra.mxu0 0.0
    %5740 = vmatprep.subr.mxu0 0.0
    %5741 = vmatpush1.msra.mxu0 0.0
    %5742 = vmatprep.mubr.f32.mxu0 0.0
    %5743 = vmatmul.mubr.f32.gmra.mrb[0].mxu0 %v5250
    %v5744 = vpop.f32.mrb[0].mxu0
    %v5745 = vadd.f32 0.0, %v5744
    %v5746 = vpop.f32.mrb[0].mxu0
    %v5747 = vadd.f32 0.0, %v5746
    %5748 = vdwg.mxu0
    %5749 = vmatprep.subr.mxu0 %v744
    %5750 = vmatpush1.msra.mxu0 %v743
    %5751 = vmatprep.subr.mxu0 %v760
    %5752 = vmatpush1.msra.mxu0 %v759
    %5753 = vmatprep.subr.mxu0 %v776
    %5754 = vmatpush1.msra.mxu0 %v775
    %5755 = vmatprep.subr.mxu0 %v792
    %5756 = vmatpush1.msra.mxu0 %v791
    %5757 = vmatprep.subr.mxu0 0.0
    %5758 = vmatpush1.msra.mxu0 0.0
    %5759 = vmatprep.subr.mxu0 0.0
    %5760 = vmatpush1.msra.mxu0 0.0
    %5761 = vmatprep.subr.mxu0 0.0
    %5762 = vmatpush1.msra.mxu0 0.0
    %5763 = vmatprep.subr.mxu0 0.0
    %5764 = vmatpush1.msra.mxu0 0.0
    %5765 = vmatprep.subr.mxu0 0.0
    %5766 = vmatpush1.msra.mxu0 0.0
    %5767 = vmatprep.subr.mxu0 0.0
    %5768 = vmatpush1.msra.mxu0 0.0
    %5769 = vmatprep.subr.mxu0 0.0
    %5770 = vmatpush1.msra.mxu0 0.0
    %5771 = vmatprep.subr.mxu0 0.0
    %5772 = vmatpush1.msra.mxu0 0.0
    %5773 = vmatprep.subr.mxu0 0.0
    %5774 = vmatpush1.msra.mxu0 0.0
    %5775 = vmatprep.subr.mxu0 0.0
    %5776 = vmatpush1.msra.mxu0 0.0
    %5777 = vmatprep.subr.mxu0 0.0
    %5778 = vmatpush1.msra.mxu0 0.0
    %5779 = vmatprep.subr.mxu0 0.0
    %5780 = vmatpush1.msra.mxu0 0.0
    %5781 = vmatprep.subr.mxu0 0.0
    %5782 = vmatpush1.msra.mxu0 0.0
    %5783 = vmatprep.subr.mxu0 0.0
    %5784 = vmatpush1.msra.mxu0 0.0
    %5785 = vmatprep.subr.mxu0 0.0
    %5786 = vmatpush1.msra.mxu0 0.0
    %5787 = vmatprep.subr.mxu0 0.0
    %5788 = vmatpush1.msra.mxu0 0.0
    %5789 = vmatprep.subr.mxu0 0.0
    %5790 = vmatpush1.msra.mxu0 0.0
    %5791 = vmatprep.subr.mxu0 0.0
    %5792 = vmatpush1.msra.mxu0 0.0
    %5793 = vmatprep.subr.mxu0 0.0
    %5794 = vmatpush1.msra.mxu0 0.0
    %5795 = vmatprep.subr.mxu0 0.0
    %5796 = vmatpush1.msra.mxu0 0.0
    %5797 = vmatprep.subr.mxu0 0.0
    %5798 = vmatpush1.msra.mxu0 0.0
    %5799 = vmatprep.subr.mxu0 0.0
    %5800 = vmatpush1.msra.mxu0 0.0
    %5801 = vmatprep.subr.mxu0 0.0
    %5802 = vmatpush1.msra.mxu0 0.0
    %5803 = vmatprep.subr.mxu0 0.0
    %5804 = vmatpush1.msra.mxu0 0.0
    %5805 = vmatprep.subr.mxu0 0.0
    %5806 = vmatpush1.msra.mxu0 0.0
    %5807 = vmatprep.subr.mxu0 0.0
    %5808 = vmatpush1.msra.mxu0 0.0
    %5809 = vmatprep.subr.mxu0 0.0
    %5810 = vmatpush1.msra.mxu0 0.0
    %5811 = vmatprep.subr.mxu0 0.0
    %5812 = vmatpush1.msra.mxu0 0.0
    %5813 = vmatprep.mubr.f32.mxu0 0.0
    %5814 = vmatmul.mubr.f32.gmra.mrb[0].mxu0 %v5250
    %v5815 = vpop.f32.mrb[0].mxu0
    %v5816 = vadd.f32 0.0, %v5815
    %v5817 = vpop.f32.mrb[0].mxu0
    %v5818 = vadd.f32 0.0, %v5817
    %5819 = vdwg.mxu0
    %v5836 = vcombine.low %v5319, %v5321
    %v5837 = vcombine.low %v5390, %v5392
    %v5838 = vcombine.low %v5461, %v5463
    %v5839 = vcombine.low %v5532, %v5534
    %v5840 = vcombine.low %v5603, %v5605
    %v5841 = vcombine.low %v5674, %v5676
    %v5842 = vcombine.low %v5745, %v5747
    %v5843 = vcombine.low %v5816, %v5818
    %v5852 = vmul.f32 %v95, %v5836
    %v5853 = vmul.f32 %v96, %v5837
    %v5854 = vmul.f32 %v97, %v5838
    %v5855 = vmul.f32 %v98, %v5839
    %v5856 = vmul.f32 %v99, %v5840
    %v5857 = vmul.f32 %v100, %v5841
    %v5858 = vmul.f32 %v101, %v5842
    %v5859 = vmul.f32 %v102, %v5843
    %v5860 = vld [vmem:[%s16] sm:$0xff]
    %v5861 = vld [vmem:[%s16 + $0x8] sm:$0xff]
    %v5862 = vld [vmem:[%s16 + $0x10] sm:$0xff]
    %v5863 = vld [vmem:[%s16 + $0x18] sm:$0xff]
    %v5864 = vld [vmem:[%s16 + $0x20] sm:$0xff]
    %v5865 = vld [vmem:[%s16 + $0x28] sm:$0xff]
    %v5866 = vld [vmem:[%s16 + $0x30] sm:$0xff]
    %v5867 = vld [vmem:[%s16 + $0x38] sm:$0xff]
    %v5868 = vld [vmem:[%s16 + $0x40] sm:$0xff]
    %v5869 = vld [vmem:[%s16 + $0x48] sm:$0xff]
    %v5870 = vld [vmem:[%s16 + $0x50] sm:$0xff]
    %v5871 = vld [vmem:[%s16 + $0x58] sm:$0xff]
    %v5872 = vld [vmem:[%s16 + $0x60] sm:$0xff]
    %v5873 = vld [vmem:[%s16 + $0x68] sm:$0xff]
    %v5874 = vld [vmem:[%s16 + $0x70] sm:$0xff]
    %v5875 = vld [vmem:[%s16 + $0x78] sm:$0xff]
    %v5876 = vld [vmem:[%s16 + $0x80] sm:$0xff]
    %v5877 = vld [vmem:[%s16 + $0x88] sm:$0xff]
    %v5878 = vld [vmem:[%s16 + $0x90] sm:$0xff]
    %v5879 = vld [vmem:[%s16 + $0x98] sm:$0xff]
    %v5880 = vld [vmem:[%s16 + $0xa0] sm:$0xff]
    %v5881 = vld [vmem:[%s16 + $0xa8] sm:$0xff]
    %v5882 = vld [vmem:[%s16 + $0xb0] sm:$0xff]
    %v5883 = vld [vmem:[%s16 + $0xb8] sm:$0xff]
    %v5884 = vld [vmem:[%s16 + $0xc0] sm:$0xff]
    %v5885 = vld [vmem:[%s16 + $0xc8] sm:$0xff]
    %v5886 = vld [vmem:[%s16 + $0xd0] sm:$0xff]
    %v5887 = vld [vmem:[%s16 + $0xd8] sm:$0xff]
    %v5888 = vld [vmem:[%s16 + $0xe0] sm:$0xff]
    %v5889 = vld [vmem:[%s16 + $0xe8] sm:$0xff]
    %v5890 = vld [vmem:[%s16 + $0xf0] sm:$0xff]
    %v5891 = vld [vmem:[%s16 + $0xf8] sm:$0xff]
    %v5892 = vld [vmem:[%s16 + $0x100] sm:$0xff]
    %v5893 = vld [vmem:[%s16 + $0x108] sm:$0xff]
    %v5894 = vld [vmem:[%s16 + $0x110] sm:$0xff]
    %v5895 = vld [vmem:[%s16 + $0x118] sm:$0xff]
    %v5896 = vld [vmem:[%s16 + $0x120] sm:$0xff]
    %v5897 = vld [vmem:[%s16 + $0x128] sm:$0xff]
    %v5898 = vld [vmem:[%s16 + $0x130] sm:$0xff]
    %v5899 = vld [vmem:[%s16 + $0x138] sm:$0xff]
    %v5900 = vld [vmem:[%s16 + $0x140] sm:$0xff]
    %v5901 = vld [vmem:[%s16 + $0x148] sm:$0xff]
    %v5902 = vld [vmem:[%s16 + $0x150] sm:$0xff]
    %v5903 = vld [vmem:[%s16 + $0x158] sm:$0xff]
    %v5904 = vld [vmem:[%s16 + $0x160] sm:$0xff]
    %v5905 = vld [vmem:[%s16 + $0x168] sm:$0xff]
    %v5906 = vld [vmem:[%s16 + $0x170] sm:$0xff]
    %v5907 = vld [vmem:[%s16 + $0x178] sm:$0xff]
    %v5908 = vld [vmem:[%s16 + $0x180] sm:$0xff]
    %v5909 = vld [vmem:[%s16 + $0x188] sm:$0xff]
    %v5910 = vld [vmem:[%s16 + $0x190] sm:$0xff]
    %v5911 = vld [vmem:[%s16 + $0x198] sm:$0xff]
    %v5912 = vld [vmem:[%s16 + $0x1a0] sm:$0xff]
    %v5913 = vld [vmem:[%s16 + $0x1a8] sm:$0xff]
    %v5914 = vld [vmem:[%s16 + $0x1b0] sm:$0xff]
    %v5915 = vld [vmem:[%s16 + $0x1b8] sm:$0xff]
    %v5916 = vld [vmem:[%s16 + $0x1c0] sm:$0xff]
    %v5917 = vld [vmem:[%s16 + $0x1c8] sm:$0xff]
    %v5918 = vld [vmem:[%s16 + $0x1d0] sm:$0xff]
    %v5919 = vld [vmem:[%s16 + $0x1d8] sm:$0xff]
    %v5920 = vld [vmem:[%s16 + $0x1e0] sm:$0xff]
    %v5921 = vld [vmem:[%s16 + $0x1e8] sm:$0xff]
    %v5922 = vld [vmem:[%s16 + $0x1f0] sm:$0xff]
    %v5923 = vld [vmem:[%s16 + $0x1f8] sm:$0xff]
    %v5924 = vld [vmem:[%s16 + $0x200] sm:$0xff]
    %v5925 = vld [vmem:[%s16 + $0x208] sm:$0xff]
    %v5926 = vld [vmem:[%s16 + $0x210] sm:$0xff]
    %v5927 = vld [vmem:[%s16 + $0x218] sm:$0xff]
    %v5928 = vld [vmem:[%s16 + $0x220] sm:$0xff]
    %v5929 = vld [vmem:[%s16 + $0x228] sm:$0xff]
    %v5930 = vld [vmem:[%s16 + $0x230] sm:$0xff]
    %v5931 = vld [vmem:[%s16 + $0x238] sm:$0xff]
    %v5932 = vld [vmem:[%s16 + $0x240] sm:$0xff]
    %v5933 = vld [vmem:[%s16 + $0x248] sm:$0xff]
    %v5934 = vld [vmem:[%s16 + $0x250] sm:$0xff]
    %v5935 = vld [vmem:[%s16 + $0x258] sm:$0xff]
    %v5936 = vld [vmem:[%s16 + $0x260] sm:$0xff]
    %v5937 = vld [vmem:[%s16 + $0x268] sm:$0xff]
    %v5938 = vld [vmem:[%s16 + $0x270] sm:$0xff]
    %v5939 = vld [vmem:[%s16 + $0x278] sm:$0xff]
    %v5940 = vld [vmem:[%s16 + $0x280] sm:$0xff]
    %v5941 = vld [vmem:[%s16 + $0x288] sm:$0xff]
    %v5942 = vld [vmem:[%s16 + $0x290] sm:$0xff]
    %v5943 = vld [vmem:[%s16 + $0x298] sm:$0xff]
    %v5944 = vld [vmem:[%s16 + $0x2a0] sm:$0xff]
    %v5945 = vld [vmem:[%s16 + $0x2a8] sm:$0xff]
    %v5946 = vld [vmem:[%s16 + $0x2b0] sm:$0xff]
    %v5947 = vld [vmem:[%s16 + $0x2b8] sm:$0xff]
    %v5948 = vld [vmem:[%s16 + $0x2c0] sm:$0xff]
    %v5949 = vld [vmem:[%s16 + $0x2c8] sm:$0xff]
    %v5950 = vld [vmem:[%s16 + $0x2d0] sm:$0xff]
    %v5951 = vld [vmem:[%s16 + $0x2d8] sm:$0xff]
    %v5952 = vld [vmem:[%s16 + $0x2e0] sm:$0xff]
    %v5953 = vld [vmem:[%s16 + $0x2e8] sm:$0xff]
    %v5954 = vld [vmem:[%s16 + $0x2f0] sm:$0xff]
    %v5955 = vld [vmem:[%s16 + $0x2f8] sm:$0xff]
    %v5956 = vld [vmem:[%s16 + $0x300] sm:$0xff]
    %v5957 = vld [vmem:[%s16 + $0x308] sm:$0xff]
    %v5958 = vld [vmem:[%s16 + $0x310] sm:$0xff]
    %v5959 = vld [vmem:[%s16 + $0x318] sm:$0xff]
    %v5960 = vld [vmem:[%s16 + $0x320] sm:$0xff]
    %v5961 = vld [vmem:[%s16 + $0x328] sm:$0xff]
    %v5962 = vld [vmem:[%s16 + $0x330] sm:$0xff]
    %v5963 = vld [vmem:[%s16 + $0x338] sm:$0xff]
    %v5964 = vld [vmem:[%s16 + $0x340] sm:$0xff]
    %v5965 = vld [vmem:[%s16 + $0x348] sm:$0xff]
    %v5966 = vld [vmem:[%s16 + $0x350] sm:$0xff]
    %v5967 = vld [vmem:[%s16 + $0x358] sm:$0xff]
    %v5968 = vld [vmem:[%s16 + $0x360] sm:$0xff]
    %v5969 = vld [vmem:[%s16 + $0x368] sm:$0xff]
    %v5970 = vld [vmem:[%s16 + $0x370] sm:$0xff]
    %v5971 = vld [vmem:[%s16 + $0x378] sm:$0xff]
    %v5972 = vld [vmem:[%s16 + $0x380] sm:$0xff]
    %v5973 = vld [vmem:[%s16 + $0x388] sm:$0xff]
    %v5974 = vld [vmem:[%s16 + $0x390] sm:$0xff]
    %v5975 = vld [vmem:[%s16 + $0x398] sm:$0xff]
    %v5976 = vld [vmem:[%s16 + $0x3a0] sm:$0xff]
    %v5977 = vld [vmem:[%s16 + $0x3a8] sm:$0xff]
    %v5978 = vld [vmem:[%s16 + $0x3b0] sm:$0xff]
    %v5979 = vld [vmem:[%s16 + $0x3b8] sm:$0xff]
    %v5980 = vld [vmem:[%s16 + $0x3c0] sm:$0xff]
    %v5981 = vld [vmem:[%s16 + $0x3c8] sm:$0xff]
    %v5982 = vld [vmem:[%s16 + $0x3d0] sm:$0xff]
    %v5983 = vld [vmem:[%s16 + $0x3d8] sm:$0xff]
    %v5984 = vld [vmem:[%s16 + $0x3e0] sm:$0xff]
    %v5985 = vld [vmem:[%s16 + $0x3e8] sm:$0xff]
    %v5986 = vld [vmem:[%s16 + $0x3f0] sm:$0xff]
    %v5987 = vld [vmem:[%s16 + $0x3f8] sm:$0xff]
    %v5988 = vld [vmem:[%s16 + $0x400] sm:$0xff]
    %v5989 = vld [vmem:[%s16 + $0x408] sm:$0xff]
    %v5990 = vld [vmem:[%s16 + $0x410] sm:$0xff]
    %v5991 = vld [vmem:[%s16 + $0x418] sm:$0xff]
    %v5992 = vld [vmem:[%s16 + $0x420] sm:$0xff]
    %v5993 = vld [vmem:[%s16 + $0x428] sm:$0xff]
    %v5994 = vld [vmem:[%s16 + $0x430] sm:$0xff]
    %v5995 = vld [vmem:[%s16 + $0x438] sm:$0xff]
    %v5996 = vld [vmem:[%s16 + $0x440] sm:$0xff]
    %v5997 = vld [vmem:[%s16 + $0x448] sm:$0xff]
    %v5998 = vld [vmem:[%s16 + $0x450] sm:$0xff]
    %v5999 = vld [vmem:[%s16 + $0x458] sm:$0xff]
    %v6000 = vld [vmem:[%s16 + $0x460] sm:$0xff]
    %v6001 = vld [vmem:[%s16 + $0x468] sm:$0xff]
    %v6002 = vld [vmem:[%s16 + $0x470] sm:$0xff]
    %v6003 = vld [vmem:[%s16 + $0x478] sm:$0xff]
    %v6004 = vld [vmem:[%s16 + $0x480] sm:$0xff]
    %v6005 = vld [vmem:[%s16 + $0x488] sm:$0xff]
    %v6006 = vld [vmem:[%s16 + $0x490] sm:$0xff]
    %v6007 = vld [vmem:[%s16 + $0x498] sm:$0xff]
    %v6008 = vld [vmem:[%s16 + $0x4a0] sm:$0xff]
    %v6009 = vld [vmem:[%s16 + $0x4a8] sm:$0xff]
    %v6010 = vld [vmem:[%s16 + $0x4b0] sm:$0xff]
    %v6011 = vld [vmem:[%s16 + $0x4b8] sm:$0xff]
    %v6012 = vld [vmem:[%s16 + $0x4c0] sm:$0xff]
    %v6013 = vld [vmem:[%s16 + $0x4c8] sm:$0xff]
    %v6014 = vld [vmem:[%s16 + $0x4d0] sm:$0xff]
    %v6015 = vld [vmem:[%s16 + $0x4d8] sm:$0xff]
    %v6016 = vld [vmem:[%s16 + $0x4e0] sm:$0xff]
    %v6017 = vld [vmem:[%s16 + $0x4e8] sm:$0xff]
    %v6018 = vld [vmem:[%s16 + $0x4f0] sm:$0xff]
    %v6019 = vld [vmem:[%s16 + $0x4f8] sm:$0xff]
    %v6020 = vld [vmem:[%s16 + $0x500] sm:$0xff]
    %v6021 = vld [vmem:[%s16 + $0x508] sm:$0xff]
    %v6022 = vld [vmem:[%s16 + $0x510] sm:$0xff]
    %v6023 = vld [vmem:[%s16 + $0x518] sm:$0xff]
    %v6024 = vld [vmem:[%s16 + $0x520] sm:$0xff]
    %v6025 = vld [vmem:[%s16 + $0x528] sm:$0xff]
    %v6026 = vld [vmem:[%s16 + $0x530] sm:$0xff]
    %v6027 = vld [vmem:[%s16 + $0x538] sm:$0xff]
    %v6028 = vld [vmem:[%s16 + $0x540] sm:$0xff]
    %v6029 = vld [vmem:[%s16 + $0x548] sm:$0xff]
    %v6030 = vld [vmem:[%s16 + $0x550] sm:$0xff]
    %v6031 = vld [vmem:[%s16 + $0x558] sm:$0xff]
    %v6032 = vld [vmem:[%s16 + $0x560] sm:$0xff]
    %v6033 = vld [vmem:[%s16 + $0x568] sm:$0xff]
    %v6034 = vld [vmem:[%s16 + $0x570] sm:$0xff]
    %v6035 = vld [vmem:[%s16 + $0x578] sm:$0xff]
    %v6036 = vld [vmem:[%s16 + $0x580] sm:$0xff]
    %v6037 = vld [vmem:[%s16 + $0x588] sm:$0xff]
    %v6038 = vld [vmem:[%s16 + $0x590] sm:$0xff]
    %v6039 = vld [vmem:[%s16 + $0x598] sm:$0xff]
    %v6040 = vld [vmem:[%s16 + $0x5a0] sm:$0xff]
    %v6041 = vld [vmem:[%s16 + $0x5a8] sm:$0xff]
    %v6042 = vld [vmem:[%s16 + $0x5b0] sm:$0xff]
    %v6043 = vld [vmem:[%s16 + $0x5b8] sm:$0xff]
    %v6044 = vld [vmem:[%s16 + $0x5c0] sm:$0xff]
    %v6045 = vld [vmem:[%s16 + $0x5c8] sm:$0xff]
    %v6046 = vld [vmem:[%s16 + $0x5d0] sm:$0xff]
    %v6047 = vld [vmem:[%s16 + $0x5d8] sm:$0xff]
    %v6048 = vld [vmem:[%s16 + $0x5e0] sm:$0xff]
    %v6049 = vld [vmem:[%s16 + $0x5e8] sm:$0xff]
    %v6050 = vld [vmem:[%s16 + $0x5f0] sm:$0xff]
    %v6051 = vld [vmem:[%s16 + $0x5f8] sm:$0xff]
    %v6052 = vld [vmem:[%s16 + $0x600] sm:$0xff]
    %v6053 = vld [vmem:[%s16 + $0x608] sm:$0xff]
    %v6054 = vld [vmem:[%s16 + $0x610] sm:$0xff]
    %v6055 = vld [vmem:[%s16 + $0x618] sm:$0xff]
    %v6056 = vld [vmem:[%s16 + $0x620] sm:$0xff]
    %v6057 = vld [vmem:[%s16 + $0x628] sm:$0xff]
    %v6058 = vld [vmem:[%s16 + $0x630] sm:$0xff]
    %v6059 = vld [vmem:[%s16 + $0x638] sm:$0xff]
    %v6060 = vld [vmem:[%s16 + $0x640] sm:$0xff]
    %v6061 = vld [vmem:[%s16 + $0x648] sm:$0xff]
    %v6062 = vld [vmem:[%s16 + $0x650] sm:$0xff]
    %v6063 = vld [vmem:[%s16 + $0x658] sm:$0xff]
    %v6064 = vld [vmem:[%s16 + $0x660] sm:$0xff]
    %v6065 = vld [vmem:[%s16 + $0x668] sm:$0xff]
    %v6066 = vld [vmem:[%s16 + $0x670] sm:$0xff]
    %v6067 = vld [vmem:[%s16 + $0x678] sm:$0xff]
    %v6068 = vld [vmem:[%s16 + $0x680] sm:$0xff]
    %v6069 = vld [vmem:[%s16 + $0x688] sm:$0xff]
    %v6070 = vld [vmem:[%s16 + $0x690] sm:$0xff]
    %v6071 = vld [vmem:[%s16 + $0x698] sm:$0xff]
    %v6072 = vld [vmem:[%s16 + $0x6a0] sm:$0xff]
    %v6073 = vld [vmem:[%s16 + $0x6a8] sm:$0xff]
    %v6074 = vld [vmem:[%s16 + $0x6b0] sm:$0xff]
    %v6075 = vld [vmem:[%s16 + $0x6b8] sm:$0xff]
    %v6076 = vld [vmem:[%s16 + $0x6c0] sm:$0xff]
    %v6077 = vld [vmem:[%s16 + $0x6c8] sm:$0xff]
    %v6078 = vld [vmem:[%s16 + $0x6d0] sm:$0xff]
    %v6079 = vld [vmem:[%s16 + $0x6d8] sm:$0xff]
    %v6080 = vld [vmem:[%s16 + $0x6e0] sm:$0xff]
    %v6081 = vld [vmem:[%s16 + $0x6e8] sm:$0xff]
    %v6082 = vld [vmem:[%s16 + $0x6f0] sm:$0xff]
    %v6083 = vld [vmem:[%s16 + $0x6f8] sm:$0xff]
    %v6084 = vld [vmem:[%s16 + $0x700] sm:$0xff]
    %v6085 = vld [vmem:[%s16 + $0x708] sm:$0xff]
    %v6086 = vld [vmem:[%s16 + $0x710] sm:$0xff]
    %v6087 = vld [vmem:[%s16 + $0x718] sm:$0xff]
    %v6088 = vld [vmem:[%s16 + $0x720] sm:$0xff]
    %v6089 = vld [vmem:[%s16 + $0x728] sm:$0xff]
    %v6090 = vld [vmem:[%s16 + $0x730] sm:$0xff]
    %v6091 = vld [vmem:[%s16 + $0x738] sm:$0xff]
    %v6092 = vld [vmem:[%s16 + $0x740] sm:$0xff]
    %v6093 = vld [vmem:[%s16 + $0x748] sm:$0xff]
    %v6094 = vld [vmem:[%s16 + $0x750] sm:$0xff]
    %v6095 = vld [vmem:[%s16 + $0x758] sm:$0xff]
    %v6096 = vld [vmem:[%s16 + $0x760] sm:$0xff]
    %v6097 = vld [vmem:[%s16 + $0x768] sm:$0xff]
    %v6098 = vld [vmem:[%s16 + $0x770] sm:$0xff]
    %v6099 = vld [vmem:[%s16 + $0x778] sm:$0xff]
    %v6100 = vld [vmem:[%s16 + $0x780] sm:$0xff]
    %v6101 = vld [vmem:[%s16 + $0x788] sm:$0xff]
    %v6102 = vld [vmem:[%s16 + $0x790] sm:$0xff]
    %v6103 = vld [vmem:[%s16 + $0x798] sm:$0xff]
    %v6104 = vld [vmem:[%s16 + $0x7a0] sm:$0xff]
    %v6105 = vld [vmem:[%s16 + $0x7a8] sm:$0xff]
    %v6106 = vld [vmem:[%s16 + $0x7b0] sm:$0xff]
    %v6107 = vld [vmem:[%s16 + $0x7b8] sm:$0xff]
    %v6108 = vld [vmem:[%s16 + $0x7c0] sm:$0xff]
    %v6109 = vld [vmem:[%s16 + $0x7c8] sm:$0xff]
    %v6110 = vld [vmem:[%s16 + $0x7d0] sm:$0xff]
    %v6111 = vld [vmem:[%s16 + $0x7d8] sm:$0xff]
    %v6112 = vld [vmem:[%s16 + $0x7e0] sm:$0xff]
    %v6113 = vld [vmem:[%s16 + $0x7e8] sm:$0xff]
    %v6114 = vld [vmem:[%s16 + $0x7f0] sm:$0xff]
    %v6115 = vld [vmem:[%s16 + $0x7f8] sm:$0xff]
    %v6116 = vld [vmem:[%s17] sm:$0x1]
    %v6118 = vlaneseq
    %v6119 = vshrl.u32 %v6118, 7
    %v6120 = vsub.s32 0, %v6119
    %v6121 = vrot.slane %v6116, %v6120
    %v6131 = vcombine.high %v5852, %v5852
    %v6132 = vcombine.high %v5853, %v5853
    %v6133 = vcombine.high %v5854, %v5854
    %v6134 = vcombine.high %v5855, %v5855
    %v6135 = vcombine.high %v5856, %v5856
    %v6136 = vcombine.high %v5857, %v5857
    %v6137 = vcombine.high %v5858, %v5858
    %v6138 = vcombine.high %v5859, %v5859
    %6147 = vmatprep.subr.mxu0 0.0
    %6148 = vmatpush1.msra.mxu0 %v5860
    %6149 = vmatprep.subr.mxu0 0.0
    %6150 = vmatpush1.msra.mxu0 %v5861
    %6151 = vmatprep.subr.mxu0 0.0
    %6152 = vmatpush1.msra.mxu0 %v5862
    %6153 = vmatprep.subr.mxu0 0.0
    %6154 = vmatpush1.msra.mxu0 %v5863
    %6155 = vmatprep.subr.mxu0 0.0
    %6156 = vmatpush1.msra.mxu0 %v5864
    %6157 = vmatprep.subr.mxu0 0.0
    %6158 = vmatpush1.msra.mxu0 %v5865
    %6159 = vmatprep.subr.mxu0 0.0
    %6160 = vmatpush1.msra.mxu0 %v5866
    %6161 = vmatprep.subr.mxu0 0.0
    %6162 = vmatpush1.msra.mxu0 %v5867
    %6163 = vmatprep.subr.mxu0 0.0
    %6164 = vmatpush1.msra.mxu0 %v5868
    %6165 = vmatprep.subr.mxu0 0.0
    %6166 = vmatpush1.msra.mxu0 %v5869
    %6167 = vmatprep.subr.mxu0 0.0
    %6168 = vmatpush1.msra.mxu0 %v5870
    %6169 = vmatprep.subr.mxu0 0.0
    %6170 = vmatpush1.msra.mxu0 %v5871
    %6171 = vmatprep.subr.mxu0 0.0
    %6172 = vmatpush1.msra.mxu0 %v5872
    %6173 = vmatprep.subr.mxu0 0.0
    %6174 = vmatpush1.msra.mxu0 %v5873
    %6175 = vmatprep.subr.mxu0 0.0
    %6176 = vmatpush1.msra.mxu0 %v5874
    %6177 = vmatprep.subr.mxu0 0.0
    %6178 = vmatpush1.msra.mxu0 %v5875
    %6179 = vmatprep.subr.mxu0 0.0
    %6180 = vmatpush1.msra.mxu0 %v5876
    %6181 = vmatprep.subr.mxu0 0.0
    %6182 = vmatpush1.msra.mxu0 %v5877
    %6183 = vmatprep.subr.mxu0 0.0
    %6184 = vmatpush1.msra.mxu0 %v5878
    %6185 = vmatprep.subr.mxu0 0.0
    %6186 = vmatpush1.msra.mxu0 %v5879
    %6187 = vmatprep.subr.mxu0 0.0
    %6188 = vmatpush1.msra.mxu0 %v5880
    %6189 = vmatprep.subr.mxu0 0.0
    %6190 = vmatpush1.msra.mxu0 %v5881
    %6191 = vmatprep.subr.mxu0 0.0
    %6192 = vmatpush1.msra.mxu0 %v5882
    %6193 = vmatprep.subr.mxu0 0.0
    %6194 = vmatpush1.msra.mxu0 %v5883
    %6195 = vmatprep.subr.mxu0 0.0
    %6196 = vmatpush1.msra.mxu0 %v5884
    %6197 = vmatprep.subr.mxu0 0.0
    %6198 = vmatpush1.msra.mxu0 %v5885
    %6199 = vmatprep.subr.mxu0 0.0
    %6200 = vmatpush1.msra.mxu0 %v5886
    %6201 = vmatprep.subr.mxu0 0.0
    %6202 = vmatpush1.msra.mxu0 %v5887
    %6203 = vmatprep.subr.mxu0 0.0
    %6204 = vmatpush1.msra.mxu0 %v5888
    %6205 = vmatprep.subr.mxu0 0.0
    %6206 = vmatpush1.msra.mxu0 %v5889
    %6207 = vmatprep.subr.mxu0 0.0
    %6208 = vmatpush1.msra.mxu0 %v5890
    %6209 = vmatprep.subr.mxu0 0.0
    %6210 = vmatpush1.msra.mxu0 %v5891
    %6211 = vmatprep.mubr.f32.mxu0 %v6131
    %6212 = vmatmul.mubr.f32.gmra.mrb[0].mxu0 %v5852
    %v6213 = vpop.f32.mrb[0].mxu0
    %v6214 = vadd.f32 %v6121, %v6213
    %v6215 = vpop.f32.mrb[0].mxu0
    %6216 = vdwg.mxu0
    %6217 = vmatprep.subr.mxu0 0.0
    %6218 = vmatpush1.msra.mxu0 %v5892
    %6219 = vmatprep.subr.mxu0 0.0
    %6220 = vmatpush1.msra.mxu0 %v5893
    %6221 = vmatprep.subr.mxu0 0.0
    %6222 = vmatpush1.msra.mxu0 %v5894
    %6223 = vmatprep.subr.mxu0 0.0
    %6224 = vmatpush1.msra.mxu0 %v5895
    %6225 = vmatprep.subr.mxu0 0.0
    %6226 = vmatpush1.msra.mxu0 %v5896
    %6227 = vmatprep.subr.mxu0 0.0
    %6228 = vmatpush1.msra.mxu0 %v5897
    %6229 = vmatprep.subr.mxu0 0.0
    %6230 = vmatpush1.msra.mxu0 %v5898
    %6231 = vmatprep.subr.mxu0 0.0
    %6232 = vmatpush1.msra.mxu0 %v5899
    %6233 = vmatprep.subr.mxu0 0.0
    %6234 = vmatpush1.msra.mxu0 %v5900
    %6235 = vmatprep.subr.mxu0 0.0
    %6236 = vmatpush1.msra.mxu0 %v5901
    %6237 = vmatprep.subr.mxu0 0.0
    %6238 = vmatpush1.msra.mxu0 %v5902
    %6239 = vmatprep.subr.mxu0 0.0
    %6240 = vmatpush1.msra.mxu0 %v5903
    %6241 = vmatprep.subr.mxu0 0.0
    %6242 = vmatpush1.msra.mxu0 %v5904
    %6243 = vmatprep.subr.mxu0 0.0
    %6244 = vmatpush1.msra.mxu0 %v5905
    %6245 = vmatprep.subr.mxu0 0.0
    %6246 = vmatpush1.msra.mxu0 %v5906
    %6247 = vmatprep.subr.mxu0 0.0
    %6248 = vmatpush1.msra.mxu0 %v5907
    %6249 = vmatprep.subr.mxu0 0.0
    %6250 = vmatpush1.msra.mxu0 %v5908
    %6251 = vmatprep.subr.mxu0 0.0
    %6252 = vmatpush1.msra.mxu0 %v5909
    %6253 = vmatprep.subr.mxu0 0.0
    %6254 = vmatpush1.msra.mxu0 %v5910
    %6255 = vmatprep.subr.mxu0 0.0
    %6256 = vmatpush1.msra.mxu0 %v5911
    %6257 = vmatprep.subr.mxu0 0.0
    %6258 = vmatpush1.msra.mxu0 %v5912
    %6259 = vmatprep.subr.mxu0 0.0
    %6260 = vmatpush1.msra.mxu0 %v5913
    %6261 = vmatprep.subr.mxu0 0.0
    %6262 = vmatpush1.msra.mxu0 %v5914
    %6263 = vmatprep.subr.mxu0 0.0
    %6264 = vmatpush1.msra.mxu0 %v5915
    %6265 = vmatprep.subr.mxu0 0.0
    %6266 = vmatpush1.msra.mxu0 %v5916
    %6267 = vmatprep.subr.mxu0 0.0
    %6268 = vmatpush1.msra.mxu0 %v5917
    %6269 = vmatprep.subr.mxu0 0.0
    %6270 = vmatpush1.msra.mxu0 %v5918
    %6271 = vmatprep.subr.mxu0 0.0
    %6272 = vmatpush1.msra.mxu0 %v5919
    %6273 = vmatprep.subr.mxu0 0.0
    %6274 = vmatpush1.msra.mxu0 %v5920
    %6275 = vmatprep.subr.mxu0 0.0
    %6276 = vmatpush1.msra.mxu0 %v5921
    %6277 = vmatprep.subr.mxu0 0.0
    %6278 = vmatpush1.msra.mxu0 %v5922
    %6279 = vmatprep.subr.mxu0 0.0
    %6280 = vmatpush1.msra.mxu0 %v5923
    %6281 = vmatprep.mubr.f32.mxu0 %v6132
    %6282 = vmatmul.mubr.f32.gmra.mrb[0].mxu0 %v5853
    %v6283 = vpop.f32.mrb[0].mxu0
    %v6284 = vadd.f32 %v6214, %v6283
    %v6285 = vpop.f32.mrb[0].mxu0
    %6286 = vdwg.mxu0
    %6287 = vmatprep.subr.mxu0 0.0
    %6288 = vmatpush1.msra.mxu0 %v5924
    %6289 = vmatprep.subr.mxu0 0.0
    %6290 = vmatpush1.msra.mxu0 %v5925
    %6291 = vmatprep.subr.mxu0 0.0
    %6292 = vmatpush1.msra.mxu0 %v5926
    %6293 = vmatprep.subr.mxu0 0.0
    %6294 = vmatpush1.msra.mxu0 %v5927
    %6295 = vmatprep.subr.mxu0 0.0
    %6296 = vmatpush1.msra.mxu0 %v5928
    %6297 = vmatprep.subr.mxu0 0.0
    %6298 = vmatpush1.msra.mxu0 %v5929
    %6299 = vmatprep.subr.mxu0 0.0
    %6300 = vmatpush1.msra.mxu0 %v5930
    %6301 = vmatprep.subr.mxu0 0.0
    %6302 = vmatpush1.msra.mxu0 %v5931
    %6303 = vmatprep.subr.mxu0 0.0
    %6304 = vmatpush1.msra.mxu0 %v5932
    %6305 = vmatprep.subr.mxu0 0.0
    %6306 = vmatpush1.msra.mxu0 %v5933
    %6307 = vmatprep.subr.mxu0 0.0
    %6308 = vmatpush1.msra.mxu0 %v5934
    %6309 = vmatprep.subr.mxu0 0.0
    %6310 = vmatpush1.msra.mxu0 %v5935
    %6311 = vmatprep.subr.mxu0 0.0
    %6312 = vmatpush1.msra.mxu0 %v5936
    %6313 = vmatprep.subr.mxu0 0.0
    %6314 = vmatpush1.msra.mxu0 %v5937
    %6315 = vmatprep.subr.mxu0 0.0
    %6316 = vmatpush1.msra.mxu0 %v5938
    %6317 = vmatprep.subr.mxu0 0.0
    %6318 = vmatpush1.msra.mxu0 %v5939
    %6319 = vmatprep.subr.mxu0 0.0
    %6320 = vmatpush1.msra.mxu0 %v5940
    %6321 = vmatprep.subr.mxu0 0.0
    %6322 = vmatpush1.msra.mxu0 %v5941
    %6323 = vmatprep.subr.mxu0 0.0
    %6324 = vmatpush1.msra.mxu0 %v5942
    %6325 = vmatprep.subr.mxu0 0.0
    %6326 = vmatpush1.msra.mxu0 %v5943
    %6327 = vmatprep.subr.mxu0 0.0
    %6328 = vmatpush1.msra.mxu0 %v5944
    %6329 = vmatprep.subr.mxu0 0.0
    %6330 = vmatpush1.msra.mxu0 %v5945
    %6331 = vmatprep.subr.mxu0 0.0
    %6332 = vmatpush1.msra.mxu0 %v5946
    %6333 = vmatprep.subr.mxu0 0.0
    %6334 = vmatpush1.msra.mxu0 %v5947
    %6335 = vmatprep.subr.mxu0 0.0
    %6336 = vmatpush1.msra.mxu0 %v5948
    %6337 = vmatprep.subr.mxu0 0.0
    %6338 = vmatpush1.msra.mxu0 %v5949
    %6339 = vmatprep.subr.mxu0 0.0
    %6340 = vmatpush1.msra.mxu0 %v5950
    %6341 = vmatprep.subr.mxu0 0.0
    %6342 = vmatpush1.msra.mxu0 %v5951
    %6343 = vmatprep.subr.mxu0 0.0
    %6344 = vmatpush1.msra.mxu0 %v5952
    %6345 = vmatprep.subr.mxu0 0.0
    %6346 = vmatpush1.msra.mxu0 %v5953
    %6347 = vmatprep.subr.mxu0 0.0
    %6348 = vmatpush1.msra.mxu0 %v5954
    %6349 = vmatprep.subr.mxu0 0.0
    %6350 = vmatpush1.msra.mxu0 %v5955
    %6351 = vmatprep.mubr.f32.mxu0 %v6133
    %6352 = vmatmul.mubr.f32.gmra.mrb[0].mxu0 %v5854
    %v6353 = vpop.f32.mrb[0].mxu0
    %v6354 = vadd.f32 %v6284, %v6353
    %v6355 = vpop.f32.mrb[0].mxu0
    %6356 = vdwg.mxu0
    %6357 = vmatprep.subr.mxu0 0.0
    %6358 = vmatpush1.msra.mxu0 %v5956
    %6359 = vmatprep.subr.mxu0 0.0
    %6360 = vmatpush1.msra.mxu0 %v5957
    %6361 = vmatprep.subr.mxu0 0.0
    %6362 = vmatpush1.msra.mxu0 %v5958
    %6363 = vmatprep.subr.mxu0 0.0
    %6364 = vmatpush1.msra.mxu0 %v5959
    %6365 = vmatprep.subr.mxu0 0.0
    %6366 = vmatpush1.msra.mxu0 %v5960
    %6367 = vmatprep.subr.mxu0 0.0
    %6368 = vmatpush1.msra.mxu0 %v5961
    %6369 = vmatprep.subr.mxu0 0.0
    %6370 = vmatpush1.msra.mxu0 %v5962
    %6371 = vmatprep.subr.mxu0 0.0
    %6372 = vmatpush1.msra.mxu0 %v5963
    %6373 = vmatprep.subr.mxu0 0.0
    %6374 = vmatpush1.msra.mxu0 %v5964
    %6375 = vmatprep.subr.mxu0 0.0
    %6376 = vmatpush1.msra.mxu0 %v5965
    %6377 = vmatprep.subr.mxu0 0.0
    %6378 = vmatpush1.msra.mxu0 %v5966
    %6379 = vmatprep.subr.mxu0 0.0
    %6380 = vmatpush1.msra.mxu0 %v5967
    %6381 = vmatprep.subr.mxu0 0.0
    %6382 = vmatpush1.msra.mxu0 %v5968
    %6383 = vmatprep.subr.mxu0 0.0
    %6384 = vmatpush1.msra.mxu0 %v5969
    %6385 = vmatprep.subr.mxu0 0.0
    %6386 = vmatpush1.msra.mxu0 %v5970
    %6387 = vmatprep.subr.mxu0 0.0
    %6388 = vmatpush1.msra.mxu0 %v5971
    %6389 = vmatprep.subr.mxu0 0.0
    %6390 = vmatpush1.msra.mxu0 %v5972
    %6391 = vmatprep.subr.mxu0 0.0
    %6392 = vmatpush1.msra.mxu0 %v5973
    %6393 = vmatprep.subr.mxu0 0.0
    %6394 = vmatpush1.msra.mxu0 %v5974
    %6395 = vmatprep.subr.mxu0 0.0
    %6396 = vmatpush1.msra.mxu0 %v5975
    %6397 = vmatprep.subr.mxu0 0.0
    %6398 = vmatpush1.msra.mxu0 %v5976
    %6399 = vmatprep.subr.mxu0 0.0
    %6400 = vmatpush1.msra.mxu0 %v5977
    %6401 = vmatprep.subr.mxu0 0.0
    %6402 = vmatpush1.msra.mxu0 %v5978
    %6403 = vmatprep.subr.mxu0 0.0
    %6404 = vmatpush1.msra.mxu0 %v5979
    %6405 = vmatprep.subr.mxu0 0.0
    %6406 = vmatpush1.msra.mxu0 %v5980
    %6407 = vmatprep.subr.mxu0 0.0
    %6408 = vmatpush1.msra.mxu0 %v5981
    %6409 = vmatprep.subr.mxu0 0.0
    %6410 = vmatpush1.msra.mxu0 %v5982
    %6411 = vmatprep.subr.mxu0 0.0
    %6412 = vmatpush1.msra.mxu0 %v5983
    %6413 = vmatprep.subr.mxu0 0.0
    %6414 = vmatpush1.msra.mxu0 %v5984
    %6415 = vmatprep.subr.mxu0 0.0
    %6416 = vmatpush1.msra.mxu0 %v5985
    %6417 = vmatprep.subr.mxu0 0.0
    %6418 = vmatpush1.msra.mxu0 %v5986
    %6419 = vmatprep.subr.mxu0 0.0
    %6420 = vmatpush1.msra.mxu0 %v5987
    %6421 = vmatprep.mubr.f32.mxu0 %v6134
    %6422 = vmatmul.mubr.f32.gmra.mrb[0].mxu0 %v5855
    %v6423 = vpop.f32.mrb[0].mxu0
    %v6424 = vadd.f32 %v6354, %v6423
    %v6425 = vpop.f32.mrb[0].mxu0
    %6426 = vdwg.mxu0
    %6427 = vmatprep.subr.mxu0 0.0
    %6428 = vmatpush1.msra.mxu0 %v5988
    %6429 = vmatprep.subr.mxu0 0.0
    %6430 = vmatpush1.msra.mxu0 %v5989
    %6431 = vmatprep.subr.mxu0 0.0
    %6432 = vmatpush1.msra.mxu0 %v5990
    %6433 = vmatprep.subr.mxu0 0.0
    %6434 = vmatpush1.msra.mxu0 %v5991
    %6435 = vmatprep.subr.mxu0 0.0
    %6436 = vmatpush1.msra.mxu0 %v5992
    %6437 = vmatprep.subr.mxu0 0.0
    %6438 = vmatpush1.msra.mxu0 %v5993
    %6439 = vmatprep.subr.mxu0 0.0
    %6440 = vmatpush1.msra.mxu0 %v5994
    %6441 = vmatprep.subr.mxu0 0.0
    %6442 = vmatpush1.msra.mxu0 %v5995
    %6443 = vmatprep.subr.mxu0 0.0
    %6444 = vmatpush1.msra.mxu0 %v5996
    %6445 = vmatprep.subr.mxu0 0.0
    %6446 = vmatpush1.msra.mxu0 %v5997
    %6447 = vmatprep.subr.mxu0 0.0
    %6448 = vmatpush1.msra.mxu0 %v5998
    %6449 = vmatprep.subr.mxu0 0.0
    %6450 = vmatpush1.msra.mxu0 %v5999
    %6451 = vmatprep.subr.mxu0 0.0
    %6452 = vmatpush1.msra.mxu0 %v6000
    %6453 = vmatprep.subr.mxu0 0.0
    %6454 = vmatpush1.msra.mxu0 %v6001
    %6455 = vmatprep.subr.mxu0 0.0
    %6456 = vmatpush1.msra.mxu0 %v6002
    %6457 = vmatprep.subr.mxu0 0.0
    %6458 = vmatpush1.msra.mxu0 %v6003
    %6459 = vmatprep.subr.mxu0 0.0
    %6460 = vmatpush1.msra.mxu0 %v6004
    %6461 = vmatprep.subr.mxu0 0.0
    %6462 = vmatpush1.msra.mxu0 %v6005
    %6463 = vmatprep.subr.mxu0 0.0
    %6464 = vmatpush1.msra.mxu0 %v6006
    %6465 = vmatprep.subr.mxu0 0.0
    %6466 = vmatpush1.msra.mxu0 %v6007
    %6467 = vmatprep.subr.mxu0 0.0
    %6468 = vmatpush1.msra.mxu0 %v6008
    %6469 = vmatprep.subr.mxu0 0.0
    %6470 = vmatpush1.msra.mxu0 %v6009
    %6471 = vmatprep.subr.mxu0 0.0
    %6472 = vmatpush1.msra.mxu0 %v6010
    %6473 = vmatprep.subr.mxu0 0.0
    %6474 = vmatpush1.msra.mxu0 %v6011
    %6475 = vmatprep.subr.mxu0 0.0
    %6476 = vmatpush1.msra.mxu0 %v6012
    %6477 = vmatprep.subr.mxu0 0.0
    %6478 = vmatpush1.msra.mxu0 %v6013
    %6479 = vmatprep.subr.mxu0 0.0
    %6480 = vmatpush1.msra.mxu0 %v6014
    %6481 = vmatprep.subr.mxu0 0.0
    %6482 = vmatpush1.msra.mxu0 %v6015
    %6483 = vmatprep.subr.mxu0 0.0
    %6484 = vmatpush1.msra.mxu0 %v6016
    %6485 = vmatprep.subr.mxu0 0.0
    %6486 = vmatpush1.msra.mxu0 %v6017
    %6487 = vmatprep.subr.mxu0 0.0
    %6488 = vmatpush1.msra.mxu0 %v6018
    %6489 = vmatprep.subr.mxu0 0.0
    %6490 = vmatpush1.msra.mxu0 %v6019
    %6491 = vmatprep.mubr.f32.mxu0 %v6135
    %6492 = vmatmul.mubr.f32.gmra.mrb[0].mxu0 %v5856
    %v6493 = vpop.f32.mrb[0].mxu0
    %v6494 = vadd.f32 %v6424, %v6493
    %v6495 = vpop.f32.mrb[0].mxu0
    %6496 = vdwg.mxu0
    %6497 = vmatprep.subr.mxu0 0.0
    %6498 = vmatpush1.msra.mxu0 %v6020
    %6499 = vmatprep.subr.mxu0 0.0
    %6500 = vmatpush1.msra.mxu0 %v6021
    %6501 = vmatprep.subr.mxu0 0.0
    %6502 = vmatpush1.msra.mxu0 %v6022
    %6503 = vmatprep.subr.mxu0 0.0
    %6504 = vmatpush1.msra.mxu0 %v6023
    %6505 = vmatprep.subr.mxu0 0.0
    %6506 = vmatpush1.msra.mxu0 %v6024
    %6507 = vmatprep.subr.mxu0 0.0
    %6508 = vmatpush1.msra.mxu0 %v6025
    %6509 = vmatprep.subr.mxu0 0.0
    %6510 = vmatpush1.msra.mxu0 %v6026
    %6511 = vmatprep.subr.mxu0 0.0
    %6512 = vmatpush1.msra.mxu0 %v6027
    %6513 = vmatprep.subr.mxu0 0.0
    %6514 = vmatpush1.msra.mxu0 %v6028
    %6515 = vmatprep.subr.mxu0 0.0
    %6516 = vmatpush1.msra.mxu0 %v6029
    %6517 = vmatprep.subr.mxu0 0.0
    %6518 = vmatpush1.msra.mxu0 %v6030
    %6519 = vmatprep.subr.mxu0 0.0
    %6520 = vmatpush1.msra.mxu0 %v6031
    %6521 = vmatprep.subr.mxu0 0.0
    %6522 = vmatpush1.msra.mxu0 %v6032
    %6523 = vmatprep.subr.mxu0 0.0
    %6524 = vmatpush1.msra.mxu0 %v6033
    %6525 = vmatprep.subr.mxu0 0.0
    %6526 = vmatpush1.msra.mxu0 %v6034
    %6527 = vmatprep.subr.mxu0 0.0
    %6528 = vmatpush1.msra.mxu0 %v6035
    %6529 = vmatprep.subr.mxu0 0.0
    %6530 = vmatpush1.msra.mxu0 %v6036
    %6531 = vmatprep.subr.mxu0 0.0
    %6532 = vmatpush1.msra.mxu0 %v6037
    %6533 = vmatprep.subr.mxu0 0.0
    %6534 = vmatpush1.msra.mxu0 %v6038
    %6535 = vmatprep.subr.mxu0 0.0
    %6536 = vmatpush1.msra.mxu0 %v6039
    %6537 = vmatprep.subr.mxu0 0.0
    %6538 = vmatpush1.msra.mxu0 %v6040
    %6539 = vmatprep.subr.mxu0 0.0
    %6540 = vmatpush1.msra.mxu0 %v6041
    %6541 = vmatprep.subr.mxu0 0.0
    %6542 = vmatpush1.msra.mxu0 %v6042
    %6543 = vmatprep.subr.mxu0 0.0
    %6544 = vmatpush1.msra.mxu0 %v6043
    %6545 = vmatprep.subr.mxu0 0.0
    %6546 = vmatpush1.msra.mxu0 %v6044
    %6547 = vmatprep.subr.mxu0 0.0
    %6548 = vmatpush1.msra.mxu0 %v6045
    %6549 = vmatprep.subr.mxu0 0.0
    %6550 = vmatpush1.msra.mxu0 %v6046
    %6551 = vmatprep.subr.mxu0 0.0
    %6552 = vmatpush1.msra.mxu0 %v6047
    %6553 = vmatprep.subr.mxu0 0.0
    %6554 = vmatpush1.msra.mxu0 %v6048
    %6555 = vmatprep.subr.mxu0 0.0
    %6556 = vmatpush1.msra.mxu0 %v6049
    %6557 = vmatprep.subr.mxu0 0.0
    %6558 = vmatpush1.msra.mxu0 %v6050
    %6559 = vmatprep.subr.mxu0 0.0
    %6560 = vmatpush1.msra.mxu0 %v6051
    %6561 = vmatprep.mubr.f32.mxu0 %v6136
    %6562 = vmatmul.mubr.f32.gmra.mrb[0].mxu0 %v5857
    %v6563 = vpop.f32.mrb[0].mxu0
    %v6564 = vadd.f32 %v6494, %v6563
    %v6565 = vpop.f32.mrb[0].mxu0
    %6566 = vdwg.mxu0
    %6567 = vmatprep.subr.mxu0 0.0
    %6568 = vmatpush1.msra.mxu0 %v6052
    %6569 = vmatprep.subr.mxu0 0.0
    %6570 = vmatpush1.msra.mxu0 %v6053
    %6571 = vmatprep.subr.mxu0 0.0
    %6572 = vmatpush1.msra.mxu0 %v6054
    %6573 = vmatprep.subr.mxu0 0.0
    %6574 = vmatpush1.msra.mxu0 %v6055
    %6575 = vmatprep.subr.mxu0 0.0
    %6576 = vmatpush1.msra.mxu0 %v6056
    %6577 = vmatprep.subr.mxu0 0.0
    %6578 = vmatpush1.msra.mxu0 %v6057
    %6579 = vmatprep.subr.mxu0 0.0
    %6580 = vmatpush1.msra.mxu0 %v6058
    %6581 = vmatprep.subr.mxu0 0.0
    %6582 = vmatpush1.msra.mxu0 %v6059
    %6583 = vmatprep.subr.mxu0 0.0
    %6584 = vmatpush1.msra.mxu0 %v6060
    %6585 = vmatprep.subr.mxu0 0.0
    %6586 = vmatpush1.msra.mxu0 %v6061
    %6587 = vmatprep.subr.mxu0 0.0
    %6588 = vmatpush1.msra.mxu0 %v6062
    %6589 = vmatprep.subr.mxu0 0.0
    %6590 = vmatpush1.msra.mxu0 %v6063
    %6591 = vmatprep.subr.mxu0 0.0
    %6592 = vmatpush1.msra.mxu0 %v6064
    %6593 = vmatprep.subr.mxu0 0.0
    %6594 = vmatpush1.msra.mxu0 %v6065
    %6595 = vmatprep.subr.mxu0 0.0
    %6596 = vmatpush1.msra.mxu0 %v6066
    %6597 = vmatprep.subr.mxu0 0.0
    %6598 = vmatpush1.msra.mxu0 %v6067
    %6599 = vmatprep.subr.mxu0 0.0
    %6600 = vmatpush1.msra.mxu0 %v6068
    %6601 = vmatprep.subr.mxu0 0.0
    %6602 = vmatpush1.msra.mxu0 %v6069
    %6603 = vmatprep.subr.mxu0 0.0
    %6604 = vmatpush1.msra.mxu0 %v6070
    %6605 = vmatprep.subr.mxu0 0.0
    %6606 = vmatpush1.msra.mxu0 %v6071
    %6607 = vmatprep.subr.mxu0 0.0
    %6608 = vmatpush1.msra.mxu0 %v6072
    %6609 = vmatprep.subr.mxu0 0.0
    %6610 = vmatpush1.msra.mxu0 %v6073
    %6611 = vmatprep.subr.mxu0 0.0
    %6612 = vmatpush1.msra.mxu0 %v6074
    %6613 = vmatprep.subr.mxu0 0.0
    %6614 = vmatpush1.msra.mxu0 %v6075
    %6615 = vmatprep.subr.mxu0 0.0
    %6616 = vmatpush1.msra.mxu0 %v6076
    %6617 = vmatprep.subr.mxu0 0.0
    %6618 = vmatpush1.msra.mxu0 %v6077
    %6619 = vmatprep.subr.mxu0 0.0
    %6620 = vmatpush1.msra.mxu0 %v6078
    %6621 = vmatprep.subr.mxu0 0.0
    %6622 = vmatpush1.msra.mxu0 %v6079
    %6623 = vmatprep.subr.mxu0 0.0
    %6624 = vmatpush1.msra.mxu0 %v6080
    %6625 = vmatprep.subr.mxu0 0.0
    %6626 = vmatpush1.msra.mxu0 %v6081
    %6627 = vmatprep.subr.mxu0 0.0
    %6628 = vmatpush1.msra.mxu0 %v6082
    %6629 = vmatprep.subr.mxu0 0.0
    %6630 = vmatpush1.msra.mxu0 %v6083
    %6631 = vmatprep.mubr.f32.mxu0 %v6137
    %6632 = vmatmul.mubr.f32.gmra.mrb[0].mxu0 %v5858
    %v6633 = vpop.f32.mrb[0].mxu0
    %v6634 = vadd.f32 %v6564, %v6633
    %v6635 = vpop.f32.mrb[0].mxu0
    %6636 = vdwg.mxu0
    %6637 = vmatprep.subr.mxu0 0.0
    %6638 = vmatpush1.msra.mxu0 %v6084
    %6639 = vmatprep.subr.mxu0 0.0
    %6640 = vmatpush1.msra.mxu0 %v6085
    %6641 = vmatprep.subr.mxu0 0.0
    %6642 = vmatpush1.msra.mxu0 %v6086
    %6643 = vmatprep.subr.mxu0 0.0
    %6644 = vmatpush1.msra.mxu0 %v6087
    %6645 = vmatprep.subr.mxu0 0.0
    %6646 = vmatpush1.msra.mxu0 %v6088
    %6647 = vmatprep.subr.mxu0 0.0
    %6648 = vmatpush1.msra.mxu0 %v6089
    %6649 = vmatprep.subr.mxu0 0.0
    %6650 = vmatpush1.msra.mxu0 %v6090
    %6651 = vmatprep.subr.mxu0 0.0
    %6652 = vmatpush1.msra.mxu0 %v6091
    %6653 = vmatprep.subr.mxu0 0.0
    %6654 = vmatpush1.msra.mxu0 %v6092
    %6655 = vmatprep.subr.mxu0 0.0
    %6656 = vmatpush1.msra.mxu0 %v6093
    %6657 = vmatprep.subr.mxu0 0.0
    %6658 = vmatpush1.msra.mxu0 %v6094
    %6659 = vmatprep.subr.mxu0 0.0
    %6660 = vmatpush1.msra.mxu0 %v6095
    %6661 = vmatprep.subr.mxu0 0.0
    %6662 = vmatpush1.msra.mxu0 %v6096
    %6663 = vmatprep.subr.mxu0 0.0
    %6664 = vmatpush1.msra.mxu0 %v6097
    %6665 = vmatprep.subr.mxu0 0.0
    %6666 = vmatpush1.msra.mxu0 %v6098
    %6667 = vmatprep.subr.mxu0 0.0
    %6668 = vmatpush1.msra.mxu0 %v6099
    %6669 = vmatprep.subr.mxu0 0.0
    %6670 = vmatpush1.msra.mxu0 %v6100
    %6671 = vmatprep.subr.mxu0 0.0
    %6672 = vmatpush1.msra.mxu0 %v6101
    %6673 = vmatprep.subr.mxu0 0.0
    %6674 = vmatpush1.msra.mxu0 %v6102
    %6675 = vmatprep.subr.mxu0 0.0
    %6676 = vmatpush1.msra.mxu0 %v6103
    %6677 = vmatprep.subr.mxu0 0.0
    %6678 = vmatpush1.msra.mxu0 %v6104
    %6679 = vmatprep.subr.mxu0 0.0
    %6680 = vmatpush1.msra.mxu0 %v6105
    %6681 = vmatprep.subr.mxu0 0.0
    %6682 = vmatpush1.msra.mxu0 %v6106
    %6683 = vmatprep.subr.mxu0 0.0
    %6684 = vmatpush1.msra.mxu0 %v6107
    %6685 = vmatprep.subr.mxu0 0.0
    %6686 = vmatpush1.msra.mxu0 %v6108
    %6687 = vmatprep.subr.mxu0 0.0
    %6688 = vmatpush1.msra.mxu0 %v6109
    %6689 = vmatprep.subr.mxu0 0.0
    %6690 = vmatpush1.msra.mxu0 %v6110
    %6691 = vmatprep.subr.mxu0 0.0
    %6692 = vmatpush1.msra.mxu0 %v6111
    %6693 = vmatprep.subr.mxu0 0.0
    %6694 = vmatpush1.msra.mxu0 %v6112
    %6695 = vmatprep.subr.mxu0 0.0
    %6696 = vmatpush1.msra.mxu0 %v6113
    %6697 = vmatprep.subr.mxu0 0.0
    %6698 = vmatpush1.msra.mxu0 %v6114
    %6699 = vmatprep.subr.mxu0 0.0
    %6700 = vmatpush1.msra.mxu0 %v6115
    %6701 = vmatprep.mubr.f32.mxu0 %v6138
    %6702 = vmatmul.mubr.f32.gmra.mrb[0].mxu0 %v5859
    %v6703 = vpop.f32.mrb[0].mxu0
    %v6704 = vadd.f32 %v6634, %v6703
    %v6705 = vpop.f32.mrb[0].mxu0
    %6706 = vdwg.mxu0
    %v6707 = vld [vmem:[%s18] sm:$0xff]
    %v6708 = vld [vmem:[%s18 + $0x8] sm:$0xff]
    %v6709 = vld [vmem:[%s18 + $0x10] sm:$0xff]
    %v6710 = vld [vmem:[%s18 + $0x18] sm:$0xff]
    %v6711 = vld [vmem:[%s18 + $0x20] sm:$0xff]
    %v6712 = vld [vmem:[%s18 + $0x28] sm:$0xff]
    %v6713 = vld [vmem:[%s18 + $0x30] sm:$0xff]
    %v6714 = vld [vmem:[%s18 + $0x38] sm:$0xff]
    %v6715 = vld [vmem:[%s18 + $0x40] sm:$0xff]
    %v6716 = vld [vmem:[%s18 + $0x48] sm:$0xff]
    %v6717 = vld [vmem:[%s18 + $0x50] sm:$0xff]
    %v6718 = vld [vmem:[%s18 + $0x58] sm:$0xff]
    %v6719 = vld [vmem:[%s18 + $0x60] sm:$0xff]
    %v6720 = vld [vmem:[%s18 + $0x68] sm:$0xff]
    %v6721 = vld [vmem:[%s18 + $0x70] sm:$0xff]
    %v6722 = vld [vmem:[%s18 + $0x78] sm:$0xff]
    %v6723 = vld [vmem:[%s18 + $0x80] sm:$0xff]
    %v6724 = vld [vmem:[%s18 + $0x88] sm:$0xff]
    %v6725 = vld [vmem:[%s18 + $0x90] sm:$0xff]
    %v6726 = vld [vmem:[%s18 + $0x98] sm:$0xff]
    %v6727 = vld [vmem:[%s18 + $0xa0] sm:$0xff]
    %v6728 = vld [vmem:[%s18 + $0xa8] sm:$0xff]
    %v6729 = vld [vmem:[%s18 + $0xb0] sm:$0xff]
    %v6730 = vld [vmem:[%s18 + $0xb8] sm:$0xff]
    %v6731 = vld [vmem:[%s18 + $0xc0] sm:$0xff]
    %v6732 = vld [vmem:[%s18 + $0xc8] sm:$0xff]
    %v6733 = vld [vmem:[%s18 + $0xd0] sm:$0xff]
    %v6734 = vld [vmem:[%s18 + $0xd8] sm:$0xff]
    %v6735 = vld [vmem:[%s18 + $0xe0] sm:$0xff]
    %v6736 = vld [vmem:[%s18 + $0xe8] sm:$0xff]
    %v6737 = vld [vmem:[%s18 + $0xf0] sm:$0xff]
    %v6738 = vld [vmem:[%s18 + $0xf8] sm:$0xff]
    %6739 = vmatprep.subr.mxu0 0.0
    %6740 = vmatpush1.msra.mxu0 %v6723
    %6741 = vmatprep.subr.mxu0 0.0
    %6742 = vmatpush1.msra.mxu0 %v6724
    %6743 = vmatprep.subr.mxu0 0.0
    %6744 = vmatpush1.msra.mxu0 %v6725
    %6745 = vmatprep.subr.mxu0 0.0
    %6746 = vmatpush1.msra.mxu0 %v6726
    %6747 = vmatprep.subr.mxu0 0.0
    %6748 = vmatpush1.msra.mxu0 %v6727
    %6749 = vmatprep.subr.mxu0 0.0
    %6750 = vmatpush1.msra.mxu0 %v6728
    %6751 = vmatprep.subr.mxu0 0.0
    %6752 = vmatpush1.msra.mxu0 %v6729
    %6753 = vmatprep.subr.mxu0 0.0
    %6754 = vmatpush1.msra.mxu0 %v6730
    %6755 = vmatprep.subr.mxu0 0.0
    %6756 = vmatpush1.msra.mxu0 %v6731
    %6757 = vmatprep.subr.mxu0 0.0
    %6758 = vmatpush1.msra.mxu0 %v6732
    %6759 = vmatprep.subr.mxu0 0.0
    %6760 = vmatpush1.msra.mxu0 %v6733
    %6761 = vmatprep.subr.mxu0 0.0
    %6762 = vmatpush1.msra.mxu0 %v6734
    %6763 = vmatprep.subr.mxu0 0.0
    %6764 = vmatpush1.msra.mxu0 %v6735
    %6765 = vmatprep.subr.mxu0 0.0
    %6766 = vmatpush1.msra.mxu0 %v6736
    %6767 = vmatprep.subr.mxu0 0.0
    %6768 = vmatpush1.msra.mxu0 %v6737
    %6769 = vmatprep.subr.mxu0 0.0
    %6770 = vmatpush1.msra.mxu0 %v6738
    %6771 = vmatprep.subr.mxu0 0.0
    %6772 = vmatpush1.msra.mxu0 0.0
    %6773 = vmatprep.subr.mxu0 0.0
    %6774 = vmatpush1.msra.mxu0 0.0
    %6775 = vmatprep.subr.mxu0 0.0
    %6776 = vmatpush1.msra.mxu0 0.0
    %6777 = vmatprep.subr.mxu0 0.0
    %6778 = vmatpush1.msra.mxu0 0.0
    %6779 = vmatprep.subr.mxu0 0.0
    %6780 = vmatpush1.msra.mxu0 0.0
    %6781 = vmatprep.subr.mxu0 0.0
    %6782 = vmatpush1.msra.mxu0 0.0
    %6783 = vmatprep.subr.mxu0 0.0
    %6784 = vmatpush1.msra.mxu0 0.0
    %6785 = vmatprep.subr.mxu0 0.0
    %6786 = vmatpush1.msra.mxu0 0.0
    %6787 = vmatprep.subr.mxu0 0.0
    %6788 = vmatpush1.msra.mxu0 0.0
    %6789 = vmatprep.subr.mxu0 0.0
    %6790 = vmatpush1.msra.mxu0 0.0
    %6791 = vmatprep.subr.mxu0 0.0
    %6792 = vmatpush1.msra.mxu0 0.0
    %6793 = vmatprep.subr.mxu0 0.0
    %6794 = vmatpush1.msra.mxu0 0.0
    %6795 = vmatprep.subr.mxu0 0.0
    %6796 = vmatpush1.msra.mxu0 0.0
    %6797 = vmatprep.subr.mxu0 0.0
    %6798 = vmatpush1.msra.mxu0 0.0
    %6799 = vmatprep.subr.mxu0 0.0
    %6800 = vmatpush1.msra.mxu0 0.0
    %6801 = vmatprep.subr.mxu0 0.0
    %6802 = vmatpush1.msra.mxu0 0.0
    %6803 = vmatprep.mubr.f32.mxu0 0.0
    %6804 = vmatmul.mubr.f32.gmra.mrb[0].mxu0 %v3466
    %v6805 = vpop.f32.mrb[0].mxu0
    %v6806 = vadd.f32 0.0, %v6805
    %v6807 = vpop.f32.mrb[0].mxu0
    %6808 = vdwg.mxu0
    %6809 = vmatprep.subr.mxu0 0.0
    %6810 = vmatpush1.msra.mxu0 %v6707
    %6811 = vmatprep.subr.mxu0 0.0
    %6812 = vmatpush1.msra.mxu0 %v6708
    %6813 = vmatprep.subr.mxu0 0.0
    %6814 = vmatpush1.msra.mxu0 %v6709
    %6815 = vmatprep.subr.mxu0 0.0
    %6816 = vmatpush1.msra.mxu0 %v6710
    %6817 = vmatprep.subr.mxu0 0.0
    %6818 = vmatpush1.msra.mxu0 %v6711
    %6819 = vmatprep.subr.mxu0 0.0
    %6820 = vmatpush1.msra.mxu0 %v6712
    %6821 = vmatprep.subr.mxu0 0.0
    %6822 = vmatpush1.msra.mxu0 %v6713
    %6823 = vmatprep.subr.mxu0 0.0
    %6824 = vmatpush1.msra.mxu0 %v6714
    %6825 = vmatprep.subr.mxu0 0.0
    %6826 = vmatpush1.msra.mxu0 %v6715
    %6827 = vmatprep.subr.mxu0 0.0
    %6828 = vmatpush1.msra.mxu0 %v6716
    %6829 = vmatprep.subr.mxu0 0.0
    %6830 = vmatpush1.msra.mxu0 %v6717
    %6831 = vmatprep.subr.mxu0 0.0
    %6832 = vmatpush1.msra.mxu0 %v6718
    %6833 = vmatprep.subr.mxu0 0.0
    %6834 = vmatpush1.msra.mxu0 %v6719
    %6835 = vmatprep.subr.mxu0 0.0
    %6836 = vmatpush1.msra.mxu0 %v6720
    %6837 = vmatprep.subr.mxu0 0.0
    %6838 = vmatpush1.msra.mxu0 %v6721
    %6839 = vmatprep.subr.mxu0 0.0
    %6840 = vmatpush1.msra.mxu0 %v6722
    %6841 = vmatprep.subr.mxu0 0.0
    %6842 = vmatpush1.msra.mxu0 0.0
    %6843 = vmatprep.subr.mxu0 0.0
    %6844 = vmatpush1.msra.mxu0 0.0
    %6845 = vmatprep.subr.mxu0 0.0
    %6846 = vmatpush1.msra.mxu0 0.0
    %6847 = vmatprep.subr.mxu0 0.0
    %6848 = vmatpush1.msra.mxu0 0.0
    %6849 = vmatprep.subr.mxu0 0.0
    %6850 = vmatpush1.msra.mxu0 0.0
    %6851 = vmatprep.subr.mxu0 0.0
    %6852 = vmatpush1.msra.mxu0 0.0
    %6853 = vmatprep.subr.mxu0 0.0
    %6854 = vmatpush1.msra.mxu0 0.0
    %6855 = vmatprep.subr.mxu0 0.0
    %6856 = vmatpush1.msra.mxu0 0.0
    %6857 = vmatprep.subr.mxu0 0.0
    %6858 = vmatpush1.msra.mxu0 0.0
    %6859 = vmatprep.subr.mxu0 0.0
    %6860 = vmatpush1.msra.mxu0 0.0
    %6861 = vmatprep.subr.mxu0 0.0
    %6862 = vmatpush1.msra.mxu0 0.0
    %6863 = vmatprep.subr.mxu0 0.0
    %6864 = vmatpush1.msra.mxu0 0.0
    %6865 = vmatprep.subr.mxu0 0.0
    %6866 = vmatpush1.msra.mxu0 0.0
    %6867 = vmatprep.subr.mxu0 0.0
    %6868 = vmatpush1.msra.mxu0 0.0
    %6869 = vmatprep.subr.mxu0 0.0
    %6870 = vmatpush1.msra.mxu0 0.0
    %6871 = vmatprep.subr.mxu0 0.0
    %6872 = vmatpush1.msra.mxu0 0.0
    %6873 = vmatprep.mubr.f32.mxu0 0.0
    %6874 = vmatmul.mubr.f32.gmra.mrb[0].mxu0 %v2570
    %v6875 = vpop.f32.mrb[0].mxu0
    %v6876 = vadd.f32 %v6806, %v6875
    %v6877 = vpop.f32.mrb[0].mxu0
    %6878 = vdwg.mxu0
    %v6879 = vld [vmem:[%s18 + $0x100] sm:$0xff]
    %v6880 = vld [vmem:[%s18 + $0x108] sm:$0xff]
    %v6881 = vld [vmem:[%s18 + $0x110] sm:$0xff]
    %v6882 = vld [vmem:[%s18 + $0x118] sm:$0xff]
    %v6883 = vld [vmem:[%s18 + $0x120] sm:$0xff]
    %v6884 = vld [vmem:[%s18 + $0x128] sm:$0xff]
    %v6885 = vld [vmem:[%s18 + $0x130] sm:$0xff]
    %v6886 = vld [vmem:[%s18 + $0x138] sm:$0xff]
    %v6887 = vld [vmem:[%s18 + $0x140] sm:$0xff]
    %v6888 = vld [vmem:[%s18 + $0x148] sm:$0xff]
    %v6889 = vld [vmem:[%s18 + $0x150] sm:$0xff]
    %v6890 = vld [vmem:[%s18 + $0x158] sm:$0xff]
    %v6891 = vld [vmem:[%s18 + $0x160] sm:$0xff]
    %v6892 = vld [vmem:[%s18 + $0x168] sm:$0xff]
    %v6893 = vld [vmem:[%s18 + $0x170] sm:$0xff]
    %v6894 = vld [vmem:[%s18 + $0x178] sm:$0xff]
    %6895 = vmatprep.subr.mxu0 0.0
    %6896 = vmatpush1.msra.mxu0 %v6879
    %6897 = vmatprep.subr.mxu0 0.0
    %6898 = vmatpush1.msra.mxu0 %v6880
    %6899 = vmatprep.subr.mxu0 0.0
    %6900 = vmatpush1.msra.mxu0 %v6881
    %6901 = vmatprep.subr.mxu0 0.0
    %6902 = vmatpush1.msra.mxu0 %v6882
    %6903 = vmatprep.subr.mxu0 0.0
    %6904 = vmatpush1.msra.mxu0 %v6883
    %6905 = vmatprep.subr.mxu0 0.0
    %6906 = vmatpush1.msra.mxu0 %v6884
    %6907 = vmatprep.subr.mxu0 0.0
    %6908 = vmatpush1.msra.mxu0 %v6885
    %6909 = vmatprep.subr.mxu0 0.0
    %6910 = vmatpush1.msra.mxu0 %v6886
    %6911 = vmatprep.subr.mxu0 0.0
    %6912 = vmatpush1.msra.mxu0 %v6887
    %6913 = vmatprep.subr.mxu0 0.0
    %6914 = vmatpush1.msra.mxu0 %v6888
    %6915 = vmatprep.subr.mxu0 0.0
    %6916 = vmatpush1.msra.mxu0 %v6889
    %6917 = vmatprep.subr.mxu0 0.0
    %6918 = vmatpush1.msra.mxu0 %v6890
    %6919 = vmatprep.subr.mxu0 0.0
    %6920 = vmatpush1.msra.mxu0 %v6891
    %6921 = vmatprep.subr.mxu0 0.0
    %6922 = vmatpush1.msra.mxu0 %v6892
    %6923 = vmatprep.subr.mxu0 0.0
    %6924 = vmatpush1.msra.mxu0 %v6893
    %6925 = vmatprep.subr.mxu0 0.0
    %6926 = vmatpush1.msra.mxu0 %v6894
    %6927 = vmatprep.subr.mxu0 0.0
    %6928 = vmatpush1.msra.mxu0 0.0
    %6929 = vmatprep.subr.mxu0 0.0
    %6930 = vmatpush1.msra.mxu0 0.0
    %6931 = vmatprep.subr.mxu0 0.0
    %6932 = vmatpush1.msra.mxu0 0.0
    %6933 = vmatprep.subr.mxu0 0.0
    %6934 = vmatpush1.msra.mxu0 0.0
    %6935 = vmatprep.subr.mxu0 0.0
    %6936 = vmatpush1.msra.mxu0 0.0
    %6937 = vmatprep.subr.mxu0 0.0
    %6938 = vmatpush1.msra.mxu0 0.0
    %6939 = vmatprep.subr.mxu0 0.0
    %6940 = vmatpush1.msra.mxu0 0.0
    %6941 = vmatprep.subr.mxu0 0.0
    %6942 = vmatpush1.msra.mxu0 0.0
    %6943 = vmatprep.subr.mxu0 0.0
    %6944 = vmatpush1.msra.mxu0 0.0
    %6945 = vmatprep.subr.mxu0 0.0
    %6946 = vmatpush1.msra.mxu0 0.0
    %6947 = vmatprep.subr.mxu0 0.0
    %6948 = vmatpush1.msra.mxu0 0.0
    %6949 = vmatprep.subr.mxu0 0.0
    %6950 = vmatpush1.msra.mxu0 0.0
    %6951 = vmatprep.subr.mxu0 0.0
    %6952 = vmatpush1.msra.mxu0 0.0
    %6953 = vmatprep.subr.mxu0 0.0
    %6954 = vmatpush1.msra.mxu0 0.0
    %6955 = vmatprep.subr.mxu0 0.0
    %6956 = vmatpush1.msra.mxu0 0.0
    %6957 = vmatprep.subr.mxu0 0.0
    %6958 = vmatpush1.msra.mxu0 0.0
    %6959 = vmatprep.mubr.f32.mxu0 0.0
    %6960 = vmatmul.mubr.f32.gmra.mrb[0].mxu0 %v5088
    %v6961 = vpop.f32.mrb[0].mxu0
    %v6962 = vadd.f32 0.0, %v6961
    %v6963 = vpop.f32.mrb[0].mxu0
    %6964 = vdwg.mxu0
    %v6965 = vadd.f32 %v6876, %v6962
    %v6966 = vld [vmem:[%s18 + $0x180] sm:$0xff]
    %v6967 = vld [vmem:[%s18 + $0x188] sm:$0xff]
    %v6968 = vld [vmem:[%s18 + $0x190] sm:$0xff]
    %v6969 = vld [vmem:[%s18 + $0x198] sm:$0xff]
    %v6970 = vld [vmem:[%s18 + $0x1a0] sm:$0xff]
    %v6971 = vld [vmem:[%s18 + $0x1a8] sm:$0xff]
    %v6972 = vld [vmem:[%s18 + $0x1b0] sm:$0xff]
    %v6973 = vld [vmem:[%s18 + $0x1b8] sm:$0xff]
    %v6974 = vld [vmem:[%s18 + $0x1c0] sm:$0xff]
    %v6975 = vld [vmem:[%s18 + $0x1c8] sm:$0xff]
    %v6976 = vld [vmem:[%s18 + $0x1d0] sm:$0xff]
    %v6977 = vld [vmem:[%s18 + $0x1d8] sm:$0xff]
    %v6978 = vld [vmem:[%s18 + $0x1e0] sm:$0xff]
    %v6979 = vld [vmem:[%s18 + $0x1e8] sm:$0xff]
    %v6980 = vld [vmem:[%s18 + $0x1f0] sm:$0xff]
    %v6981 = vld [vmem:[%s18 + $0x1f8] sm:$0xff]
    %6982 = vmatprep.subr.mxu0 0.0
    %6983 = vmatpush1.msra.mxu0 %v6966
    %6984 = vmatprep.subr.mxu0 0.0
    %6985 = vmatpush1.msra.mxu0 %v6967
    %6986 = vmatprep.subr.mxu0 0.0
    %6987 = vmatpush1.msra.mxu0 %v6968
    %6988 = vmatprep.subr.mxu0 0.0
    %6989 = vmatpush1.msra.mxu0 %v6969
    %6990 = vmatprep.subr.mxu0 0.0
    %6991 = vmatpush1.msra.mxu0 %v6970
    %6992 = vmatprep.subr.mxu0 0.0
    %6993 = vmatpush1.msra.mxu0 %v6971
    %6994 = vmatprep.subr.mxu0 0.0
    %6995 = vmatpush1.msra.mxu0 %v6972
    %6996 = vmatprep.subr.mxu0 0.0
    %6997 = vmatpush1.msra.mxu0 %v6973
    %6998 = vmatprep.subr.mxu0 0.0
    %6999 = vmatpush1.msra.mxu0 %v6974
    %7000 = vmatprep.subr.mxu0 0.0
    %7001 = vmatpush1.msra.mxu0 %v6975
    %7002 = vmatprep.subr.mxu0 0.0
    %7003 = vmatpush1.msra.mxu0 %v6976
    %7004 = vmatprep.subr.mxu0 0.0
    %7005 = vmatpush1.msra.mxu0 %v6977
    %7006 = vmatprep.subr.mxu0 0.0
    %7007 = vmatpush1.msra.mxu0 %v6978
    %7008 = vmatprep.subr.mxu0 0.0
    %7009 = vmatpush1.msra.mxu0 %v6979
    %7010 = vmatprep.subr.mxu0 0.0
    %7011 = vmatpush1.msra.mxu0 %v6980
    %7012 = vmatprep.subr.mxu0 0.0
    %7013 = vmatpush1.msra.mxu0 %v6981
    %7014 = vmatprep.subr.mxu0 0.0
    %7015 = vmatpush1.msra.mxu0 0.0
    %7016 = vmatprep.subr.mxu0 0.0
    %7017 = vmatpush1.msra.mxu0 0.0
    %7018 = vmatprep.subr.mxu0 0.0
    %7019 = vmatpush1.msra.mxu0 0.0
    %7020 = vmatprep.subr.mxu0 0.0
    %7021 = vmatpush1.msra.mxu0 0.0
    %7022 = vmatprep.subr.mxu0 0.0
    %7023 = vmatpush1.msra.mxu0 0.0
    %7024 = vmatprep.subr.mxu0 0.0
    %7025 = vmatpush1.msra.mxu0 0.0
    %7026 = vmatprep.subr.mxu0 0.0
    %7027 = vmatpush1.msra.mxu0 0.0
    %7028 = vmatprep.subr.mxu0 0.0
    %7029 = vmatpush1.msra.mxu0 0.0
    %7030 = vmatprep.subr.mxu0 0.0
    %7031 = vmatpush1.msra.mxu0 0.0
    %7032 = vmatprep.subr.mxu0 0.0
    %7033 = vmatpush1.msra.mxu0 0.0
    %7034 = vmatprep.subr.mxu0 0.0
    %7035 = vmatpush1.msra.mxu0 0.0
    %7036 = vmatprep.subr.mxu0 0.0
    %7037 = vmatpush1.msra.mxu0 0.0
    %7038 = vmatprep.subr.mxu0 0.0
    %7039 = vmatpush1.msra.mxu0 0.0
    %7040 = vmatprep.subr.mxu0 0.0
    %7041 = vmatpush1.msra.mxu0 0.0
    %7042 = vmatprep.subr.mxu0 0.0
    %7043 = vmatpush1.msra.mxu0 0.0
    %7044 = vmatprep.subr.mxu0 0.0
    %7045 = vmatpush1.msra.mxu0 0.0
    %7046 = vmatprep.mubr.f32.mxu0 0.0
    %7047 = vmatmul.mubr.f32.gmra.mrb[0].mxu0 %v6704
    %v7048 = vpop.f32.mrb[0].mxu0
    %v7049 = vadd.f32 0.0, %v7048
    %v7050 = vpop.f32.mrb[0].mxu0
    %7051 = vdwg.mxu0
    %v7052 = vadd.f32 %v6965, %v7049
    %v7053 = vld [vmem:[%s19] sm:$0x1]
    %v7055 = vlaneseq
    %v7056 = vshrl.u32 %v7055, 7
    %v7057 = vsub.s32 0, %v7056
    %v7058 = vrot.slane %v7053, %v7057
    %v7060 = vadd.f32 %v7052, %v7058
    %vm7061 = vcmask 715776
    %v7062 = vsel %vm7061, %v7060, -inf
    %7063 = vmax.xlane.f32.xlu0 %v7062
    %v7064 = vpop.xlane.xlu0 %7063
    %v7065 = vsub.f32 %v7060, %v7064
    %v7066 = vmul.f32 %v7065, 1.442695
    %v7067 = vpow.pop %v7066
    %v7068 = vsel %vm7061, %v7067, 0.0
    %7069 = vadd.xlane.f32.xlu0 %v7068
    %v7070 = vpop.xlane.xlu0 %7069
    %v7071 = vrcp.pop %v7070
    %v7072 = vmul.f32 %v7067, %v7071
    %7073 = vst.msk [vmem:[#allocation3] sm:$0xf] %vm7061, %v7072
    %s7074 = sld [smem:[#allocation2]]
    %v7075 = vmax.f32 %v91, 1e-06
    %v7076 = vmax.f32 %v92, 1e-06
    %v7077 = vmax.f32 %v93, 1e-06
    %v7078 = vmax.f32 %v94, 1e-06
    %v7079 = vlog2.pop %v7075
    %v7080 = vmul.f32 %v7079, 0.6931472
    %v7081 = vlog2.pop %v7076
    %v7082 = vmul.f32 %v7081, 0.6931472
    %v7083 = vlog2.pop %v7077
    %v7084 = vmul.f32 %v7083, 0.6931472
    %v7085 = vlog2.pop %v7078
    %v7086 = vmul.f32 %v7085, 0.6931472
    %v7087 = vstv %s7074
    %v7088 = vmul.f32 %v7080, %v7087
    %v7089 = vmul.f32 %v7082, %v7087
    %v7090 = vmul.f32 %v7084, %v7087
    %v7091 = vmul.f32 %v7086, %v7087
    %v7092 = vmul.f32 %v7088, 1.442695
    %v7093 = vpow.pop %v7092
    %v7094 = vmul.f32 %v7089, 1.442695
    %v7095 = vpow.pop %v7094
    %v7096 = vmul.f32 %v7090, 1.442695
    %v7097 = vpow.pop %v7096
    %v7098 = vmul.f32 %v7091, 1.442695
    %v7099 = vpow.pop %v7098
    %v7104 = vcombine.high %v7093, %v7093
    %v7105 = vcombine.high %v7095, %v7095
    %v7106 = vcombine.high %v7097, %v7097
    %v7107 = vcombine.high %v7099, %v7099
    %7112 = vmatprep.subr.mxu0 %v394
    %7113 = vmatpush1.xpose.msra.mxu0 %v393
    %7114 = vmatprep.subr.mxu0 %v402
    %7115 = vmatpush1.xpose.msra.mxu0 %v401
    %7116 = vmatprep.subr.mxu0 %v410
    %7117 = vmatpush1.xpose.msra.mxu0 %v409
    %7118 = vmatprep.subr.mxu0 %v418
    %7119 = vmatpush1.xpose.msra.mxu0 %v417
    %7120 = vmatprep.subr.mxu0 %v426
    %7121 = vmatpush1.xpose.msra.mxu0 %v425
    %7122 = vmatprep.subr.mxu0 %v434
    %7123 = vmatpush1.xpose.msra.mxu0 %v433
    %7124 = vmatprep.subr.mxu0 %v442
    %7125 = vmatpush1.xpose.msra.mxu0 %v441
    %7126 = vmatprep.subr.mxu0 %v450
    %7127 = vmatpush1.xpose.msra.mxu0 %v449
    %7128 = vmatprep.subr.mxu0 0.0
    %7129 = vmatpush1.xpose.msra.mxu0 0.0
    %7130 = vmatprep.subr.mxu0 0.0
    %7131 = vmatpush1.xpose.msra.mxu0 0.0
    %7132 = vmatprep.subr.mxu0 0.0
    %7133 = vmatpush1.xpose.msra.mxu0 0.0
    %7134 = vmatprep.subr.mxu0 0.0
    %7135 = vmatpush1.xpose.msra.mxu0 0.0
    %7136 = vmatprep.subr.mxu0 0.0
    %7137 = vmatpush1.xpose.msra.mxu0 0.0
    %7138 = vmatprep.subr.mxu0 0.0
    %7139 = vmatpush1.xpose.msra.mxu0 0.0
    %7140 = vmatprep.subr.mxu0 0.0
    %7141 = vmatpush1.xpose.msra.mxu0 0.0
    %7142 = vmatprep.subr.mxu0 0.0
    %7143 = vmatpush1.xpose.msra.mxu0 0.0
    %7144 = vmatprep.subr.mxu0 0.0
    %7145 = vmatpush1.xpose.msra.mxu0 0.0
    %7146 = vmatprep.subr.mxu0 0.0
    %7147 = vmatpush1.xpose.msra.mxu0 0.0
    %7148 = vmatprep.subr.mxu0 0.0
    %7149 = vmatpush1.xpose.msra.mxu0 0.0
    %7150 = vmatprep.subr.mxu0 0.0
    %7151 = vmatpush1.xpose.msra.mxu0 0.0
    %7152 = vmatprep.subr.mxu0 0.0
    %7153 = vmatpush1.xpose.msra.mxu0 0.0
    %7154 = vmatprep.subr.mxu0 0.0
    %7155 = vmatpush1.xpose.msra.mxu0 0.0
    %7156 = vmatprep.subr.mxu0 0.0
    %7157 = vmatpush1.xpose.msra.mxu0 0.0
    %7158 = vmatprep.subr.mxu0 0.0
    %7159 = vmatpush1.xpose.msra.mxu0 0.0
    %7160 = vmatprep.subr.mxu0 0.0
    %7161 = vmatpush1.xpose.msra.mxu0 0.0
    %7162 = vmatprep.subr.mxu0 0.0
    %7163 = vmatpush1.xpose.msra.mxu0 0.0
    %7164 = vmatprep.subr.mxu0 0.0
    %7165 = vmatpush1.xpose.msra.mxu0 0.0
    %7166 = vmatprep.subr.mxu0 0.0
    %7167 = vmatpush1.xpose.msra.mxu0 0.0
    %7168 = vmatprep.subr.mxu0 0.0
    %7169 = vmatpush1.xpose.msra.mxu0 0.0
    %7170 = vmatprep.subr.mxu0 0.0
    %7171 = vmatpush1.xpose.msra.mxu0 0.0
    %7172 = vmatprep.subr.mxu0 0.0
    %7173 = vmatpush1.xpose.msra.mxu0 0.0
    %7174 = vmatprep.subr.mxu0 0.0
    %7175 = vmatpush1.xpose.msra.mxu0 0.0
    %7176 = vmatprep.mubr.f32.mxu0 %v7104
    %7177 = vmatmul.mubr.f32.gmra.mrb[0].mxu0 %v7093
    %v7178 = vpop.f32.mrb[0].mxu0
    %v7179 = vadd.f32 0.0, %v7178
    %v7180 = vpop.f32.mrb[0].mxu0
    %7181 = vdwg.mxu0
    %7182 = vmatprep.subr.mxu0 %v396
    %7183 = vmatpush1.xpose.msra.mxu0 %v395
    %7184 = vmatprep.subr.mxu0 %v404
    %7185 = vmatpush1.xpose.msra.mxu0 %v403
    %7186 = vmatprep.subr.mxu0 %v412
    %7187 = vmatpush1.xpose.msra.mxu0 %v411
    %7188 = vmatprep.subr.mxu0 %v420
    %7189 = vmatpush1.xpose.msra.mxu0 %v419
    %7190 = vmatprep.subr.mxu0 %v428
    %7191 = vmatpush1.xpose.msra.mxu0 %v427
    %7192 = vmatprep.subr.mxu0 %v436
    %7193 = vmatpush1.xpose.msra.mxu0 %v435
    %7194 = vmatprep.subr.mxu0 %v444
    %7195 = vmatpush1.xpose.msra.mxu0 %v443
    %7196 = vmatprep.subr.mxu0 %v452
    %7197 = vmatpush1.xpose.msra.mxu0 %v451
    %7198 = vmatprep.subr.mxu0 0.0
    %7199 = vmatpush1.xpose.msra.mxu0 0.0
    %7200 = vmatprep.subr.mxu0 0.0
    %7201 = vmatpush1.xpose.msra.mxu0 0.0
    %7202 = vmatprep.subr.mxu0 0.0
    %7203 = vmatpush1.xpose.msra.mxu0 0.0
    %7204 = vmatprep.subr.mxu0 0.0
    %7205 = vmatpush1.xpose.msra.mxu0 0.0
    %7206 = vmatprep.subr.mxu0 0.0
    %7207 = vmatpush1.xpose.msra.mxu0 0.0
    %7208 = vmatprep.subr.mxu0 0.0
    %7209 = vmatpush1.xpose.msra.mxu0 0.0
    %7210 = vmatprep.subr.mxu0 0.0
    %7211 = vmatpush1.xpose.msra.mxu0 0.0
    %7212 = vmatprep.subr.mxu0 0.0
    %7213 = vmatpush1.xpose.msra.mxu0 0.0
    %7214 = vmatprep.subr.mxu0 0.0
    %7215 = vmatpush1.xpose.msra.mxu0 0.0
    %7216 = vmatprep.subr.mxu0 0.0
    %7217 = vmatpush1.xpose.msra.mxu0 0.0
    %7218 = vmatprep.subr.mxu0 0.0
    %7219 = vmatpush1.xpose.msra.mxu0 0.0
    %7220 = vmatprep.subr.mxu0 0.0
    %7221 = vmatpush1.xpose.msra.mxu0 0.0
    %7222 = vmatprep.subr.mxu0 0.0
    %7223 = vmatpush1.xpose.msra.mxu0 0.0
    %7224 = vmatprep.subr.mxu0 0.0
    %7225 = vmatpush1.xpose.msra.mxu0 0.0
    %7226 = vmatprep.subr.mxu0 0.0
    %7227 = vmatpush1.xpose.msra.mxu0 0.0
    %7228 = vmatprep.subr.mxu0 0.0
    %7229 = vmatpush1.xpose.msra.mxu0 0.0
    %7230 = vmatprep.subr.mxu0 0.0
    %7231 = vmatpush1.xpose.msra.mxu0 0.0
    %7232 = vmatprep.subr.mxu0 0.0
    %7233 = vmatpush1.xpose.msra.mxu0 0.0
    %7234 = vmatprep.subr.mxu0 0.0
    %7235 = vmatpush1.xpose.msra.mxu0 0.0
    %7236 = vmatprep.subr.mxu0 0.0
    %7237 = vmatpush1.xpose.msra.mxu0 0.0
    %7238 = vmatprep.subr.mxu0 0.0
    %7239 = vmatpush1.xpose.msra.mxu0 0.0
    %7240 = vmatprep.subr.mxu0 0.0
    %7241 = vmatpush1.xpose.msra.mxu0 0.0
    %7242 = vmatprep.subr.mxu0 0.0
    %7243 = vmatpush1.xpose.msra.mxu0 0.0
    %7244 = vmatprep.subr.mxu0 0.0
    %7245 = vmatpush1.xpose.msra.mxu0 0.0
    %7246 = vmatprep.mubr.f32.mxu0 %v7105
    %7247 = vmatmul.mubr.f32.gmra.mrb[0].mxu0 %v7095
    %v7248 = vpop.f32.mrb[0].mxu0
    %v7249 = vadd.f32 %v7179, %v7248
    %v7250 = vpop.f32.mrb[0].mxu0
    %7251 = vdwg.mxu0
    %7252 = vmatprep.subr.mxu0 %v398
    %7253 = vmatpush1.xpose.msra.mxu0 %v397
    %7254 = vmatprep.subr.mxu0 %v406
    %7255 = vmatpush1.xpose.msra.mxu0 %v405
    %7256 = vmatprep.subr.mxu0 %v414
    %7257 = vmatpush1.xpose.msra.mxu0 %v413
    %7258 = vmatprep.subr.mxu0 %v422
    %7259 = vmatpush1.xpose.msra.mxu0 %v421
    %7260 = vmatprep.subr.mxu0 %v430
    %7261 = vmatpush1.xpose.msra.mxu0 %v429
    %7262 = vmatprep.subr.mxu0 %v438
    %7263 = vmatpush1.xpose.msra.mxu0 %v437
    %7264 = vmatprep.subr.mxu0 %v446
    %7265 = vmatpush1.xpose.msra.mxu0 %v445
    %7266 = vmatprep.subr.mxu0 %v454
    %7267 = vmatpush1.xpose.msra.mxu0 %v453
    %7268 = vmatprep.subr.mxu0 0.0
    %7269 = vmatpush1.xpose.msra.mxu0 0.0
    %7270 = vmatprep.subr.mxu0 0.0
    %7271 = vmatpush1.xpose.msra.mxu0 0.0
    %7272 = vmatprep.subr.mxu0 0.0
    %7273 = vmatpush1.xpose.msra.mxu0 0.0
    %7274 = vmatprep.subr.mxu0 0.0
    %7275 = vmatpush1.xpose.msra.mxu0 0.0
    %7276 = vmatprep.subr.mxu0 0.0
    %7277 = vmatpush1.xpose.msra.mxu0 0.0
    %7278 = vmatprep.subr.mxu0 0.0
    %7279 = vmatpush1.xpose.msra.mxu0 0.0
    %7280 = vmatprep.subr.mxu0 0.0
    %7281 = vmatpush1.xpose.msra.mxu0 0.0
    %7282 = vmatprep.subr.mxu0 0.0
    %7283 = vmatpush1.xpose.msra.mxu0 0.0
    %7284 = vmatprep.subr.mxu0 0.0
    %7285 = vmatpush1.xpose.msra.mxu0 0.0
    %7286 = vmatprep.subr.mxu0 0.0
    %7287 = vmatpush1.xpose.msra.mxu0 0.0
    %7288 = vmatprep.subr.mxu0 0.0
    %7289 = vmatpush1.xpose.msra.mxu0 0.0
    %7290 = vmatprep.subr.mxu0 0.0
    %7291 = vmatpush1.xpose.msra.mxu0 0.0
    %7292 = vmatprep.subr.mxu0 0.0
    %7293 = vmatpush1.xpose.msra.mxu0 0.0
    %7294 = vmatprep.subr.mxu0 0.0
    %7295 = vmatpush1.xpose.msra.mxu0 0.0
    %7296 = vmatprep.subr.mxu0 0.0
    %7297 = vmatpush1.xpose.msra.mxu0 0.0
    %7298 = vmatprep.subr.mxu0 0.0
    %7299 = vmatpush1.xpose.msra.mxu0 0.0
    %7300 = vmatprep.subr.mxu0 0.0
    %7301 = vmatpush1.xpose.msra.mxu0 0.0
    %7302 = vmatprep.subr.mxu0 0.0
    %7303 = vmatpush1.xpose.msra.mxu0 0.0
    %7304 = vmatprep.subr.mxu0 0.0
    %7305 = vmatpush1.xpose.msra.mxu0 0.0
    %7306 = vmatprep.subr.mxu0 0.0
    %7307 = vmatpush1.xpose.msra.mxu0 0.0
    %7308 = vmatprep.subr.mxu0 0.0
    %7309 = vmatpush1.xpose.msra.mxu0 0.0
    %7310 = vmatprep.subr.mxu0 0.0
    %7311 = vmatpush1.xpose.msra.mxu0 0.0
    %7312 = vmatprep.subr.mxu0 0.0
    %7313 = vmatpush1.xpose.msra.mxu0 0.0
    %7314 = vmatprep.subr.mxu0 0.0
    %7315 = vmatpush1.xpose.msra.mxu0 0.0
    %7316 = vmatprep.mubr.f32.mxu0 %v7106
    %7317 = vmatmul.mubr.f32.gmra.mrb[0].mxu0 %v7097
    %v7318 = vpop.f32.mrb[0].mxu0
    %v7319 = vadd.f32 %v7249, %v7318
    %v7320 = vpop.f32.mrb[0].mxu0
    %7321 = vdwg.mxu0
    %7322 = vmatprep.subr.mxu0 %v400
    %7323 = vmatpush1.xpose.msra.mxu0 %v399
    %7324 = vmatprep.subr.mxu0 %v408
    %7325 = vmatpush1.xpose.msra.mxu0 %v407
    %7326 = vmatprep.subr.mxu0 %v416
    %7327 = vmatpush1.xpose.msra.mxu0 %v415
    %7328 = vmatprep.subr.mxu0 %v424
    %7329 = vmatpush1.xpose.msra.mxu0 %v423
    %7330 = vmatprep.subr.mxu0 %v432
    %7331 = vmatpush1.xpose.msra.mxu0 %v431
    %7332 = vmatprep.subr.mxu0 %v440
    %7333 = vmatpush1.xpose.msra.mxu0 %v439
    %7334 = vmatprep.subr.mxu0 %v448
    %7335 = vmatpush1.xpose.msra.mxu0 %v447
    %7336 = vmatprep.subr.mxu0 %v456
    %7337 = vmatpush1.xpose.msra.mxu0 %v455
    %7338 = vmatprep.subr.mxu0 0.0
    %7339 = vmatpush1.xpose.msra.mxu0 0.0
    %7340 = vmatprep.subr.mxu0 0.0
    %7341 = vmatpush1.xpose.msra.mxu0 0.0
    %7342 = vmatprep.subr.mxu0 0.0
    %7343 = vmatpush1.xpose.msra.mxu0 0.0
    %7344 = vmatprep.subr.mxu0 0.0
    %7345 = vmatpush1.xpose.msra.mxu0 0.0
    %7346 = vmatprep.subr.mxu0 0.0
    %7347 = vmatpush1.xpose.msra.mxu0 0.0
    %7348 = vmatprep.subr.mxu0 0.0
    %7349 = vmatpush1.xpose.msra.mxu0 0.0
    %7350 = vmatprep.subr.mxu0 0.0
    %7351 = vmatpush1.xpose.msra.mxu0 0.0
    %7352 = vmatprep.subr.mxu0 0.0
    %7353 = vmatpush1.xpose.msra.mxu0 0.0
    %7354 = vmatprep.subr.mxu0 0.0
    %7355 = vmatpush1.xpose.msra.mxu0 0.0
    %7356 = vmatprep.subr.mxu0 0.0
    %7357 = vmatpush1.xpose.msra.mxu0 0.0
    %7358 = vmatprep.subr.mxu0 0.0
    %7359 = vmatpush1.xpose.msra.mxu0 0.0
    %7360 = vmatprep.subr.mxu0 0.0
    %7361 = vmatpush1.xpose.msra.mxu0 0.0
    %7362 = vmatprep.subr.mxu0 0.0
    %7363 = vmatpush1.xpose.msra.mxu0 0.0
    %7364 = vmatprep.subr.mxu0 0.0
    %7365 = vmatpush1.xpose.msra.mxu0 0.0
    %7366 = vmatprep.subr.mxu0 0.0
    %7367 = vmatpush1.xpose.msra.mxu0 0.0
    %7368 = vmatprep.subr.mxu0 0.0
    %7369 = vmatpush1.xpose.msra.mxu0 0.0
    %7370 = vmatprep.subr.mxu0 0.0
    %7371 = vmatpush1.xpose.msra.mxu0 0.0
    %7372 = vmatprep.subr.mxu0 0.0
    %7373 = vmatpush1.xpose.msra.mxu0 0.0
    %7374 = vmatprep.subr.mxu0 0.0
    %7375 = vmatpush1.xpose.msra.mxu0 0.0
    %7376 = vmatprep.subr.mxu0 0.0
    %7377 = vmatpush1.xpose.msra.mxu0 0.0
    %7378 = vmatprep.subr.mxu0 0.0
    %7379 = vmatpush1.xpose.msra.mxu0 0.0
    %7380 = vmatprep.subr.mxu0 0.0
    %7381 = vmatpush1.xpose.msra.mxu0 0.0
    %7382 = vmatprep.subr.mxu0 0.0
    %7383 = vmatpush1.xpose.msra.mxu0 0.0
    %7384 = vmatprep.subr.mxu0 0.0
    %7385 = vmatpush1.xpose.msra.mxu0 0.0
    %7386 = vmatprep.mubr.f32.mxu0 %v7107
    %7387 = vmatmul.mubr.f32.gmra.mrb[0].mxu0 %v7099
    %v7388 = vpop.f32.mrb[0].mxu0
    %v7389 = vadd.f32 %v7319, %v7388
    %v7390 = vpop.f32.mrb[0].mxu0
    %7391 = vdwg.mxu0
    %v7392 = vmul.f32 %v7389, 0.0625
    %v7393 = vlog2.pop %v7392
    %v7394 = vmul.f32 %v7393, 0.6931472
    %v7395 = vrcp.pop %v7087
    %v7396 = vmul.f32 %v7394, %v7395
    %v7397 = vmul.f32 %v7396, 1.442695
    %v7398 = vpow.pop %v7397
    %v7399 = vld [vmem:[%s21] sm:$0xff]
    %v7400 = vld [vmem:[%s21 + $0x8] sm:$0xff]
    %v7401 = vld [vmem:[%s21 + $0x10] sm:$0xff]
    %v7402 = vld [vmem:[%s21 + $0x18] sm:$0xff]
    %v7403 = vld [vmem:[%s21 + $0x20] sm:$0xff]
    %v7404 = vld [vmem:[%s21 + $0x28] sm:$0xff]
    %v7405 = vld [vmem:[%s21 + $0x30] sm:$0xff]
    %v7406 = vld [vmem:[%s21 + $0x38] sm:$0xff]
    %v7407 = vld [vmem:[%s22] sm:$0x1]
    %v7409 = vlaneseq
    %v7410 = vshrl.u32 %v7409, 7
    %v7411 = vsub.s32 0, %v7410
    %v7412 = vrot.slane %v7407, %v7411
    %v7415 = vsel %vm1679, %v7398, 0
    %7417 = vmatprep.subr.mxu0 0.0
    %7418 = vmatpush1.msra.mxu0 %v7399
    %7419 = vmatprep.subr.mxu0 0.0
    %7420 = vmatpush1.msra.mxu0 %v7400
    %7421 = vmatprep.subr.mxu0 0.0
    %7422 = vmatpush1.msra.mxu0 %v7401
    %7423 = vmatprep.subr.mxu0 0.0
    %7424 = vmatpush1.msra.mxu0 %v7402
    %7425 = vmatprep.subr.mxu0 0.0
    %7426 = vmatpush1.msra.mxu0 %v7403
    %7427 = vmatprep.subr.mxu0 0.0
    %7428 = vmatpush1.msra.mxu0 %v7404
    %7429 = vmatprep.subr.mxu0 0.0
    %7430 = vmatpush1.msra.mxu0 %v7405
    %7431 = vmatprep.subr.mxu0 0.0
    %7432 = vmatpush1.msra.mxu0 %v7406
    %7433 = vmatprep.subr.mxu0 0.0
    %7434 = vmatpush1.msra.mxu0 0.0
    %7435 = vmatprep.subr.mxu0 0.0
    %7436 = vmatpush1.msra.mxu0 0.0
    %7437 = vmatprep.subr.mxu0 0.0
    %7438 = vmatpush1.msra.mxu0 0.0
    %7439 = vmatprep.subr.mxu0 0.0
    %7440 = vmatpush1.msra.mxu0 0.0
    %7441 = vmatprep.subr.mxu0 0.0
    %7442 = vmatpush1.msra.mxu0 0.0
    %7443 = vmatprep.subr.mxu0 0.0
    %7444 = vmatpush1.msra.mxu0 0.0
    %7445 = vmatprep.subr.mxu0 0.0
    %7446 = vmatpush1.msra.mxu0 0.0
    %7447 = vmatprep.subr.mxu0 0.0
    %7448 = vmatpush1.msra.mxu0 0.0
    %7449 = vmatprep.subr.mxu0 0.0
    %7450 = vmatpush1.msra.mxu0 0.0
    %7451 = vmatprep.subr.mxu0 0.0
    %7452 = vmatpush1.msra.mxu0 0.0
    %7453 = vmatprep.subr.mxu0 0.0
    %7454 = vmatpush1.msra.mxu0 0.0
    %7455 = vmatprep.subr.mxu0 0.0
    %7456 = vmatpush1.msra.mxu0 0.0
    %7457 = vmatprep.subr.mxu0 0.0
    %7458 = vmatpush1.msra.mxu0 0.0
    %7459 = vmatprep.subr.mxu0 0.0
    %7460 = vmatpush1.msra.mxu0 0.0
    %7461 = vmatprep.subr.mxu0 0.0
    %7462 = vmatpush1.msra.mxu0 0.0
    %7463 = vmatprep.subr.mxu0 0.0
    %7464 = vmatpush1.msra.mxu0 0.0
    %7465 = vmatprep.subr.mxu0 0.0
    %7466 = vmatpush1.msra.mxu0 0.0
    %7467 = vmatprep.subr.mxu0 0.0
    %7468 = vmatpush1.msra.mxu0 0.0
    %7469 = vmatprep.subr.mxu0 0.0
    %7470 = vmatpush1.msra.mxu0 0.0
    %7471 = vmatprep.subr.mxu0 0.0
    %7472 = vmatpush1.msra.mxu0 0.0
    %7473 = vmatprep.subr.mxu0 0.0
    %7474 = vmatpush1.msra.mxu0 0.0
    %7475 = vmatprep.subr.mxu0 0.0
    %7476 = vmatpush1.msra.mxu0 0.0
    %7477 = vmatprep.subr.mxu0 0.0
    %7478 = vmatpush1.msra.mxu0 0.0
    %7479 = vmatprep.subr.mxu0 0.0
    %7480 = vmatpush1.msra.mxu0 0.0
    %7481 = vmatprep.mubr.f32.mxu0 0.0
    %7482 = vmatmul.mubr.f32.gmra.mrb[0].mxu0 %v7415
    %v7483 = vpop.f32.mrb[0].mxu0
    %v7484 = vadd.f32 %v7412, %v7483
    %v7485 = vpop.f32.mrb[0].mxu0
    %7486 = vdwg.mxu0
    %vm7487 = vcmask 519168
    %v7488 = vsel %vm7487, %v7484, 0.0
    %v7489 = vrot.slane %v7488, 4
    %v7490 = vadd.f32 %v7488, %v7489
    %v7491 = vrot.slane %v7490, 2
    %v7492 = vadd.f32 %v7490, %v7491
    %v7493 = vrot.slane %v7492, 1
    %v7494 = vadd.f32 %v7492, %v7493
    %v7495 = vrcp.pop 4.0
    %v7496 = vmul.f32 %v7494, %v7495
    %v7497 = vsub.f32 %v7484, %v7496
    %v7498 = vmul.f32 %v7497, %v7497
    %v7499 = vsel %vm7487, %v7498, 0.0
    %v7500 = vrot.slane %v7499, 4
    %v7501 = vadd.f32 %v7499, %v7500
    %v7502 = vrot.slane %v7501, 2
    %v7503 = vadd.f32 %v7501, %v7502
    %v7504 = vrot.slane %v7503, 1
    %v7505 = vadd.f32 %v7503, %v7504
    %v7506 = vmul.f32 %v7505, %v7495
    %v7507 = vld [vmem:[%s23] sm:$0x1]
    %v7509 = vlaneseq
    %v7510 = vshrl.u32 %v7509, 7
    %v7511 = vsub.s32 0, %v7510
    %v7512 = vrot.slane %v7507, %v7511
    %v7514 = vmul.f32 %v7512, %v7497
    %v7515 = vadd.f32 %v7506, 1e-05
    %v7516 = vrsqrt.pop %v7515
    %v7517 = vmul.f32 %v7514, %v7516
    %v7518 = vld [vmem:[%s24] sm:$0x1]
    %v7520 = vlaneseq
    %v7521 = vshrl.u32 %v7520, 7
    %v7522 = vsub.s32 0, %v7521
    %v7523 = vrot.slane %v7518, %v7522
    %v7525 = vadd.f32 %v7517, %v7523
    %v7526 = vmul.f32 %v7525, %v7525
    %v7527 = vsel %vm7487, %v7526, 0.0
    %7528 = vadd.xlane.f32.xlu0 %v7527
    %v7529 = vpop.xlane.xlu0 %7528
    %v7530 = vrsqrt.pop %v7529
    %v7531 = vmul.f32 %v7529, %v7530
    %vm7532 = vcmp.eq.f32.partialorder %v7529, inf
    %v7533 = vsel %vm7532, %v7529, %v7531
    %vm7534 = vcmp.eq.f32.partialorder %v7529, 0.0
    %v7535 = vand.u32 %v7529, 2147483648
    %v7536 = vsel %vm7534, %v7535, %v7533
    %v7537 = vmax.f32 %v7536, 1e-12
    %v7538 = vrcp.pop %v7537
    %v7539 = vmul.f32 %v7525, %v7538
    %v7540 = vld [vmem:[%s25] sm:$0xff]
    %v7541 = vld [vmem:[%s25 + $0x8] sm:$0xff]
    %v7542 = vld [vmem:[%s25 + $0x10] sm:$0xff]
    %v7543 = vld [vmem:[%s25 + $0x18] sm:$0xff]
    %v7544 = vmul.f32 %v7540, %v7540
    %v7545 = vmul.f32 %v7541, %v7541
    %v7546 = vmul.f32 %v7542, %v7542
    %v7547 = vmul.f32 %v7543, %v7543
    %v7548 = vsel %vm1679, %v7544, 0.0
    %7549 = vadd.xlane.f32.xlu0 %v7548
    %v7550 = vpop.xlane.xlu0 %7549
    %v7551 = vsel %vm1679, %v7545, 0.0
    %7552 = vadd.xlane.f32.xlu0 %v7551
    %v7553 = vpop.xlane.xlu0 %7552
    %v7554 = vsel %vm1679, %v7546, 0.0
    %7555 = vadd.xlane.f32.xlu0 %v7554
    %v7556 = vpop.xlane.xlu0 %7555
    %v7557 = vsel %vm1679, %v7547, 0.0
    %7558 = vadd.xlane.f32.xlu0 %v7557
    %v7559 = vpop.xlane.xlu0 %7558
    %v7560 = vrsqrt.pop %v7550
    %v7561 = vmul.f32 %v7550, %v7560
    %vm7562 = vcmp.eq.f32.partialorder %v7550, inf
    %v7563 = vsel %vm7562, %v7550, %v7561
    %vm7564 = vcmp.eq.f32.partialorder %v7550, 0.0
    %v7565 = vand.u32 %v7550, 2147483648
    %v7566 = vsel %vm7564, %v7565, %v7563
    %v7567 = vrsqrt.pop %v7553
    %v7568 = vmul.f32 %v7553, %v7567
    %vm7569 = vcmp.eq.f32.partialorder %v7553, inf
    %v7570 = vsel %vm7569, %v7553, %v7568
    %vm7571 = vcmp.eq.f32.partialorder %v7553, 0.0
    %v7572 = vand.u32 %v7553, 2147483648
    %v7573 = vsel %vm7571, %v7572, %v7570
    %v7574 = vrsqrt.pop %v7556
    %v7575 = vmul.f32 %v7556, %v7574
    %vm7576 = vcmp.eq.f32.partialorder %v7556, inf
    %v7577 = vsel %vm7576, %v7556, %v7575
    %vm7578 = vcmp.eq.f32.partialorder %v7556, 0.0
    %v7579 = vand.u32 %v7556, 2147483648
    %v7580 = vsel %vm7578, %v7579, %v7577
    %v7581 = vrsqrt.pop %v7559
    %v7582 = vmul.f32 %v7559, %v7581
    %vm7583 = vcmp.eq.f32.partialorder %v7559, inf
    %v7584 = vsel %vm7583, %v7559, %v7582
    %vm7585 = vcmp.eq.f32.partialorder %v7559, 0.0
    %v7586 = vand.u32 %v7559, 2147483648
    %v7587 = vsel %vm7585, %v7586, %v7584
    %v7588 = vmax.f32 %v7566, 1e-12
    %v7589 = vmax.f32 %v7573, 1e-12
    %v7590 = vmax.f32 %v7580, 1e-12
    %v7591 = vmax.f32 %v7587, 1e-12
    %v7592 = vrcp.pop %v7588
    %v7593 = vmul.f32 %v7540, %v7592
    %v7594 = vrcp.pop %v7589
    %v7595 = vmul.f32 %v7541, %v7594
    %v7596 = vrcp.pop %v7590
    %v7597 = vmul.f32 %v7542, %v7596
    %v7598 = vrcp.pop %v7591
    %v7599 = vmul.f32 %v7543, %v7598
    %v7601 = vsel %vm1679, %v7539, 0
    %v7604 = vsel %vm1679, %v7593, 0
    %v7607 = vsel %vm1679, %v7595, 0
    %v7610 = vsel %vm1679, %v7597, 0
    %v7613 = vsel %vm1679, %v7599, 0
    %7615 = vmatprep.subr.mxu0 0.0
    %7616 = vmatpush1.xpose.msra.mxu0 %v7604
    %7617 = vmatprep.subr.mxu0 0.0
    %7618 = vmatpush1.xpose.msra.mxu0 %v7607
    %7619 = vmatprep.subr.mxu0 0.0
    %7620 = vmatpush1.xpose.msra.mxu0 %v7610
    %7621 = vmatprep.subr.mxu0 0.0
    %7622 = vmatpush1.xpose.msra.mxu0 %v7613
    %7623 = vmatprep.subr.mxu0 0.0
    %7624 = vmatpush1.xpose.msra.mxu0 0.0
    %7625 = vmatprep.subr.mxu0 0.0
    %7626 = vmatpush1.xpose.msra.mxu0 0.0
    %7627 = vmatprep.subr.mxu0 0.0
    %7628 = vmatpush1.xpose.msra.mxu0 0.0
    %7629 = vmatprep.subr.mxu0 0.0
    %7630 = vmatpush1.xpose.msra.mxu0 0.0
    %7631 = vmatprep.subr.mxu0 0.0
    %7632 = vmatpush1.xpose.msra.mxu0 0.0
    %7633 = vmatprep.subr.mxu0 0.0
    %7634 = vmatpush1.xpose.msra.mxu0 0.0
    %7635 = vmatprep.subr.mxu0 0.0
    %7636 = vmatpush1.xpose.msra.mxu0 0.0
    %7637 = vmatprep.subr.mxu0 0.0
    %7638 = vmatpush1.xpose.msra.mxu0 0.0
    %7639 = vmatprep.subr.mxu0 0.0
    %7640 = vmatpush1.xpose.msra.mxu0 0.0
    %7641 = vmatprep.subr.mxu0 0.0
    %7642 = vmatpush1.xpose.msra.mxu0 0.0
    %7643 = vmatprep.subr.mxu0 0.0
    %7644 = vmatpush1.xpose.msra.mxu0 0.0
    %7645 = vmatprep.subr.mxu0 0.0
    %7646 = vmatpush1.xpose.msra.mxu0 0.0
    %7647 = vmatprep.subr.mxu0 0.0
    %7648 = vmatpush1.xpose.msra.mxu0 0.0
    %7649 = vmatprep.subr.mxu0 0.0
    %7650 = vmatpush1.xpose.msra.mxu0 0.0
    %7651 = vmatprep.subr.mxu0 0.0
    %7652 = vmatpush1.xpose.msra.mxu0 0.0
    %7653 = vmatprep.subr.mxu0 0.0
    %7654 = vmatpush1.xpose.msra.mxu0 0.0
    %7655 = vmatprep.subr.mxu0 0.0
    %7656 = vmatpush1.xpose.msra.mxu0 0.0
    %7657 = vmatprep.subr.mxu0 0.0
    %7658 = vmatpush1.xpose.msra.mxu0 0.0
    %7659 = vmatprep.subr.mxu0 0.0
    %7660 = vmatpush1.xpose.msra.mxu0 0.0
    %7661 = vmatprep.subr.mxu0 0.0
    %7662 = vmatpush1.xpose.msra.mxu0 0.0
    %7663 = vmatprep.subr.mxu0 0.0
    %7664 = vmatpush1.xpose.msra.mxu0 0.0
    %7665 = vmatprep.subr.mxu0 0.0
    %7666 = vmatpush1.xpose.msra.mxu0 0.0
    %7667 = vmatprep.subr.mxu0 0.0
    %7668 = vmatpush1.xpose.msra.mxu0 0.0
    %7669 = vmatprep.subr.mxu0 0.0
    %7670 = vmatpush1.xpose.msra.mxu0 0.0
    %7671 = vmatprep.subr.mxu0 0.0
    %7672 = vmatpush1.xpose.msra.mxu0 0.0
    %7673 = vmatprep.subr.mxu0 0.0
    %7674 = vmatpush1.xpose.msra.mxu0 0.0
    %7675 = vmatprep.subr.mxu0 0.0
    %7676 = vmatpush1.xpose.msra.mxu0 0.0
    %7677 = vmatprep.subr.mxu0 0.0
    %7678 = vmatpush1.xpose.msra.mxu0 0.0
    %7679 = vmatprep.mubr.f32.mxu0 0.0
    %7680 = vmatmul.mubr.f32.gmra.mrb[0].mxu0 %v7601
    %v7681 = vpop.f32.mrb[0].mxu0
    %v7682 = vadd.f32 0.0, %v7681
    %v7683 = vpop.f32.mrb[0].mxu0
    %7684 = vdwg.mxu0
    %v7685 = vmul.f32 %v7682, %v7682
    %v7686 = vsub.f32 1.0, %v7685
    %v7687 = vmax.f32 %v7686, 0.0
    %v7688 = vrsqrt.pop %v7687
    %v7689 = vmul.f32 %v7687, %v7688
    %vm7690 = vcmp.eq.f32.partialorder %v7687, inf
    %v7691 = vsel %vm7690, %v7687, %v7689
    %vm7692 = vcmp.eq.f32.partialorder %v7687, 0.0
    %v7693 = vand.u32 %v7687, 2147483648
    %v7694 = vsel %vm7692, %v7693, %v7691
    %v7695 = vmul.f32 %v7682, 0.9553365
    %v7696 = vmul.f32 %v7694, 0.29552022
    %v7697 = vsub.f32 %v7695, %v7696
    %vm7698 = vcmp.gt.f32.partialorder %v7682, -0.9553365
    %v7699 = vsub.f32 %v7682, 0.08865606
    %v7700 = vsel %vm7698, %v7697, %v7699
    %v7701 = vld [vmem:[%s26] sm:$0xf]
    %7702 = vset.pattern.permute.xlu0 0
    %7703 = vperm.xlu0 %7702, %v7701
    %v7704 = vpop.permute.xlu0 %7703
    %vm7705 = vcmp.eq.s32.totalorder %v104, %v7704
    %v7706 = vsel %vm7705, 1, 0
    %v7707 = vcvt.s32.f32 %v7706
    %v7708 = vmul.f32 %v7707, %v7700
    %v7709 = vsub.f32 1.0, %v7707
    %v7710 = vmul.f32 %v7709, %v7682
    %v7711 = vadd.f32 %v7708, %v7710
    %v7712 = vmul.f32 %v7711, 30.0
    %vm7713 = vcmask 257024
    %7714 = vst.msk [vmem:[#allocation5] sm:$0xf] %vm7713, %v7712
    // Predicated region
    $region110: #{forward.1} parent=1 // pred_check
      _
    $region111: #{forward.1} parent=1 // pred_check_branch
      %7716 = sbr.rel (0) target = $region113
    $region112: #{forward.1} parent=1 // pred_region
      %s7718 = ssub.s32 64, 64
      %7719 = vsyncadd [#allocation4], %s7718
      %s7721 = sshll.u32 [#allocation3], 4
      %s7722 = int_to_ptr.vmem [resolvable:$true] %s7721
      %7724 = dma.vmem_to_hbm [thread:$0]  %s7722, 64, %s27, [#allocation4]
    $region113: #{forward.1} parent=1 // pred_fallthru
      _
    // Predicated region
    $region114: #{forward.1} parent=1 // pred_check
      _
    $region115: #{forward.1} parent=1 // pred_check_branch
      %7726 = sbr.rel (0) target = $region117
    $region116: #{forward.1} parent=1 // pred_region
      %s7728 = ssub.s32 64, 64
      %7729 = vsyncadd [#allocation6], %s7728
      %s7731 = sshll.u32 [#allocation5], 4
      %s7732 = int_to_ptr.vmem [resolvable:$true] %s7731
      %7734 = dma.vmem_to_hbm [thread:$0]  %s7732, 64, %s28, [#allocation6]
    $region117: #{forward.1} parent=1 // pred_fallthru
      _
    // Predicated region
    $region118: #{forward.1} parent=1 // pred_check
      _
    $region119: #{forward.1} parent=1 // pred_check_branch
      %7736 = sbr.rel (0) target = $region121
    $region120: #{forward.1} parent=1 // pred_region
      %7737 = dma.done [#allocation4], 64
    $region121: #{forward.1} parent=1 // pred_fallthru
      _
    // Predicated region
    $region122: #{forward.1} parent=1 // pred_check
      _
    $region123: #{forward.1} parent=1 // pred_check_branch
      %7739 = sbr.rel (0) target = $region125
    $region124: #{forward.1} parent=1 // pred_region
      %7740 = dma.done [#allocation6], 64
    $region125: #{forward.1} parent=1 // pred_fallthru
      _
    %7741 = vsyncpa [#allocation4], 1
    %7742 = vsyncpa [#allocation6], 1

</llo_original>
